<compile_context>
chip_gen: v5e
topology: v5e:2x2
jax: 0.10.0
libtpu: 0.0.40
codegen_flags: <defaults>
</compile_context>

<pallas_src>
import jax
import jax.numpy as jnp
from jax.experimental import pallas as pl
from jax.experimental.pallas import tpu as pltpu


# ---------------------------------------------------------------------------
# In-kernel helpers (Python-level, traced once per stage).
# ---------------------------------------------------------------------------
def _conv5x5_taps(xpad_ref, w_ref, H, W, Cin):
    """5x5 'same' conv as an uninterrupted 25-tap dot-accumulate chain.

    xpad_ref: (Hp, Wp, Cin) f32 VMEM scratch holding the zero-halo'd input.
    w_ref:    (25, Cin, Cout) bf16 tap matrices (tap t = di*5 + dj).
    Returns (H*W, Cout) f32 (rows in h*W + w order).
    """
    acc = None
    for t in range(25):
        di, dj = divmod(t, 5)
        patch = xpad_ref[di:di + H, dj:dj + W, :].reshape(H * W, Cin)
        contrib = jnp.dot(patch.astype(jnp.bfloat16), w_ref[t],
                          preferred_element_type=jnp.float32)
        acc = contrib if acc is None else acc + contrib
    return acc


def _maxpool2x2(y, H, W, C, hbuf_ref):
    """2x2 stride-2 max pool of y (H*W, C) f32 -> (H//2 * W//2, C) f32.

    H-direction on the live value (outer-dim max); W-direction via stride-2
    sublane reads of the small f32 scratch hbuf_ref (shape (H//2 * W, C)).
    """
    Ho, Wo = H // 2, W // 2
    y = y.reshape(Ho, 2, W, C)
    y = jnp.maximum(y[:, 0], y[:, 1])                    # (Ho, W, C)
    hbuf_ref[...] = y.reshape(Ho * W, C)
    even = hbuf_ref[pl.ds(0, Ho * Wo, stride=2), :]
    odd = hbuf_ref[pl.ds(1, Ho * Wo, stride=2), :]
    return jnp.maximum(even, odd)                        # rows = h*Wo + w


# ---------------------------------------------------------------------------
# The fused per-image kernel: conv1+pool -> conv2+pool -> conv3+pool -> fc.
# ---------------------------------------------------------------------------
def _net_kernel(x1_ref, w1_ref, b1_ref, w2_ref, b2_ref, w3_ref, b3_ref,
                wk_ref, bk_ref, o_ref, x2s, x3s, h1, h2, h3):
    # ---- stage 1: conv(3->32) as a single matmul over host-side im2col -----
    y1 = jnp.dot(x1_ref[...], w1_ref[...],
                 preferred_element_type=jnp.float32)      # (1024, 32)
    y1 = y1 + b1_ref[...]
    p1 = _maxpool2x2(y1, 32, 32, 32, h1)                  # (256, 32) f32

    # ---- stage 2: conv(32->32) over a zero-halo'd VMEM buffer --------------
    x2s[...] = jnp.zeros_like(x2s)
    x2s[2:18, 2:18, :] = p1.reshape(16, 16, 32)
    y2 = _conv5x5_taps(x2s, w2_ref, 16, 16, 32) + b2_ref[...]   # (256, 32)
    p2 = _maxpool2x2(y2, 16, 16, 32, h2)                  # (64, 32) f32

    # ---- stage 3: conv(32->64) ---------------------------------------------
    x3s[...] = jnp.zeros_like(x3s)
    x3s[2:10, 2:10, :] = p2.reshape(8, 8, 32)
    y3 = _conv5x5_taps(x3s, w3_ref, 8, 8, 32) + b3_ref[...]     # (64, 64)
    p3 = _maxpool2x2(y3, 8, 8, 64, h3)                    # (16, 64) f32

    # ---- collapsed fc1+fc2 head --------------------------------------------
    # out[o] = sum_{s,c} p3[s, c] * wk[s, c, o]  (flatten order baked into wk),
    # done as 16 tiny accumulating matmuls so no in-kernel flatten/relayout.
    head = None
    for s in range(16):
        row = p3[s:s + 1, :].astype(jnp.bfloat16)         # (1, 64)
        contrib = jnp.dot(row, wk_ref[s],
                          preferred_element_type=jnp.float32)   # (1, 128)
        head = contrib if head is None else head + contrib
    o_ref[...] = jnp.broadcast_to(head + bk_ref[...], (8, 128))


def _fused_net(x1, w1, b1, w2, b2, w3, b3, wk, bk):
    N = x1.shape[0]
    return pl.pallas_call(
        _net_kernel,
        out_shape=jax.ShapeDtypeStruct((N, 8, 128), jnp.float32),
        grid=(N,),
        in_specs=[
            pl.BlockSpec((None, 1024, 128), lambda n: (n, 0, 0)),   # im2col x
            pl.BlockSpec((128, 32), lambda n: (0, 0)),              # w1
            pl.BlockSpec((1, 32), lambda n: (0, 0)),                # b1
            pl.BlockSpec((25, 32, 32), lambda n: (0, 0, 0)),        # w2 taps
            pl.BlockSpec((1, 32), lambda n: (0, 0)),                # b2
            pl.BlockSpec((25, 32, 64), lambda n: (0, 0, 0)),        # w3 taps
            pl.BlockSpec((1, 64), lambda n: (0, 0)),                # b3
            pl.BlockSpec((16, 64, 128), lambda n: (0, 0, 0)),       # fc (fused)
            pl.BlockSpec((1, 128), lambda n: (0, 0)),               # fc bias
        ],
        out_specs=pl.BlockSpec((None, 8, 128), lambda n: (n, 0, 0)),
        scratch_shapes=[
            pltpu.VMEM((20, 24, 32), jnp.float32),   # stage-2 padded input
            pltpu.VMEM((12, 16, 32), jnp.float32),   # stage-3 padded input
            pltpu.VMEM((512, 32), jnp.float32),      # stage-1 H-pooled rows
            pltpu.VMEM((128, 32), jnp.float32),      # stage-2 H-pooled rows
            pltpu.VMEM((32, 64), jnp.float32),       # stage-3 H-pooled rows
        ],
        compiler_params=pltpu.CompilerParams(
            dimension_semantics=("parallel",),
        ),
    )(x1, w1, b1, w2, b2, w3, b3, wk, bk)


# ------------------------------- parameters --------------------------------
def init_params(key):
    """Deterministic PyTorch-style uniform(-1/sqrt(fan_in), 1/sqrt(fan_in))."""
    keys = jax.random.split(key, 10)

    def u(k, shape, fan_in):
        bound = 1.0 / jnp.sqrt(jnp.float32(fan_in))
        return jax.random.uniform(k, shape, jnp.float32, -bound, bound)

    return {
        "w1": u(keys[0], (32, 3, 5, 5), 3 * 25),
        "b1": u(keys[1], (32,), 3 * 25),
        "w2": u(keys[2], (32, 32, 5, 5), 32 * 25),
        "b2": u(keys[3], (32,), 32 * 25),
        "w3": u(keys[4], (64, 32, 5, 5), 32 * 25),
        "b3": u(keys[5], (64,), 32 * 25),
        "w4": u(keys[6], (64, 1024), 1024),   # Linear(1024, 64) weight (out, in)
        "b4": u(keys[7], (64,), 1024),
        "w5": u(keys[8], (10, 64), 64),       # Linear(64, 10) weight (out, in)
        "b5": u(keys[9], (10,), 64),
    }


def _conv_taps(w_oihw):
    """PyTorch (Cout, Cin, 5, 5) -> (25, Cin, Cout) bf16 tap matrices."""
    cout, cin = w_oihw.shape[0], w_oihw.shape[1]
    return (jnp.transpose(w_oihw, (2, 3, 1, 0))
            .reshape(25, cin, cout).astype(jnp.bfloat16))


# -------------------------------- forward ----------------------------------
def net_forward(params, x_nchw):
    N = x_nchw.shape[0]
    assert x_nchw.shape[1:] == (3, 32, 32), x_nchw.shape

    # Stage-1 im2col (cheap XLA glue): NCHW -> NHWC, 2px zero halo, 25 shifted
    # windows concatenated along channels -> (N, 1024, 75), K zero-padded to
    # 128 for a lane-dense block and an exact single-matmul conv1.
    x = jnp.transpose(x_nchw, (0, 2, 3, 1))
    xp = jnp.pad(x, ((0, 0), (2, 2), (2, 2), (0, 0)))
    cols = [xp[:, di:di + 32, dj:dj + 32, :]
            for di in range(5) for dj in range(5)]
    x1 = jnp.concatenate(cols, axis=-1).reshape(N, 1024, 75)
    x1 = jnp.pad(x1, ((0, 0), (0, 0), (0, 53))).astype(jnp.bfloat16)

    # conv1 weight as a single (75 -> padded 128, 32) matrix, rows di*15+dj*3+c.
    w1 = jnp.transpose(params["w1"], (2, 3, 1, 0)).reshape(75, 32)
    w1 = jnp.pad(w1, ((0, 53), (0, 0))).astype(jnp.bfloat16)
    b1 = params["b1"].reshape(1, 32).astype(jnp.float32)

    w2 = _conv_taps(params["w2"]); b2 = params["b2"].reshape(1, 32).astype(jnp.float32)
    w3 = _conv_taps(params["w3"]); b3 = params["b3"].reshape(1, 64).astype(jnp.float32)

    # Collapsed head: Linear(64,10) o Linear(1024,64) == one Linear(1024,10)
    # (exact -- no nonlinearity between them).  Permute its input dim from the
    # PyTorch NCHW-flatten index (c*16 + s) to our NHWC order (s, c), and
    # zero-pad the 10 outputs to 128 lanes for a lane-dense store.
    wc = params["w5"] @ params["w4"]                       # (10, 1024)
    bc = params["w5"] @ params["b4"] + params["b5"]        # (10,)
    wk = jnp.transpose(wc.reshape(10, 64, 16), (2, 1, 0))  # (16, 64, 10) = (s, c, o)
    wk = jnp.pad(wk, ((0, 0), (0, 0), (0, 118))).astype(jnp.bfloat16)
    bk = jnp.pad(bc, (0, 118)).reshape(1, 128).astype(jnp.float32)

    out = _fused_net(x1, w1, b1, w2, b2, w3, b3, wk, bk)   # (N, 8, 128) f32
    return out[:, 0, :10]


if __name__ == "__main__":
    key = jax.random.PRNGKey(0)
    k_params, k_x = jax.random.split(key)
    params = init_params(k_params)
    # Shape implied by the module: Linear(1024, 64) after 3x (conv5x5 + pool2)
    # of a 3-channel input => 3x32x32 images; small batch of 2.
    x = jax.random.normal(k_x, (2, 3, 32, 32), dtype=jnp.float32)

    fwd = jax.jit(net_forward)
    out = jax.block_until_ready(fwd(params, x))
    assert out.shape == (2, 10), out.shape
    assert out.dtype == jnp.float32, out.dtype
    assert bool(jnp.all(jnp.isfinite(out)))
    print("KERNEL_OK")
</pallas_src>

<mosaic_0001>
module attributes {stable_mosaic.version = 11 : i64} {
  func.func @_net_kernel(%arg0: i32, %arg1: memref<1x1024x128xbf16, #tpu.memory_space<vmem>>, %arg2: memref<128x32xbf16, #tpu.memory_space<vmem>>, %arg3: memref<1x32xf32, #tpu.memory_space<vmem>>, %arg4: memref<25x32x32xbf16, #tpu.memory_space<vmem>>, %arg5: memref<1x32xf32, #tpu.memory_space<vmem>>, %arg6: memref<25x32x64xbf16, #tpu.memory_space<vmem>>, %arg7: memref<1x64xf32, #tpu.memory_space<vmem>>, %arg8: memref<16x64x128xbf16, #tpu.memory_space<vmem>>, %arg9: memref<1x128xf32, #tpu.memory_space<vmem>>, %arg10: memref<1x8x128xf32, #tpu.memory_space<vmem>>, %arg11: memref<20x24x32xf32, #tpu.memory_space<vmem>>, %arg12: memref<12x16x32xf32, #tpu.memory_space<vmem>>, %arg13: memref<512x32xf32, #tpu.memory_space<vmem>>, %arg14: memref<128x32xf32, #tpu.memory_space<vmem>>, %arg15: memref<32x64xf32, #tpu.memory_space<vmem>>) attributes {dimension_semantics = [#tpu.dimension_semantics<parallel>], iteration_bounds = array<i64: 2>, scalar_prefetch = 0 : i64, scratch_operands = 5 : i64, tpu.core_type = #tpu.core_type<tc>, window_params = [{transform_indices = @transform_0, window_bounds = array<i64: 1, 1024, 128>}, {pipeline_mode = #tpu.pipeline_mode<synchronous>, transform_indices = @transform_1, window_bounds = array<i64: 128, 32>}, {pipeline_mode = #tpu.pipeline_mode<synchronous>, transform_indices = @transform_2, window_bounds = array<i64: 1, 32>}, {pipeline_mode = #tpu.pipeline_mode<synchronous>, transform_indices = @transform_3, window_bounds = array<i64: 25, 32, 32>}, {pipeline_mode = #tpu.pipeline_mode<synchronous>, transform_indices = @transform_4, window_bounds = array<i64: 1, 32>}, {pipeline_mode = #tpu.pipeline_mode<synchronous>, transform_indices = @transform_5, window_bounds = array<i64: 25, 32, 64>}, {pipeline_mode = #tpu.pipeline_mode<synchronous>, transform_indices = @transform_6, window_bounds = array<i64: 1, 64>}, {pipeline_mode = #tpu.pipeline_mode<synchronous>, transform_indices = @transform_7, window_bounds = array<i64: 16, 64, 128>}, {pipeline_mode = #tpu.pipeline_mode<synchronous>, transform_indices = @transform_8, window_bounds = array<i64: 1, 128>}, {transform_indices = @transform_9, window_bounds = array<i64: 1, 8, 128>}]} {
    %c0 = arith.constant 0 : index
    %c0_0 = arith.constant 0 : index
    %c0_1 = arith.constant 0 : index
    %0 = vector.load %arg1[%c0, %c0_0, %c0_1] : memref<1x1024x128xbf16, #tpu.memory_space<vmem>>, vector<1x1024x128xbf16>
    %1 = vector.shape_cast %0 : vector<1x1024x128xbf16> to vector<1024x128xbf16>
    %c0_2 = arith.constant 0 : index
    %c0_3 = arith.constant 0 : index
    %2 = vector.load %arg2[%c0_2, %c0_3] : memref<128x32xbf16, #tpu.memory_space<vmem>>, vector<128x32xbf16>
    %cst = arith.constant dense<0.000000e+00> : vector<1024x32xf32>
    %3 = tpu.matmul %1, %2, %cst {dimension_numbers = #tpu.dot_dimension_numbers<[1], [0], [0], [1], [0, 0, 1, 1], [], []>} : vector<1024x128xbf16>, vector<128x32xbf16>, vector<1024x32xf32> -> vector<1024x32xf32>
    %c0_4 = arith.constant 0 : index
    %c0_5 = arith.constant 0 : index
    %4 = vector.load %arg3[%c0_4, %c0_5] : memref<1x32xf32, #tpu.memory_space<vmem>>, vector<1x32xf32>
    %5 = vector.broadcast %4 : vector<1x32xf32> to vector<1024x32xf32>
    %6 = arith.addf %3, %5 : vector<1024x32xf32>
    %7 = vector.shape_cast %6 : vector<1024x32xf32> to vector<16x2x32x32xf32>
    %8 = vector.extract_strided_slice %7 {offsets = [0, 0, 0, 0], sizes = [16, 1, 32, 32], strides = [1, 1, 1, 1]} : vector<16x2x32x32xf32> to vector<16x1x32x32xf32>
    %9 = vector.shape_cast %8 : vector<16x1x32x32xf32> to vector<16x32x32xf32>
    %10 = vector.extract_strided_slice %7 {offsets = [0, 1, 0, 0], sizes = [16, 1, 32, 32], strides = [1, 1, 1, 1]} : vector<16x2x32x32xf32> to vector<16x1x32x32xf32>
    %11 = vector.shape_cast %10 : vector<16x1x32x32xf32> to vector<16x32x32xf32>
    %12 = arith.maximumf %9, %11 : vector<16x32x32xf32>
    %13 = vector.shape_cast %12 : vector<16x32x32xf32> to vector<512x32xf32>
    %c0_6 = arith.constant 0 : index
    %c0_7 = arith.constant 0 : index
    %14 = vector.load %arg13[%c0_6, %c0_7] : memref<512x32xf32, #tpu.memory_space<vmem>>, vector<512x32xf32>
    tpu.vector_store %arg13[%c0_6, %c0_7], %13 {strides = array<i32>} : memref<512x32xf32, #tpu.memory_space<vmem>>, vector<512x32xf32>,
    %c0_8 = arith.constant 0 : index
    %c0_9 = arith.constant 0 : index
    %15 = tpu.strided_load %arg13[%c0_8, %c0_9] {strides = array<i32: 2, 1>} : memref<512x32xf32, #tpu.memory_space<vmem>>, vector<256x32xf32>
    %c1 = arith.constant 1 : index
    %c0_10 = arith.constant 0 : index
    %16 = tpu.strided_load %arg13[%c1, %c0_10] {strides = array<i32: 2, 1>} : memref<512x32xf32, #tpu.memory_space<vmem>>, vector<256x32xf32>
    %17 = arith.maximumf %15, %16 : vector<256x32xf32>
    %cst_11 = arith.constant 0.000000e+00 : f32
    %18 = vector.broadcast %cst_11 : f32 to vector<20x24x32xf32>
    %c0_12 = arith.constant 0 : index
    %c0_13 = arith.constant 0 : index
    %c0_14 = arith.constant 0 : index
    %19 = vector.load %arg11[%c0_12, %c0_13, %c0_14] : memref<20x24x32xf32, #tpu.memory_space<vmem>>, vector<20x24x32xf32>
    tpu.vector_store %arg11[%c0_12, %c0_13, %c0_14], %18 {strides = array<i32>} : memref<20x24x32xf32, #tpu.memory_space<vmem>>, vector<20x24x32xf32>,
    %20 = vector.shape_cast %17 : vector<256x32xf32> to vector<16x16x32xf32>
    %c2 = arith.constant 2 : index
    %c2_15 = arith.constant 2 : index
    %c0_16 = arith.constant 0 : index
    %21 = vector.load %arg11[%c2, %c2_15, %c0_16] : memref<20x24x32xf32, #tpu.memory_space<vmem>>, vector<16x16x32xf32>
    tpu.vector_store %arg11[%c2, %c2_15, %c0_16], %20 {strides = array<i32>} : memref<20x24x32xf32, #tpu.memory_space<vmem>>, vector<16x16x32xf32>,
    %c0_17 = arith.constant 0 : index
    %c0_18 = arith.constant 0 : index
    %c0_19 = arith.constant 0 : index
    %22 = vector.load %arg11[%c0_17, %c0_18, %c0_19] : memref<20x24x32xf32, #tpu.memory_space<vmem>>, vector<16x16x32xf32>
    %23 = vector.shape_cast %22 : vector<16x16x32xf32> to vector<256x32xf32>
    %24 = arith.truncf %23 : vector<256x32xf32> to vector<256x32xbf16>
    %c0_20 = arith.constant 0 : index
    %c0_21 = arith.constant 0 : index
    %c0_22 = arith.constant 0 : index
    %25 = vector.load %arg4[%c0_20, %c0_21, %c0_22] : memref<25x32x32xbf16, #tpu.memory_space<vmem>>, vector<1x32x32xbf16>
    %26 = vector.shape_cast %25 : vector<1x32x32xbf16> to vector<32x32xbf16>
    %cst_23 = arith.constant dense<0.000000e+00> : vector<256x32xf32>
    %27 = tpu.matmul %24, %26, %cst_23 {dimension_numbers = #tpu.dot_dimension_numbers<[1], [0], [0], [1], [0, 0, 1, 1], [], []>} : vector<256x32xbf16>, vector<32x32xbf16>, vector<256x32xf32> -> vector<256x32xf32>
    %c0_24 = arith.constant 0 : index
    %c1_25 = arith.constant 1 : index
    %c0_26 = arith.constant 0 : index
    %28 = vector.load %arg11[%c0_24, %c1_25, %c0_26] : memref<20x24x32xf32, #tpu.memory_space<vmem>>, vector<16x16x32xf32>
    %29 = vector.shape_cast %28 : vector<16x16x32xf32> to vector<256x32xf32>
    %30 = arith.truncf %29 : vector<256x32xf32> to vector<256x32xbf16>
    %c1_27 = arith.constant 1 : index
    %c0_28 = arith.constant 0 : index
    %c0_29 = arith.constant 0 : index
    %31 = vector.load %arg4[%c1_27, %c0_28, %c0_29] : memref<25x32x32xbf16, #tpu.memory_space<vmem>>, vector<1x32x32xbf16>
    %32 = vector.shape_cast %31 : vector<1x32x32xbf16> to vector<32x32xbf16>
    %cst_30 = arith.constant dense<0.000000e+00> : vector<256x32xf32>
    %33 = tpu.matmul %30, %32, %cst_30 {dimension_numbers = #tpu.dot_dimension_numbers<[1], [0], [0], [1], [0, 0, 1, 1], [], []>} : vector<256x32xbf16>, vector<32x32xbf16>, vector<256x32xf32> -> vector<256x32xf32>
    %34 = arith.addf %27, %33 : vector<256x32xf32>
    %c0_31 = arith.constant 0 : index
    %c2_32 = arith.constant 2 : index
    %c0_33 = arith.constant 0 : index
    %35 = vector.load %arg11[%c0_31, %c2_32, %c0_33] : memref<20x24x32xf32, #tpu.memory_space<vmem>>, vector<16x16x32xf32>
    %36 = vector.shape_cast %35 : vector<16x16x32xf32> to vector<256x32xf32>
    %37 = arith.truncf %36 : vector<256x32xf32> to vector<256x32xbf16>
    %c2_34 = arith.constant 2 : index
    %c0_35 = arith.constant 0 : index
    %c0_36 = arith.constant 0 : index
    %38 = vector.load %arg4[%c2_34, %c0_35, %c0_36] : memref<25x32x32xbf16, #tpu.memory_space<vmem>>, vector<1x32x32xbf16>
    %39 = vector.shape_cast %38 : vector<1x32x32xbf16> to vector<32x32xbf16>
    %cst_37 = arith.constant dense<0.000000e+00> : vector<256x32xf32>
    %40 = tpu.matmul %37, %39, %cst_37 {dimension_numbers = #tpu.dot_dimension_numbers<[1], [0], [0], [1], [0, 0, 1, 1], [], []>} : vector<256x32xbf16>, vector<32x32xbf16>, vector<256x32xf32> -> vector<256x32xf32>
    %41 = arith.addf %34, %40 : vector<256x32xf32>
    %c0_38 = arith.constant 0 : index
    %c3 = arith.constant 3 : index
    %c0_39 = arith.constant 0 : index
    %42 = vector.load %arg11[%c0_38, %c3, %c0_39] : memref<20x24x32xf32, #tpu.memory_space<vmem>>, vector<16x16x32xf32>
    %43 = vector.shape_cast %42 : vector<16x16x32xf32> to vector<256x32xf32>
    %44 = arith.truncf %43 : vector<256x32xf32> to vector<256x32xbf16>
    %c3_40 = arith.constant 3 : index
    %c0_41 = arith.constant 0 : index
    %c0_42 = arith.constant 0 : index
    %45 = vector.load %arg4[%c3_40, %c0_41, %c0_42] : memref<25x32x32xbf16, #tpu.memory_space<vmem>>, vector<1x32x32xbf16>
    %46 = vector.shape_cast %45 : vector<1x32x32xbf16> to vector<32x32xbf16>
    %cst_43 = arith.constant dense<0.000000e+00> : vector<256x32xf32>
    %47 = tpu.matmul %44, %46, %cst_43 {dimension_numbers = #tpu.dot_dimension_numbers<[1], [0], [0], [1], [0, 0, 1, 1], [], []>} : vector<256x32xbf16>, vector<32x32xbf16>, vector<256x32xf32> -> vector<256x32xf32>
    %48 = arith.addf %41, %47 : vector<256x32xf32>
    %c0_44 = arith.constant 0 : index
    %c4 = arith.constant 4 : index
    %c0_45 = arith.constant 0 : index
    %49 = vector.load %arg11[%c0_44, %c4, %c0_45] : memref<20x24x32xf32, #tpu.memory_space<vmem>>, vector<16x16x32xf32>
    %50 = vector.shape_cast %49 : vector<16x16x32xf32> to vector<256x32xf32>
    %51 = arith.truncf %50 : vector<256x32xf32> to vector<256x32xbf16>
    %c4_46 = arith.constant 4 : index
    %c0_47 = arith.constant 0 : index
    %c0_48 = arith.constant 0 : index
    %52 = vector.load %arg4[%c4_46, %c0_47, %c0_48] : memref<25x32x32xbf16, #tpu.memory_space<vmem>>, vector<1x32x32xbf16>
    %53 = vector.shape_cast %52 : vector<1x32x32xbf16> to vector<32x32xbf16>
    %cst_49 = arith.constant dense<0.000000e+00> : vector<256x32xf32>
    %54 = tpu.matmul %51, %53, %cst_49 {dimension_numbers = #tpu.dot_dimension_numbers<[1], [0], [0], [1], [0, 0, 1, 1], [], []>} : vector<256x32xbf16>, vector<32x32xbf16>, vector<256x32xf32> -> vector<256x32xf32>
    %55 = arith.addf %48, %54 : vector<256x32xf32>
    %c1_50 = arith.constant 1 : index
    %c0_51 = arith.constant 0 : index
    %c0_52 = arith.constant 0 : index
    %56 = vector.load %arg11[%c1_50, %c0_51, %c0_52] : memref<20x24x32xf32, #tpu.memory_space<vmem>>, vector<16x16x32xf32>
    %57 = vector.shape_cast %56 : vector<16x16x32xf32> to vector<256x32xf32>
    %58 = arith.truncf %57 : vector<256x32xf32> to vector<256x32xbf16>
    %c5 = arith.constant 5 : index
    %c0_53 = arith.constant 0 : index
    %c0_54 = arith.constant 0 : index
    %59 = vector.load %arg4[%c5, %c0_53, %c0_54] : memref<25x32x32xbf16, #tpu.memory_space<vmem>>, vector<1x32x32xbf16>
    %60 = vector.shape_cast %59 : vector<1x32x32xbf16> to vector<32x32xbf16>
    %cst_55 = arith.constant dense<0.000000e+00> : vector<256x32xf32>
    %61 = tpu.matmul %58, %60, %cst_55 {dimension_numbers = #tpu.dot_dimension_numbers<[1], [0], [0], [1], [0, 0, 1, 1], [], []>} : vector<256x32xbf16>, vector<32x32xbf16>, vector<256x32xf32> -> vector<256x32xf32>
    %62 = arith.addf %55, %61 : vector<256x32xf32>
    %c1_56 = arith.constant 1 : index
    %c1_57 = arith.constant 1 : index
    %c0_58 = arith.constant 0 : index
    %63 = vector.load %arg11[%c1_56, %c1_57, %c0_58] : memref<20x24x32xf32, #tpu.memory_space<vmem>>, vector<16x16x32xf32>
    %64 = vector.shape_cast %63 : vector<16x16x32xf32> to vector<256x32xf32>
    %65 = arith.truncf %64 : vector<256x32xf32> to vector<256x32xbf16>
    %c6 = arith.constant 6 : index
    %c0_59 = arith.constant 0 : index
    %c0_60 = arith.constant 0 : index
    %66 = vector.load %arg4[%c6, %c0_59, %c0_60] : memref<25x32x32xbf16, #tpu.memory_space<vmem>>, vector<1x32x32xbf16>
    %67 = vector.shape_cast %66 : vector<1x32x32xbf16> to vector<32x32xbf16>
    %cst_61 = arith.constant dense<0.000000e+00> : vector<256x32xf32>
    %68 = tpu.matmul %65, %67, %cst_61 {dimension_numbers = #tpu.dot_dimension_numbers<[1], [0], [0], [1], [0, 0, 1, 1], [], []>} : vector<256x32xbf16>, vector<32x32xbf16>, vector<256x32xf32> -> vector<256x32xf32>
    %69 = arith.addf %62, %68 : vector<256x32xf32>
    %c1_62 = arith.constant 1 : index
    %c2_63 = arith.constant 2 : index
    %c0_64 = arith.constant 0 : index
    %70 = vector.load %arg11[%c1_62, %c2_63, %c0_64] : memref<20x24x32xf32, #tpu.memory_space<vmem>>, vector<16x16x32xf32>
    %71 = vector.shape_cast %70 : vector<16x16x32xf32> to vector<256x32xf32>
    %72 = arith.truncf %71 : vector<256x32xf32> to vector<256x32xbf16>
    %c7 = arith.constant 7 : index
    %c0_65 = arith.constant 0 : index
    %c0_66 = arith.constant 0 : index
    %73 = vector.load %arg4[%c7, %c0_65, %c0_66] : memref<25x32x32xbf16, #tpu.memory_space<vmem>>, vector<1x32x32xbf16>
    %74 = vector.shape_cast %73 : vector<1x32x32xbf16> to vector<32x32xbf16>
    %cst_67 = arith.constant dense<0.000000e+00> : vector<256x32xf32>
    %75 = tpu.matmul %72, %74, %cst_67 {dimension_numbers = #tpu.dot_dimension_numbers<[1], [0], [0], [1], [0, 0, 1, 1], [], []>} : vector<256x32xbf16>, vector<32x32xbf16>, vector<256x32xf32> -> vector<256x32xf32>
    %76 = arith.addf %69, %75 : vector<256x32xf32>
    %c1_68 = arith.constant 1 : index
    %c3_69 = arith.constant 3 : index
    %c0_70 = arith.constant 0 : index
    %77 = vector.load %arg11[%c1_68, %c3_69, %c0_70] : memref<20x24x32xf32, #tpu.memory_space<vmem>>, vector<16x16x32xf32>
    %78 = vector.shape_cast %77 : vector<16x16x32xf32> to vector<256x32xf32>
    %79 = arith.truncf %78 : vector<256x32xf32> to vector<256x32xbf16>
    %c8 = arith.constant 8 : index
    %c0_71 = arith.constant 0 : index
    %c0_72 = arith.constant 0 : index
    %80 = vector.load %arg4[%c8, %c0_71, %c0_72] : memref<25x32x32xbf16, #tpu.memory_space<vmem>>, vector<1x32x32xbf16>
    %81 = vector.shape_cast %80 : vector<1x32x32xbf16> to vector<32x32xbf16>
    %cst_73 = arith.constant dense<0.000000e+00> : vector<256x32xf32>
    %82 = tpu.matmul %79, %81, %cst_73 {dimension_numbers = #tpu.dot_dimension_numbers<[1], [0], [0], [1], [0, 0, 1, 1], [], []>} : vector<256x32xbf16>, vector<32x32xbf16>, vector<256x32xf32> -> vector<256x32xf32>
    %83 = arith.addf %76, %82 : vector<256x32xf32>
    %c1_74 = arith.constant 1 : index
    %c4_75 = arith.constant 4 : index
    %c0_76 = arith.constant 0 : index
    %84 = vector.load %arg11[%c1_74, %c4_75, %c0_76] : memref<20x24x32xf32, #tpu.memory_space<vmem>>, vector<16x16x32xf32>
    %85 = vector.shape_cast %84 : vector<16x16x32xf32> to vector<256x32xf32>
    %86 = arith.truncf %85 : vector<256x32xf32> to vector<256x32xbf16>
    %c9 = arith.constant 9 : index
    %c0_77 = arith.constant 0 : index
    %c0_78 = arith.constant 0 : index
    %87 = vector.load %arg4[%c9, %c0_77, %c0_78] : memref<25x32x32xbf16, #tpu.memory_space<vmem>>, vector<1x32x32xbf16>
    %88 = vector.shape_cast %87 : vector<1x32x32xbf16> to vector<32x32xbf16>
    %cst_79 = arith.constant dense<0.000000e+00> : vector<256x32xf32>
    %89 = tpu.matmul %86, %88, %cst_79 {dimension_numbers = #tpu.dot_dimension_numbers<[1], [0], [0], [1], [0, 0, 1, 1], [], []>} : vector<256x32xbf16>, vector<32x32xbf16>, vector<256x32xf32> -> vector<256x32xf32>
    %90 = arith.addf %83, %89 : vector<256x32xf32>
    %c2_80 = arith.constant 2 : index
    %c0_81 = arith.constant 0 : index
    %c0_82 = arith.constant 0 : index
    %91 = vector.load %arg11[%c2_80, %c0_81, %c0_82] : memref<20x24x32xf32, #tpu.memory_space<vmem>>, vector<16x16x32xf32>
    %92 = vector.shape_cast %91 : vector<16x16x32xf32> to vector<256x32xf32>
    %93 = arith.truncf %92 : vector<256x32xf32> to vector<256x32xbf16>
    %c10 = arith.constant 10 : index
    %c0_83 = arith.constant 0 : index
    %c0_84 = arith.constant 0 : index
    %94 = vector.load %arg4[%c10, %c0_83, %c0_84] : memref<25x32x32xbf16, #tpu.memory_space<vmem>>, vector<1x32x32xbf16>
    %95 = vector.shape_cast %94 : vector<1x32x32xbf16> to vector<32x32xbf16>
    %cst_85 = arith.constant dense<0.000000e+00> : vector<256x32xf32>
    %96 = tpu.matmul %93, %95, %cst_85 {dimension_numbers = #tpu.dot_dimension_numbers<[1], [0], [0], [1], [0, 0, 1, 1], [], []>} : vector<256x32xbf16>, vector<32x32xbf16>, vector<256x32xf32> -> vector<256x32xf32>
    %97 = arith.addf %90, %96 : vector<256x32xf32>
    %c2_86 = arith.constant 2 : index
    %c1_87 = arith.constant 1 : index
    %c0_88 = arith.constant 0 : index
    %98 = vector.load %arg11[%c2_86, %c1_87, %c0_88] : memref<20x24x32xf32, #tpu.memory_space<vmem>>, vector<16x16x32xf32>
    %99 = vector.shape_cast %98 : vector<16x16x32xf32> to vector<256x32xf32>
    %100 = arith.truncf %99 : vector<256x32xf32> to vector<256x32xbf16>
    %c11 = arith.constant 11 : index
    %c0_89 = arith.constant 0 : index
    %c0_90 = arith.constant 0 : index
    %101 = vector.load %arg4[%c11, %c0_89, %c0_90] : memref<25x32x32xbf16, #tpu.memory_space<vmem>>, vector<1x32x32xbf16>
    %102 = vector.shape_cast %101 : vector<1x32x32xbf16> to vector<32x32xbf16>
    %cst_91 = arith.constant dense<0.000000e+00> : vector<256x32xf32>
    %103 = tpu.matmul %100, %102, %cst_91 {dimension_numbers = #tpu.dot_dimension_numbers<[1], [0], [0], [1], [0, 0, 1, 1], [], []>} : vector<256x32xbf16>, vector<32x32xbf16>, vector<256x32xf32> -> vector<256x32xf32>
    %104 = arith.addf %97, %103 : vector<256x32xf32>
    %c2_92 = arith.constant 2 : index
    %c2_93 = arith.constant 2 : index
    %c0_94 = arith.constant 0 : index
    %105 = vector.load %arg11[%c2_92, %c2_93, %c0_94] : memref<20x24x32xf32, #tpu.memory_space<vmem>>, vector<16x16x32xf32>
    %106 = vector.shape_cast %105 : vector<16x16x32xf32> to vector<256x32xf32>
    %107 = arith.truncf %106 : vector<256x32xf32> to vector<256x32xbf16>
    %c12 = arith.constant 12 : index
    %c0_95 = arith.constant 0 : index
    %c0_96 = arith.constant 0 : index
    %108 = vector.load %arg4[%c12, %c0_95, %c0_96] : memref<25x32x32xbf16, #tpu.memory_space<vmem>>, vector<1x32x32xbf16>
    %109 = vector.shape_cast %108 : vector<1x32x32xbf16> to vector<32x32xbf16>
    %cst_97 = arith.constant dense<0.000000e+00> : vector<256x32xf32>
    %110 = tpu.matmul %107, %109, %cst_97 {dimension_numbers = #tpu.dot_dimension_numbers<[1], [0], [0], [1], [0, 0, 1, 1], [], []>} : vector<256x32xbf16>, vector<32x32xbf16>, vector<256x32xf32> -> vector<256x32xf32>
    %111 = arith.addf %104, %110 : vector<256x32xf32>
    %c2_98 = arith.constant 2 : index
    %c3_99 = arith.constant 3 : index
    %c0_100 = arith.constant 0 : index
    %112 = vector.load %arg11[%c2_98, %c3_99, %c0_100] : memref<20x24x32xf32, #tpu.memory_space<vmem>>, vector<16x16x32xf32>
    %113 = vector.shape_cast %112 : vector<16x16x32xf32> to vector<256x32xf32>
    %114 = arith.truncf %113 : vector<256x32xf32> to vector<256x32xbf16>
    %c13 = arith.constant 13 : index
    %c0_101 = arith.constant 0 : index
    %c0_102 = arith.constant 0 : index
    %115 = vector.load %arg4[%c13, %c0_101, %c0_102] : memref<25x32x32xbf16, #tpu.memory_space<vmem>>, vector<1x32x32xbf16>
    %116 = vector.shape_cast %115 : vector<1x32x32xbf16> to vector<32x32xbf16>
    %cst_103 = arith.constant dense<0.000000e+00> : vector<256x32xf32>
    %117 = tpu.matmul %114, %116, %cst_103 {dimension_numbers = #tpu.dot_dimension_numbers<[1], [0], [0], [1], [0, 0, 1, 1], [], []>} : vector<256x32xbf16>, vector<32x32xbf16>, vector<256x32xf32> -> vector<256x32xf32>
    %118 = arith.addf %111, %117 : vector<256x32xf32>
    %c2_104 = arith.constant 2 : index
    %c4_105 = arith.constant 4 : index
    %c0_106 = arith.constant 0 : index
    %119 = vector.load %arg11[%c2_104, %c4_105, %c0_106] : memref<20x24x32xf32, #tpu.memory_space<vmem>>, vector<16x16x32xf32>
    %120 = vector.shape_cast %119 : vector<16x16x32xf32> to vector<256x32xf32>
    %121 = arith.truncf %120 : vector<256x32xf32> to vector<256x32xbf16>
    %c14 = arith.constant 14 : index
    %c0_107 = arith.constant 0 : index
    %c0_108 = arith.constant 0 : index
    %122 = vector.load %arg4[%c14, %c0_107, %c0_108] : memref<25x32x32xbf16, #tpu.memory_space<vmem>>, vector<1x32x32xbf16>
    %123 = vector.shape_cast %122 : vector<1x32x32xbf16> to vector<32x32xbf16>
    %cst_109 = arith.constant dense<0.000000e+00> : vector<256x32xf32>
    %124 = tpu.matmul %121, %123, %cst_109 {dimension_numbers = #tpu.dot_dimension_numbers<[1], [0], [0], [1], [0, 0, 1, 1], [], []>} : vector<256x32xbf16>, vector<32x32xbf16>, vector<256x32xf32> -> vector<256x32xf32>
    %125 = arith.addf %118, %124 : vector<256x32xf32>
    %c3_110 = arith.constant 3 : index
    %c0_111 = arith.constant 0 : index
    %c0_112 = arith.constant 0 : index
    %126 = vector.load %arg11[%c3_110, %c0_111, %c0_112] : memref<20x24x32xf32, #tpu.memory_space<vmem>>, vector<16x16x32xf32>
    %127 = vector.shape_cast %126 : vector<16x16x32xf32> to vector<256x32xf32>
    %128 = arith.truncf %127 : vector<256x32xf32> to vector<256x32xbf16>
    %c15 = arith.constant 15 : index
    %c0_113 = arith.constant 0 : index
    %c0_114 = arith.constant 0 : index
    %129 = vector.load %arg4[%c15, %c0_113, %c0_114] : memref<25x32x32xbf16, #tpu.memory_space<vmem>>, vector<1x32x32xbf16>
    %130 = vector.shape_cast %129 : vector<1x32x32xbf16> to vector<32x32xbf16>
    %cst_115 = arith.constant dense<0.000000e+00> : vector<256x32xf32>
    %131 = tpu.matmul %128, %130, %cst_115 {dimension_numbers = #tpu.dot_dimension_numbers<[1], [0], [0], [1], [0, 0, 1, 1], [], []>} : vector<256x32xbf16>, vector<32x32xbf16>, vector<256x32xf32> -> vector<256x32xf32>
    %132 = arith.addf %125, %131 : vector<256x32xf32>
    %c3_116 = arith.constant 3 : index
    %c1_117 = arith.constant 1 : index
    %c0_118 = arith.constant 0 : index
    %133 = vector.load %arg11[%c3_116, %c1_117, %c0_118] : memref<20x24x32xf32, #tpu.memory_space<vmem>>, vector<16x16x32xf32>
    %134 = vector.shape_cast %133 : vector<16x16x32xf32> to vector<256x32xf32>
    %135 = arith.truncf %134 : vector<256x32xf32> to vector<256x32xbf16>
    %c16 = arith.constant 16 : index
    %c0_119 = arith.constant 0 : index
    %c0_120 = arith.constant 0 : index
    %136 = vector.load %arg4[%c16, %c0_119, %c0_120] : memref<25x32x32xbf16, #tpu.memory_space<vmem>>, vector<1x32x32xbf16>
    %137 = vector.shape_cast %136 : vector<1x32x32xbf16> to vector<32x32xbf16>
    %cst_121 = arith.constant dense<0.000000e+00> : vector<256x32xf32>
    %138 = tpu.matmul %135, %137, %cst_121 {dimension_numbers = #tpu.dot_dimension_numbers<[1], [0], [0], [1], [0, 0, 1, 1], [], []>} : vector<256x32xbf16>, vector<32x32xbf16>, vector<256x32xf32> -> vector<256x32xf32>
    %139 = arith.addf %132, %138 : vector<256x32xf32>
    %c3_122 = arith.constant 3 : index
    %c2_123 = arith.constant 2 : index
    %c0_124 = arith.constant 0 : index
    %140 = vector.load %arg11[%c3_122, %c2_123, %c0_124] : memref<20x24x32xf32, #tpu.memory_space<vmem>>, vector<16x16x32xf32>
    %141 = vector.shape_cast %140 : vector<16x16x32xf32> to vector<256x32xf32>
    %142 = arith.truncf %141 : vector<256x32xf32> to vector<256x32xbf16>
    %c17 = arith.constant 17 : index
    %c0_125 = arith.constant 0 : index
    %c0_126 = arith.constant 0 : index
    %143 = vector.load %arg4[%c17, %c0_125, %c0_126] : memref<25x32x32xbf16, #tpu.memory_space<vmem>>, vector<1x32x32xbf16>
    %144 = vector.shape_cast %143 : vector<1x32x32xbf16> to vector<32x32xbf16>
    %cst_127 = arith.constant dense<0.000000e+00> : vector<256x32xf32>
    %145 = tpu.matmul %142, %144, %cst_127 {dimension_numbers = #tpu.dot_dimension_numbers<[1], [0], [0], [1], [0, 0, 1, 1], [], []>} : vector<256x32xbf16>, vector<32x32xbf16>, vector<256x32xf32> -> vector<256x32xf32>
    %146 = arith.addf %139, %145 : vector<256x32xf32>
    %c3_128 = arith.constant 3 : index
    %c3_129 = arith.constant 3 : index
    %c0_130 = arith.constant 0 : index
    %147 = vector.load %arg11[%c3_128, %c3_129, %c0_130] : memref<20x24x32xf32, #tpu.memory_space<vmem>>, vector<16x16x32xf32>
    %148 = vector.shape_cast %147 : vector<16x16x32xf32> to vector<256x32xf32>
    %149 = arith.truncf %148 : vector<256x32xf32> to vector<256x32xbf16>
    %c18 = arith.constant 18 : index
    %c0_131 = arith.constant 0 : index
    %c0_132 = arith.constant 0 : index
    %150 = vector.load %arg4[%c18, %c0_131, %c0_132] : memref<25x32x32xbf16, #tpu.memory_space<vmem>>, vector<1x32x32xbf16>
    %151 = vector.shape_cast %150 : vector<1x32x32xbf16> to vector<32x32xbf16>
    %cst_133 = arith.constant dense<0.000000e+00> : vector<256x32xf32>
    %152 = tpu.matmul %149, %151, %cst_133 {dimension_numbers = #tpu.dot_dimension_numbers<[1], [0], [0], [1], [0, 0, 1, 1], [], []>} : vector<256x32xbf16>, vector<32x32xbf16>, vector<256x32xf32> -> vector<256x32xf32>
    %153 = arith.addf %146, %152 : vector<256x32xf32>
    %c3_134 = arith.constant 3 : index
    %c4_135 = arith.constant 4 : index
    %c0_136 = arith.constant 0 : index
    %154 = vector.load %arg11[%c3_134, %c4_135, %c0_136] : memref<20x24x32xf32, #tpu.memory_space<vmem>>, vector<16x16x32xf32>
    %155 = vector.shape_cast %154 : vector<16x16x32xf32> to vector<256x32xf32>
    %156 = arith.truncf %155 : vector<256x32xf32> to vector<256x32xbf16>
    %c19 = arith.constant 19 : index
    %c0_137 = arith.constant 0 : index
    %c0_138 = arith.constant 0 : index
    %157 = vector.load %arg4[%c19, %c0_137, %c0_138] : memref<25x32x32xbf16, #tpu.memory_space<vmem>>, vector<1x32x32xbf16>
    %158 = vector.shape_cast %157 : vector<1x32x32xbf16> to vector<32x32xbf16>
    %cst_139 = arith.constant dense<0.000000e+00> : vector<256x32xf32>
    %159 = tpu.matmul %156, %158, %cst_139 {dimension_numbers = #tpu.dot_dimension_numbers<[1], [0], [0], [1], [0, 0, 1, 1], [], []>} : vector<256x32xbf16>, vector<32x32xbf16>, vector<256x32xf32> -> vector<256x32xf32>
    %160 = arith.addf %153, %159 : vector<256x32xf32>
    %c4_140 = arith.constant 4 : index
    %c0_141 = arith.constant 0 : index
    %c0_142 = arith.constant 0 : index
    %161 = vector.load %arg11[%c4_140, %c0_141, %c0_142] : memref<20x24x32xf32, #tpu.memory_space<vmem>>, vector<16x16x32xf32>
    %162 = vector.shape_cast %161 : vector<16x16x32xf32> to vector<256x32xf32>
    %163 = arith.truncf %162 : vector<256x32xf32> to vector<256x32xbf16>
    %c20 = arith.constant 20 : index
    %c0_143 = arith.constant 0 : index
    %c0_144 = arith.constant 0 : index
    %164 = vector.load %arg4[%c20, %c0_143, %c0_144] : memref<25x32x32xbf16, #tpu.memory_space<vmem>>, vector<1x32x32xbf16>
    %165 = vector.shape_cast %164 : vector<1x32x32xbf16> to vector<32x32xbf16>
    %cst_145 = arith.constant dense<0.000000e+00> : vector<256x32xf32>
    %166 = tpu.matmul %163, %165, %cst_145 {dimension_numbers = #tpu.dot_dimension_numbers<[1], [0], [0], [1], [0, 0, 1, 1], [], []>} : vector<256x32xbf16>, vector<32x32xbf16>, vector<256x32xf32> -> vector<256x32xf32>
    %167 = arith.addf %160, %166 : vector<256x32xf32>
    %c4_146 = arith.constant 4 : index
    %c1_147 = arith.constant 1 : index
    %c0_148 = arith.constant 0 : index
    %168 = vector.load %arg11[%c4_146, %c1_147, %c0_148] : memref<20x24x32xf32, #tpu.memory_space<vmem>>, vector<16x16x32xf32>
    %169 = vector.shape_cast %168 : vector<16x16x32xf32> to vector<256x32xf32>
    %170 = arith.truncf %169 : vector<256x32xf32> to vector<256x32xbf16>
    %c21 = arith.constant 21 : index
    %c0_149 = arith.constant 0 : index
    %c0_150 = arith.constant 0 : index
    %171 = vector.load %arg4[%c21, %c0_149, %c0_150] : memref<25x32x32xbf16, #tpu.memory_space<vmem>>, vector<1x32x32xbf16>
    %172 = vector.shape_cast %171 : vector<1x32x32xbf16> to vector<32x32xbf16>
    %cst_151 = arith.constant dense<0.000000e+00> : vector<256x32xf32>
    %173 = tpu.matmul %170, %172, %cst_151 {dimension_numbers = #tpu.dot_dimension_numbers<[1], [0], [0], [1], [0, 0, 1, 1], [], []>} : vector<256x32xbf16>, vector<32x32xbf16>, vector<256x32xf32> -> vector<256x32xf32>
    %174 = arith.addf %167, %173 : vector<256x32xf32>
    %c4_152 = arith.constant 4 : index
    %c2_153 = arith.constant 2 : index
    %c0_154 = arith.constant 0 : index
    %175 = vector.load %arg11[%c4_152, %c2_153, %c0_154] : memref<20x24x32xf32, #tpu.memory_space<vmem>>, vector<16x16x32xf32>
    %176 = vector.shape_cast %175 : vector<16x16x32xf32> to vector<256x32xf32>
    %177 = arith.truncf %176 : vector<256x32xf32> to vector<256x32xbf16>
    %c22 = arith.constant 22 : index
    %c0_155 = arith.constant 0 : index
    %c0_156 = arith.constant 0 : index
    %178 = vector.load %arg4[%c22, %c0_155, %c0_156] : memref<25x32x32xbf16, #tpu.memory_space<vmem>>, vector<1x32x32xbf16>
    %179 = vector.shape_cast %178 : vector<1x32x32xbf16> to vector<32x32xbf16>
    %cst_157 = arith.constant dense<0.000000e+00> : vector<256x32xf32>
    %180 = tpu.matmul %177, %179, %cst_157 {dimension_numbers = #tpu.dot_dimension_numbers<[1], [0], [0], [1], [0, 0, 1, 1], [], []>} : vector<256x32xbf16>, vector<32x32xbf16>, vector<256x32xf32> -> vector<256x32xf32>
    %181 = arith.addf %174, %180 : vector<256x32xf32>
    %c4_158 = arith.constant 4 : index
    %c3_159 = arith.constant 3 : index
    %c0_160 = arith.constant 0 : index
    %182 = vector.load %arg11[%c4_158, %c3_159, %c0_160] : memref<20x24x32xf32, #tpu.memory_space<vmem>>, vector<16x16x32xf32>
    %183 = vector.shape_cast %182 : vector<16x16x32xf32> to vector<256x32xf32>
    %184 = arith.truncf %183 : vector<256x32xf32> to vector<256x32xbf16>
    %c23 = arith.constant 23 : index
    %c0_161 = arith.constant 0 : index
    %c0_162 = arith.constant 0 : index
    %185 = vector.load %arg4[%c23, %c0_161, %c0_162] : memref<25x32x32xbf16, #tpu.memory_space<vmem>>, vector<1x32x32xbf16>
    %186 = vector.shape_cast %185 : vector<1x32x32xbf16> to vector<32x32xbf16>
    %cst_163 = arith.constant dense<0.000000e+00> : vector<256x32xf32>
    %187 = tpu.matmul %184, %186, %cst_163 {dimension_numbers = #tpu.dot_dimension_numbers<[1], [0], [0], [1], [0, 0, 1, 1], [], []>} : vector<256x32xbf16>, vector<32x32xbf16>, vector<256x32xf32> -> vector<256x32xf32>
    %188 = arith.addf %181, %187 : vector<256x32xf32>
    %c4_164 = arith.constant 4 : index
    %c4_165 = arith.constant 4 : index
    %c0_166 = arith.constant 0 : index
    %189 = vector.load %arg11[%c4_164, %c4_165, %c0_166] : memref<20x24x32xf32, #tpu.memory_space<vmem>>, vector<16x16x32xf32>
    %190 = vector.shape_cast %189 : vector<16x16x32xf32> to vector<256x32xf32>
    %191 = arith.truncf %190 : vector<256x32xf32> to vector<256x32xbf16>
    %c24 = arith.constant 24 : index
    %c0_167 = arith.constant 0 : index
    %c0_168 = arith.constant 0 : index
    %192 = vector.load %arg4[%c24, %c0_167, %c0_168] : memref<25x32x32xbf16, #tpu.memory_space<vmem>>, vector<1x32x32xbf16>
    %193 = vector.shape_cast %192 : vector<1x32x32xbf16> to vector<32x32xbf16>
    %cst_169 = arith.constant dense<0.000000e+00> : vector<256x32xf32>
    %194 = tpu.matmul %191, %193, %cst_169 {dimension_numbers = #tpu.dot_dimension_numbers<[1], [0], [0], [1], [0, 0, 1, 1], [], []>} : vector<256x32xbf16>, vector<32x32xbf16>, vector<256x32xf32> -> vector<256x32xf32>
    %195 = arith.addf %188, %194 : vector<256x32xf32>
    %c0_170 = arith.constant 0 : index
    %c0_171 = arith.constant 0 : index
    %196 = vector.load %arg5[%c0_170, %c0_171] : memref<1x32xf32, #tpu.memory_space<vmem>>, vector<1x32xf32>
    %197 = vector.broadcast %196 : vector<1x32xf32> to vector<256x32xf32>
    %198 = arith.addf %195, %197 : vector<256x32xf32>
    %199 = vector.shape_cast %198 : vector<256x32xf32> to vector<8x2x16x32xf32>
    %200 = vector.extract_strided_slice %199 {offsets = [0, 0, 0, 0], sizes = [8, 1, 16, 32], strides = [1, 1, 1, 1]} : vector<8x2x16x32xf32> to vector<8x1x16x32xf32>
    %201 = vector.shape_cast %200 : vector<8x1x16x32xf32> to vector<8x16x32xf32>
    %202 = vector.extract_strided_slice %199 {offsets = [0, 1, 0, 0], sizes = [8, 1, 16, 32], strides = [1, 1, 1, 1]} : vector<8x2x16x32xf32> to vector<8x1x16x32xf32>
    %203 = vector.shape_cast %202 : vector<8x1x16x32xf32> to vector<8x16x32xf32>
    %204 = arith.maximumf %201, %203 : vector<8x16x32xf32>
    %205 = vector.shape_cast %204 : vector<8x16x32xf32> to vector<128x32xf32>
    %c0_172 = arith.constant 0 : index
    %c0_173 = arith.constant 0 : index
    %206 = vector.load %arg14[%c0_172, %c0_173] : memref<128x32xf32, #tpu.memory_space<vmem>>, vector<128x32xf32>
    tpu.vector_store %arg14[%c0_172, %c0_173], %205 {strides = array<i32>} : memref<128x32xf32, #tpu.memory_space<vmem>>, vector<128x32xf32>,
    %c0_174 = arith.constant 0 : index
    %c0_175 = arith.constant 0 : index
    %207 = tpu.strided_load %arg14[%c0_174, %c0_175] {strides = array<i32: 2, 1>} : memref<128x32xf32, #tpu.memory_space<vmem>>, vector<64x32xf32>
    %c1_176 = arith.constant 1 : index
    %c0_177 = arith.constant 0 : index
    %208 = tpu.strided_load %arg14[%c1_176, %c0_177] {strides = array<i32: 2, 1>} : memref<128x32xf32, #tpu.memory_space<vmem>>, vector<64x32xf32>
    %209 = arith.maximumf %207, %208 : vector<64x32xf32>
    %cst_178 = arith.constant 0.000000e+00 : f32
    %210 = vector.broadcast %cst_178 : f32 to vector<12x16x32xf32>
    %c0_179 = arith.constant 0 : index
    %c0_180 = arith.constant 0 : index
    %c0_181 = arith.constant 0 : index
    %211 = vector.load %arg12[%c0_179, %c0_180, %c0_181] : memref<12x16x32xf32, #tpu.memory_space<vmem>>, vector<12x16x32xf32>
    tpu.vector_store %arg12[%c0_179, %c0_180, %c0_181], %210 {strides = array<i32>} : memref<12x16x32xf32, #tpu.memory_space<vmem>>, vector<12x16x32xf32>,
    %212 = vector.shape_cast %209 : vector<64x32xf32> to vector<8x8x32xf32>
    %c2_182 = arith.constant 2 : index
    %c2_183 = arith.constant 2 : index
    %c0_184 = arith.constant 0 : index
    %213 = vector.load %arg12[%c2_182, %c2_183, %c0_184] : memref<12x16x32xf32, #tpu.memory_space<vmem>>, vector<8x8x32xf32>
    tpu.vector_store %arg12[%c2_182, %c2_183, %c0_184], %212 {strides = array<i32>} : memref<12x16x32xf32, #tpu.memory_space<vmem>>, vector<8x8x32xf32>,
    %c0_185 = arith.constant 0 : index
    %c0_186 = arith.constant 0 : index
    %c0_187 = arith.constant 0 : index
    %214 = vector.load %arg12[%c0_185, %c0_186, %c0_187] : memref<12x16x32xf32, #tpu.memory_space<vmem>>, vector<8x8x32xf32>
    %215 = vector.shape_cast %214 : vector<8x8x32xf32> to vector<64x32xf32>
    %216 = arith.truncf %215 : vector<64x32xf32> to vector<64x32xbf16>
    %c0_188 = arith.constant 0 : index
    %c0_189 = arith.constant 0 : index
    %c0_190 = arith.constant 0 : index
    %217 = vector.load %arg6[%c0_188, %c0_189, %c0_190] : memref<25x32x64xbf16, #tpu.memory_space<vmem>>, vector<1x32x64xbf16>
    %218 = vector.shape_cast %217 : vector<1x32x64xbf16> to vector<32x64xbf16>
    %cst_191 = arith.constant dense<0.000000e+00> : vector<64x64xf32>
    %219 = tpu.matmul %216, %218, %cst_191 {dimension_numbers = #tpu.dot_dimension_numbers<[1], [0], [0], [1], [0, 0, 1, 1], [], []>} : vector<64x32xbf16>, vector<32x64xbf16>, vector<64x64xf32> -> vector<64x64xf32>
    %c0_192 = arith.constant 0 : index
    %c1_193 = arith.constant 1 : index
    %c0_194 = arith.constant 0 : index
    %220 = vector.load %arg12[%c0_192, %c1_193, %c0_194] : memref<12x16x32xf32, #tpu.memory_space<vmem>>, vector<8x8x32xf32>
    %221 = vector.shape_cast %220 : vector<8x8x32xf32> to vector<64x32xf32>
    %222 = arith.truncf %221 : vector<64x32xf32> to vector<64x32xbf16>
    %c1_195 = arith.constant 1 : index
    %c0_196 = arith.constant 0 : index
    %c0_197 = arith.constant 0 : index
    %223 = vector.load %arg6[%c1_195, %c0_196, %c0_197] : memref<25x32x64xbf16, #tpu.memory_space<vmem>>, vector<1x32x64xbf16>
    %224 = vector.shape_cast %223 : vector<1x32x64xbf16> to vector<32x64xbf16>
    %cst_198 = arith.constant dense<0.000000e+00> : vector<64x64xf32>
    %225 = tpu.matmul %222, %224, %cst_198 {dimension_numbers = #tpu.dot_dimension_numbers<[1], [0], [0], [1], [0, 0, 1, 1], [], []>} : vector<64x32xbf16>, vector<32x64xbf16>, vector<64x64xf32> -> vector<64x64xf32>
    %226 = arith.addf %219, %225 : vector<64x64xf32>
    %c0_199 = arith.constant 0 : index
    %c2_200 = arith.constant 2 : index
    %c0_201 = arith.constant 0 : index
    %227 = vector.load %arg12[%c0_199, %c2_200, %c0_201] : memref<12x16x32xf32, #tpu.memory_space<vmem>>, vector<8x8x32xf32>
    %228 = vector.shape_cast %227 : vector<8x8x32xf32> to vector<64x32xf32>
    %229 = arith.truncf %228 : vector<64x32xf32> to vector<64x32xbf16>
    %c2_202 = arith.constant 2 : index
    %c0_203 = arith.constant 0 : index
    %c0_204 = arith.constant 0 : index
    %230 = vector.load %arg6[%c2_202, %c0_203, %c0_204] : memref<25x32x64xbf16, #tpu.memory_space<vmem>>, vector<1x32x64xbf16>
    %231 = vector.shape_cast %230 : vector<1x32x64xbf16> to vector<32x64xbf16>
    %cst_205 = arith.constant dense<0.000000e+00> : vector<64x64xf32>
    %232 = tpu.matmul %229, %231, %cst_205 {dimension_numbers = #tpu.dot_dimension_numbers<[1], [0], [0], [1], [0, 0, 1, 1], [], []>} : vector<64x32xbf16>, vector<32x64xbf16>, vector<64x64xf32> -> vector<64x64xf32>
    %233 = arith.addf %226, %232 : vector<64x64xf32>
    %c0_206 = arith.constant 0 : index
    %c3_207 = arith.constant 3 : index
    %c0_208 = arith.constant 0 : index
    %234 = vector.load %arg12[%c0_206, %c3_207, %c0_208] : memref<12x16x32xf32, #tpu.memory_space<vmem>>, vector<8x8x32xf32>
    %235 = vector.shape_cast %234 : vector<8x8x32xf32> to vector<64x32xf32>
    %236 = arith.truncf %235 : vector<64x32xf32> to vector<64x32xbf16>
    %c3_209 = arith.constant 3 : index
    %c0_210 = arith.constant 0 : index
    %c0_211 = arith.constant 0 : index
    %237 = vector.load %arg6[%c3_209, %c0_210, %c0_211] : memref<25x32x64xbf16, #tpu.memory_space<vmem>>, vector<1x32x64xbf16>
    %238 = vector.shape_cast %237 : vector<1x32x64xbf16> to vector<32x64xbf16>
    %cst_212 = arith.constant dense<0.000000e+00> : vector<64x64xf32>
    %239 = tpu.matmul %236, %238, %cst_212 {dimension_numbers = #tpu.dot_dimension_numbers<[1], [0], [0], [1], [0, 0, 1, 1], [], []>} : vector<64x32xbf16>, vector<32x64xbf16>, vector<64x64xf32> -> vector<64x64xf32>
    %240 = arith.addf %233, %239 : vector<64x64xf32>
    %c0_213 = arith.constant 0 : index
    %c4_214 = arith.constant 4 : index
    %c0_215 = arith.constant 0 : index
    %241 = vector.load %arg12[%c0_213, %c4_214, %c0_215] : memref<12x16x32xf32, #tpu.memory_space<vmem>>, vector<8x8x32xf32>
    %242 = vector.shape_cast %241 : vector<8x8x32xf32> to vector<64x32xf32>
    %243 = arith.truncf %242 : vector<64x32xf32> to vector<64x32xbf16>
    %c4_216 = arith.constant 4 : index
    %c0_217 = arith.constant 0 : index
    %c0_218 = arith.constant 0 : index
    %244 = vector.load %arg6[%c4_216, %c0_217, %c0_218] : memref<25x32x64xbf16, #tpu.memory_space<vmem>>, vector<1x32x64xbf16>
    %245 = vector.shape_cast %244 : vector<1x32x64xbf16> to vector<32x64xbf16>
    %cst_219 = arith.constant dense<0.000000e+00> : vector<64x64xf32>
    %246 = tpu.matmul %243, %245, %cst_219 {dimension_numbers = #tpu.dot_dimension_numbers<[1], [0], [0], [1], [0, 0, 1, 1], [], []>} : vector<64x32xbf16>, vector<32x64xbf16>, vector<64x64xf32> -> vector<64x64xf32>
    %247 = arith.addf %240, %246 : vector<64x64xf32>
    %c1_220 = arith.constant 1 : index
    %c0_221 = arith.constant 0 : index
    %c0_222 = arith.constant 0 : index
    %248 = vector.load %arg12[%c1_220, %c0_221, %c0_222] : memref<12x16x32xf32, #tpu.memory_space<vmem>>, vector<8x8x32xf32>
    %249 = vector.shape_cast %248 : vector<8x8x32xf32> to vector<64x32xf32>
    %250 = arith.truncf %249 : vector<64x32xf32> to vector<64x32xbf16>
    %c5_223 = arith.constant 5 : index
    %c0_224 = arith.constant 0 : index
    %c0_225 = arith.constant 0 : index
    %251 = vector.load %arg6[%c5_223, %c0_224, %c0_225] : memref<25x32x64xbf16, #tpu.memory_space<vmem>>, vector<1x32x64xbf16>
    %252 = vector.shape_cast %251 : vector<1x32x64xbf16> to vector<32x64xbf16>
    %cst_226 = arith.constant dense<0.000000e+00> : vector<64x64xf32>
    %253 = tpu.matmul %250, %252, %cst_226 {dimension_numbers = #tpu.dot_dimension_numbers<[1], [0], [0], [1], [0, 0, 1, 1], [], []>} : vector<64x32xbf16>, vector<32x64xbf16>, vector<64x64xf32> -> vector<64x64xf32>
    %254 = arith.addf %247, %253 : vector<64x64xf32>
    %c1_227 = arith.constant 1 : index
    %c1_228 = arith.constant 1 : index
    %c0_229 = arith.constant 0 : index
    %255 = vector.load %arg12[%c1_227, %c1_228, %c0_229] : memref<12x16x32xf32, #tpu.memory_space<vmem>>, vector<8x8x32xf32>
    %256 = vector.shape_cast %255 : vector<8x8x32xf32> to vector<64x32xf32>
    %257 = arith.truncf %256 : vector<64x32xf32> to vector<64x32xbf16>
    %c6_230 = arith.constant 6 : index
    %c0_231 = arith.constant 0 : index
    %c0_232 = arith.constant 0 : index
    %258 = vector.load %arg6[%c6_230, %c0_231, %c0_232] : memref<25x32x64xbf16, #tpu.memory_space<vmem>>, vector<1x32x64xbf16>
    %259 = vector.shape_cast %258 : vector<1x32x64xbf16> to vector<32x64xbf16>
    %cst_233 = arith.constant dense<0.000000e+00> : vector<64x64xf32>
    %260 = tpu.matmul %257, %259, %cst_233 {dimension_numbers = #tpu.dot_dimension_numbers<[1], [0], [0], [1], [0, 0, 1, 1], [], []>} : vector<64x32xbf16>, vector<32x64xbf16>, vector<64x64xf32> -> vector<64x64xf32>
    %261 = arith.addf %254, %260 : vector<64x64xf32>
    %c1_234 = arith.constant 1 : index
    %c2_235 = arith.constant 2 : index
    %c0_236 = arith.constant 0 : index
    %262 = vector.load %arg12[%c1_234, %c2_235, %c0_236] : memref<12x16x32xf32, #tpu.memory_space<vmem>>, vector<8x8x32xf32>
    %263 = vector.shape_cast %262 : vector<8x8x32xf32> to vector<64x32xf32>
    %264 = arith.truncf %263 : vector<64x32xf32> to vector<64x32xbf16>
    %c7_237 = arith.constant 7 : index
    %c0_238 = arith.constant 0 : index
    %c0_239 = arith.constant 0 : index
    %265 = vector.load %arg6[%c7_237, %c0_238, %c0_239] : memref<25x32x64xbf16, #tpu.memory_space<vmem>>, vector<1x32x64xbf16>
    %266 = vector.shape_cast %265 : vector<1x32x64xbf16> to vector<32x64xbf16>
    %cst_240 = arith.constant dense<0.000000e+00> : vector<64x64xf32>
    %267 = tpu.matmul %264, %266, %cst_240 {dimension_numbers = #tpu.dot_dimension_numbers<[1], [0], [0], [1], [0, 0, 1, 1], [], []>} : vector<64x32xbf16>, vector<32x64xbf16>, vector<64x64xf32> -> vector<64x64xf32>
    %268 = arith.addf %261, %267 : vector<64x64xf32>
    %c1_241 = arith.constant 1 : index
    %c3_242 = arith.constant 3 : index
    %c0_243 = arith.constant 0 : index
    %269 = vector.load %arg12[%c1_241, %c3_242, %c0_243] : memref<12x16x32xf32, #tpu.memory_space<vmem>>, vector<8x8x32xf32>
    %270 = vector.shape_cast %269 : vector<8x8x32xf32> to vector<64x32xf32>
    %271 = arith.truncf %270 : vector<64x32xf32> to vector<64x32xbf16>
    %c8_244 = arith.constant 8 : index
    %c0_245 = arith.constant 0 : index
    %c0_246 = arith.constant 0 : index
    %272 = vector.load %arg6[%c8_244, %c0_245, %c0_246] : memref<25x32x64xbf16, #tpu.memory_space<vmem>>, vector<1x32x64xbf16>
    %273 = vector.shape_cast %272 : vector<1x32x64xbf16> to vector<32x64xbf16>
    %cst_247 = arith.constant dense<0.000000e+00> : vector<64x64xf32>
    %274 = tpu.matmul %271, %273, %cst_247 {dimension_numbers = #tpu.dot_dimension_numbers<[1], [0], [0], [1], [0, 0, 1, 1], [], []>} : vector<64x32xbf16>, vector<32x64xbf16>, vector<64x64xf32> -> vector<64x64xf32>
    %275 = arith.addf %268, %274 : vector<64x64xf32>
    %c1_248 = arith.constant 1 : index
    %c4_249 = arith.constant 4 : index
    %c0_250 = arith.constant 0 : index
    %276 = vector.load %arg12[%c1_248, %c4_249, %c0_250] : memref<12x16x32xf32, #tpu.memory_space<vmem>>, vector<8x8x32xf32>
    %277 = vector.shape_cast %276 : vector<8x8x32xf32> to vector<64x32xf32>
    %278 = arith.truncf %277 : vector<64x32xf32> to vector<64x32xbf16>
    %c9_251 = arith.constant 9 : index
    %c0_252 = arith.constant 0 : index
    %c0_253 = arith.constant 0 : index
    %279 = vector.load %arg6[%c9_251, %c0_252, %c0_253] : memref<25x32x64xbf16, #tpu.memory_space<vmem>>, vector<1x32x64xbf16>
    %280 = vector.shape_cast %279 : vector<1x32x64xbf16> to vector<32x64xbf16>
    %cst_254 = arith.constant dense<0.000000e+00> : vector<64x64xf32>
    %281 = tpu.matmul %278, %280, %cst_254 {dimension_numbers = #tpu.dot_dimension_numbers<[1], [0], [0], [1], [0, 0, 1, 1], [], []>} : vector<64x32xbf16>, vector<32x64xbf16>, vector<64x64xf32> -> vector<64x64xf32>
    %282 = arith.addf %275, %281 : vector<64x64xf32>
    %c2_255 = arith.constant 2 : index
    %c0_256 = arith.constant 0 : index
    %c0_257 = arith.constant 0 : index
    %283 = vector.load %arg12[%c2_255, %c0_256, %c0_257] : memref<12x16x32xf32, #tpu.memory_space<vmem>>, vector<8x8x32xf32>
    %284 = vector.shape_cast %283 : vector<8x8x32xf32> to vector<64x32xf32>
    %285 = arith.truncf %284 : vector<64x32xf32> to vector<64x32xbf16>
    %c10_258 = arith.constant 10 : index
    %c0_259 = arith.constant 0 : index
    %c0_260 = arith.constant 0 : index
    %286 = vector.load %arg6[%c10_258, %c0_259, %c0_260] : memref<25x32x64xbf16, #tpu.memory_space<vmem>>, vector<1x32x64xbf16>
    %287 = vector.shape_cast %286 : vector<1x32x64xbf16> to vector<32x64xbf16>
    %cst_261 = arith.constant dense<0.000000e+00> : vector<64x64xf32>
    %288 = tpu.matmul %285, %287, %cst_261 {dimension_numbers = #tpu.dot_dimension_numbers<[1], [0], [0], [1], [0, 0, 1, 1], [], []>} : vector<64x32xbf16>, vector<32x64xbf16>, vector<64x64xf32> -> vector<64x64xf32>
    %289 = arith.addf %282, %288 : vector<64x64xf32>
    %c2_262 = arith.constant 2 : index
    %c1_263 = arith.constant 1 : index
    %c0_264 = arith.constant 0 : index
    %290 = vector.load %arg12[%c2_262, %c1_263, %c0_264] : memref<12x16x32xf32, #tpu.memory_space<vmem>>, vector<8x8x32xf32>
    %291 = vector.shape_cast %290 : vector<8x8x32xf32> to vector<64x32xf32>
    %292 = arith.truncf %291 : vector<64x32xf32> to vector<64x32xbf16>
    %c11_265 = arith.constant 11 : index
    %c0_266 = arith.constant 0 : index
    %c0_267 = arith.constant 0 : index
    %293 = vector.load %arg6[%c11_265, %c0_266, %c0_267] : memref<25x32x64xbf16, #tpu.memory_space<vmem>>, vector<1x32x64xbf16>
    %294 = vector.shape_cast %293 : vector<1x32x64xbf16> to vector<32x64xbf16>
    %cst_268 = arith.constant dense<0.000000e+00> : vector<64x64xf32>
    %295 = tpu.matmul %292, %294, %cst_268 {dimension_numbers = #tpu.dot_dimension_numbers<[1], [0], [0], [1], [0, 0, 1, 1], [], []>} : vector<64x32xbf16>, vector<32x64xbf16>, vector<64x64xf32> -> vector<64x64xf32>
    %296 = arith.addf %289, %295 : vector<64x64xf32>
    %c2_269 = arith.constant 2 : index
    %c2_270 = arith.constant 2 : index
    %c0_271 = arith.constant 0 : index
    %297 = vector.load %arg12[%c2_269, %c2_270, %c0_271] : memref<12x16x32xf32, #tpu.memory_space<vmem>>, vector<8x8x32xf32>
    %298 = vector.shape_cast %297 : vector<8x8x32xf32> to vector<64x32xf32>
    %299 = arith.truncf %298 : vector<64x32xf32> to vector<64x32xbf16>
    %c12_272 = arith.constant 12 : index
    %c0_273 = arith.constant 0 : index
    %c0_274 = arith.constant 0 : index
    %300 = vector.load %arg6[%c12_272, %c0_273, %c0_274] : memref<25x32x64xbf16, #tpu.memory_space<vmem>>, vector<1x32x64xbf16>
    %301 = vector.shape_cast %300 : vector<1x32x64xbf16> to vector<32x64xbf16>
    %cst_275 = arith.constant dense<0.000000e+00> : vector<64x64xf32>
    %302 = tpu.matmul %299, %301, %cst_275 {dimension_numbers = #tpu.dot_dimension_numbers<[1], [0], [0], [1], [0, 0, 1, 1], [], []>} : vector<64x32xbf16>, vector<32x64xbf16>, vector<64x64xf32> -> vector<64x64xf32>
    %303 = arith.addf %296, %302 : vector<64x64xf32>
    %c2_276 = arith.constant 2 : index
    %c3_277 = arith.constant 3 : index
    %c0_278 = arith.constant 0 : index
    %304 = vector.load %arg12[%c2_276, %c3_277, %c0_278] : memref<12x16x32xf32, #tpu.memory_space<vmem>>, vector<8x8x32xf32>
    %305 = vector.shape_cast %304 : vector<8x8x32xf32> to vector<64x32xf32>
    %306 = arith.truncf %305 : vector<64x32xf32> to vector<64x32xbf16>
    %c13_279 = arith.constant 13 : index
    %c0_280 = arith.constant 0 : index
    %c0_281 = arith.constant 0 : index
    %307 = vector.load %arg6[%c13_279, %c0_280, %c0_281] : memref<25x32x64xbf16, #tpu.memory_space<vmem>>, vector<1x32x64xbf16>
    %308 = vector.shape_cast %307 : vector<1x32x64xbf16> to vector<32x64xbf16>
    %cst_282 = arith.constant dense<0.000000e+00> : vector<64x64xf32>
    %309 = tpu.matmul %306, %308, %cst_282 {dimension_numbers = #tpu.dot_dimension_numbers<[1], [0], [0], [1], [0, 0, 1, 1], [], []>} : vector<64x32xbf16>, vector<32x64xbf16>, vector<64x64xf32> -> vector<64x64xf32>
    %310 = arith.addf %303, %309 : vector<64x64xf32>
    %c2_283 = arith.constant 2 : index
    %c4_284 = arith.constant 4 : index
    %c0_285 = arith.constant 0 : index
    %311 = vector.load %arg12[%c2_283, %c4_284, %c0_285] : memref<12x16x32xf32, #tpu.memory_space<vmem>>, vector<8x8x32xf32>
    %312 = vector.shape_cast %311 : vector<8x8x32xf32> to vector<64x32xf32>
    %313 = arith.truncf %312 : vector<64x32xf32> to vector<64x32xbf16>
    %c14_286 = arith.constant 14 : index
    %c0_287 = arith.constant 0 : index
    %c0_288 = arith.constant 0 : index
    %314 = vector.load %arg6[%c14_286, %c0_287, %c0_288] : memref<25x32x64xbf16, #tpu.memory_space<vmem>>, vector<1x32x64xbf16>
    %315 = vector.shape_cast %314 : vector<1x32x64xbf16> to vector<32x64xbf16>
    %cst_289 = arith.constant dense<0.000000e+00> : vector<64x64xf32>
    %316 = tpu.matmul %313, %315, %cst_289 {dimension_numbers = #tpu.dot_dimension_numbers<[1], [0], [0], [1], [0, 0, 1, 1], [], []>} : vector<64x32xbf16>, vector<32x64xbf16>, vector<64x64xf32> -> vector<64x64xf32>
    %317 = arith.addf %310, %316 : vector<64x64xf32>
    %c3_290 = arith.constant 3 : index
    %c0_291 = arith.constant 0 : index
    %c0_292 = arith.constant 0 : index
    %318 = vector.load %arg12[%c3_290, %c0_291, %c0_292] : memref<12x16x32xf32, #tpu.memory_space<vmem>>, vector<8x8x32xf32>
    %319 = vector.shape_cast %318 : vector<8x8x32xf32> to vector<64x32xf32>
    %320 = arith.truncf %319 : vector<64x32xf32> to vector<64x32xbf16>
    %c15_293 = arith.constant 15 : index
    %c0_294 = arith.constant 0 : index
    %c0_295 = arith.constant 0 : index
    %321 = vector.load %arg6[%c15_293, %c0_294, %c0_295] : memref<25x32x64xbf16, #tpu.memory_space<vmem>>, vector<1x32x64xbf16>
    %322 = vector.shape_cast %321 : vector<1x32x64xbf16> to vector<32x64xbf16>
    %cst_296 = arith.constant dense<0.000000e+00> : vector<64x64xf32>
    %323 = tpu.matmul %320, %322, %cst_296 {dimension_numbers = #tpu.dot_dimension_numbers<[1], [0], [0], [1], [0, 0, 1, 1], [], []>} : vector<64x32xbf16>, vector<32x64xbf16>, vector<64x64xf32> -> vector<64x64xf32>
    %324 = arith.addf %317, %323 : vector<64x64xf32>
    %c3_297 = arith.constant 3 : index
    %c1_298 = arith.constant 1 : index
    %c0_299 = arith.constant 0 : index
    %325 = vector.load %arg12[%c3_297, %c1_298, %c0_299] : memref<12x16x32xf32, #tpu.memory_space<vmem>>, vector<8x8x32xf32>
    %326 = vector.shape_cast %325 : vector<8x8x32xf32> to vector<64x32xf32>
    %327 = arith.truncf %326 : vector<64x32xf32> to vector<64x32xbf16>
    %c16_300 = arith.constant 16 : index
    %c0_301 = arith.constant 0 : index
    %c0_302 = arith.constant 0 : index
    %328 = vector.load %arg6[%c16_300, %c0_301, %c0_302] : memref<25x32x64xbf16, #tpu.memory_space<vmem>>, vector<1x32x64xbf16>
    %329 = vector.shape_cast %328 : vector<1x32x64xbf16> to vector<32x64xbf16>
    %cst_303 = arith.constant dense<0.000000e+00> : vector<64x64xf32>
    %330 = tpu.matmul %327, %329, %cst_303 {dimension_numbers = #tpu.dot_dimension_numbers<[1], [0], [0], [1], [0, 0, 1, 1], [], []>} : vector<64x32xbf16>, vector<32x64xbf16>, vector<64x64xf32> -> vector<64x64xf32>
    %331 = arith.addf %324, %330 : vector<64x64xf32>
    %c3_304 = arith.constant 3 : index
    %c2_305 = arith.constant 2 : index
    %c0_306 = arith.constant 0 : index
    %332 = vector.load %arg12[%c3_304, %c2_305, %c0_306] : memref<12x16x32xf32, #tpu.memory_space<vmem>>, vector<8x8x32xf32>
    %333 = vector.shape_cast %332 : vector<8x8x32xf32> to vector<64x32xf32>
    %334 = arith.truncf %333 : vector<64x32xf32> to vector<64x32xbf16>
    %c17_307 = arith.constant 17 : index
    %c0_308 = arith.constant 0 : index
    %c0_309 = arith.constant 0 : index
    %335 = vector.load %arg6[%c17_307, %c0_308, %c0_309] : memref<25x32x64xbf16, #tpu.memory_space<vmem>>, vector<1x32x64xbf16>
    %336 = vector.shape_cast %335 : vector<1x32x64xbf16> to vector<32x64xbf16>
    %cst_310 = arith.constant dense<0.000000e+00> : vector<64x64xf32>
    %337 = tpu.matmul %334, %336, %cst_310 {dimension_numbers = #tpu.dot_dimension_numbers<[1], [0], [0], [1], [0, 0, 1, 1], [], []>} : vector<64x32xbf16>, vector<32x64xbf16>, vector<64x64xf32> -> vector<64x64xf32>
    %338 = arith.addf %331, %337 : vector<64x64xf32>
    %c3_311 = arith.constant 3 : index
    %c3_312 = arith.constant 3 : index
    %c0_313 = arith.constant 0 : index
    %339 = vector.load %arg12[%c3_311, %c3_312, %c0_313] : memref<12x16x32xf32, #tpu.memory_space<vmem>>, vector<8x8x32xf32>
    %340 = vector.shape_cast %339 : vector<8x8x32xf32> to vector<64x32xf32>
    %341 = arith.truncf %340 : vector<64x32xf32> to vector<64x32xbf16>
    %c18_314 = arith.constant 18 : index
    %c0_315 = arith.constant 0 : index
    %c0_316 = arith.constant 0 : index
    %342 = vector.load %arg6[%c18_314, %c0_315, %c0_316] : memref<25x32x64xbf16, #tpu.memory_space<vmem>>, vector<1x32x64xbf16>
    %343 = vector.shape_cast %342 : vector<1x32x64xbf16> to vector<32x64xbf16>
    %cst_317 = arith.constant dense<0.000000e+00> : vector<64x64xf32>
    %344 = tpu.matmul %341, %343, %cst_317 {dimension_numbers = #tpu.dot_dimension_numbers<[1], [0], [0], [1], [0, 0, 1, 1], [], []>} : vector<64x32xbf16>, vector<32x64xbf16>, vector<64x64xf32> -> vector<64x64xf32>
    %345 = arith.addf %338, %344 : vector<64x64xf32>
    %c3_318 = arith.constant 3 : index
    %c4_319 = arith.constant 4 : index
    %c0_320 = arith.constant 0 : index
    %346 = vector.load %arg12[%c3_318, %c4_319, %c0_320] : memref<12x16x32xf32, #tpu.memory_space<vmem>>, vector<8x8x32xf32>
    %347 = vector.shape_cast %346 : vector<8x8x32xf32> to vector<64x32xf32>
    %348 = arith.truncf %347 : vector<64x32xf32> to vector<64x32xbf16>
    %c19_321 = arith.constant 19 : index
    %c0_322 = arith.constant 0 : index
    %c0_323 = arith.constant 0 : index
    %349 = vector.load %arg6[%c19_321, %c0_322, %c0_323] : memref<25x32x64xbf16, #tpu.memory_space<vmem>>, vector<1x32x64xbf16>
    %350 = vector.shape_cast %349 : vector<1x32x64xbf16> to vector<32x64xbf16>
    %cst_324 = arith.constant dense<0.000000e+00> : vector<64x64xf32>
    %351 = tpu.matmul %348, %350, %cst_324 {dimension_numbers = #tpu.dot_dimension_numbers<[1], [0], [0], [1], [0, 0, 1, 1], [], []>} : vector<64x32xbf16>, vector<32x64xbf16>, vector<64x64xf32> -> vector<64x64xf32>
    %352 = arith.addf %345, %351 : vector<64x64xf32>
    %c4_325 = arith.constant 4 : index
    %c0_326 = arith.constant 0 : index
    %c0_327 = arith.constant 0 : index
    %353 = vector.load %arg12[%c4_325, %c0_326, %c0_327] : memref<12x16x32xf32, #tpu.memory_space<vmem>>, vector<8x8x32xf32>
    %354 = vector.shape_cast %353 : vector<8x8x32xf32> to vector<64x32xf32>
    %355 = arith.truncf %354 : vector<64x32xf32> to vector<64x32xbf16>
    %c20_328 = arith.constant 20 : index
    %c0_329 = arith.constant 0 : index
    %c0_330 = arith.constant 0 : index
    %356 = vector.load %arg6[%c20_328, %c0_329, %c0_330] : memref<25x32x64xbf16, #tpu.memory_space<vmem>>, vector<1x32x64xbf16>
    %357 = vector.shape_cast %356 : vector<1x32x64xbf16> to vector<32x64xbf16>
    %cst_331 = arith.constant dense<0.000000e+00> : vector<64x64xf32>
    %358 = tpu.matmul %355, %357, %cst_331 {dimension_numbers = #tpu.dot_dimension_numbers<[1], [0], [0], [1], [0, 0, 1, 1], [], []>} : vector<64x32xbf16>, vector<32x64xbf16>, vector<64x64xf32> -> vector<64x64xf32>
    %359 = arith.addf %352, %358 : vector<64x64xf32>
    %c4_332 = arith.constant 4 : index
    %c1_333 = arith.constant 1 : index
    %c0_334 = arith.constant 0 : index
    %360 = vector.load %arg12[%c4_332, %c1_333, %c0_334] : memref<12x16x32xf32, #tpu.memory_space<vmem>>, vector<8x8x32xf32>
    %361 = vector.shape_cast %360 : vector<8x8x32xf32> to vector<64x32xf32>
    %362 = arith.truncf %361 : vector<64x32xf32> to vector<64x32xbf16>
    %c21_335 = arith.constant 21 : index
    %c0_336 = arith.constant 0 : index
    %c0_337 = arith.constant 0 : index
    %363 = vector.load %arg6[%c21_335, %c0_336, %c0_337] : memref<25x32x64xbf16, #tpu.memory_space<vmem>>, vector<1x32x64xbf16>
    %364 = vector.shape_cast %363 : vector<1x32x64xbf16> to vector<32x64xbf16>
    %cst_338 = arith.constant dense<0.000000e+00> : vector<64x64xf32>
    %365 = tpu.matmul %362, %364, %cst_338 {dimension_numbers = #tpu.dot_dimension_numbers<[1], [0], [0], [1], [0, 0, 1, 1], [], []>} : vector<64x32xbf16>, vector<32x64xbf16>, vector<64x64xf32> -> vector<64x64xf32>
    %366 = arith.addf %359, %365 : vector<64x64xf32>
    %c4_339 = arith.constant 4 : index
    %c2_340 = arith.constant 2 : index
    %c0_341 = arith.constant 0 : index
    %367 = vector.load %arg12[%c4_339, %c2_340, %c0_341] : memref<12x16x32xf32, #tpu.memory_space<vmem>>, vector<8x8x32xf32>
    %368 = vector.shape_cast %367 : vector<8x8x32xf32> to vector<64x32xf32>
    %369 = arith.truncf %368 : vector<64x32xf32> to vector<64x32xbf16>
    %c22_342 = arith.constant 22 : index
    %c0_343 = arith.constant 0 : index
    %c0_344 = arith.constant 0 : index
    %370 = vector.load %arg6[%c22_342, %c0_343, %c0_344] : memref<25x32x64xbf16, #tpu.memory_space<vmem>>, vector<1x32x64xbf16>
    %371 = vector.shape_cast %370 : vector<1x32x64xbf16> to vector<32x64xbf16>
    %cst_345 = arith.constant dense<0.000000e+00> : vector<64x64xf32>
    %372 = tpu.matmul %369, %371, %cst_345 {dimension_numbers = #tpu.dot_dimension_numbers<[1], [0], [0], [1], [0, 0, 1, 1], [], []>} : vector<64x32xbf16>, vector<32x64xbf16>, vector<64x64xf32> -> vector<64x64xf32>
    %373 = arith.addf %366, %372 : vector<64x64xf32>
    %c4_346 = arith.constant 4 : index
    %c3_347 = arith.constant 3 : index
    %c0_348 = arith.constant 0 : index
    %374 = vector.load %arg12[%c4_346, %c3_347, %c0_348] : memref<12x16x32xf32, #tpu.memory_space<vmem>>, vector<8x8x32xf32>
    %375 = vector.shape_cast %374 : vector<8x8x32xf32> to vector<64x32xf32>
    %376 = arith.truncf %375 : vector<64x32xf32> to vector<64x32xbf16>
    %c23_349 = arith.constant 23 : index
    %c0_350 = arith.constant 0 : index
    %c0_351 = arith.constant 0 : index
    %377 = vector.load %arg6[%c23_349, %c0_350, %c0_351] : memref<25x32x64xbf16, #tpu.memory_space<vmem>>, vector<1x32x64xbf16>
    %378 = vector.shape_cast %377 : vector<1x32x64xbf16> to vector<32x64xbf16>
    %cst_352 = arith.constant dense<0.000000e+00> : vector<64x64xf32>
    %379 = tpu.matmul %376, %378, %cst_352 {dimension_numbers = #tpu.dot_dimension_numbers<[1], [0], [0], [1], [0, 0, 1, 1], [], []>} : vector<64x32xbf16>, vector<32x64xbf16>, vector<64x64xf32> -> vector<64x64xf32>
    %380 = arith.addf %373, %379 : vector<64x64xf32>
    %c4_353 = arith.constant 4 : index
    %c4_354 = arith.constant 4 : index
    %c0_355 = arith.constant 0 : index
    %381 = vector.load %arg12[%c4_353, %c4_354, %c0_355] : memref<12x16x32xf32, #tpu.memory_space<vmem>>, vector<8x8x32xf32>
    %382 = vector.shape_cast %381 : vector<8x8x32xf32> to vector<64x32xf32>
    %383 = arith.truncf %382 : vector<64x32xf32> to vector<64x32xbf16>
    %c24_356 = arith.constant 24 : index
    %c0_357 = arith.constant 0 : index
    %c0_358 = arith.constant 0 : index
    %384 = vector.load %arg6[%c24_356, %c0_357, %c0_358] : memref<25x32x64xbf16, #tpu.memory_space<vmem>>, vector<1x32x64xbf16>
    %385 = vector.shape_cast %384 : vector<1x32x64xbf16> to vector<32x64xbf16>
    %cst_359 = arith.constant dense<0.000000e+00> : vector<64x64xf32>
    %386 = tpu.matmul %383, %385, %cst_359 {dimension_numbers = #tpu.dot_dimension_numbers<[1], [0], [0], [1], [0, 0, 1, 1], [], []>} : vector<64x32xbf16>, vector<32x64xbf16>, vector<64x64xf32> -> vector<64x64xf32>
    %387 = arith.addf %380, %386 : vector<64x64xf32>
    %c0_360 = arith.constant 0 : index
    %c0_361 = arith.constant 0 : index
    %388 = vector.load %arg7[%c0_360, %c0_361] : memref<1x64xf32, #tpu.memory_space<vmem>>, vector<1x64xf32>
    %389 = vector.broadcast %388 : vector<1x64xf32> to vector<64x64xf32>
    %390 = arith.addf %387, %389 : vector<64x64xf32>
    %391 = vector.shape_cast %390 : vector<64x64xf32> to vector<4x2x8x64xf32>
    %392 = vector.extract_strided_slice %391 {offsets = [0, 0, 0, 0], sizes = [4, 1, 8, 64], strides = [1, 1, 1, 1]} : vector<4x2x8x64xf32> to vector<4x1x8x64xf32>
    %393 = vector.shape_cast %392 : vector<4x1x8x64xf32> to vector<4x8x64xf32>
    %394 = vector.extract_strided_slice %391 {offsets = [0, 1, 0, 0], sizes = [4, 1, 8, 64], strides = [1, 1, 1, 1]} : vector<4x2x8x64xf32> to vector<4x1x8x64xf32>
    %395 = vector.shape_cast %394 : vector<4x1x8x64xf32> to vector<4x8x64xf32>
    %396 = arith.maximumf %393, %395 : vector<4x8x64xf32>
    %397 = vector.shape_cast %396 : vector<4x8x64xf32> to vector<32x64xf32>
    %c0_362 = arith.constant 0 : index
    %c0_363 = arith.constant 0 : index
    %398 = vector.load %arg15[%c0_362, %c0_363] : memref<32x64xf32, #tpu.memory_space<vmem>>, vector<32x64xf32>
    tpu.vector_store %arg15[%c0_362, %c0_363], %397 {strides = array<i32>} : memref<32x64xf32, #tpu.memory_space<vmem>>, vector<32x64xf32>,
    %c0_364 = arith.constant 0 : index
    %c0_365 = arith.constant 0 : index
    %399 = tpu.strided_load %arg15[%c0_364, %c0_365] {strides = array<i32: 2, 1>} : memref<32x64xf32, #tpu.memory_space<vmem>>, vector<16x64xf32>
    %c1_366 = arith.constant 1 : index
    %c0_367 = arith.constant 0 : index
    %400 = tpu.strided_load %arg15[%c1_366, %c0_367] {strides = array<i32: 2, 1>} : memref<32x64xf32, #tpu.memory_space<vmem>>, vector<16x64xf32>
    %401 = arith.maximumf %399, %400 : vector<16x64xf32>
    %402 = vector.extract_strided_slice %401 {offsets = [0, 0], sizes = [1, 64], strides = [1, 1]} : vector<16x64xf32> to vector<1x64xf32>
    %403 = arith.truncf %402 : vector<1x64xf32> to vector<1x64xbf16>
    %c0_368 = arith.constant 0 : index
    %c0_369 = arith.constant 0 : index
    %c0_370 = arith.constant 0 : index
    %404 = vector.load %arg8[%c0_368, %c0_369, %c0_370] : memref<16x64x128xbf16, #tpu.memory_space<vmem>>, vector<1x64x128xbf16>
    %405 = vector.shape_cast %404 : vector<1x64x128xbf16> to vector<64x128xbf16>
    %cst_371 = arith.constant dense<0.000000e+00> : vector<1x128xf32>
    %406 = tpu.matmul %403, %405, %cst_371 {dimension_numbers = #tpu.dot_dimension_numbers<[1], [0], [0], [1], [0, 0, 1, 1], [], []>} : vector<1x64xbf16>, vector<64x128xbf16>, vector<1x128xf32> -> vector<1x128xf32>
    %407 = vector.extract_strided_slice %401 {offsets = [1, 0], sizes = [1, 64], strides = [1, 1]} : vector<16x64xf32> to vector<1x64xf32>
    %408 = arith.truncf %407 : vector<1x64xf32> to vector<1x64xbf16>
    %c1_372 = arith.constant 1 : index
    %c0_373 = arith.constant 0 : index
    %c0_374 = arith.constant 0 : index
    %409 = vector.load %arg8[%c1_372, %c0_373, %c0_374] : memref<16x64x128xbf16, #tpu.memory_space<vmem>>, vector<1x64x128xbf16>
    %410 = vector.shape_cast %409 : vector<1x64x128xbf16> to vector<64x128xbf16>
    %cst_375 = arith.constant dense<0.000000e+00> : vector<1x128xf32>
    %411 = tpu.matmul %408, %410, %cst_375 {dimension_numbers = #tpu.dot_dimension_numbers<[1], [0], [0], [1], [0, 0, 1, 1], [], []>} : vector<1x64xbf16>, vector<64x128xbf16>, vector<1x128xf32> -> vector<1x128xf32>
    %412 = arith.addf %406, %411 : vector<1x128xf32>
    %413 = vector.extract_strided_slice %401 {offsets = [2, 0], sizes = [1, 64], strides = [1, 1]} : vector<16x64xf32> to vector<1x64xf32>
    %414 = arith.truncf %413 : vector<1x64xf32> to vector<1x64xbf16>
    %c2_376 = arith.constant 2 : index
    %c0_377 = arith.constant 0 : index
    %c0_378 = arith.constant 0 : index
    %415 = vector.load %arg8[%c2_376, %c0_377, %c0_378] : memref<16x64x128xbf16, #tpu.memory_space<vmem>>, vector<1x64x128xbf16>
    %416 = vector.shape_cast %415 : vector<1x64x128xbf16> to vector<64x128xbf16>
    %cst_379 = arith.constant dense<0.000000e+00> : vector<1x128xf32>
    %417 = tpu.matmul %414, %416, %cst_379 {dimension_numbers = #tpu.dot_dimension_numbers<[1], [0], [0], [1], [0, 0, 1, 1], [], []>} : vector<1x64xbf16>, vector<64x128xbf16>, vector<1x128xf32> -> vector<1x128xf32>
    %418 = arith.addf %412, %417 : vector<1x128xf32>
    %419 = vector.extract_strided_slice %401 {offsets = [3, 0], sizes = [1, 64], strides = [1, 1]} : vector<16x64xf32> to vector<1x64xf32>
    %420 = arith.truncf %419 : vector<1x64xf32> to vector<1x64xbf16>
    %c3_380 = arith.constant 3 : index
    %c0_381 = arith.constant 0 : index
    %c0_382 = arith.constant 0 : index
    %421 = vector.load %arg8[%c3_380, %c0_381, %c0_382] : memref<16x64x128xbf16, #tpu.memory_space<vmem>>, vector<1x64x128xbf16>
    %422 = vector.shape_cast %421 : vector<1x64x128xbf16> to vector<64x128xbf16>
    %cst_383 = arith.constant dense<0.000000e+00> : vector<1x128xf32>
    %423 = tpu.matmul %420, %422, %cst_383 {dimension_numbers = #tpu.dot_dimension_numbers<[1], [0], [0], [1], [0, 0, 1, 1], [], []>} : vector<1x64xbf16>, vector<64x128xbf16>, vector<1x128xf32> -> vector<1x128xf32>
    %424 = arith.addf %418, %423 : vector<1x128xf32>
    %425 = vector.extract_strided_slice %401 {offsets = [4, 0], sizes = [1, 64], strides = [1, 1]} : vector<16x64xf32> to vector<1x64xf32>
    %426 = arith.truncf %425 : vector<1x64xf32> to vector<1x64xbf16>
    %c4_384 = arith.constant 4 : index
    %c0_385 = arith.constant 0 : index
    %c0_386 = arith.constant 0 : index
    %427 = vector.load %arg8[%c4_384, %c0_385, %c0_386] : memref<16x64x128xbf16, #tpu.memory_space<vmem>>, vector<1x64x128xbf16>
    %428 = vector.shape_cast %427 : vector<1x64x128xbf16> to vector<64x128xbf16>
    %cst_387 = arith.constant dense<0.000000e+00> : vector<1x128xf32>
    %429 = tpu.matmul %426, %428, %cst_387 {dimension_numbers = #tpu.dot_dimension_numbers<[1], [0], [0], [1], [0, 0, 1, 1], [], []>} : vector<1x64xbf16>, vector<64x128xbf16>, vector<1x128xf32> -> vector<1x128xf32>
    %430 = arith.addf %424, %429 : vector<1x128xf32>
    %431 = vector.extract_strided_slice %401 {offsets = [5, 0], sizes = [1, 64], strides = [1, 1]} : vector<16x64xf32> to vector<1x64xf32>
    %432 = arith.truncf %431 : vector<1x64xf32> to vector<1x64xbf16>
    %c5_388 = arith.constant 5 : index
    %c0_389 = arith.constant 0 : index
    %c0_390 = arith.constant 0 : index
    %433 = vector.load %arg8[%c5_388, %c0_389, %c0_390] : memref<16x64x128xbf16, #tpu.memory_space<vmem>>, vector<1x64x128xbf16>
    %434 = vector.shape_cast %433 : vector<1x64x128xbf16> to vector<64x128xbf16>
    %cst_391 = arith.constant dense<0.000000e+00> : vector<1x128xf32>
    %435 = tpu.matmul %432, %434, %cst_391 {dimension_numbers = #tpu.dot_dimension_numbers<[1], [0], [0], [1], [0, 0, 1, 1], [], []>} : vector<1x64xbf16>, vector<64x128xbf16>, vector<1x128xf32> -> vector<1x128xf32>
    %436 = arith.addf %430, %435 : vector<1x128xf32>
    %437 = vector.extract_strided_slice %401 {offsets = [6, 0], sizes = [1, 64], strides = [1, 1]} : vector<16x64xf32> to vector<1x64xf32>
    %438 = arith.truncf %437 : vector<1x64xf32> to vector<1x64xbf16>
    %c6_392 = arith.constant 6 : index
    %c0_393 = arith.constant 0 : index
    %c0_394 = arith.constant 0 : index
    %439 = vector.load %arg8[%c6_392, %c0_393, %c0_394] : memref<16x64x128xbf16, #tpu.memory_space<vmem>>, vector<1x64x128xbf16>
    %440 = vector.shape_cast %439 : vector<1x64x128xbf16> to vector<64x128xbf16>
    %cst_395 = arith.constant dense<0.000000e+00> : vector<1x128xf32>
    %441 = tpu.matmul %438, %440, %cst_395 {dimension_numbers = #tpu.dot_dimension_numbers<[1], [0], [0], [1], [0, 0, 1, 1], [], []>} : vector<1x64xbf16>, vector<64x128xbf16>, vector<1x128xf32> -> vector<1x128xf32>
    %442 = arith.addf %436, %441 : vector<1x128xf32>
    %443 = vector.extract_strided_slice %401 {offsets = [7, 0], sizes = [1, 64], strides = [1, 1]} : vector<16x64xf32> to vector<1x64xf32>
    %444 = arith.truncf %443 : vector<1x64xf32> to vector<1x64xbf16>
    %c7_396 = arith.constant 7 : index
    %c0_397 = arith.constant 0 : index
    %c0_398 = arith.constant 0 : index
    %445 = vector.load %arg8[%c7_396, %c0_397, %c0_398] : memref<16x64x128xbf16, #tpu.memory_space<vmem>>, vector<1x64x128xbf16>
    %446 = vector.shape_cast %445 : vector<1x64x128xbf16> to vector<64x128xbf16>
    %cst_399 = arith.constant dense<0.000000e+00> : vector<1x128xf32>
    %447 = tpu.matmul %444, %446, %cst_399 {dimension_numbers = #tpu.dot_dimension_numbers<[1], [0], [0], [1], [0, 0, 1, 1], [], []>} : vector<1x64xbf16>, vector<64x128xbf16>, vector<1x128xf32> -> vector<1x128xf32>
    %448 = arith.addf %442, %447 : vector<1x128xf32>
    %449 = vector.extract_strided_slice %401 {offsets = [8, 0], sizes = [1, 64], strides = [1, 1]} : vector<16x64xf32> to vector<1x64xf32>
    %450 = arith.truncf %449 : vector<1x64xf32> to vector<1x64xbf16>
    %c8_400 = arith.constant 8 : index
    %c0_401 = arith.constant 0 : index
    %c0_402 = arith.constant 0 : index
    %451 = vector.load %arg8[%c8_400, %c0_401, %c0_402] : memref<16x64x128xbf16, #tpu.memory_space<vmem>>, vector<1x64x128xbf16>
    %452 = vector.shape_cast %451 : vector<1x64x128xbf16> to vector<64x128xbf16>
    %cst_403 = arith.constant dense<0.000000e+00> : vector<1x128xf32>
    %453 = tpu.matmul %450, %452, %cst_403 {dimension_numbers = #tpu.dot_dimension_numbers<[1], [0], [0], [1], [0, 0, 1, 1], [], []>} : vector<1x64xbf16>, vector<64x128xbf16>, vector<1x128xf32> -> vector<1x128xf32>
    %454 = arith.addf %448, %453 : vector<1x128xf32>
    %455 = vector.extract_strided_slice %401 {offsets = [9, 0], sizes = [1, 64], strides = [1, 1]} : vector<16x64xf32> to vector<1x64xf32>
    %456 = arith.truncf %455 : vector<1x64xf32> to vector<1x64xbf16>
    %c9_404 = arith.constant 9 : index
    %c0_405 = arith.constant 0 : index
    %c0_406 = arith.constant 0 : index
    %457 = vector.load %arg8[%c9_404, %c0_405, %c0_406] : memref<16x64x128xbf16, #tpu.memory_space<vmem>>, vector<1x64x128xbf16>
    %458 = vector.shape_cast %457 : vector<1x64x128xbf16> to vector<64x128xbf16>
    %cst_407 = arith.constant dense<0.000000e+00> : vector<1x128xf32>
    %459 = tpu.matmul %456, %458, %cst_407 {dimension_numbers = #tpu.dot_dimension_numbers<[1], [0], [0], [1], [0, 0, 1, 1], [], []>} : vector<1x64xbf16>, vector<64x128xbf16>, vector<1x128xf32> -> vector<1x128xf32>
    %460 = arith.addf %454, %459 : vector<1x128xf32>
    %461 = vector.extract_strided_slice %401 {offsets = [10, 0], sizes = [1, 64], strides = [1, 1]} : vector<16x64xf32> to vector<1x64xf32>
    %462 = arith.truncf %461 : vector<1x64xf32> to vector<1x64xbf16>
    %c10_408 = arith.constant 10 : index
    %c0_409 = arith.constant 0 : index
    %c0_410 = arith.constant 0 : index
    %463 = vector.load %arg8[%c10_408, %c0_409, %c0_410] : memref<16x64x128xbf16, #tpu.memory_space<vmem>>, vector<1x64x128xbf16>
    %464 = vector.shape_cast %463 : vector<1x64x128xbf16> to vector<64x128xbf16>
    %cst_411 = arith.constant dense<0.000000e+00> : vector<1x128xf32>
    %465 = tpu.matmul %462, %464, %cst_411 {dimension_numbers = #tpu.dot_dimension_numbers<[1], [0], [0], [1], [0, 0, 1, 1], [], []>} : vector<1x64xbf16>, vector<64x128xbf16>, vector<1x128xf32> -> vector<1x128xf32>
    %466 = arith.addf %460, %465 : vector<1x128xf32>
    %467 = vector.extract_strided_slice %401 {offsets = [11, 0], sizes = [1, 64], strides = [1, 1]} : vector<16x64xf32> to vector<1x64xf32>
    %468 = arith.truncf %467 : vector<1x64xf32> to vector<1x64xbf16>
    %c11_412 = arith.constant 11 : index
    %c0_413 = arith.constant 0 : index
    %c0_414 = arith.constant 0 : index
    %469 = vector.load %arg8[%c11_412, %c0_413, %c0_414] : memref<16x64x128xbf16, #tpu.memory_space<vmem>>, vector<1x64x128xbf16>
    %470 = vector.shape_cast %469 : vector<1x64x128xbf16> to vector<64x128xbf16>
    %cst_415 = arith.constant dense<0.000000e+00> : vector<1x128xf32>
    %471 = tpu.matmul %468, %470, %cst_415 {dimension_numbers = #tpu.dot_dimension_numbers<[1], [0], [0], [1], [0, 0, 1, 1], [], []>} : vector<1x64xbf16>, vector<64x128xbf16>, vector<1x128xf32> -> vector<1x128xf32>
    %472 = arith.addf %466, %471 : vector<1x128xf32>
    %473 = vector.extract_strided_slice %401 {offsets = [12, 0], sizes = [1, 64], strides = [1, 1]} : vector<16x64xf32> to vector<1x64xf32>
    %474 = arith.truncf %473 : vector<1x64xf32> to vector<1x64xbf16>
    %c12_416 = arith.constant 12 : index
    %c0_417 = arith.constant 0 : index
    %c0_418 = arith.constant 0 : index
    %475 = vector.load %arg8[%c12_416, %c0_417, %c0_418] : memref<16x64x128xbf16, #tpu.memory_space<vmem>>, vector<1x64x128xbf16>
    %476 = vector.shape_cast %475 : vector<1x64x128xbf16> to vector<64x128xbf16>
    %cst_419 = arith.constant dense<0.000000e+00> : vector<1x128xf32>
    %477 = tpu.matmul %474, %476, %cst_419 {dimension_numbers = #tpu.dot_dimension_numbers<[1], [0], [0], [1], [0, 0, 1, 1], [], []>} : vector<1x64xbf16>, vector<64x128xbf16>, vector<1x128xf32> -> vector<1x128xf32>
    %478 = arith.addf %472, %477 : vector<1x128xf32>
    %479 = vector.extract_strided_slice %401 {offsets = [13, 0], sizes = [1, 64], strides = [1, 1]} : vector<16x64xf32> to vector<1x64xf32>
    %480 = arith.truncf %479 : vector<1x64xf32> to vector<1x64xbf16>
    %c13_420 = arith.constant 13 : index
    %c0_421 = arith.constant 0 : index
    %c0_422 = arith.constant 0 : index
    %481 = vector.load %arg8[%c13_420, %c0_421, %c0_422] : memref<16x64x128xbf16, #tpu.memory_space<vmem>>, vector<1x64x128xbf16>
    %482 = vector.shape_cast %481 : vector<1x64x128xbf16> to vector<64x128xbf16>
    %cst_423 = arith.constant dense<0.000000e+00> : vector<1x128xf32>
    %483 = tpu.matmul %480, %482, %cst_423 {dimension_numbers = #tpu.dot_dimension_numbers<[1], [0], [0], [1], [0, 0, 1, 1], [], []>} : vector<1x64xbf16>, vector<64x128xbf16>, vector<1x128xf32> -> vector<1x128xf32>
    %484 = arith.addf %478, %483 : vector<1x128xf32>
    %485 = vector.extract_strided_slice %401 {offsets = [14, 0], sizes = [1, 64], strides = [1, 1]} : vector<16x64xf32> to vector<1x64xf32>
    %486 = arith.truncf %485 : vector<1x64xf32> to vector<1x64xbf16>
    %c14_424 = arith.constant 14 : index
    %c0_425 = arith.constant 0 : index
    %c0_426 = arith.constant 0 : index
    %487 = vector.load %arg8[%c14_424, %c0_425, %c0_426] : memref<16x64x128xbf16, #tpu.memory_space<vmem>>, vector<1x64x128xbf16>
    %488 = vector.shape_cast %487 : vector<1x64x128xbf16> to vector<64x128xbf16>
    %cst_427 = arith.constant dense<0.000000e+00> : vector<1x128xf32>
    %489 = tpu.matmul %486, %488, %cst_427 {dimension_numbers = #tpu.dot_dimension_numbers<[1], [0], [0], [1], [0, 0, 1, 1], [], []>} : vector<1x64xbf16>, vector<64x128xbf16>, vector<1x128xf32> -> vector<1x128xf32>
    %490 = arith.addf %484, %489 : vector<1x128xf32>
    %491 = vector.extract_strided_slice %401 {offsets = [15, 0], sizes = [1, 64], strides = [1, 1]} : vector<16x64xf32> to vector<1x64xf32>
    %492 = arith.truncf %491 : vector<1x64xf32> to vector<1x64xbf16>
    %c15_428 = arith.constant 15 : index
    %c0_429 = arith.constant 0 : index
    %c0_430 = arith.constant 0 : index
    %493 = vector.load %arg8[%c15_428, %c0_429, %c0_430] : memref<16x64x128xbf16, #tpu.memory_space<vmem>>, vector<1x64x128xbf16>
    %494 = vector.shape_cast %493 : vector<1x64x128xbf16> to vector<64x128xbf16>
    %cst_431 = arith.constant dense<0.000000e+00> : vector<1x128xf32>
    %495 = tpu.matmul %492, %494, %cst_431 {dimension_numbers = #tpu.dot_dimension_numbers<[1], [0], [0], [1], [0, 0, 1, 1], [], []>} : vector<1x64xbf16>, vector<64x128xbf16>, vector<1x128xf32> -> vector<1x128xf32>
    %496 = arith.addf %490, %495 : vector<1x128xf32>
    %c0_432 = arith.constant 0 : index
    %c0_433 = arith.constant 0 : index
    %497 = vector.load %arg9[%c0_432, %c0_433] : memref<1x128xf32, #tpu.memory_space<vmem>>, vector<1x128xf32>
    %498 = arith.addf %496, %497 : vector<1x128xf32>
    %499 = vector.shape_cast %498 : vector<1x128xf32> to vector<1x128xf32>
    %500 = vector.broadcast %499 : vector<1x128xf32> to vector<8x128xf32>
    %c0_434 = arith.constant 0 : index
    %c0_435 = arith.constant 0 : index
    %c0_436 = arith.constant 0 : index
    %501 = vector.load %arg10[%c0_434, %c0_435, %c0_436] : memref<1x8x128xf32, #tpu.memory_space<vmem>>, vector<1x8x128xf32>
    %502 = vector.shape_cast %501 : vector<1x8x128xf32> to vector<8x128xf32>
    %503 = vector.shape_cast %500 : vector<8x128xf32> to vector<1x8x128xf32>
    tpu.vector_store %arg10[%c0_434, %c0_435, %c0_436], %503 {strides = array<i32>} : memref<1x8x128xf32, #tpu.memory_space<vmem>>, vector<1x8x128xf32>,
    return
  }
  func.func @transform_0(%arg0: i32) -> (i32, i32, i32) {
    %c0_i32 = arith.constant 0 : i32
    %c0_i32_0 = arith.constant 0 : i32
    %c0_i32_1 = arith.constant 0 : i32
    return %arg0, %c0_i32, %c0_i32_0 : i32, i32, i32
  }
  func.func @transform_1(%arg0: i32) -> (i32, i32) {
    %c0_i32 = arith.constant 0 : i32
    %c0_i32_0 = arith.constant 0 : i32
    %c0_i32_1 = arith.constant 0 : i32
    return %c0_i32, %c0_i32_0 : i32, i32
  }
  func.func @transform_2(%arg0: i32) -> (i32, i32) {
    %c0_i32 = arith.constant 0 : i32
    %c0_i32_0 = arith.constant 0 : i32
    %c0_i32_1 = arith.constant 0 : i32
    return %c0_i32, %c0_i32_0 : i32, i32
  }
  func.func @transform_3(%arg0: i32) -> (i32, i32, i32) {
    %c0_i32 = arith.constant 0 : i32
    %c0_i32_0 = arith.constant 0 : i32
    %c0_i32_1 = arith.constant 0 : i32
    %c0_i32_2 = arith.constant 0 : i32
    return %c0_i32, %c0_i32_0, %c0_i32_1 : i32, i32, i32
  }
  func.func @transform_4(%arg0: i32) -> (i32, i32) {
    %c0_i32 = arith.constant 0 : i32
    %c0_i32_0 = arith.constant 0 : i32
    %c0_i32_1 = arith.constant 0 : i32
    return %c0_i32, %c0_i32_0 : i32, i32
  }
  func.func @transform_5(%arg0: i32) -> (i32, i32, i32) {
    %c0_i32 = arith.constant 0 : i32
    %c0_i32_0 = arith.constant 0 : i32
    %c0_i32_1 = arith.constant 0 : i32
    %c0_i32_2 = arith.constant 0 : i32
    return %c0_i32, %c0_i32_0, %c0_i32_1 : i32, i32, i32
  }
  func.func @transform_6(%arg0: i32) -> (i32, i32) {
    %c0_i32 = arith.constant 0 : i32
    %c0_i32_0 = arith.constant 0 : i32
    %c0_i32_1 = arith.constant 0 : i32
    return %c0_i32, %c0_i32_0 : i32, i32
  }
  func.func @transform_7(%arg0: i32) -> (i32, i32, i32) {
    %c0_i32 = arith.constant 0 : i32
    %c0_i32_0 = arith.constant 0 : i32
    %c0_i32_1 = arith.constant 0 : i32
    %c0_i32_2 = arith.constant 0 : i32
    return %c0_i32, %c0_i32_0, %c0_i32_1 : i32, i32, i32
  }
  func.func @transform_8(%arg0: i32) -> (i32, i32) {
    %c0_i32 = arith.constant 0 : i32
    %c0_i32_0 = arith.constant 0 : i32
    %c0_i32_1 = arith.constant 0 : i32
    return %c0_i32, %c0_i32_0 : i32, i32
  }
  func.func @transform_9(%arg0: i32) -> (i32, i32, i32) {
    %c0_i32 = arith.constant 0 : i32
    %c0_i32_0 = arith.constant 0 : i32
    %c0_i32_1 = arith.constant 0 : i32
    return %arg0, %c0_i32, %c0_i32_0 : i32, i32, i32
  }
}

</mosaic_0001>

<llo_original>
// kernel: net_forward.1
$region0: #{net_forward.1}
  #allocation0 [shape = 'u32[]', space=smem, size = 0x4, offset = 0x4, fixed_abs, tag = 'smem constant byte address 0x4 - core index']
  #allocation1 [shape = 'u32[72,128]{1,0:T(1,128)}', space=vmem, size = 0x9000, scoped, tag = 'internal scratch']
  #allocation2 [shape = 'f32[20,24,32]{2,1,0:T(8,128)}', space=vmem, size = 0x3c000, scoped, tag = 'scratch operand']
  #allocation3 [shape = 'f32[12,16,32]{2,1,0:T(8,128)}', space=vmem, size = 0x18000, scoped, tag = 'scratch operand']
  #allocation4 [shape = 'f32[512,32]{1,0:T(8,128)}', space=vmem, size = 0x40000, scoped, tag = 'scratch operand']
  #allocation5 [shape = 'f32[128,32]{1,0:T(8,128)}', space=vmem, size = 0x10000, scoped, tag = 'scratch operand']
  #allocation6 [shape = 'f32[32,64]{1,0:T(8,128)}', space=vmem, size = 0x4000, scoped, tag = 'scratch operand']
  %s0 = inlined_call_operand.vmem [shape: bf16[2,1024,128], index: 0, kind: input, shape index: {}]
  %s1 = inlined_call_operand.vmem [shape: bf16[128,32], index: 1, kind: input, shape index: {}]
  %s2 = inlined_call_operand.vmem [shape: f32[1,32], index: 2, kind: input, shape index: {}]
  %s3 = inlined_call_operand.vmem [shape: bf16[25,32,32], index: 3, kind: input, shape index: {}]
  %s4 = inlined_call_operand.vmem [shape: f32[1,32], index: 4, kind: input, shape index: {}]
  %s5 = inlined_call_operand.vmem [shape: bf16[25,32,64], index: 5, kind: input, shape index: {}]
  %s6 = inlined_call_operand.vmem [shape: f32[1,64], index: 6, kind: input, shape index: {}]
  %s7 = inlined_call_operand.vmem [shape: bf16[16,64,128], index: 7, kind: input, shape index: {}]
  %s8 = inlined_call_operand.vmem [shape: f32[1,128], index: 8, kind: input, shape index: {}]
  %s9 = inlined_call_operand.vmem [shape: f32[2,8,128], index: 9, kind: output, shape index: {}]
  %s10 = sld [smem:[#allocation0]]
  $region69: #{net_forward.1} parent=0
    _
  %s12 = ssub.s32 1, %s10
  %s13 = scalar_select 0, %s12, %s10
  loop: start=0, step=1, limit=4
  $region2: #{net_forward.1} parent=0 // loop_pre_header
    _
  $region3: #{net_forward.1} parent=0 // loop_header
    %s15 = sphi 0, %s19
    %p16 = scmp.ge.s32.totalorder %s15, 4
    %s25 = sphi 0, %s27
    %s28 = sphi 0, %s25
    %s29 = sphi 0, %s28
    %s45 = sphi 0, %s29
    %s49 = sphi 0, %s49
    %s51 = sphi 0, %s49
    %s52 = sphi 0, %s51
    %s66 = sphi 0, %s52
    %s70 = sphi 0, %s70
    %s72 = sphi 0, %s70
    %s73 = sphi 0, %s72
    %s87 = sphi 0, %s73
    %s91 = sphi 0, %s91
    %s93 = sphi 0, %s91
    %s94 = sphi 0, %s93
    %s108 = sphi 0, %s94
    %s112 = sphi 0, %s112
    %s114 = sphi 0, %s112
    %s115 = sphi 0, %s114
    %s129 = sphi 0, %s115
    %s133 = sphi 0, %s133
    %s135 = sphi 0, %s133
    %s136 = sphi 0, %s135
    %s150 = sphi 0, %s136
    %s154 = sphi 0, %s154
    %s156 = sphi 0, %s154
    %s157 = sphi 0, %s156
    %s171 = sphi 0, %s157
    %s175 = sphi 0, %s175
    %s177 = sphi 0, %s175
    %s178 = sphi 0, %s177
    %s192 = sphi 0, %s178
    %s196 = sphi 0, %s196
    %s198 = sphi 0, %s196
    %s199 = sphi 0, %s198
    %s213 = sphi 0, %s199
    %s219 = sphi 0, %s221
    %s222 = sphi 0, %s219
    %s223 = sphi 0, %s222
    %s239 = sphi 0, %s223
  $region4: #{net_forward.1} parent=0 // loop_header_branch
    %18 = sbr.rel (%p16) target = $region8
  $region5: #{net_forward.1} parent=0 // loop_body
    %s20 = ssub.s32 %s15, 1
    %s21 = ssub.s32 %s15, 2
    %s22 = sadd.s32 %s15, 1
    %s23 = ssub.s32 %s15, %s22
    %p24 = scmp.eq.s32.totalorder %s23, 0
    %s26 = sadd.s32 %s25, 1
    %s27 = scalar_select %p24, %s25, %s26
    %p30 = pneg %p24
    %p31 = scmp.eq.s32.totalorder %s15, 1
    %p32 = por %p30, %p31
    %p33 = scmp.ne.s32.totalorder %s25, %s28
    %p34 = scmp.eq.s32.totalorder %s15, 0
    %p35 = por %p33, %p34
    %p36 = scmp.ne.s32.totalorder %s25, %s28
    %p37 = scmp.eq.s32.totalorder %s20, 1
    %p38 = por %p36, %p37
    %p39 = scmp.ne.s32.totalorder %s28, %s29
    %p40 = scmp.eq.s32.totalorder %s20, 0
    %p41 = por %p39, %p40
    %p42 = scmp.ne.s32.totalorder %s28, %s29
    %p43 = scmp.eq.s32.totalorder %s21, 1
    %p44 = por %p42, %p43
    %p46 = scmp.ne.s32.totalorder %s29, %s45
    %p47 = scmp.eq.s32.totalorder %s21, 0
    %p48 = por %p46, %p47
    %s50 = sadd.s32 %s49, 1
    %p53 = scmp.eq.s32.totalorder %s15, 1
    %p54 = scmp.ne.s32.totalorder %s49, %s51
    %p55 = scmp.eq.s32.totalorder %s15, 0
    %p56 = por %p54, %p55
    %p57 = scmp.ne.s32.totalorder %s49, %s51
    %p58 = scmp.eq.s32.totalorder %s20, 1
    %p59 = por %p57, %p58
    %p60 = scmp.ne.s32.totalorder %s51, %s52
    %p61 = scmp.eq.s32.totalorder %s20, 0
    %p62 = por %p60, %p61
    %p63 = scmp.ne.s32.totalorder %s51, %s52
    %p64 = scmp.eq.s32.totalorder %s21, 1
    %p65 = por %p63, %p64
    %p67 = scmp.ne.s32.totalorder %s52, %s66
    %p68 = scmp.eq.s32.totalorder %s21, 0
    %p69 = por %p67, %p68
    %s71 = sadd.s32 %s70, 1
    %p74 = scmp.eq.s32.totalorder %s15, 1
    %p75 = scmp.ne.s32.totalorder %s70, %s72
    %p76 = scmp.eq.s32.totalorder %s15, 0
    %p77 = por %p75, %p76
    %p78 = scmp.ne.s32.totalorder %s70, %s72
    %p79 = scmp.eq.s32.totalorder %s20, 1
    %p80 = por %p78, %p79
    %p81 = scmp.ne.s32.totalorder %s72, %s73
    %p82 = scmp.eq.s32.totalorder %s20, 0
    %p83 = por %p81, %p82
    %p84 = scmp.ne.s32.totalorder %s72, %s73
    %p85 = scmp.eq.s32.totalorder %s21, 1
    %p86 = por %p84, %p85
    %p88 = scmp.ne.s32.totalorder %s73, %s87
    %p89 = scmp.eq.s32.totalorder %s21, 0
    %p90 = por %p88, %p89
    %s92 = sadd.s32 %s91, 1
    %p95 = scmp.eq.s32.totalorder %s15, 1
    %p96 = scmp.ne.s32.totalorder %s91, %s93
    %p97 = scmp.eq.s32.totalorder %s15, 0
    %p98 = por %p96, %p97
    %p99 = scmp.ne.s32.totalorder %s91, %s93
    %p100 = scmp.eq.s32.totalorder %s20, 1
    %p101 = por %p99, %p100
    %p102 = scmp.ne.s32.totalorder %s93, %s94
    %p103 = scmp.eq.s32.totalorder %s20, 0
    %p104 = por %p102, %p103
    %p105 = scmp.ne.s32.totalorder %s93, %s94
    %p106 = scmp.eq.s32.totalorder %s21, 1
    %p107 = por %p105, %p106
    %p109 = scmp.ne.s32.totalorder %s94, %s108
    %p110 = scmp.eq.s32.totalorder %s21, 0
    %p111 = por %p109, %p110
    %s113 = sadd.s32 %s112, 1
    %p116 = scmp.eq.s32.totalorder %s15, 1
    %p117 = scmp.ne.s32.totalorder %s112, %s114
    %p118 = scmp.eq.s32.totalorder %s15, 0
    %p119 = por %p117, %p118
    %p120 = scmp.ne.s32.totalorder %s112, %s114
    %p121 = scmp.eq.s32.totalorder %s20, 1
    %p122 = por %p120, %p121
    %p123 = scmp.ne.s32.totalorder %s114, %s115
    %p124 = scmp.eq.s32.totalorder %s20, 0
    %p125 = por %p123, %p124
    %p126 = scmp.ne.s32.totalorder %s114, %s115
    %p127 = scmp.eq.s32.totalorder %s21, 1
    %p128 = por %p126, %p127
    %p130 = scmp.ne.s32.totalorder %s115, %s129
    %p131 = scmp.eq.s32.totalorder %s21, 0
    %p132 = por %p130, %p131
    %s134 = sadd.s32 %s133, 1
    %p137 = scmp.eq.s32.totalorder %s15, 1
    %p138 = scmp.ne.s32.totalorder %s133, %s135
    %p139 = scmp.eq.s32.totalorder %s15, 0
    %p140 = por %p138, %p139
    %p141 = scmp.ne.s32.totalorder %s133, %s135
    %p142 = scmp.eq.s32.totalorder %s20, 1
    %p143 = por %p141, %p142
    %p144 = scmp.ne.s32.totalorder %s135, %s136
    %p145 = scmp.eq.s32.totalorder %s20, 0
    %p146 = por %p144, %p145
    %p147 = scmp.ne.s32.totalorder %s135, %s136
    %p148 = scmp.eq.s32.totalorder %s21, 1
    %p149 = por %p147, %p148
    %p151 = scmp.ne.s32.totalorder %s136, %s150
    %p152 = scmp.eq.s32.totalorder %s21, 0
    %p153 = por %p151, %p152
    %s155 = sadd.s32 %s154, 1
    %p158 = scmp.eq.s32.totalorder %s15, 1
    %p159 = scmp.ne.s32.totalorder %s154, %s156
    %p160 = scmp.eq.s32.totalorder %s15, 0
    %p161 = por %p159, %p160
    %p162 = scmp.ne.s32.totalorder %s154, %s156
    %p163 = scmp.eq.s32.totalorder %s20, 1
    %p164 = por %p162, %p163
    %p165 = scmp.ne.s32.totalorder %s156, %s157
    %p166 = scmp.eq.s32.totalorder %s20, 0
    %p167 = por %p165, %p166
    %p168 = scmp.ne.s32.totalorder %s156, %s157
    %p169 = scmp.eq.s32.totalorder %s21, 1
    %p170 = por %p168, %p169
    %p172 = scmp.ne.s32.totalorder %s157, %s171
    %p173 = scmp.eq.s32.totalorder %s21, 0
    %p174 = por %p172, %p173
    %s176 = sadd.s32 %s175, 1
    %p179 = scmp.eq.s32.totalorder %s15, 1
    %p180 = scmp.ne.s32.totalorder %s175, %s177
    %p181 = scmp.eq.s32.totalorder %s15, 0
    %p182 = por %p180, %p181
    %p183 = scmp.ne.s32.totalorder %s175, %s177
    %p184 = scmp.eq.s32.totalorder %s20, 1
    %p185 = por %p183, %p184
    %p186 = scmp.ne.s32.totalorder %s177, %s178
    %p187 = scmp.eq.s32.totalorder %s20, 0
    %p188 = por %p186, %p187
    %p189 = scmp.ne.s32.totalorder %s177, %s178
    %p190 = scmp.eq.s32.totalorder %s21, 1
    %p191 = por %p189, %p190
    %p193 = scmp.ne.s32.totalorder %s178, %s192
    %p194 = scmp.eq.s32.totalorder %s21, 0
    %p195 = por %p193, %p194
    %s197 = sadd.s32 %s196, 1
    %p200 = scmp.eq.s32.totalorder %s15, 1
    %p201 = scmp.ne.s32.totalorder %s196, %s198
    %p202 = scmp.eq.s32.totalorder %s15, 0
    %p203 = por %p201, %p202
    %p204 = scmp.ne.s32.totalorder %s196, %s198
    %p205 = scmp.eq.s32.totalorder %s20, 1
    %p206 = por %p204, %p205
    %p207 = scmp.ne.s32.totalorder %s198, %s199
    %p208 = scmp.eq.s32.totalorder %s20, 0
    %p209 = por %p207, %p208
    %p210 = scmp.ne.s32.totalorder %s198, %s199
    %p211 = scmp.eq.s32.totalorder %s21, 1
    %p212 = por %p210, %p211
    %p214 = scmp.ne.s32.totalorder %s199, %s213
    %p215 = scmp.eq.s32.totalorder %s21, 0
    %p216 = por %p214, %p215
    %s217 = ssub.s32 %s15, %s22
    %p218 = scmp.eq.s32.totalorder %s217, 0
    %s220 = sadd.s32 %s219, 1
    %s221 = scalar_select %p218, %s219, %s220
    %p224 = pneg %p218
    %p225 = scmp.eq.s32.totalorder %s15, 1
    %p226 = por %p224, %p225
    %p227 = scmp.ne.s32.totalorder %s219, %s222
    %p228 = scmp.eq.s32.totalorder %s15, 0
    %p229 = por %p227, %p228
    %p230 = scmp.ne.s32.totalorder %s219, %s222
    %p231 = scmp.eq.s32.totalorder %s20, 1
    %p232 = por %p230, %p231
    %p233 = scmp.ne.s32.totalorder %s222, %s223
    %p234 = scmp.eq.s32.totalorder %s20, 0
    %p235 = por %p233, %p234
    %p236 = scmp.ne.s32.totalorder %s222, %s223
    %p237 = scmp.eq.s32.totalorder %s21, 1
    %p238 = por %p236, %p237
    %p240 = scmp.ne.s32.totalorder %s223, %s239
    %p241 = scmp.eq.s32.totalorder %s21, 0
    %p242 = por %p240, %p241
    %p243 = scmp.le.s32.totalorder 1, %s15
    %p244 = scmp.lt.s32.totalorder %s15, 3
    %p245 = pnand %p243, %p244
    %p246 = pneg %p245
    // Predicated region
    $region9: #{net_forward.1} parent=5 // pred_check
      _
    $region10: #{net_forward.1} parent=5 // pred_check_branch
      %248 = sbr.rel (%p245) target = $region12
    $region11: #{net_forward.1} parent=5 // pred_region
      %s249 = ssub.s32 %s15, 1
      // Predicated region
      $region13: #{net_forward.1} parent=11 // pred_check
        %p250 = pneg %p62
      $region14: #{net_forward.1} parent=11 // pred_check_branch
        %252 = sbr.rel (%p250) target = $region16
      $region15: #{net_forward.1} parent=11 // pred_region
        _
      $region16: #{net_forward.1} parent=11 // pred_fallthru
        _
      // Predicated region
      $region17: #{net_forward.1} parent=11 // pred_check
        %p253 = pneg %p83
      $region18: #{net_forward.1} parent=11 // pred_check_branch
        %255 = sbr.rel (%p253) target = $region20
      $region19: #{net_forward.1} parent=11 // pred_region
        _
      $region20: #{net_forward.1} parent=11 // pred_fallthru
        _
      // Predicated region
      $region21: #{net_forward.1} parent=11 // pred_check
        %p256 = pneg %p104
      $region22: #{net_forward.1} parent=11 // pred_check_branch
        %258 = sbr.rel (%p256) target = $region24
      $region23: #{net_forward.1} parent=11 // pred_region
        _
      $region24: #{net_forward.1} parent=11 // pred_fallthru
        _
      // Predicated region
      $region25: #{net_forward.1} parent=11 // pred_check
        %p259 = pneg %p125
      $region26: #{net_forward.1} parent=11 // pred_check_branch
        %261 = sbr.rel (%p259) target = $region28
      $region27: #{net_forward.1} parent=11 // pred_region
        _
      $region28: #{net_forward.1} parent=11 // pred_fallthru
        _
      // Predicated region
      $region29: #{net_forward.1} parent=11 // pred_check
        %p262 = pneg %p146
      $region30: #{net_forward.1} parent=11 // pred_check_branch
        %264 = sbr.rel (%p262) target = $region32
      $region31: #{net_forward.1} parent=11 // pred_region
        _
      $region32: #{net_forward.1} parent=11 // pred_fallthru
        _
      // Predicated region
      $region33: #{net_forward.1} parent=11 // pred_check
        %p265 = pneg %p167
      $region34: #{net_forward.1} parent=11 // pred_check_branch
        %267 = sbr.rel (%p265) target = $region36
      $region35: #{net_forward.1} parent=11 // pred_region
        _
      $region36: #{net_forward.1} parent=11 // pred_fallthru
        _
      // Predicated region
      $region37: #{net_forward.1} parent=11 // pred_check
        %p268 = pneg %p188
      $region38: #{net_forward.1} parent=11 // pred_check_branch
        %270 = sbr.rel (%p268) target = $region40
      $region39: #{net_forward.1} parent=11 // pred_region
        _
      $region40: #{net_forward.1} parent=11 // pred_fallthru
        _
      // Predicated region
      $region41: #{net_forward.1} parent=11 // pred_check
        %p271 = pneg %p209
      $region42: #{net_forward.1} parent=11 // pred_check_branch
        %273 = sbr.rel (%p271) target = $region44
      $region43: #{net_forward.1} parent=11 // pred_region
        _
      $region44: #{net_forward.1} parent=11 // pred_fallthru
        _
    $region12: #{net_forward.1} parent=5 // pred_fallthru
      _
    %p274 = scmp.lt.s32.totalorder %s15, 2
    // Predicated region
    $region45: #{net_forward.1} parent=5 // pred_check
      %p275 = pneg %p274
    $region46: #{net_forward.1} parent=5 // pred_check_branch
      %277 = sbr.rel (%p275) target = $region48
    $region47: #{net_forward.1} parent=5 // pred_region
      // Predicated region
      $region49: #{net_forward.1} parent=47 // pred_check
        %p278 = pneg %p35
      $region50: #{net_forward.1} parent=47 // pred_check_branch
        %280 = sbr.rel (%p278) target = $region52
      $region51: #{net_forward.1} parent=47 // pred_region
        %p281 = scmp.lt.s32.totalorder %s15, 1
        %s282 = scalar_select %p281, %s15, 1
        %s283 = smul.addr %s282, 128
        %s284 = smul.addr %s283, 4
        %s285 = scalar_lea.vmem %s0, %s284
      $region52: #{net_forward.1} parent=47 // pred_fallthru
        _
    $region48: #{net_forward.1} parent=5 // pred_fallthru
      _
    %p286 = scmp.le.s32.totalorder 1, %s15
    %p287 = scmp.lt.s32.totalorder %s15, 3
    %p288 = pnand %p286, %p287
    %p289 = pneg %p288
    // Predicated region
    $region53: #{net_forward.1} parent=5 // pred_check
      _
    $region54: #{net_forward.1} parent=5 // pred_check_branch
      %291 = sbr.rel (%p288) target = $region56
    $region55: #{net_forward.1} parent=5 // pred_region
      %s292 = ssub.s32 %s15, 1
      %p293 = scmp.lt.s32.totalorder %s20, 1
      %s294 = scalar_select %p293, %s20, 1
      %s295 = smul.addr %s294, 128
      %s296 = smul.addr %s295, 4
      %s297 = scalar_lea.vmem %s0, %s296
      %p298 = pneg %p41
      %p299 = pneg %p38
      %p300 = pneg %p62
      %p301 = pneg %p59
      %p302 = pneg %p83
      %p303 = pneg %p80
      %p304 = pneg %p104
      %p305 = pneg %p101
      %p306 = pneg %p125
      %p307 = pneg %p122
      %p308 = pneg %p146
      %p309 = pneg %p143
      %p310 = pneg %p167
      %p311 = pneg %p164
      %p312 = pneg %p188
      %p313 = pneg %p185
      %p314 = pneg %p209
      %p315 = pneg %p206
      %p316 = pneg %p235
      %p317 = pneg %p232
      %p318 = scmp.lt.s32.totalorder %s20, 1
      %s319 = scalar_select %p318, %s20, 1
      %s320 = smul.addr %s319, 8
      %s321 = scalar_lea.vmem %s9, %s320
      %p322 = scmp.lt.s32.totalorder %s20, 1
      %s323 = scalar_select %p322, %s20, 1
      %s324 = smul.addr %s323, 128
      %s325 = smul.addr %s324, 4
      %s326 = scalar_lea.vmem %s0, %s325
      %p327 = scmp.lt.s32.totalorder %s20, 1
      %s328 = scalar_select %p327, %s20, 1
      %s329 = smul.addr %s328, 8
      %s330 = scalar_lea.vmem %s9, %s329
      %v332 = vld [vmem:[%s326] sm:$0xf]
      %v333 = vld [vmem:[%s326 + $0x4] sm:$0xf]
      %v334 = vld [vmem:[%s326 + $0x8] sm:$0xf]
      %v335 = vld [vmem:[%s326 + $0xc] sm:$0xf]
      %v336 = vld [vmem:[%s326 + $0x10] sm:$0xf]
      %v337 = vld [vmem:[%s326 + $0x14] sm:$0xf]
      %v338 = vld [vmem:[%s326 + $0x18] sm:$0xf]
      %v339 = vld [vmem:[%s326 + $0x1c] sm:$0xf]
      %v340 = vld [vmem:[%s326 + $0x20] sm:$0xf]
      %v341 = vld [vmem:[%s326 + $0x24] sm:$0xf]
      %v342 = vld [vmem:[%s326 + $0x28] sm:$0xf]
      %v343 = vld [vmem:[%s326 + $0x2c] sm:$0xf]
      %v344 = vld [vmem:[%s326 + $0x30] sm:$0xf]
      %v345 = vld [vmem:[%s326 + $0x34] sm:$0xf]
      %v346 = vld [vmem:[%s326 + $0x38] sm:$0xf]
      %v347 = vld [vmem:[%s326 + $0x3c] sm:$0xf]
      %v348 = vld [vmem:[%s326 + $0x40] sm:$0xf]
      %v349 = vld [vmem:[%s326 + $0x44] sm:$0xf]
      %v350 = vld [vmem:[%s326 + $0x48] sm:$0xf]
      %v351 = vld [vmem:[%s326 + $0x4c] sm:$0xf]
      %v352 = vld [vmem:[%s326 + $0x50] sm:$0xf]
      %v353 = vld [vmem:[%s326 + $0x54] sm:$0xf]
      %v354 = vld [vmem:[%s326 + $0x58] sm:$0xf]
      %v355 = vld [vmem:[%s326 + $0x5c] sm:$0xf]
      %v356 = vld [vmem:[%s326 + $0x60] sm:$0xf]
      %v357 = vld [vmem:[%s326 + $0x64] sm:$0xf]
      %v358 = vld [vmem:[%s326 + $0x68] sm:$0xf]
      %v359 = vld [vmem:[%s326 + $0x6c] sm:$0xf]
      %v360 = vld [vmem:[%s326 + $0x70] sm:$0xf]
      %v361 = vld [vmem:[%s326 + $0x74] sm:$0xf]
      %v362 = vld [vmem:[%s326 + $0x78] sm:$0xf]
      %v363 = vld [vmem:[%s326 + $0x7c] sm:$0xf]
      %v364 = vld [vmem:[%s326 + $0x80] sm:$0xf]
      %v365 = vld [vmem:[%s326 + $0x84] sm:$0xf]
      %v366 = vld [vmem:[%s326 + $0x88] sm:$0xf]
      %v367 = vld [vmem:[%s326 + $0x8c] sm:$0xf]
      %v368 = vld [vmem:[%s326 + $0x90] sm:$0xf]
      %v369 = vld [vmem:[%s326 + $0x94] sm:$0xf]
      %v370 = vld [vmem:[%s326 + $0x98] sm:$0xf]
      %v371 = vld [vmem:[%s326 + $0x9c] sm:$0xf]
      %v372 = vld [vmem:[%s326 + $0xa0] sm:$0xf]
      %v373 = vld [vmem:[%s326 + $0xa4] sm:$0xf]
      %v374 = vld [vmem:[%s326 + $0xa8] sm:$0xf]
      %v375 = vld [vmem:[%s326 + $0xac] sm:$0xf]
      %v376 = vld [vmem:[%s326 + $0xb0] sm:$0xf]
      %v377 = vld [vmem:[%s326 + $0xb4] sm:$0xf]
      %v378 = vld [vmem:[%s326 + $0xb8] sm:$0xf]
      %v379 = vld [vmem:[%s326 + $0xbc] sm:$0xf]
      %v380 = vld [vmem:[%s326 + $0xc0] sm:$0xf]
      %v381 = vld [vmem:[%s326 + $0xc4] sm:$0xf]
      %v382 = vld [vmem:[%s326 + $0xc8] sm:$0xf]
      %v383 = vld [vmem:[%s326 + $0xcc] sm:$0xf]
      %v384 = vld [vmem:[%s326 + $0xd0] sm:$0xf]
      %v385 = vld [vmem:[%s326 + $0xd4] sm:$0xf]
      %v386 = vld [vmem:[%s326 + $0xd8] sm:$0xf]
      %v387 = vld [vmem:[%s326 + $0xdc] sm:$0xf]
      %v388 = vld [vmem:[%s326 + $0xe0] sm:$0xf]
      %v389 = vld [vmem:[%s326 + $0xe4] sm:$0xf]
      %v390 = vld [vmem:[%s326 + $0xe8] sm:$0xf]
      %v391 = vld [vmem:[%s326 + $0xec] sm:$0xf]
      %v392 = vld [vmem:[%s326 + $0xf0] sm:$0xf]
      %v393 = vld [vmem:[%s326 + $0xf4] sm:$0xf]
      %v394 = vld [vmem:[%s326 + $0xf8] sm:$0xf]
      %v395 = vld [vmem:[%s326 + $0xfc] sm:$0xf]
      %v396 = vld [vmem:[%s326 + $0x100] sm:$0xf]
      %v397 = vld [vmem:[%s326 + $0x104] sm:$0xf]
      %v398 = vld [vmem:[%s326 + $0x108] sm:$0xf]
      %v399 = vld [vmem:[%s326 + $0x10c] sm:$0xf]
      %v400 = vld [vmem:[%s326 + $0x110] sm:$0xf]
      %v401 = vld [vmem:[%s326 + $0x114] sm:$0xf]
      %v402 = vld [vmem:[%s326 + $0x118] sm:$0xf]
      %v403 = vld [vmem:[%s326 + $0x11c] sm:$0xf]
      %v404 = vld [vmem:[%s326 + $0x120] sm:$0xf]
      %v405 = vld [vmem:[%s326 + $0x124] sm:$0xf]
      %v406 = vld [vmem:[%s326 + $0x128] sm:$0xf]
      %v407 = vld [vmem:[%s326 + $0x12c] sm:$0xf]
      %v408 = vld [vmem:[%s326 + $0x130] sm:$0xf]
      %v409 = vld [vmem:[%s326 + $0x134] sm:$0xf]
      %v410 = vld [vmem:[%s326 + $0x138] sm:$0xf]
      %v411 = vld [vmem:[%s326 + $0x13c] sm:$0xf]
      %v412 = vld [vmem:[%s326 + $0x140] sm:$0xf]
      %v413 = vld [vmem:[%s326 + $0x144] sm:$0xf]
      %v414 = vld [vmem:[%s326 + $0x148] sm:$0xf]
      %v415 = vld [vmem:[%s326 + $0x14c] sm:$0xf]
      %v416 = vld [vmem:[%s326 + $0x150] sm:$0xf]
      %v417 = vld [vmem:[%s326 + $0x154] sm:$0xf]
      %v418 = vld [vmem:[%s326 + $0x158] sm:$0xf]
      %v419 = vld [vmem:[%s326 + $0x15c] sm:$0xf]
      %v420 = vld [vmem:[%s326 + $0x160] sm:$0xf]
      %v421 = vld [vmem:[%s326 + $0x164] sm:$0xf]
      %v422 = vld [vmem:[%s326 + $0x168] sm:$0xf]
      %v423 = vld [vmem:[%s326 + $0x16c] sm:$0xf]
      %v424 = vld [vmem:[%s326 + $0x170] sm:$0xf]
      %v425 = vld [vmem:[%s326 + $0x174] sm:$0xf]
      %v426 = vld [vmem:[%s326 + $0x178] sm:$0xf]
      %v427 = vld [vmem:[%s326 + $0x17c] sm:$0xf]
      %v428 = vld [vmem:[%s326 + $0x180] sm:$0xf]
      %v429 = vld [vmem:[%s326 + $0x184] sm:$0xf]
      %v430 = vld [vmem:[%s326 + $0x188] sm:$0xf]
      %v431 = vld [vmem:[%s326 + $0x18c] sm:$0xf]
      %v432 = vld [vmem:[%s326 + $0x190] sm:$0xf]
      %v433 = vld [vmem:[%s326 + $0x194] sm:$0xf]
      %v434 = vld [vmem:[%s326 + $0x198] sm:$0xf]
      %v435 = vld [vmem:[%s326 + $0x19c] sm:$0xf]
      %v436 = vld [vmem:[%s326 + $0x1a0] sm:$0xf]
      %v437 = vld [vmem:[%s326 + $0x1a4] sm:$0xf]
      %v438 = vld [vmem:[%s326 + $0x1a8] sm:$0xf]
      %v439 = vld [vmem:[%s326 + $0x1ac] sm:$0xf]
      %v440 = vld [vmem:[%s326 + $0x1b0] sm:$0xf]
      %v441 = vld [vmem:[%s326 + $0x1b4] sm:$0xf]
      %v442 = vld [vmem:[%s326 + $0x1b8] sm:$0xf]
      %v443 = vld [vmem:[%s326 + $0x1bc] sm:$0xf]
      %v444 = vld [vmem:[%s326 + $0x1c0] sm:$0xf]
      %v445 = vld [vmem:[%s326 + $0x1c4] sm:$0xf]
      %v446 = vld [vmem:[%s326 + $0x1c8] sm:$0xf]
      %v447 = vld [vmem:[%s326 + $0x1cc] sm:$0xf]
      %v448 = vld [vmem:[%s326 + $0x1d0] sm:$0xf]
      %v449 = vld [vmem:[%s326 + $0x1d4] sm:$0xf]
      %v450 = vld [vmem:[%s326 + $0x1d8] sm:$0xf]
      %v451 = vld [vmem:[%s326 + $0x1dc] sm:$0xf]
      %v452 = vld [vmem:[%s326 + $0x1e0] sm:$0xf]
      %v453 = vld [vmem:[%s326 + $0x1e4] sm:$0xf]
      %v454 = vld [vmem:[%s326 + $0x1e8] sm:$0xf]
      %v455 = vld [vmem:[%s326 + $0x1ec] sm:$0xf]
      %v456 = vld [vmem:[%s326 + $0x1f0] sm:$0xf]
      %v457 = vld [vmem:[%s326 + $0x1f4] sm:$0xf]
      %v458 = vld [vmem:[%s326 + $0x1f8] sm:$0xf]
      %v459 = vld [vmem:[%s326 + $0x1fc] sm:$0xf]
      %v460 = vld [vmem:[%s1] sm:$0xf]
      %v461 = vld [vmem:[%s1 + $0x4] sm:$0xf]
      %v462 = vld [vmem:[%s1 + $0x8] sm:$0xf]
      %v463 = vld [vmem:[%s1 + $0xc] sm:$0xf]
      %v464 = vld [vmem:[%s1 + $0x10] sm:$0xf]
      %v465 = vld [vmem:[%s1 + $0x14] sm:$0xf]
      %v466 = vld [vmem:[%s1 + $0x18] sm:$0xf]
      %v467 = vld [vmem:[%s1 + $0x1c] sm:$0xf]
      %v468 = vld [vmem:[%s1 + $0x20] sm:$0xf]
      %v469 = vld [vmem:[%s1 + $0x24] sm:$0xf]
      %v470 = vld [vmem:[%s1 + $0x28] sm:$0xf]
      %v471 = vld [vmem:[%s1 + $0x2c] sm:$0xf]
      %v472 = vld [vmem:[%s1 + $0x30] sm:$0xf]
      %v473 = vld [vmem:[%s1 + $0x34] sm:$0xf]
      %v474 = vld [vmem:[%s1 + $0x38] sm:$0xf]
      %v475 = vld [vmem:[%s1 + $0x3c] sm:$0xf]
      %v476 = vld [vmem:[%s2] sm:$0x1]
      %v478 = vperm.slane %v476, 0
      %v608 = vunpack.c.l.b16 %v332
      %v609 = vunpack.c.l.b16 %v333
      %v610 = vunpack.c.l.b16 %v334
      %v611 = vunpack.c.l.b16 %v335
      %v612 = vunpack.c.l.b16 %v336
      %v613 = vunpack.c.l.b16 %v337
      %v614 = vunpack.c.l.b16 %v338
      %v615 = vunpack.c.l.b16 %v339
      %v616 = vunpack.c.l.b16 %v340
      %v617 = vunpack.c.l.b16 %v341
      %v618 = vunpack.c.l.b16 %v342
      %v619 = vunpack.c.l.b16 %v343
      %v620 = vunpack.c.l.b16 %v344
      %v621 = vunpack.c.l.b16 %v345
      %v622 = vunpack.c.l.b16 %v346
      %v623 = vunpack.c.l.b16 %v347
      %v624 = vunpack.c.l.b16 %v348
      %v625 = vunpack.c.l.b16 %v349
      %v626 = vunpack.c.l.b16 %v350
      %v627 = vunpack.c.l.b16 %v351
      %v628 = vunpack.c.l.b16 %v352
      %v629 = vunpack.c.l.b16 %v353
      %v630 = vunpack.c.l.b16 %v354
      %v631 = vunpack.c.l.b16 %v355
      %v632 = vunpack.c.l.b16 %v356
      %v633 = vunpack.c.l.b16 %v357
      %v634 = vunpack.c.l.b16 %v358
      %v635 = vunpack.c.l.b16 %v359
      %v636 = vunpack.c.l.b16 %v360
      %v637 = vunpack.c.l.b16 %v361
      %v638 = vunpack.c.l.b16 %v362
      %v639 = vunpack.c.l.b16 %v363
      %v640 = vunpack.c.l.b16 %v364
      %v641 = vunpack.c.l.b16 %v365
      %v642 = vunpack.c.l.b16 %v366
      %v643 = vunpack.c.l.b16 %v367
      %v644 = vunpack.c.l.b16 %v368
      %v645 = vunpack.c.l.b16 %v369
      %v646 = vunpack.c.l.b16 %v370
      %v647 = vunpack.c.l.b16 %v371
      %v648 = vunpack.c.l.b16 %v372
      %v649 = vunpack.c.l.b16 %v373
      %v650 = vunpack.c.l.b16 %v374
      %v651 = vunpack.c.l.b16 %v375
      %v652 = vunpack.c.l.b16 %v376
      %v653 = vunpack.c.l.b16 %v377
      %v654 = vunpack.c.l.b16 %v378
      %v655 = vunpack.c.l.b16 %v379
      %v656 = vunpack.c.l.b16 %v380
      %v657 = vunpack.c.l.b16 %v381
      %v658 = vunpack.c.l.b16 %v382
      %v659 = vunpack.c.l.b16 %v383
      %v660 = vunpack.c.l.b16 %v384
      %v661 = vunpack.c.l.b16 %v385
      %v662 = vunpack.c.l.b16 %v386
      %v663 = vunpack.c.l.b16 %v387
      %v664 = vunpack.c.l.b16 %v388
      %v665 = vunpack.c.l.b16 %v389
      %v666 = vunpack.c.l.b16 %v390
      %v667 = vunpack.c.l.b16 %v391
      %v668 = vunpack.c.l.b16 %v392
      %v669 = vunpack.c.l.b16 %v393
      %v670 = vunpack.c.l.b16 %v394
      %v671 = vunpack.c.l.b16 %v395
      %v672 = vunpack.c.l.b16 %v396
      %v673 = vunpack.c.l.b16 %v397
      %v674 = vunpack.c.l.b16 %v398
      %v675 = vunpack.c.l.b16 %v399
      %v676 = vunpack.c.l.b16 %v400
      %v677 = vunpack.c.l.b16 %v401
      %v678 = vunpack.c.l.b16 %v402
      %v679 = vunpack.c.l.b16 %v403
      %v680 = vunpack.c.l.b16 %v404
      %v681 = vunpack.c.l.b16 %v405
      %v682 = vunpack.c.l.b16 %v406
      %v683 = vunpack.c.l.b16 %v407
      %v684 = vunpack.c.l.b16 %v408
      %v685 = vunpack.c.l.b16 %v409
      %v686 = vunpack.c.l.b16 %v410
      %v687 = vunpack.c.l.b16 %v411
      %v688 = vunpack.c.l.b16 %v412
      %v689 = vunpack.c.l.b16 %v413
      %v690 = vunpack.c.l.b16 %v414
      %v691 = vunpack.c.l.b16 %v415
      %v692 = vunpack.c.l.b16 %v416
      %v693 = vunpack.c.l.b16 %v417
      %v694 = vunpack.c.l.b16 %v418
      %v695 = vunpack.c.l.b16 %v419
      %v696 = vunpack.c.l.b16 %v420
      %v697 = vunpack.c.l.b16 %v421
      %v698 = vunpack.c.l.b16 %v422
      %v699 = vunpack.c.l.b16 %v423
      %v700 = vunpack.c.l.b16 %v424
      %v701 = vunpack.c.l.b16 %v425
      %v702 = vunpack.c.l.b16 %v426
      %v703 = vunpack.c.l.b16 %v427
      %v704 = vunpack.c.l.b16 %v428
      %v705 = vunpack.c.l.b16 %v429
      %v706 = vunpack.c.l.b16 %v430
      %v707 = vunpack.c.l.b16 %v431
      %v708 = vunpack.c.l.b16 %v432
      %v709 = vunpack.c.l.b16 %v433
      %v710 = vunpack.c.l.b16 %v434
      %v711 = vunpack.c.l.b16 %v435
      %v712 = vunpack.c.l.b16 %v436
      %v713 = vunpack.c.l.b16 %v437
      %v714 = vunpack.c.l.b16 %v438
      %v715 = vunpack.c.l.b16 %v439
      %v716 = vunpack.c.l.b16 %v440
      %v717 = vunpack.c.l.b16 %v441
      %v718 = vunpack.c.l.b16 %v442
      %v719 = vunpack.c.l.b16 %v443
      %v720 = vunpack.c.l.b16 %v444
      %v721 = vunpack.c.l.b16 %v445
      %v722 = vunpack.c.l.b16 %v446
      %v723 = vunpack.c.l.b16 %v447
      %v724 = vunpack.c.l.b16 %v448
      %v725 = vunpack.c.l.b16 %v449
      %v726 = vunpack.c.l.b16 %v450
      %v727 = vunpack.c.l.b16 %v451
      %v728 = vunpack.c.l.b16 %v452
      %v729 = vunpack.c.l.b16 %v453
      %v730 = vunpack.c.l.b16 %v454
      %v731 = vunpack.c.l.b16 %v455
      %v732 = vunpack.c.l.b16 %v456
      %v733 = vunpack.c.l.b16 %v457
      %v734 = vunpack.c.l.b16 %v458
      %v735 = vunpack.c.l.b16 %v459
      %v736 = vpack.c.b16 %v609, %v608
      %v737 = vpack.c.b16 %v611, %v610
      %v738 = vpack.c.b16 %v613, %v612
      %v739 = vpack.c.b16 %v615, %v614
      %v740 = vpack.c.b16 %v617, %v616
      %v741 = vpack.c.b16 %v619, %v618
      %v742 = vpack.c.b16 %v621, %v620
      %v743 = vpack.c.b16 %v623, %v622
      %v744 = vpack.c.b16 %v625, %v624
      %v745 = vpack.c.b16 %v627, %v626
      %v746 = vpack.c.b16 %v629, %v628
      %v747 = vpack.c.b16 %v631, %v630
      %v748 = vpack.c.b16 %v633, %v632
      %v749 = vpack.c.b16 %v635, %v634
      %v750 = vpack.c.b16 %v637, %v636
      %v751 = vpack.c.b16 %v639, %v638
      %v752 = vpack.c.b16 %v641, %v640
      %v753 = vpack.c.b16 %v643, %v642
      %v754 = vpack.c.b16 %v645, %v644
      %v755 = vpack.c.b16 %v647, %v646
      %v756 = vpack.c.b16 %v649, %v648
      %v757 = vpack.c.b16 %v651, %v650
      %v758 = vpack.c.b16 %v653, %v652
      %v759 = vpack.c.b16 %v655, %v654
      %v760 = vpack.c.b16 %v657, %v656
      %v761 = vpack.c.b16 %v659, %v658
      %v762 = vpack.c.b16 %v661, %v660
      %v763 = vpack.c.b16 %v663, %v662
      %v764 = vpack.c.b16 %v665, %v664
      %v765 = vpack.c.b16 %v667, %v666
      %v766 = vpack.c.b16 %v669, %v668
      %v767 = vpack.c.b16 %v671, %v670
      %v768 = vpack.c.b16 %v673, %v672
      %v769 = vpack.c.b16 %v675, %v674
      %v770 = vpack.c.b16 %v677, %v676
      %v771 = vpack.c.b16 %v679, %v678
      %v772 = vpack.c.b16 %v681, %v680
      %v773 = vpack.c.b16 %v683, %v682
      %v774 = vpack.c.b16 %v685, %v684
      %v775 = vpack.c.b16 %v687, %v686
      %v776 = vpack.c.b16 %v689, %v688
      %v777 = vpack.c.b16 %v691, %v690
      %v778 = vpack.c.b16 %v693, %v692
      %v779 = vpack.c.b16 %v695, %v694
      %v780 = vpack.c.b16 %v697, %v696
      %v781 = vpack.c.b16 %v699, %v698
      %v782 = vpack.c.b16 %v701, %v700
      %v783 = vpack.c.b16 %v703, %v702
      %v784 = vpack.c.b16 %v705, %v704
      %v785 = vpack.c.b16 %v707, %v706
      %v786 = vpack.c.b16 %v709, %v708
      %v787 = vpack.c.b16 %v711, %v710
      %v788 = vpack.c.b16 %v713, %v712
      %v789 = vpack.c.b16 %v715, %v714
      %v790 = vpack.c.b16 %v717, %v716
      %v791 = vpack.c.b16 %v719, %v718
      %v792 = vpack.c.b16 %v721, %v720
      %v793 = vpack.c.b16 %v723, %v722
      %v794 = vpack.c.b16 %v725, %v724
      %v795 = vpack.c.b16 %v727, %v726
      %v796 = vpack.c.b16 %v729, %v728
      %v797 = vpack.c.b16 %v731, %v730
      %v798 = vpack.c.b16 %v733, %v732
      %v799 = vpack.c.b16 %v735, %v734
      %v880 = vunpack.c.l.b16 %v460
      %v881 = vunpack.c.l.b16 %v461
      %v882 = vunpack.c.l.b16 %v462
      %v883 = vunpack.c.l.b16 %v463
      %v884 = vunpack.c.l.b16 %v464
      %v885 = vunpack.c.l.b16 %v465
      %v886 = vunpack.c.l.b16 %v466
      %v887 = vunpack.c.l.b16 %v467
      %v888 = vunpack.c.l.b16 %v468
      %v889 = vunpack.c.l.b16 %v469
      %v890 = vunpack.c.l.b16 %v470
      %v891 = vunpack.c.l.b16 %v471
      %v892 = vunpack.c.l.b16 %v472
      %v893 = vunpack.c.l.b16 %v473
      %v894 = vunpack.c.l.b16 %v474
      %v895 = vunpack.c.l.b16 %v475
      %v896 = vpack.c.b16 %v881, %v880
      %v897 = vpack.c.b16 %v883, %v882
      %v898 = vpack.c.b16 %v885, %v884
      %v899 = vpack.c.b16 %v887, %v886
      %v900 = vpack.c.b16 %v889, %v888
      %v901 = vpack.c.b16 %v891, %v890
      %v902 = vpack.c.b16 %v893, %v892
      %v903 = vpack.c.b16 %v895, %v894
      %912 = vmatpush.bf16.msra.mxu0 %v903
      %913 = vmatpush.bf16.msra.mxu0 %v902
      %914 = vmatpush.bf16.msra.mxu0 %v901
      %915 = vmatpush.bf16.msra.mxu0 %v900
      %916 = vmatpush.bf16.msra.mxu0 %v899
      %917 = vmatpush.bf16.msra.mxu0 %v898
      %918 = vmatpush.bf16.msra.mxu0 %v897
      %919 = vmatpush.bf16.msra.mxu0 %v896
      %920 = vmatmul.bf16.gmra.mxu0 %v736
      %v921 = vpop.f32.mrf.mxu0
      %v922 = vadd.f32 %v478, %v921
      %v923 = vpop.f32.mrf.mxu0
      %v924 = vadd.f32 %v478, %v923
      %925 = vmatmul.bf16.gmra.mxu0 %v737
      %v926 = vpop.f32.mrf.mxu0
      %v927 = vadd.f32 %v478, %v926
      %v928 = vpop.f32.mrf.mxu0
      %v929 = vadd.f32 %v478, %v928
      %930 = vmatmul.bf16.gmra.mxu0 %v738
      %v931 = vpop.f32.mrf.mxu0
      %v932 = vadd.f32 %v478, %v931
      %v933 = vpop.f32.mrf.mxu0
      %v934 = vadd.f32 %v478, %v933
      %935 = vmatmul.bf16.gmra.mxu0 %v739
      %v936 = vpop.f32.mrf.mxu0
      %v937 = vadd.f32 %v478, %v936
      %v938 = vpop.f32.mrf.mxu0
      %v939 = vadd.f32 %v478, %v938
      %940 = vmatmul.bf16.gmra.mxu0 %v740
      %v941 = vpop.f32.mrf.mxu0
      %v942 = vadd.f32 %v478, %v941
      %v943 = vpop.f32.mrf.mxu0
      %v944 = vadd.f32 %v478, %v943
      %945 = vmatmul.bf16.gmra.mxu0 %v741
      %v946 = vpop.f32.mrf.mxu0
      %v947 = vadd.f32 %v478, %v946
      %v948 = vpop.f32.mrf.mxu0
      %v949 = vadd.f32 %v478, %v948
      %950 = vmatmul.bf16.gmra.mxu0 %v742
      %v951 = vpop.f32.mrf.mxu0
      %v952 = vadd.f32 %v478, %v951
      %v953 = vpop.f32.mrf.mxu0
      %v954 = vadd.f32 %v478, %v953
      %955 = vmatmul.bf16.gmra.mxu0 %v743
      %v956 = vpop.f32.mrf.mxu0
      %v957 = vadd.f32 %v478, %v956
      %v958 = vpop.f32.mrf.mxu0
      %v959 = vadd.f32 %v478, %v958
      %960 = vmatmul.bf16.gmra.mxu0 %v744
      %v961 = vpop.f32.mrf.mxu0
      %v962 = vadd.f32 %v478, %v961
      %v963 = vpop.f32.mrf.mxu0
      %v964 = vadd.f32 %v478, %v963
      %965 = vmatmul.bf16.gmra.mxu0 %v745
      %v966 = vpop.f32.mrf.mxu0
      %v967 = vadd.f32 %v478, %v966
      %v968 = vpop.f32.mrf.mxu0
      %v969 = vadd.f32 %v478, %v968
      %970 = vmatmul.bf16.gmra.mxu0 %v746
      %v971 = vpop.f32.mrf.mxu0
      %v972 = vadd.f32 %v478, %v971
      %v973 = vpop.f32.mrf.mxu0
      %v974 = vadd.f32 %v478, %v973
      %975 = vmatmul.bf16.gmra.mxu0 %v747
      %v976 = vpop.f32.mrf.mxu0
      %v977 = vadd.f32 %v478, %v976
      %v978 = vpop.f32.mrf.mxu0
      %v979 = vadd.f32 %v478, %v978
      %980 = vmatmul.bf16.gmra.mxu0 %v748
      %v981 = vpop.f32.mrf.mxu0
      %v982 = vadd.f32 %v478, %v981
      %v983 = vpop.f32.mrf.mxu0
      %v984 = vadd.f32 %v478, %v983
      %985 = vmatmul.bf16.gmra.mxu0 %v749
      %v986 = vpop.f32.mrf.mxu0
      %v987 = vadd.f32 %v478, %v986
      %v988 = vpop.f32.mrf.mxu0
      %v989 = vadd.f32 %v478, %v988
      %990 = vmatmul.bf16.gmra.mxu0 %v750
      %v991 = vpop.f32.mrf.mxu0
      %v992 = vadd.f32 %v478, %v991
      %v993 = vpop.f32.mrf.mxu0
      %v994 = vadd.f32 %v478, %v993
      %995 = vmatmul.bf16.gmra.mxu0 %v751
      %v996 = vpop.f32.mrf.mxu0
      %v997 = vadd.f32 %v478, %v996
      %v998 = vpop.f32.mrf.mxu0
      %v999 = vadd.f32 %v478, %v998
      %1000 = vmatmul.bf16.gmra.mxu0 %v752
      %v1001 = vpop.f32.mrf.mxu0
      %v1002 = vadd.f32 %v478, %v1001
      %v1003 = vpop.f32.mrf.mxu0
      %v1004 = vadd.f32 %v478, %v1003
      %1005 = vmatmul.bf16.gmra.mxu0 %v753
      %v1006 = vpop.f32.mrf.mxu0
      %v1007 = vadd.f32 %v478, %v1006
      %v1008 = vpop.f32.mrf.mxu0
      %v1009 = vadd.f32 %v478, %v1008
      %1010 = vmatmul.bf16.gmra.mxu0 %v754
      %v1011 = vpop.f32.mrf.mxu0
      %v1012 = vadd.f32 %v478, %v1011
      %v1013 = vpop.f32.mrf.mxu0
      %v1014 = vadd.f32 %v478, %v1013
      %1015 = vmatmul.bf16.gmra.mxu0 %v755
      %v1016 = vpop.f32.mrf.mxu0
      %v1017 = vadd.f32 %v478, %v1016
      %v1018 = vpop.f32.mrf.mxu0
      %v1019 = vadd.f32 %v478, %v1018
      %1020 = vmatmul.bf16.gmra.mxu0 %v756
      %v1021 = vpop.f32.mrf.mxu0
      %v1022 = vadd.f32 %v478, %v1021
      %v1023 = vpop.f32.mrf.mxu0
      %v1024 = vadd.f32 %v478, %v1023
      %1025 = vmatmul.bf16.gmra.mxu0 %v757
      %v1026 = vpop.f32.mrf.mxu0
      %v1027 = vadd.f32 %v478, %v1026
      %v1028 = vpop.f32.mrf.mxu0
      %v1029 = vadd.f32 %v478, %v1028
      %1030 = vmatmul.bf16.gmra.mxu0 %v758
      %v1031 = vpop.f32.mrf.mxu0
      %v1032 = vadd.f32 %v478, %v1031
      %v1033 = vpop.f32.mrf.mxu0
      %v1034 = vadd.f32 %v478, %v1033
      %1035 = vmatmul.bf16.gmra.mxu0 %v759
      %v1036 = vpop.f32.mrf.mxu0
      %v1037 = vadd.f32 %v478, %v1036
      %v1038 = vpop.f32.mrf.mxu0
      %v1039 = vadd.f32 %v478, %v1038
      %1040 = vmatmul.bf16.gmra.mxu0 %v760
      %v1041 = vpop.f32.mrf.mxu0
      %v1042 = vadd.f32 %v478, %v1041
      %v1043 = vpop.f32.mrf.mxu0
      %v1044 = vadd.f32 %v478, %v1043
      %1045 = vmatmul.bf16.gmra.mxu0 %v761
      %v1046 = vpop.f32.mrf.mxu0
      %v1047 = vadd.f32 %v478, %v1046
      %v1048 = vpop.f32.mrf.mxu0
      %v1049 = vadd.f32 %v478, %v1048
      %1050 = vmatmul.bf16.gmra.mxu0 %v762
      %v1051 = vpop.f32.mrf.mxu0
      %v1052 = vadd.f32 %v478, %v1051
      %v1053 = vpop.f32.mrf.mxu0
      %v1054 = vadd.f32 %v478, %v1053
      %1055 = vmatmul.bf16.gmra.mxu0 %v763
      %v1056 = vpop.f32.mrf.mxu0
      %v1057 = vadd.f32 %v478, %v1056
      %v1058 = vpop.f32.mrf.mxu0
      %v1059 = vadd.f32 %v478, %v1058
      %1060 = vmatmul.bf16.gmra.mxu0 %v764
      %v1061 = vpop.f32.mrf.mxu0
      %v1062 = vadd.f32 %v478, %v1061
      %v1063 = vpop.f32.mrf.mxu0
      %v1064 = vadd.f32 %v478, %v1063
      %1065 = vmatmul.bf16.gmra.mxu0 %v765
      %v1066 = vpop.f32.mrf.mxu0
      %v1067 = vadd.f32 %v478, %v1066
      %v1068 = vpop.f32.mrf.mxu0
      %v1069 = vadd.f32 %v478, %v1068
      %1070 = vmatmul.bf16.gmra.mxu0 %v766
      %v1071 = vpop.f32.mrf.mxu0
      %v1072 = vadd.f32 %v478, %v1071
      %v1073 = vpop.f32.mrf.mxu0
      %v1074 = vadd.f32 %v478, %v1073
      %1075 = vmatmul.bf16.gmra.mxu0 %v767
      %v1076 = vpop.f32.mrf.mxu0
      %v1077 = vadd.f32 %v478, %v1076
      %v1078 = vpop.f32.mrf.mxu0
      %v1079 = vadd.f32 %v478, %v1078
      %1080 = vmatmul.bf16.gmra.mxu0 %v768
      %v1081 = vpop.f32.mrf.mxu0
      %v1082 = vadd.f32 %v478, %v1081
      %v1083 = vpop.f32.mrf.mxu0
      %v1084 = vadd.f32 %v478, %v1083
      %1085 = vmatmul.bf16.gmra.mxu0 %v769
      %v1086 = vpop.f32.mrf.mxu0
      %v1087 = vadd.f32 %v478, %v1086
      %v1088 = vpop.f32.mrf.mxu0
      %v1089 = vadd.f32 %v478, %v1088
      %1090 = vmatmul.bf16.gmra.mxu0 %v770
      %v1091 = vpop.f32.mrf.mxu0
      %v1092 = vadd.f32 %v478, %v1091
      %v1093 = vpop.f32.mrf.mxu0
      %v1094 = vadd.f32 %v478, %v1093
      %1095 = vmatmul.bf16.gmra.mxu0 %v771
      %v1096 = vpop.f32.mrf.mxu0
      %v1097 = vadd.f32 %v478, %v1096
      %v1098 = vpop.f32.mrf.mxu0
      %v1099 = vadd.f32 %v478, %v1098
      %1100 = vmatmul.bf16.gmra.mxu0 %v772
      %v1101 = vpop.f32.mrf.mxu0
      %v1102 = vadd.f32 %v478, %v1101
      %v1103 = vpop.f32.mrf.mxu0
      %v1104 = vadd.f32 %v478, %v1103
      %1105 = vmatmul.bf16.gmra.mxu0 %v773
      %v1106 = vpop.f32.mrf.mxu0
      %v1107 = vadd.f32 %v478, %v1106
      %v1108 = vpop.f32.mrf.mxu0
      %v1109 = vadd.f32 %v478, %v1108
      %1110 = vmatmul.bf16.gmra.mxu0 %v774
      %v1111 = vpop.f32.mrf.mxu0
      %v1112 = vadd.f32 %v478, %v1111
      %v1113 = vpop.f32.mrf.mxu0
      %v1114 = vadd.f32 %v478, %v1113
      %1115 = vmatmul.bf16.gmra.mxu0 %v775
      %v1116 = vpop.f32.mrf.mxu0
      %v1117 = vadd.f32 %v478, %v1116
      %v1118 = vpop.f32.mrf.mxu0
      %v1119 = vadd.f32 %v478, %v1118
      %1120 = vmatmul.bf16.gmra.mxu0 %v776
      %v1121 = vpop.f32.mrf.mxu0
      %v1122 = vadd.f32 %v478, %v1121
      %v1123 = vpop.f32.mrf.mxu0
      %v1124 = vadd.f32 %v478, %v1123
      %1125 = vmatmul.bf16.gmra.mxu0 %v777
      %v1126 = vpop.f32.mrf.mxu0
      %v1127 = vadd.f32 %v478, %v1126
      %v1128 = vpop.f32.mrf.mxu0
      %v1129 = vadd.f32 %v478, %v1128
      %1130 = vmatmul.bf16.gmra.mxu0 %v778
      %v1131 = vpop.f32.mrf.mxu0
      %v1132 = vadd.f32 %v478, %v1131
      %v1133 = vpop.f32.mrf.mxu0
      %v1134 = vadd.f32 %v478, %v1133
      %1135 = vmatmul.bf16.gmra.mxu0 %v779
      %v1136 = vpop.f32.mrf.mxu0
      %v1137 = vadd.f32 %v478, %v1136
      %v1138 = vpop.f32.mrf.mxu0
      %v1139 = vadd.f32 %v478, %v1138
      %1140 = vmatmul.bf16.gmra.mxu0 %v780
      %v1141 = vpop.f32.mrf.mxu0
      %v1142 = vadd.f32 %v478, %v1141
      %v1143 = vpop.f32.mrf.mxu0
      %v1144 = vadd.f32 %v478, %v1143
      %1145 = vmatmul.bf16.gmra.mxu0 %v781
      %v1146 = vpop.f32.mrf.mxu0
      %v1147 = vadd.f32 %v478, %v1146
      %v1148 = vpop.f32.mrf.mxu0
      %v1149 = vadd.f32 %v478, %v1148
      %1150 = vmatmul.bf16.gmra.mxu0 %v782
      %v1151 = vpop.f32.mrf.mxu0
      %v1152 = vadd.f32 %v478, %v1151
      %v1153 = vpop.f32.mrf.mxu0
      %v1154 = vadd.f32 %v478, %v1153
      %1155 = vmatmul.bf16.gmra.mxu0 %v783
      %v1156 = vpop.f32.mrf.mxu0
      %v1157 = vadd.f32 %v478, %v1156
      %v1158 = vpop.f32.mrf.mxu0
      %v1159 = vadd.f32 %v478, %v1158
      %1160 = vmatmul.bf16.gmra.mxu0 %v784
      %v1161 = vpop.f32.mrf.mxu0
      %v1162 = vadd.f32 %v478, %v1161
      %v1163 = vpop.f32.mrf.mxu0
      %v1164 = vadd.f32 %v478, %v1163
      %1165 = vmatmul.bf16.gmra.mxu0 %v785
      %v1166 = vpop.f32.mrf.mxu0
      %v1167 = vadd.f32 %v478, %v1166
      %v1168 = vpop.f32.mrf.mxu0
      %v1169 = vadd.f32 %v478, %v1168
      %1170 = vmatmul.bf16.gmra.mxu0 %v786
      %v1171 = vpop.f32.mrf.mxu0
      %v1172 = vadd.f32 %v478, %v1171
      %v1173 = vpop.f32.mrf.mxu0
      %v1174 = vadd.f32 %v478, %v1173
      %1175 = vmatmul.bf16.gmra.mxu0 %v787
      %v1176 = vpop.f32.mrf.mxu0
      %v1177 = vadd.f32 %v478, %v1176
      %v1178 = vpop.f32.mrf.mxu0
      %v1179 = vadd.f32 %v478, %v1178
      %1180 = vmatmul.bf16.gmra.mxu0 %v788
      %v1181 = vpop.f32.mrf.mxu0
      %v1182 = vadd.f32 %v478, %v1181
      %v1183 = vpop.f32.mrf.mxu0
      %v1184 = vadd.f32 %v478, %v1183
      %1185 = vmatmul.bf16.gmra.mxu0 %v789
      %v1186 = vpop.f32.mrf.mxu0
      %v1187 = vadd.f32 %v478, %v1186
      %v1188 = vpop.f32.mrf.mxu0
      %v1189 = vadd.f32 %v478, %v1188
      %1190 = vmatmul.bf16.gmra.mxu0 %v790
      %v1191 = vpop.f32.mrf.mxu0
      %v1192 = vadd.f32 %v478, %v1191
      %v1193 = vpop.f32.mrf.mxu0
      %v1194 = vadd.f32 %v478, %v1193
      %1195 = vmatmul.bf16.gmra.mxu0 %v791
      %v1196 = vpop.f32.mrf.mxu0
      %v1197 = vadd.f32 %v478, %v1196
      %v1198 = vpop.f32.mrf.mxu0
      %v1199 = vadd.f32 %v478, %v1198
      %1200 = vmatmul.bf16.gmra.mxu0 %v792
      %v1201 = vpop.f32.mrf.mxu0
      %v1202 = vadd.f32 %v478, %v1201
      %v1203 = vpop.f32.mrf.mxu0
      %v1204 = vadd.f32 %v478, %v1203
      %1205 = vmatmul.bf16.gmra.mxu0 %v793
      %v1206 = vpop.f32.mrf.mxu0
      %v1207 = vadd.f32 %v478, %v1206
      %v1208 = vpop.f32.mrf.mxu0
      %v1209 = vadd.f32 %v478, %v1208
      %1210 = vmatmul.bf16.gmra.mxu0 %v794
      %v1211 = vpop.f32.mrf.mxu0
      %v1212 = vadd.f32 %v478, %v1211
      %v1213 = vpop.f32.mrf.mxu0
      %v1214 = vadd.f32 %v478, %v1213
      %1215 = vmatmul.bf16.gmra.mxu0 %v795
      %v1216 = vpop.f32.mrf.mxu0
      %v1217 = vadd.f32 %v478, %v1216
      %v1218 = vpop.f32.mrf.mxu0
      %v1219 = vadd.f32 %v478, %v1218
      %1220 = vmatmul.bf16.gmra.mxu0 %v796
      %v1221 = vpop.f32.mrf.mxu0
      %v1222 = vadd.f32 %v478, %v1221
      %v1223 = vpop.f32.mrf.mxu0
      %v1224 = vadd.f32 %v478, %v1223
      %1225 = vmatmul.bf16.gmra.mxu0 %v797
      %v1226 = vpop.f32.mrf.mxu0
      %v1227 = vadd.f32 %v478, %v1226
      %v1228 = vpop.f32.mrf.mxu0
      %v1229 = vadd.f32 %v478, %v1228
      %1230 = vmatmul.bf16.gmra.mxu0 %v798
      %v1231 = vpop.f32.mrf.mxu0
      %v1232 = vadd.f32 %v478, %v1231
      %v1233 = vpop.f32.mrf.mxu0
      %v1234 = vadd.f32 %v478, %v1233
      %1235 = vmatmul.bf16.gmra.mxu0 %v799
      %v1236 = vpop.f32.mrf.mxu0
      %v1237 = vadd.f32 %v478, %v1236
      %v1238 = vpop.f32.mrf.mxu0
      %v1239 = vadd.f32 %v478, %v1238
      %1240 = vdwg.mxu0
      %v1241 = vmax.f32 %v922, %v932
      %v1242 = vmax.f32 %v924, %v934
      %v1243 = vmax.f32 %v927, %v937
      %v1244 = vmax.f32 %v929, %v939
      %v1245 = vmax.f32 %v942, %v952
      %v1246 = vmax.f32 %v944, %v954
      %v1247 = vmax.f32 %v947, %v957
      %v1248 = vmax.f32 %v949, %v959
      %v1249 = vmax.f32 %v962, %v972
      %v1250 = vmax.f32 %v964, %v974
      %v1251 = vmax.f32 %v967, %v977
      %v1252 = vmax.f32 %v969, %v979
      %v1253 = vmax.f32 %v982, %v992
      %v1254 = vmax.f32 %v984, %v994
      %v1255 = vmax.f32 %v987, %v997
      %v1256 = vmax.f32 %v989, %v999
      %v1257 = vmax.f32 %v1002, %v1012
      %v1258 = vmax.f32 %v1004, %v1014
      %v1259 = vmax.f32 %v1007, %v1017
      %v1260 = vmax.f32 %v1009, %v1019
      %v1261 = vmax.f32 %v1022, %v1032
      %v1262 = vmax.f32 %v1024, %v1034
      %v1263 = vmax.f32 %v1027, %v1037
      %v1264 = vmax.f32 %v1029, %v1039
      %v1265 = vmax.f32 %v1042, %v1052
      %v1266 = vmax.f32 %v1044, %v1054
      %v1267 = vmax.f32 %v1047, %v1057
      %v1268 = vmax.f32 %v1049, %v1059
      %v1269 = vmax.f32 %v1062, %v1072
      %v1270 = vmax.f32 %v1064, %v1074
      %v1271 = vmax.f32 %v1067, %v1077
      %v1272 = vmax.f32 %v1069, %v1079
      %v1273 = vmax.f32 %v1082, %v1092
      %v1274 = vmax.f32 %v1084, %v1094
      %v1275 = vmax.f32 %v1087, %v1097
      %v1276 = vmax.f32 %v1089, %v1099
      %v1277 = vmax.f32 %v1102, %v1112
      %v1278 = vmax.f32 %v1104, %v1114
      %v1279 = vmax.f32 %v1107, %v1117
      %v1280 = vmax.f32 %v1109, %v1119
      %v1281 = vmax.f32 %v1122, %v1132
      %v1282 = vmax.f32 %v1124, %v1134
      %v1283 = vmax.f32 %v1127, %v1137
      %v1284 = vmax.f32 %v1129, %v1139
      %v1285 = vmax.f32 %v1142, %v1152
      %v1286 = vmax.f32 %v1144, %v1154
      %v1287 = vmax.f32 %v1147, %v1157
      %v1288 = vmax.f32 %v1149, %v1159
      %v1289 = vmax.f32 %v1162, %v1172
      %v1290 = vmax.f32 %v1164, %v1174
      %v1291 = vmax.f32 %v1167, %v1177
      %v1292 = vmax.f32 %v1169, %v1179
      %v1293 = vmax.f32 %v1182, %v1192
      %v1294 = vmax.f32 %v1184, %v1194
      %v1295 = vmax.f32 %v1187, %v1197
      %v1296 = vmax.f32 %v1189, %v1199
      %v1297 = vmax.f32 %v1202, %v1212
      %v1298 = vmax.f32 %v1204, %v1214
      %v1299 = vmax.f32 %v1207, %v1217
      %v1300 = vmax.f32 %v1209, %v1219
      %v1301 = vmax.f32 %v1222, %v1232
      %v1302 = vmax.f32 %v1224, %v1234
      %v1303 = vmax.f32 %v1227, %v1237
      %v1304 = vmax.f32 %v1229, %v1239
      %vm1305 = vcmask 261120
      %1306 = vst.msk [vmem:[#allocation4] sm:$0xff] %vm1305, %v1241
      %1307 = vst.msk [vmem:[#allocation4 + $0x8] sm:$0xff] %vm1305, %v1242
      %1308 = vst.msk [vmem:[#allocation4 + $0x10] sm:$0xff] %vm1305, %v1243
      %1309 = vst.msk [vmem:[#allocation4 + $0x18] sm:$0xff] %vm1305, %v1244
      %1310 = vst.msk [vmem:[#allocation4 + $0x20] sm:$0xff] %vm1305, %v1245
      %1311 = vst.msk [vmem:[#allocation4 + $0x28] sm:$0xff] %vm1305, %v1246
      %1312 = vst.msk [vmem:[#allocation4 + $0x30] sm:$0xff] %vm1305, %v1247
      %1313 = vst.msk [vmem:[#allocation4 + $0x38] sm:$0xff] %vm1305, %v1248
      %1314 = vst.msk [vmem:[#allocation4 + $0x40] sm:$0xff] %vm1305, %v1249
      %1315 = vst.msk [vmem:[#allocation4 + $0x48] sm:$0xff] %vm1305, %v1250
      %1316 = vst.msk [vmem:[#allocation4 + $0x50] sm:$0xff] %vm1305, %v1251
      %1317 = vst.msk [vmem:[#allocation4 + $0x58] sm:$0xff] %vm1305, %v1252
      %1318 = vst.msk [vmem:[#allocation4 + $0x60] sm:$0xff] %vm1305, %v1253
      %1319 = vst.msk [vmem:[#allocation4 + $0x68] sm:$0xff] %vm1305, %v1254
      %1320 = vst.msk [vmem:[#allocation4 + $0x70] sm:$0xff] %vm1305, %v1255
      %1321 = vst.msk [vmem:[#allocation4 + $0x78] sm:$0xff] %vm1305, %v1256
      %1322 = vst.msk [vmem:[#allocation4 + $0x80] sm:$0xff] %vm1305, %v1257
      %1323 = vst.msk [vmem:[#allocation4 + $0x88] sm:$0xff] %vm1305, %v1258
      %1324 = vst.msk [vmem:[#allocation4 + $0x90] sm:$0xff] %vm1305, %v1259
      %1325 = vst.msk [vmem:[#allocation4 + $0x98] sm:$0xff] %vm1305, %v1260
      %1326 = vst.msk [vmem:[#allocation4 + $0xa0] sm:$0xff] %vm1305, %v1261
      %1327 = vst.msk [vmem:[#allocation4 + $0xa8] sm:$0xff] %vm1305, %v1262
      %1328 = vst.msk [vmem:[#allocation4 + $0xb0] sm:$0xff] %vm1305, %v1263
      %1329 = vst.msk [vmem:[#allocation4 + $0xb8] sm:$0xff] %vm1305, %v1264
      %1330 = vst.msk [vmem:[#allocation4 + $0xc0] sm:$0xff] %vm1305, %v1265
      %1331 = vst.msk [vmem:[#allocation4 + $0xc8] sm:$0xff] %vm1305, %v1266
      %1332 = vst.msk [vmem:[#allocation4 + $0xd0] sm:$0xff] %vm1305, %v1267
      %1333 = vst.msk [vmem:[#allocation4 + $0xd8] sm:$0xff] %vm1305, %v1268
      %1334 = vst.msk [vmem:[#allocation4 + $0xe0] sm:$0xff] %vm1305, %v1269
      %1335 = vst.msk [vmem:[#allocation4 + $0xe8] sm:$0xff] %vm1305, %v1270
      %1336 = vst.msk [vmem:[#allocation4 + $0xf0] sm:$0xff] %vm1305, %v1271
      %1337 = vst.msk [vmem:[#allocation4 + $0xf8] sm:$0xff] %vm1305, %v1272
      %1338 = vst.msk [vmem:[#allocation4 + $0x100] sm:$0xff] %vm1305, %v1273
      %1339 = vst.msk [vmem:[#allocation4 + $0x108] sm:$0xff] %vm1305, %v1274
      %1340 = vst.msk [vmem:[#allocation4 + $0x110] sm:$0xff] %vm1305, %v1275
      %1341 = vst.msk [vmem:[#allocation4 + $0x118] sm:$0xff] %vm1305, %v1276
      %1342 = vst.msk [vmem:[#allocation4 + $0x120] sm:$0xff] %vm1305, %v1277
      %1343 = vst.msk [vmem:[#allocation4 + $0x128] sm:$0xff] %vm1305, %v1278
      %1344 = vst.msk [vmem:[#allocation4 + $0x130] sm:$0xff] %vm1305, %v1279
      %1345 = vst.msk [vmem:[#allocation4 + $0x138] sm:$0xff] %vm1305, %v1280
      %1346 = vst.msk [vmem:[#allocation4 + $0x140] sm:$0xff] %vm1305, %v1281
      %1347 = vst.msk [vmem:[#allocation4 + $0x148] sm:$0xff] %vm1305, %v1282
      %1348 = vst.msk [vmem:[#allocation4 + $0x150] sm:$0xff] %vm1305, %v1283
      %1349 = vst.msk [vmem:[#allocation4 + $0x158] sm:$0xff] %vm1305, %v1284
      %1350 = vst.msk [vmem:[#allocation4 + $0x160] sm:$0xff] %vm1305, %v1285
      %1351 = vst.msk [vmem:[#allocation4 + $0x168] sm:$0xff] %vm1305, %v1286
      %1352 = vst.msk [vmem:[#allocation4 + $0x170] sm:$0xff] %vm1305, %v1287
      %1353 = vst.msk [vmem:[#allocation4 + $0x178] sm:$0xff] %vm1305, %v1288
      %1354 = vst.msk [vmem:[#allocation4 + $0x180] sm:$0xff] %vm1305, %v1289
      %1355 = vst.msk [vmem:[#allocation4 + $0x188] sm:$0xff] %vm1305, %v1290
      %1356 = vst.msk [vmem:[#allocation4 + $0x190] sm:$0xff] %vm1305, %v1291
      %1357 = vst.msk [vmem:[#allocation4 + $0x198] sm:$0xff] %vm1305, %v1292
      %1358 = vst.msk [vmem:[#allocation4 + $0x1a0] sm:$0xff] %vm1305, %v1293
      %1359 = vst.msk [vmem:[#allocation4 + $0x1a8] sm:$0xff] %vm1305, %v1294
      %1360 = vst.msk [vmem:[#allocation4 + $0x1b0] sm:$0xff] %vm1305, %v1295
      %1361 = vst.msk [vmem:[#allocation4 + $0x1b8] sm:$0xff] %vm1305, %v1296
      %1362 = vst.msk [vmem:[#allocation4 + $0x1c0] sm:$0xff] %vm1305, %v1297
      %1363 = vst.msk [vmem:[#allocation4 + $0x1c8] sm:$0xff] %vm1305, %v1298
      %1364 = vst.msk [vmem:[#allocation4 + $0x1d0] sm:$0xff] %vm1305, %v1299
      %1365 = vst.msk [vmem:[#allocation4 + $0x1d8] sm:$0xff] %vm1305, %v1300
      %1366 = vst.msk [vmem:[#allocation4 + $0x1e0] sm:$0xff] %vm1305, %v1301
      %1367 = vst.msk [vmem:[#allocation4 + $0x1e8] sm:$0xff] %vm1305, %v1302
      %1368 = vst.msk [vmem:[#allocation4 + $0x1f0] sm:$0xff] %vm1305, %v1303
      %1369 = vst.msk [vmem:[#allocation4 + $0x1f8] sm:$0xff] %vm1305, %v1304
      %v1370 = vld [vmem:[#allocation4] ss:$2 sm:$0xff]
      %s1371 = scalar_lea.vmem [#allocation4], 16
      %v1372 = vld [vmem:[%s1371] ss:$2 sm:$0xff]
      %s1373 = scalar_lea.vmem [#allocation4], 32
      %v1374 = vld [vmem:[%s1373] ss:$2 sm:$0xff]
      %s1375 = scalar_lea.vmem [#allocation4], 48
      %v1376 = vld [vmem:[%s1375] ss:$2 sm:$0xff]
      %s1377 = scalar_lea.vmem [#allocation4], 64
      %v1378 = vld [vmem:[%s1377] ss:$2 sm:$0xff]
      %s1379 = scalar_lea.vmem [#allocation4], 80
      %v1380 = vld [vmem:[%s1379] ss:$2 sm:$0xff]
      %s1381 = scalar_lea.vmem [#allocation4], 96
      %v1382 = vld [vmem:[%s1381] ss:$2 sm:$0xff]
      %s1383 = scalar_lea.vmem [#allocation4], 112
      %v1384 = vld [vmem:[%s1383] ss:$2 sm:$0xff]
      %s1385 = scalar_lea.vmem [#allocation4], 128
      %v1386 = vld [vmem:[%s1385] ss:$2 sm:$0xff]
      %s1387 = scalar_lea.vmem [#allocation4], 144
      %v1388 = vld [vmem:[%s1387] ss:$2 sm:$0xff]
      %s1389 = scalar_lea.vmem [#allocation4], 160
      %v1390 = vld [vmem:[%s1389] ss:$2 sm:$0xff]
      %s1391 = scalar_lea.vmem [#allocation4], 176
      %v1392 = vld [vmem:[%s1391] ss:$2 sm:$0xff]
      %s1393 = scalar_lea.vmem [#allocation4], 192
      %v1394 = vld [vmem:[%s1393] ss:$2 sm:$0xff]
      %s1395 = scalar_lea.vmem [#allocation4], 208
      %v1396 = vld [vmem:[%s1395] ss:$2 sm:$0xff]
      %s1397 = scalar_lea.vmem [#allocation4], 224
      %v1398 = vld [vmem:[%s1397] ss:$2 sm:$0xff]
      %s1399 = scalar_lea.vmem [#allocation4], 240
      %v1400 = vld [vmem:[%s1399] ss:$2 sm:$0xff]
      %s1401 = scalar_lea.vmem [#allocation4], 256
      %v1402 = vld [vmem:[%s1401] ss:$2 sm:$0xff]
      %s1403 = scalar_lea.vmem [#allocation4], 272
      %v1404 = vld [vmem:[%s1403] ss:$2 sm:$0xff]
      %s1405 = scalar_lea.vmem [#allocation4], 288
      %v1406 = vld [vmem:[%s1405] ss:$2 sm:$0xff]
      %s1407 = scalar_lea.vmem [#allocation4], 304
      %v1408 = vld [vmem:[%s1407] ss:$2 sm:$0xff]
      %s1409 = scalar_lea.vmem [#allocation4], 320
      %v1410 = vld [vmem:[%s1409] ss:$2 sm:$0xff]
      %s1411 = scalar_lea.vmem [#allocation4], 336
      %v1412 = vld [vmem:[%s1411] ss:$2 sm:$0xff]
      %s1413 = scalar_lea.vmem [#allocation4], 352
      %v1414 = vld [vmem:[%s1413] ss:$2 sm:$0xff]
      %s1415 = scalar_lea.vmem [#allocation4], 368
      %v1416 = vld [vmem:[%s1415] ss:$2 sm:$0xff]
      %s1417 = scalar_lea.vmem [#allocation4], 384
      %v1418 = vld [vmem:[%s1417] ss:$2 sm:$0xff]
      %s1419 = scalar_lea.vmem [#allocation4], 400
      %v1420 = vld [vmem:[%s1419] ss:$2 sm:$0xff]
      %s1421 = scalar_lea.vmem [#allocation4], 416
      %v1422 = vld [vmem:[%s1421] ss:$2 sm:$0xff]
      %s1423 = scalar_lea.vmem [#allocation4], 432
      %v1424 = vld [vmem:[%s1423] ss:$2 sm:$0xff]
      %s1425 = scalar_lea.vmem [#allocation4], 448
      %v1426 = vld [vmem:[%s1425] ss:$2 sm:$0xff]
      %s1427 = scalar_lea.vmem [#allocation4], 464
      %v1428 = vld [vmem:[%s1427] ss:$2 sm:$0xff]
      %s1429 = scalar_lea.vmem [#allocation4], 480
      %v1430 = vld [vmem:[%s1429] ss:$2 sm:$0xff]
      %s1431 = scalar_lea.vmem [#allocation4], 496
      %v1432 = vld [vmem:[%s1431] ss:$2 sm:$0xff]
      %s1433 = scalar_lea.vmem [#allocation4], 1
      %v1434 = vld [vmem:[%s1433] ss:$2 sm:$0xff]
      %s1435 = scalar_lea.vmem [#allocation4], 17
      %v1436 = vld [vmem:[%s1435] ss:$2 sm:$0xff]
      %s1437 = scalar_lea.vmem [#allocation4], 33
      %v1438 = vld [vmem:[%s1437] ss:$2 sm:$0xff]
      %s1439 = scalar_lea.vmem [#allocation4], 49
      %v1440 = vld [vmem:[%s1439] ss:$2 sm:$0xff]
      %s1441 = scalar_lea.vmem [#allocation4], 65
      %v1442 = vld [vmem:[%s1441] ss:$2 sm:$0xff]
      %s1443 = scalar_lea.vmem [#allocation4], 81
      %v1444 = vld [vmem:[%s1443] ss:$2 sm:$0xff]
      %s1445 = scalar_lea.vmem [#allocation4], 97
      %v1446 = vld [vmem:[%s1445] ss:$2 sm:$0xff]
      %s1447 = scalar_lea.vmem [#allocation4], 113
      %v1448 = vld [vmem:[%s1447] ss:$2 sm:$0xff]
      %s1449 = scalar_lea.vmem [#allocation4], 129
      %v1450 = vld [vmem:[%s1449] ss:$2 sm:$0xff]
      %s1451 = scalar_lea.vmem [#allocation4], 145
      %v1452 = vld [vmem:[%s1451] ss:$2 sm:$0xff]
      %s1453 = scalar_lea.vmem [#allocation4], 161
      %v1454 = vld [vmem:[%s1453] ss:$2 sm:$0xff]
      %s1455 = scalar_lea.vmem [#allocation4], 177
      %v1456 = vld [vmem:[%s1455] ss:$2 sm:$0xff]
      %s1457 = scalar_lea.vmem [#allocation4], 193
      %v1458 = vld [vmem:[%s1457] ss:$2 sm:$0xff]
      %s1459 = scalar_lea.vmem [#allocation4], 209
      %v1460 = vld [vmem:[%s1459] ss:$2 sm:$0xff]
      %s1461 = scalar_lea.vmem [#allocation4], 225
      %v1462 = vld [vmem:[%s1461] ss:$2 sm:$0xff]
      %s1463 = scalar_lea.vmem [#allocation4], 241
      %v1464 = vld [vmem:[%s1463] ss:$2 sm:$0xff]
      %s1465 = scalar_lea.vmem [#allocation4], 257
      %v1466 = vld [vmem:[%s1465] ss:$2 sm:$0xff]
      %s1467 = scalar_lea.vmem [#allocation4], 273
      %v1468 = vld [vmem:[%s1467] ss:$2 sm:$0xff]
      %s1469 = scalar_lea.vmem [#allocation4], 289
      %v1470 = vld [vmem:[%s1469] ss:$2 sm:$0xff]
      %s1471 = scalar_lea.vmem [#allocation4], 305
      %v1472 = vld [vmem:[%s1471] ss:$2 sm:$0xff]
      %s1473 = scalar_lea.vmem [#allocation4], 321
      %v1474 = vld [vmem:[%s1473] ss:$2 sm:$0xff]
      %s1475 = scalar_lea.vmem [#allocation4], 337
      %v1476 = vld [vmem:[%s1475] ss:$2 sm:$0xff]
      %s1477 = scalar_lea.vmem [#allocation4], 353
      %v1478 = vld [vmem:[%s1477] ss:$2 sm:$0xff]
      %s1479 = scalar_lea.vmem [#allocation4], 369
      %v1480 = vld [vmem:[%s1479] ss:$2 sm:$0xff]
      %s1481 = scalar_lea.vmem [#allocation4], 385
      %v1482 = vld [vmem:[%s1481] ss:$2 sm:$0xff]
      %s1483 = scalar_lea.vmem [#allocation4], 401
      %v1484 = vld [vmem:[%s1483] ss:$2 sm:$0xff]
      %s1485 = scalar_lea.vmem [#allocation4], 417
      %v1486 = vld [vmem:[%s1485] ss:$2 sm:$0xff]
      %s1487 = scalar_lea.vmem [#allocation4], 433
      %v1488 = vld [vmem:[%s1487] ss:$2 sm:$0xff]
      %s1489 = scalar_lea.vmem [#allocation4], 449
      %v1490 = vld [vmem:[%s1489] ss:$2 sm:$0xff]
      %s1491 = scalar_lea.vmem [#allocation4], 465
      %v1492 = vld [vmem:[%s1491] ss:$2 sm:$0xff]
      %s1493 = scalar_lea.vmem [#allocation4], 481
      %v1494 = vld [vmem:[%s1493] ss:$2 sm:$0xff]
      %s1495 = scalar_lea.vmem [#allocation4], 497
      %v1496 = vld [vmem:[%s1495] ss:$2 sm:$0xff]
      %v1497 = vmax.f32 %v1370, %v1434
      %v1498 = vmax.f32 %v1372, %v1436
      %v1499 = vmax.f32 %v1374, %v1438
      %v1500 = vmax.f32 %v1376, %v1440
      %v1501 = vmax.f32 %v1378, %v1442
      %v1502 = vmax.f32 %v1380, %v1444
      %v1503 = vmax.f32 %v1382, %v1446
      %v1504 = vmax.f32 %v1384, %v1448
      %v1505 = vmax.f32 %v1386, %v1450
      %v1506 = vmax.f32 %v1388, %v1452
      %v1507 = vmax.f32 %v1390, %v1454
      %v1508 = vmax.f32 %v1392, %v1456
      %v1509 = vmax.f32 %v1394, %v1458
      %v1510 = vmax.f32 %v1396, %v1460
      %v1511 = vmax.f32 %v1398, %v1462
      %v1512 = vmax.f32 %v1400, %v1464
      %v1513 = vmax.f32 %v1402, %v1466
      %v1514 = vmax.f32 %v1404, %v1468
      %v1515 = vmax.f32 %v1406, %v1470
      %v1516 = vmax.f32 %v1408, %v1472
      %v1517 = vmax.f32 %v1410, %v1474
      %v1518 = vmax.f32 %v1412, %v1476
      %v1519 = vmax.f32 %v1414, %v1478
      %v1520 = vmax.f32 %v1416, %v1480
      %v1521 = vmax.f32 %v1418, %v1482
      %v1522 = vmax.f32 %v1420, %v1484
      %v1523 = vmax.f32 %v1422, %v1486
      %v1524 = vmax.f32 %v1424, %v1488
      %v1525 = vmax.f32 %v1426, %v1490
      %v1526 = vmax.f32 %v1428, %v1492
      %v1527 = vmax.f32 %v1430, %v1494
      %v1528 = vmax.f32 %v1432, %v1496
      %1529 = vst.msk [vmem:[#allocation2] sm:$0xff] %vm1305, 0.0
      %1530 = vst.msk [vmem:[#allocation2 + $0x8] sm:$0xff] %vm1305, 0.0
      %1531 = vst.msk [vmem:[#allocation2 + $0x10] sm:$0xff] %vm1305, 0.0
      %1532 = vst.msk [vmem:[#allocation2 + $0x18] sm:$0xff] %vm1305, 0.0
      %1533 = vst.msk [vmem:[#allocation2 + $0x20] sm:$0xff] %vm1305, 0.0
      %1534 = vst.msk [vmem:[#allocation2 + $0x28] sm:$0xff] %vm1305, 0.0
      %1535 = vst.msk [vmem:[#allocation2 + $0x30] sm:$0xff] %vm1305, 0.0
      %1536 = vst.msk [vmem:[#allocation2 + $0x38] sm:$0xff] %vm1305, 0.0
      %1537 = vst.msk [vmem:[#allocation2 + $0x40] sm:$0xff] %vm1305, 0.0
      %1538 = vst.msk [vmem:[#allocation2 + $0x48] sm:$0xff] %vm1305, 0.0
      %1539 = vst.msk [vmem:[#allocation2 + $0x50] sm:$0xff] %vm1305, 0.0
      %1540 = vst.msk [vmem:[#allocation2 + $0x58] sm:$0xff] %vm1305, 0.0
      %1541 = vst.msk [vmem:[#allocation2 + $0x60] sm:$0xff] %vm1305, 0.0
      %1542 = vst.msk [vmem:[#allocation2 + $0x68] sm:$0xff] %vm1305, 0.0
      %1543 = vst.msk [vmem:[#allocation2 + $0x70] sm:$0xff] %vm1305, 0.0
      %1544 = vst.msk [vmem:[#allocation2 + $0x78] sm:$0xff] %vm1305, 0.0
      %1545 = vst.msk [vmem:[#allocation2 + $0x80] sm:$0xff] %vm1305, 0.0
      %1546 = vst.msk [vmem:[#allocation2 + $0x88] sm:$0xff] %vm1305, 0.0
      %1547 = vst.msk [vmem:[#allocation2 + $0x90] sm:$0xff] %vm1305, 0.0
      %1548 = vst.msk [vmem:[#allocation2 + $0x98] sm:$0xff] %vm1305, 0.0
      %1549 = vst.msk [vmem:[#allocation2 + $0xa0] sm:$0xff] %vm1305, 0.0
      %1550 = vst.msk [vmem:[#allocation2 + $0xa8] sm:$0xff] %vm1305, 0.0
      %1551 = vst.msk [vmem:[#allocation2 + $0xb0] sm:$0xff] %vm1305, 0.0
      %1552 = vst.msk [vmem:[#allocation2 + $0xb8] sm:$0xff] %vm1305, 0.0
      %1553 = vst.msk [vmem:[#allocation2 + $0xc0] sm:$0xff] %vm1305, 0.0
      %1554 = vst.msk [vmem:[#allocation2 + $0xc8] sm:$0xff] %vm1305, 0.0
      %1555 = vst.msk [vmem:[#allocation2 + $0xd0] sm:$0xff] %vm1305, 0.0
      %1556 = vst.msk [vmem:[#allocation2 + $0xd8] sm:$0xff] %vm1305, 0.0
      %1557 = vst.msk [vmem:[#allocation2 + $0xe0] sm:$0xff] %vm1305, 0.0
      %1558 = vst.msk [vmem:[#allocation2 + $0xe8] sm:$0xff] %vm1305, 0.0
      %1559 = vst.msk [vmem:[#allocation2 + $0xf0] sm:$0xff] %vm1305, 0.0
      %1560 = vst.msk [vmem:[#allocation2 + $0xf8] sm:$0xff] %vm1305, 0.0
      %1561 = vst.msk [vmem:[#allocation2 + $0x100] sm:$0xff] %vm1305, 0.0
      %1562 = vst.msk [vmem:[#allocation2 + $0x108] sm:$0xff] %vm1305, 0.0
      %1563 = vst.msk [vmem:[#allocation2 + $0x110] sm:$0xff] %vm1305, 0.0
      %1564 = vst.msk [vmem:[#allocation2 + $0x118] sm:$0xff] %vm1305, 0.0
      %1565 = vst.msk [vmem:[#allocation2 + $0x120] sm:$0xff] %vm1305, 0.0
      %1566 = vst.msk [vmem:[#allocation2 + $0x128] sm:$0xff] %vm1305, 0.0
      %1567 = vst.msk [vmem:[#allocation2 + $0x130] sm:$0xff] %vm1305, 0.0
      %1568 = vst.msk [vmem:[#allocation2 + $0x138] sm:$0xff] %vm1305, 0.0
      %1569 = vst.msk [vmem:[#allocation2 + $0x140] sm:$0xff] %vm1305, 0.0
      %1570 = vst.msk [vmem:[#allocation2 + $0x148] sm:$0xff] %vm1305, 0.0
      %1571 = vst.msk [vmem:[#allocation2 + $0x150] sm:$0xff] %vm1305, 0.0
      %1572 = vst.msk [vmem:[#allocation2 + $0x158] sm:$0xff] %vm1305, 0.0
      %1573 = vst.msk [vmem:[#allocation2 + $0x160] sm:$0xff] %vm1305, 0.0
      %1574 = vst.msk [vmem:[#allocation2 + $0x168] sm:$0xff] %vm1305, 0.0
      %1575 = vst.msk [vmem:[#allocation2 + $0x170] sm:$0xff] %vm1305, 0.0
      %1576 = vst.msk [vmem:[#allocation2 + $0x178] sm:$0xff] %vm1305, 0.0
      %1577 = vst.msk [vmem:[#allocation2 + $0x180] sm:$0xff] %vm1305, 0.0
      %1578 = vst.msk [vmem:[#allocation2 + $0x188] sm:$0xff] %vm1305, 0.0
      %1579 = vst.msk [vmem:[#allocation2 + $0x190] sm:$0xff] %vm1305, 0.0
      %1580 = vst.msk [vmem:[#allocation2 + $0x198] sm:$0xff] %vm1305, 0.0
      %1581 = vst.msk [vmem:[#allocation2 + $0x1a0] sm:$0xff] %vm1305, 0.0
      %1582 = vst.msk [vmem:[#allocation2 + $0x1a8] sm:$0xff] %vm1305, 0.0
      %1583 = vst.msk [vmem:[#allocation2 + $0x1b0] sm:$0xff] %vm1305, 0.0
      %1584 = vst.msk [vmem:[#allocation2 + $0x1b8] sm:$0xff] %vm1305, 0.0
      %1585 = vst.msk [vmem:[#allocation2 + $0x1c0] sm:$0xff] %vm1305, 0.0
      %1586 = vst.msk [vmem:[#allocation2 + $0x1c8] sm:$0xff] %vm1305, 0.0
      %1587 = vst.msk [vmem:[#allocation2 + $0x1d0] sm:$0xff] %vm1305, 0.0
      %1588 = vst.msk [vmem:[#allocation2 + $0x1d8] sm:$0xff] %vm1305, 0.0
      %s1589 = scalar_lea.vmem [#allocation2], 48
      %1590 = vst.msk [vmem:[%s1589 + $0x2] sm:$0xff] %vm1305, %v1497
      %1591 = vst.msk [vmem:[%s1589 + $0xa] sm:$0xff] %vm1305, %v1498
      %1592 = vst.msk [vmem:[%s1589 + $0x1a] sm:$0xff] %vm1305, %v1499
      %1593 = vst.msk [vmem:[%s1589 + $0x22] sm:$0xff] %vm1305, %v1500
      %1594 = vst.msk [vmem:[%s1589 + $0x32] sm:$0xff] %vm1305, %v1501
      %1595 = vst.msk [vmem:[%s1589 + $0x3a] sm:$0xff] %vm1305, %v1502
      %1596 = vst.msk [vmem:[%s1589 + $0x4a] sm:$0xff] %vm1305, %v1503
      %1597 = vst.msk [vmem:[%s1589 + $0x52] sm:$0xff] %vm1305, %v1504
      %1598 = vst.msk [vmem:[%s1589 + $0x62] sm:$0xff] %vm1305, %v1505
      %1599 = vst.msk [vmem:[%s1589 + $0x6a] sm:$0xff] %vm1305, %v1506
      %1600 = vst.msk [vmem:[%s1589 + $0x7a] sm:$0xff] %vm1305, %v1507
      %1601 = vst.msk [vmem:[%s1589 + $0x82] sm:$0xff] %vm1305, %v1508
      %1602 = vst.msk [vmem:[%s1589 + $0x92] sm:$0xff] %vm1305, %v1509
      %1603 = vst.msk [vmem:[%s1589 + $0x9a] sm:$0xff] %vm1305, %v1510
      %1604 = vst.msk [vmem:[%s1589 + $0xaa] sm:$0xff] %vm1305, %v1511
      %1605 = vst.msk [vmem:[%s1589 + $0xb2] sm:$0xff] %vm1305, %v1512
      %1606 = vst.msk [vmem:[%s1589 + $0xc2] sm:$0xff] %vm1305, %v1513
      %1607 = vst.msk [vmem:[%s1589 + $0xca] sm:$0xff] %vm1305, %v1514
      %1608 = vst.msk [vmem:[%s1589 + $0xda] sm:$0xff] %vm1305, %v1515
      %1609 = vst.msk [vmem:[%s1589 + $0xe2] sm:$0xff] %vm1305, %v1516
      %1610 = vst.msk [vmem:[%s1589 + $0xf2] sm:$0xff] %vm1305, %v1517
      %1611 = vst.msk [vmem:[%s1589 + $0xfa] sm:$0xff] %vm1305, %v1518
      %1612 = vst.msk [vmem:[%s1589 + $0x10a] sm:$0xff] %vm1305, %v1519
      %1613 = vst.msk [vmem:[%s1589 + $0x112] sm:$0xff] %vm1305, %v1520
      %1614 = vst.msk [vmem:[%s1589 + $0x122] sm:$0xff] %vm1305, %v1521
      %1615 = vst.msk [vmem:[%s1589 + $0x12a] sm:$0xff] %vm1305, %v1522
      %1616 = vst.msk [vmem:[%s1589 + $0x13a] sm:$0xff] %vm1305, %v1523
      %1617 = vst.msk [vmem:[%s1589 + $0x142] sm:$0xff] %vm1305, %v1524
      %1618 = vst.msk [vmem:[%s1589 + $0x152] sm:$0xff] %vm1305, %v1525
      %1619 = vst.msk [vmem:[%s1589 + $0x15a] sm:$0xff] %vm1305, %v1526
      %1620 = vst.msk [vmem:[%s1589 + $0x16a] sm:$0xff] %vm1305, %v1527
      %1621 = vst.msk [vmem:[%s1589 + $0x172] sm:$0xff] %vm1305, %v1528
      %v1622 = vld [vmem:[#allocation2] sm:$0xff]
      %v1623 = vld [vmem:[#allocation2 + $0x8] sm:$0xff]
      %v1624 = vld [vmem:[#allocation2 + $0x18] sm:$0xff]
      %v1625 = vld [vmem:[#allocation2 + $0x20] sm:$0xff]
      %v1626 = vld [vmem:[#allocation2 + $0x30] sm:$0xff]
      %v1627 = vld [vmem:[#allocation2 + $0x38] sm:$0xff]
      %v1628 = vld [vmem:[#allocation2 + $0x48] sm:$0xff]
      %v1629 = vld [vmem:[#allocation2 + $0x50] sm:$0xff]
      %v1630 = vld [vmem:[#allocation2 + $0x60] sm:$0xff]
      %v1631 = vld [vmem:[#allocation2 + $0x68] sm:$0xff]
      %v1632 = vld [vmem:[#allocation2 + $0x78] sm:$0xff]
      %v1633 = vld [vmem:[#allocation2 + $0x80] sm:$0xff]
      %v1634 = vld [vmem:[#allocation2 + $0x90] sm:$0xff]
      %v1635 = vld [vmem:[#allocation2 + $0x98] sm:$0xff]
      %v1636 = vld [vmem:[#allocation2 + $0xa8] sm:$0xff]
      %v1637 = vld [vmem:[#allocation2 + $0xb0] sm:$0xff]
      %v1638 = vld [vmem:[#allocation2 + $0xc0] sm:$0xff]
      %v1639 = vld [vmem:[#allocation2 + $0xc8] sm:$0xff]
      %v1640 = vld [vmem:[#allocation2 + $0xd8] sm:$0xff]
      %v1641 = vld [vmem:[#allocation2 + $0xe0] sm:$0xff]
      %v1642 = vld [vmem:[#allocation2 + $0xf0] sm:$0xff]
      %v1643 = vld [vmem:[#allocation2 + $0xf8] sm:$0xff]
      %v1644 = vld [vmem:[#allocation2 + $0x108] sm:$0xff]
      %v1645 = vld [vmem:[#allocation2 + $0x110] sm:$0xff]
      %v1646 = vld [vmem:[#allocation2 + $0x120] sm:$0xff]
      %v1647 = vld [vmem:[#allocation2 + $0x128] sm:$0xff]
      %v1648 = vld [vmem:[#allocation2 + $0x138] sm:$0xff]
      %v1649 = vld [vmem:[#allocation2 + $0x140] sm:$0xff]
      %v1650 = vld [vmem:[#allocation2 + $0x150] sm:$0xff]
      %v1651 = vld [vmem:[#allocation2 + $0x158] sm:$0xff]
      %v1652 = vld [vmem:[#allocation2 + $0x168] sm:$0xff]
      %v1653 = vld [vmem:[#allocation2 + $0x170] sm:$0xff]
      %v1654 = vpack.c.bf16 %v1623, %v1622
      %v1655 = vpack.c.bf16 %v1625, %v1624
      %v1656 = vpack.c.bf16 %v1627, %v1626
      %v1657 = vpack.c.bf16 %v1629, %v1628
      %v1658 = vpack.c.bf16 %v1631, %v1630
      %v1659 = vpack.c.bf16 %v1633, %v1632
      %v1660 = vpack.c.bf16 %v1635, %v1634
      %v1661 = vpack.c.bf16 %v1637, %v1636
      %v1662 = vpack.c.bf16 %v1639, %v1638
      %v1663 = vpack.c.bf16 %v1641, %v1640
      %v1664 = vpack.c.bf16 %v1643, %v1642
      %v1665 = vpack.c.bf16 %v1645, %v1644
      %v1666 = vpack.c.bf16 %v1647, %v1646
      %v1667 = vpack.c.bf16 %v1649, %v1648
      %v1668 = vpack.c.bf16 %v1651, %v1650
      %v1669 = vpack.c.bf16 %v1653, %v1652
      %v1670 = vld [vmem:[%s3] sm:$0xf]
      %v1671 = vld [vmem:[%s3 + $0x4] sm:$0xf]
      %v1672 = vld [vmem:[%s3 + $0x8] sm:$0xf]
      %v1673 = vld [vmem:[%s3 + $0xc] sm:$0xf]
      %v1674 = vld [vmem:[#allocation2 + $0x1] sm:$0xff]
      %v1675 = vld [vmem:[#allocation2 + $0x9] sm:$0xff]
      %v1676 = vld [vmem:[#allocation2 + $0x19] sm:$0xff]
      %v1677 = vld [vmem:[#allocation2 + $0x21] sm:$0xff]
      %v1678 = vld [vmem:[#allocation2 + $0x31] sm:$0xff]
      %v1679 = vld [vmem:[#allocation2 + $0x39] sm:$0xff]
      %v1680 = vld [vmem:[#allocation2 + $0x49] sm:$0xff]
      %v1681 = vld [vmem:[#allocation2 + $0x51] sm:$0xff]
      %v1682 = vld [vmem:[#allocation2 + $0x61] sm:$0xff]
      %v1683 = vld [vmem:[#allocation2 + $0x69] sm:$0xff]
      %v1684 = vld [vmem:[#allocation2 + $0x79] sm:$0xff]
      %v1685 = vld [vmem:[#allocation2 + $0x81] sm:$0xff]
      %v1686 = vld [vmem:[#allocation2 + $0x91] sm:$0xff]
      %v1687 = vld [vmem:[#allocation2 + $0x99] sm:$0xff]
      %v1688 = vld [vmem:[#allocation2 + $0xa9] sm:$0xff]
      %v1689 = vld [vmem:[#allocation2 + $0xb1] sm:$0xff]
      %v1690 = vld [vmem:[#allocation2 + $0xc1] sm:$0xff]
      %v1691 = vld [vmem:[#allocation2 + $0xc9] sm:$0xff]
      %v1692 = vld [vmem:[#allocation2 + $0xd9] sm:$0xff]
      %v1693 = vld [vmem:[#allocation2 + $0xe1] sm:$0xff]
      %v1694 = vld [vmem:[#allocation2 + $0xf1] sm:$0xff]
      %v1695 = vld [vmem:[#allocation2 + $0xf9] sm:$0xff]
      %v1696 = vld [vmem:[#allocation2 + $0x109] sm:$0xff]
      %v1697 = vld [vmem:[#allocation2 + $0x111] sm:$0xff]
      %v1698 = vld [vmem:[#allocation2 + $0x121] sm:$0xff]
      %v1699 = vld [vmem:[#allocation2 + $0x129] sm:$0xff]
      %v1700 = vld [vmem:[#allocation2 + $0x139] sm:$0xff]
      %v1701 = vld [vmem:[#allocation2 + $0x141] sm:$0xff]
      %v1702 = vld [vmem:[#allocation2 + $0x151] sm:$0xff]
      %v1703 = vld [vmem:[#allocation2 + $0x159] sm:$0xff]
      %v1704 = vld [vmem:[#allocation2 + $0x169] sm:$0xff]
      %v1705 = vld [vmem:[#allocation2 + $0x171] sm:$0xff]
      %v1706 = vpack.c.bf16 %v1675, %v1674
      %v1707 = vpack.c.bf16 %v1677, %v1676
      %v1708 = vpack.c.bf16 %v1679, %v1678
      %v1709 = vpack.c.bf16 %v1681, %v1680
      %v1710 = vpack.c.bf16 %v1683, %v1682
      %v1711 = vpack.c.bf16 %v1685, %v1684
      %v1712 = vpack.c.bf16 %v1687, %v1686
      %v1713 = vpack.c.bf16 %v1689, %v1688
      %v1714 = vpack.c.bf16 %v1691, %v1690
      %v1715 = vpack.c.bf16 %v1693, %v1692
      %v1716 = vpack.c.bf16 %v1695, %v1694
      %v1717 = vpack.c.bf16 %v1697, %v1696
      %v1718 = vpack.c.bf16 %v1699, %v1698
      %v1719 = vpack.c.bf16 %v1701, %v1700
      %v1720 = vpack.c.bf16 %v1703, %v1702
      %v1721 = vpack.c.bf16 %v1705, %v1704
      %s1722 = scalar_lea.vmem %s3, 16
      %v1723 = vld [vmem:[%s1722] sm:$0xf]
      %v1724 = vld [vmem:[%s1722 + $0x4] sm:$0xf]
      %v1725 = vld [vmem:[%s1722 + $0x8] sm:$0xf]
      %v1726 = vld [vmem:[%s1722 + $0xc] sm:$0xf]
      %v1731 = vunpack.c.l.b16 %v1723
      %v1732 = vunpack.c.l.b16 %v1724
      %v1733 = vunpack.c.l.b16 %v1725
      %v1734 = vunpack.c.l.b16 %v1726
      %v1735 = vpack.c.b16 %v1732, %v1731
      %v1736 = vpack.c.b16 %v1734, %v1733
      %v1740 = vsel %vm1305, %v1706, 0
      %v1743 = vsel %vm1305, %v1707, 0
      %v1746 = vsel %vm1305, %v1708, 0
      %v1749 = vsel %vm1305, %v1709, 0
      %v1752 = vsel %vm1305, %v1710, 0
      %v1755 = vsel %vm1305, %v1711, 0
      %v1758 = vsel %vm1305, %v1712, 0
      %v1761 = vsel %vm1305, %v1713, 0
      %v1764 = vsel %vm1305, %v1714, 0
      %v1767 = vsel %vm1305, %v1715, 0
      %v1770 = vsel %vm1305, %v1716, 0
      %v1773 = vsel %vm1305, %v1717, 0
      %v1776 = vsel %vm1305, %v1718, 0
      %v1779 = vsel %vm1305, %v1719, 0
      %v1782 = vsel %vm1305, %v1720, 0
      %v1785 = vsel %vm1305, %v1721, 0
      %1787 = vmatpush.bf16.msra.mxu0 0
      %1788 = vmatpush.bf16.msra.mxu0 0
      %1789 = vmatpush.bf16.msra.mxu0 0
      %1790 = vmatpush.bf16.msra.mxu0 0
      %1791 = vmatpush.bf16.msra.mxu0 0
      %1792 = vmatpush.bf16.msra.mxu0 0
      %1793 = vmatpush.bf16.msra.mxu0 %v1736
      %1794 = vmatpush.bf16.msra.mxu0 %v1735
      %1795 = vmatmul.bf16.gmra.mxu0 %v1740
      %v1796 = vpop.f32.mrf.mxu0
      %v1797 = vadd.f32 0.0, %v1796
      %v1798 = vpop.f32.mrf.mxu0
      %v1799 = vadd.f32 0.0, %v1798
      %1800 = vmatmul.bf16.gmra.mxu0 %v1743
      %v1801 = vpop.f32.mrf.mxu0
      %v1802 = vadd.f32 0.0, %v1801
      %v1803 = vpop.f32.mrf.mxu0
      %v1804 = vadd.f32 0.0, %v1803
      %1805 = vmatmul.bf16.gmra.mxu0 %v1746
      %v1806 = vpop.f32.mrf.mxu0
      %v1807 = vadd.f32 0.0, %v1806
      %v1808 = vpop.f32.mrf.mxu0
      %v1809 = vadd.f32 0.0, %v1808
      %1810 = vmatmul.bf16.gmra.mxu0 %v1749
      %v1811 = vpop.f32.mrf.mxu0
      %v1812 = vadd.f32 0.0, %v1811
      %v1813 = vpop.f32.mrf.mxu0
      %v1814 = vadd.f32 0.0, %v1813
      %1815 = vmatmul.bf16.gmra.mxu0 %v1752
      %v1816 = vpop.f32.mrf.mxu0
      %v1817 = vadd.f32 0.0, %v1816
      %v1818 = vpop.f32.mrf.mxu0
      %v1819 = vadd.f32 0.0, %v1818
      %1820 = vmatmul.bf16.gmra.mxu0 %v1755
      %v1821 = vpop.f32.mrf.mxu0
      %v1822 = vadd.f32 0.0, %v1821
      %v1823 = vpop.f32.mrf.mxu0
      %v1824 = vadd.f32 0.0, %v1823
      %1825 = vmatmul.bf16.gmra.mxu0 %v1758
      %v1826 = vpop.f32.mrf.mxu0
      %v1827 = vadd.f32 0.0, %v1826
      %v1828 = vpop.f32.mrf.mxu0
      %v1829 = vadd.f32 0.0, %v1828
      %1830 = vmatmul.bf16.gmra.mxu0 %v1761
      %v1831 = vpop.f32.mrf.mxu0
      %v1832 = vadd.f32 0.0, %v1831
      %v1833 = vpop.f32.mrf.mxu0
      %v1834 = vadd.f32 0.0, %v1833
      %1835 = vmatmul.bf16.gmra.mxu0 %v1764
      %v1836 = vpop.f32.mrf.mxu0
      %v1837 = vadd.f32 0.0, %v1836
      %v1838 = vpop.f32.mrf.mxu0
      %v1839 = vadd.f32 0.0, %v1838
      %1840 = vmatmul.bf16.gmra.mxu0 %v1767
      %v1841 = vpop.f32.mrf.mxu0
      %v1842 = vadd.f32 0.0, %v1841
      %v1843 = vpop.f32.mrf.mxu0
      %v1844 = vadd.f32 0.0, %v1843
      %1845 = vmatmul.bf16.gmra.mxu0 %v1770
      %v1846 = vpop.f32.mrf.mxu0
      %v1847 = vadd.f32 0.0, %v1846
      %v1848 = vpop.f32.mrf.mxu0
      %v1849 = vadd.f32 0.0, %v1848
      %1850 = vmatmul.bf16.gmra.mxu0 %v1773
      %v1851 = vpop.f32.mrf.mxu0
      %v1852 = vadd.f32 0.0, %v1851
      %v1853 = vpop.f32.mrf.mxu0
      %v1854 = vadd.f32 0.0, %v1853
      %1855 = vmatmul.bf16.gmra.mxu0 %v1776
      %v1856 = vpop.f32.mrf.mxu0
      %v1857 = vadd.f32 0.0, %v1856
      %v1858 = vpop.f32.mrf.mxu0
      %v1859 = vadd.f32 0.0, %v1858
      %1860 = vmatmul.bf16.gmra.mxu0 %v1779
      %v1861 = vpop.f32.mrf.mxu0
      %v1862 = vadd.f32 0.0, %v1861
      %v1863 = vpop.f32.mrf.mxu0
      %v1864 = vadd.f32 0.0, %v1863
      %1865 = vmatmul.bf16.gmra.mxu0 %v1782
      %v1866 = vpop.f32.mrf.mxu0
      %v1867 = vadd.f32 0.0, %v1866
      %v1868 = vpop.f32.mrf.mxu0
      %v1869 = vadd.f32 0.0, %v1868
      %1870 = vmatmul.bf16.gmra.mxu0 %v1785
      %v1871 = vpop.f32.mrf.mxu0
      %v1872 = vadd.f32 0.0, %v1871
      %v1873 = vpop.f32.mrf.mxu0
      %v1874 = vadd.f32 0.0, %v1873
      %1875 = vdwg.mxu0
      %v1880 = vunpack.c.l.b16 %v1670
      %v1881 = vunpack.c.l.b16 %v1671
      %v1882 = vunpack.c.l.b16 %v1672
      %v1883 = vunpack.c.l.b16 %v1673
      %v1884 = vpack.c.b16 %v1881, %v1880
      %v1885 = vpack.c.b16 %v1883, %v1882
      %v1889 = vsel %vm1305, %v1654, 0
      %v1892 = vsel %vm1305, %v1655, 0
      %v1895 = vsel %vm1305, %v1656, 0
      %v1898 = vsel %vm1305, %v1657, 0
      %v1901 = vsel %vm1305, %v1658, 0
      %v1904 = vsel %vm1305, %v1659, 0
      %v1907 = vsel %vm1305, %v1660, 0
      %v1910 = vsel %vm1305, %v1661, 0
      %v1913 = vsel %vm1305, %v1662, 0
      %v1916 = vsel %vm1305, %v1663, 0
      %v1919 = vsel %vm1305, %v1664, 0
      %v1922 = vsel %vm1305, %v1665, 0
      %v1925 = vsel %vm1305, %v1666, 0
      %v1928 = vsel %vm1305, %v1667, 0
      %v1931 = vsel %vm1305, %v1668, 0
      %v1934 = vsel %vm1305, %v1669, 0
      %1936 = vmatpush.bf16.msra.mxu0 0
      %1937 = vmatpush.bf16.msra.mxu0 0
      %1938 = vmatpush.bf16.msra.mxu0 0
      %1939 = vmatpush.bf16.msra.mxu0 0
      %1940 = vmatpush.bf16.msra.mxu0 0
      %1941 = vmatpush.bf16.msra.mxu0 0
      %1942 = vmatpush.bf16.msra.mxu0 %v1885
      %1943 = vmatpush.bf16.msra.mxu0 %v1884
      %1944 = vmatmul.bf16.gmra.mxu0 %v1889
      %v1945 = vpop.f32.mrf.mxu0
      %v1946 = vadd.f32 %v1797, %v1945
      %v1947 = vpop.f32.mrf.mxu0
      %v1948 = vadd.f32 %v1799, %v1947
      %1949 = vmatmul.bf16.gmra.mxu0 %v1892
      %v1950 = vpop.f32.mrf.mxu0
      %v1951 = vadd.f32 %v1802, %v1950
      %v1952 = vpop.f32.mrf.mxu0
      %v1953 = vadd.f32 %v1804, %v1952
      %1954 = vmatmul.bf16.gmra.mxu0 %v1895
      %v1955 = vpop.f32.mrf.mxu0
      %v1956 = vadd.f32 %v1807, %v1955
      %v1957 = vpop.f32.mrf.mxu0
      %v1958 = vadd.f32 %v1809, %v1957
      %1959 = vmatmul.bf16.gmra.mxu0 %v1898
      %v1960 = vpop.f32.mrf.mxu0
      %v1961 = vadd.f32 %v1812, %v1960
      %v1962 = vpop.f32.mrf.mxu0
      %v1963 = vadd.f32 %v1814, %v1962
      %1964 = vmatmul.bf16.gmra.mxu0 %v1901
      %v1965 = vpop.f32.mrf.mxu0
      %v1966 = vadd.f32 %v1817, %v1965
      %v1967 = vpop.f32.mrf.mxu0
      %v1968 = vadd.f32 %v1819, %v1967
      %1969 = vmatmul.bf16.gmra.mxu0 %v1904
      %v1970 = vpop.f32.mrf.mxu0
      %v1971 = vadd.f32 %v1822, %v1970
      %v1972 = vpop.f32.mrf.mxu0
      %v1973 = vadd.f32 %v1824, %v1972
      %1974 = vmatmul.bf16.gmra.mxu0 %v1907
      %v1975 = vpop.f32.mrf.mxu0
      %v1976 = vadd.f32 %v1827, %v1975
      %v1977 = vpop.f32.mrf.mxu0
      %v1978 = vadd.f32 %v1829, %v1977
      %1979 = vmatmul.bf16.gmra.mxu0 %v1910
      %v1980 = vpop.f32.mrf.mxu0
      %v1981 = vadd.f32 %v1832, %v1980
      %v1982 = vpop.f32.mrf.mxu0
      %v1983 = vadd.f32 %v1834, %v1982
      %1984 = vmatmul.bf16.gmra.mxu0 %v1913
      %v1985 = vpop.f32.mrf.mxu0
      %v1986 = vadd.f32 %v1837, %v1985
      %v1987 = vpop.f32.mrf.mxu0
      %v1988 = vadd.f32 %v1839, %v1987
      %1989 = vmatmul.bf16.gmra.mxu0 %v1916
      %v1990 = vpop.f32.mrf.mxu0
      %v1991 = vadd.f32 %v1842, %v1990
      %v1992 = vpop.f32.mrf.mxu0
      %v1993 = vadd.f32 %v1844, %v1992
      %1994 = vmatmul.bf16.gmra.mxu0 %v1919
      %v1995 = vpop.f32.mrf.mxu0
      %v1996 = vadd.f32 %v1847, %v1995
      %v1997 = vpop.f32.mrf.mxu0
      %v1998 = vadd.f32 %v1849, %v1997
      %1999 = vmatmul.bf16.gmra.mxu0 %v1922
      %v2000 = vpop.f32.mrf.mxu0
      %v2001 = vadd.f32 %v1852, %v2000
      %v2002 = vpop.f32.mrf.mxu0
      %v2003 = vadd.f32 %v1854, %v2002
      %2004 = vmatmul.bf16.gmra.mxu0 %v1925
      %v2005 = vpop.f32.mrf.mxu0
      %v2006 = vadd.f32 %v1857, %v2005
      %v2007 = vpop.f32.mrf.mxu0
      %v2008 = vadd.f32 %v1859, %v2007
      %2009 = vmatmul.bf16.gmra.mxu0 %v1928
      %v2010 = vpop.f32.mrf.mxu0
      %v2011 = vadd.f32 %v1862, %v2010
      %v2012 = vpop.f32.mrf.mxu0
      %v2013 = vadd.f32 %v1864, %v2012
      %2014 = vmatmul.bf16.gmra.mxu0 %v1931
      %v2015 = vpop.f32.mrf.mxu0
      %v2016 = vadd.f32 %v1867, %v2015
      %v2017 = vpop.f32.mrf.mxu0
      %v2018 = vadd.f32 %v1869, %v2017
      %2019 = vmatmul.bf16.gmra.mxu0 %v1934
      %v2020 = vpop.f32.mrf.mxu0
      %v2021 = vadd.f32 %v1872, %v2020
      %v2022 = vpop.f32.mrf.mxu0
      %v2023 = vadd.f32 %v1874, %v2022
      %2024 = vdwg.mxu0
      %v2025 = vld [vmem:[#allocation2 + $0x2] sm:$0xff]
      %v2026 = vld [vmem:[#allocation2 + $0xa] sm:$0xff]
      %v2027 = vld [vmem:[#allocation2 + $0x1a] sm:$0xff]
      %v2028 = vld [vmem:[#allocation2 + $0x22] sm:$0xff]
      %v2029 = vld [vmem:[#allocation2 + $0x32] sm:$0xff]
      %v2030 = vld [vmem:[#allocation2 + $0x3a] sm:$0xff]
      %v2031 = vld [vmem:[#allocation2 + $0x4a] sm:$0xff]
      %v2032 = vld [vmem:[#allocation2 + $0x52] sm:$0xff]
      %v2033 = vld [vmem:[#allocation2 + $0x62] sm:$0xff]
      %v2034 = vld [vmem:[#allocation2 + $0x6a] sm:$0xff]
      %v2035 = vld [vmem:[#allocation2 + $0x7a] sm:$0xff]
      %v2036 = vld [vmem:[#allocation2 + $0x82] sm:$0xff]
      %v2037 = vld [vmem:[#allocation2 + $0x92] sm:$0xff]
      %v2038 = vld [vmem:[#allocation2 + $0x9a] sm:$0xff]
      %v2039 = vld [vmem:[#allocation2 + $0xaa] sm:$0xff]
      %v2040 = vld [vmem:[#allocation2 + $0xb2] sm:$0xff]
      %v2041 = vld [vmem:[#allocation2 + $0xc2] sm:$0xff]
      %v2042 = vld [vmem:[#allocation2 + $0xca] sm:$0xff]
      %v2043 = vld [vmem:[#allocation2 + $0xda] sm:$0xff]
      %v2044 = vld [vmem:[#allocation2 + $0xe2] sm:$0xff]
      %v2045 = vld [vmem:[#allocation2 + $0xf2] sm:$0xff]
      %v2046 = vld [vmem:[#allocation2 + $0xfa] sm:$0xff]
      %v2047 = vld [vmem:[#allocation2 + $0x10a] sm:$0xff]
      %v2048 = vld [vmem:[#allocation2 + $0x112] sm:$0xff]
      %v2049 = vld [vmem:[#allocation2 + $0x122] sm:$0xff]
      %v2050 = vld [vmem:[#allocation2 + $0x12a] sm:$0xff]
      %v2051 = vld [vmem:[#allocation2 + $0x13a] sm:$0xff]
      %v2052 = vld [vmem:[#allocation2 + $0x142] sm:$0xff]
      %v2053 = vld [vmem:[#allocation2 + $0x152] sm:$0xff]
      %v2054 = vld [vmem:[#allocation2 + $0x15a] sm:$0xff]
      %v2055 = vld [vmem:[#allocation2 + $0x16a] sm:$0xff]
      %v2056 = vld [vmem:[#allocation2 + $0x172] sm:$0xff]
      %v2057 = vpack.c.bf16 %v2026, %v2025
      %v2058 = vpack.c.bf16 %v2028, %v2027
      %v2059 = vpack.c.bf16 %v2030, %v2029
      %v2060 = vpack.c.bf16 %v2032, %v2031
      %v2061 = vpack.c.bf16 %v2034, %v2033
      %v2062 = vpack.c.bf16 %v2036, %v2035
      %v2063 = vpack.c.bf16 %v2038, %v2037
      %v2064 = vpack.c.bf16 %v2040, %v2039
      %v2065 = vpack.c.bf16 %v2042, %v2041
      %v2066 = vpack.c.bf16 %v2044, %v2043
      %v2067 = vpack.c.bf16 %v2046, %v2045
      %v2068 = vpack.c.bf16 %v2048, %v2047
      %v2069 = vpack.c.bf16 %v2050, %v2049
      %v2070 = vpack.c.bf16 %v2052, %v2051
      %v2071 = vpack.c.bf16 %v2054, %v2053
      %v2072 = vpack.c.bf16 %v2056, %v2055
      %s2073 = scalar_lea.vmem %s3, 32
      %v2074 = vld [vmem:[%s2073] sm:$0xf]
      %v2075 = vld [vmem:[%s2073 + $0x4] sm:$0xf]
      %v2076 = vld [vmem:[%s2073 + $0x8] sm:$0xf]
      %v2077 = vld [vmem:[%s2073 + $0xc] sm:$0xf]
      %v2082 = vunpack.c.l.b16 %v2074
      %v2083 = vunpack.c.l.b16 %v2075
      %v2084 = vunpack.c.l.b16 %v2076
      %v2085 = vunpack.c.l.b16 %v2077
      %v2086 = vpack.c.b16 %v2083, %v2082
      %v2087 = vpack.c.b16 %v2085, %v2084
      %v2091 = vsel %vm1305, %v2057, 0
      %v2094 = vsel %vm1305, %v2058, 0
      %v2097 = vsel %vm1305, %v2059, 0
      %v2100 = vsel %vm1305, %v2060, 0
      %v2103 = vsel %vm1305, %v2061, 0
      %v2106 = vsel %vm1305, %v2062, 0
      %v2109 = vsel %vm1305, %v2063, 0
      %v2112 = vsel %vm1305, %v2064, 0
      %v2115 = vsel %vm1305, %v2065, 0
      %v2118 = vsel %vm1305, %v2066, 0
      %v2121 = vsel %vm1305, %v2067, 0
      %v2124 = vsel %vm1305, %v2068, 0
      %v2127 = vsel %vm1305, %v2069, 0
      %v2130 = vsel %vm1305, %v2070, 0
      %v2133 = vsel %vm1305, %v2071, 0
      %v2136 = vsel %vm1305, %v2072, 0
      %2138 = vmatpush.bf16.msra.mxu0 0
      %2139 = vmatpush.bf16.msra.mxu0 0
      %2140 = vmatpush.bf16.msra.mxu0 0
      %2141 = vmatpush.bf16.msra.mxu0 0
      %2142 = vmatpush.bf16.msra.mxu0 0
      %2143 = vmatpush.bf16.msra.mxu0 0
      %2144 = vmatpush.bf16.msra.mxu0 %v2087
      %2145 = vmatpush.bf16.msra.mxu0 %v2086
      %2146 = vmatmul.bf16.gmra.mxu0 %v2091
      %v2147 = vpop.f32.mrf.mxu0
      %v2148 = vadd.f32 0.0, %v2147
      %v2149 = vpop.f32.mrf.mxu0
      %v2150 = vadd.f32 0.0, %v2149
      %2151 = vmatmul.bf16.gmra.mxu0 %v2094
      %v2152 = vpop.f32.mrf.mxu0
      %v2153 = vadd.f32 0.0, %v2152
      %v2154 = vpop.f32.mrf.mxu0
      %v2155 = vadd.f32 0.0, %v2154
      %2156 = vmatmul.bf16.gmra.mxu0 %v2097
      %v2157 = vpop.f32.mrf.mxu0
      %v2158 = vadd.f32 0.0, %v2157
      %v2159 = vpop.f32.mrf.mxu0
      %v2160 = vadd.f32 0.0, %v2159
      %2161 = vmatmul.bf16.gmra.mxu0 %v2100
      %v2162 = vpop.f32.mrf.mxu0
      %v2163 = vadd.f32 0.0, %v2162
      %v2164 = vpop.f32.mrf.mxu0
      %v2165 = vadd.f32 0.0, %v2164
      %2166 = vmatmul.bf16.gmra.mxu0 %v2103
      %v2167 = vpop.f32.mrf.mxu0
      %v2168 = vadd.f32 0.0, %v2167
      %v2169 = vpop.f32.mrf.mxu0
      %v2170 = vadd.f32 0.0, %v2169
      %2171 = vmatmul.bf16.gmra.mxu0 %v2106
      %v2172 = vpop.f32.mrf.mxu0
      %v2173 = vadd.f32 0.0, %v2172
      %v2174 = vpop.f32.mrf.mxu0
      %v2175 = vadd.f32 0.0, %v2174
      %2176 = vmatmul.bf16.gmra.mxu0 %v2109
      %v2177 = vpop.f32.mrf.mxu0
      %v2178 = vadd.f32 0.0, %v2177
      %v2179 = vpop.f32.mrf.mxu0
      %v2180 = vadd.f32 0.0, %v2179
      %2181 = vmatmul.bf16.gmra.mxu0 %v2112
      %v2182 = vpop.f32.mrf.mxu0
      %v2183 = vadd.f32 0.0, %v2182
      %v2184 = vpop.f32.mrf.mxu0
      %v2185 = vadd.f32 0.0, %v2184
      %2186 = vmatmul.bf16.gmra.mxu0 %v2115
      %v2187 = vpop.f32.mrf.mxu0
      %v2188 = vadd.f32 0.0, %v2187
      %v2189 = vpop.f32.mrf.mxu0
      %v2190 = vadd.f32 0.0, %v2189
      %2191 = vmatmul.bf16.gmra.mxu0 %v2118
      %v2192 = vpop.f32.mrf.mxu0
      %v2193 = vadd.f32 0.0, %v2192
      %v2194 = vpop.f32.mrf.mxu0
      %v2195 = vadd.f32 0.0, %v2194
      %2196 = vmatmul.bf16.gmra.mxu0 %v2121
      %v2197 = vpop.f32.mrf.mxu0
      %v2198 = vadd.f32 0.0, %v2197
      %v2199 = vpop.f32.mrf.mxu0
      %v2200 = vadd.f32 0.0, %v2199
      %2201 = vmatmul.bf16.gmra.mxu0 %v2124
      %v2202 = vpop.f32.mrf.mxu0
      %v2203 = vadd.f32 0.0, %v2202
      %v2204 = vpop.f32.mrf.mxu0
      %v2205 = vadd.f32 0.0, %v2204
      %2206 = vmatmul.bf16.gmra.mxu0 %v2127
      %v2207 = vpop.f32.mrf.mxu0
      %v2208 = vadd.f32 0.0, %v2207
      %v2209 = vpop.f32.mrf.mxu0
      %v2210 = vadd.f32 0.0, %v2209
      %2211 = vmatmul.bf16.gmra.mxu0 %v2130
      %v2212 = vpop.f32.mrf.mxu0
      %v2213 = vadd.f32 0.0, %v2212
      %v2214 = vpop.f32.mrf.mxu0
      %v2215 = vadd.f32 0.0, %v2214
      %2216 = vmatmul.bf16.gmra.mxu0 %v2133
      %v2217 = vpop.f32.mrf.mxu0
      %v2218 = vadd.f32 0.0, %v2217
      %v2219 = vpop.f32.mrf.mxu0
      %v2220 = vadd.f32 0.0, %v2219
      %2221 = vmatmul.bf16.gmra.mxu0 %v2136
      %v2222 = vpop.f32.mrf.mxu0
      %v2223 = vadd.f32 0.0, %v2222
      %v2224 = vpop.f32.mrf.mxu0
      %v2225 = vadd.f32 0.0, %v2224
      %2226 = vdwg.mxu0
      %v2227 = vadd.f32 %v1946, %v2148
      %v2228 = vadd.f32 %v1948, %v2150
      %v2229 = vadd.f32 %v1951, %v2153
      %v2230 = vadd.f32 %v1953, %v2155
      %v2231 = vadd.f32 %v1956, %v2158
      %v2232 = vadd.f32 %v1958, %v2160
      %v2233 = vadd.f32 %v1961, %v2163
      %v2234 = vadd.f32 %v1963, %v2165
      %v2235 = vadd.f32 %v1966, %v2168
      %v2236 = vadd.f32 %v1968, %v2170
      %v2237 = vadd.f32 %v1971, %v2173
      %v2238 = vadd.f32 %v1973, %v2175
      %v2239 = vadd.f32 %v1976, %v2178
      %v2240 = vadd.f32 %v1978, %v2180
      %v2241 = vadd.f32 %v1981, %v2183
      %v2242 = vadd.f32 %v1983, %v2185
      %v2243 = vadd.f32 %v1986, %v2188
      %v2244 = vadd.f32 %v1988, %v2190
      %v2245 = vadd.f32 %v1991, %v2193
      %v2246 = vadd.f32 %v1993, %v2195
      %v2247 = vadd.f32 %v1996, %v2198
      %v2248 = vadd.f32 %v1998, %v2200
      %v2249 = vadd.f32 %v2001, %v2203
      %v2250 = vadd.f32 %v2003, %v2205
      %v2251 = vadd.f32 %v2006, %v2208
      %v2252 = vadd.f32 %v2008, %v2210
      %v2253 = vadd.f32 %v2011, %v2213
      %v2254 = vadd.f32 %v2013, %v2215
      %v2255 = vadd.f32 %v2016, %v2218
      %v2256 = vadd.f32 %v2018, %v2220
      %v2257 = vadd.f32 %v2021, %v2223
      %v2258 = vadd.f32 %v2023, %v2225
      %v2259 = vld [vmem:[#allocation2 + $0x3] sm:$0xff]
      %v2260 = vld [vmem:[#allocation2 + $0xb] sm:$0xff]
      %v2261 = vld [vmem:[#allocation2 + $0x1b] sm:$0xff]
      %v2262 = vld [vmem:[#allocation2 + $0x23] sm:$0xff]
      %v2263 = vld [vmem:[#allocation2 + $0x33] sm:$0xff]
      %v2264 = vld [vmem:[#allocation2 + $0x3b] sm:$0xff]
      %v2265 = vld [vmem:[#allocation2 + $0x4b] sm:$0xff]
      %v2266 = vld [vmem:[#allocation2 + $0x53] sm:$0xff]
      %v2267 = vld [vmem:[#allocation2 + $0x63] sm:$0xff]
      %v2268 = vld [vmem:[#allocation2 + $0x6b] sm:$0xff]
      %v2269 = vld [vmem:[#allocation2 + $0x7b] sm:$0xff]
      %v2270 = vld [vmem:[#allocation2 + $0x83] sm:$0xff]
      %v2271 = vld [vmem:[#allocation2 + $0x93] sm:$0xff]
      %v2272 = vld [vmem:[#allocation2 + $0x9b] sm:$0xff]
      %v2273 = vld [vmem:[#allocation2 + $0xab] sm:$0xff]
      %v2274 = vld [vmem:[#allocation2 + $0xb3] sm:$0xff]
      %v2275 = vld [vmem:[#allocation2 + $0xc3] sm:$0xff]
      %v2276 = vld [vmem:[#allocation2 + $0xcb] sm:$0xff]
      %v2277 = vld [vmem:[#allocation2 + $0xdb] sm:$0xff]
      %v2278 = vld [vmem:[#allocation2 + $0xe3] sm:$0xff]
      %v2279 = vld [vmem:[#allocation2 + $0xf3] sm:$0xff]
      %v2280 = vld [vmem:[#allocation2 + $0xfb] sm:$0xff]
      %v2281 = vld [vmem:[#allocation2 + $0x10b] sm:$0xff]
      %v2282 = vld [vmem:[#allocation2 + $0x113] sm:$0xff]
      %v2283 = vld [vmem:[#allocation2 + $0x123] sm:$0xff]
      %v2284 = vld [vmem:[#allocation2 + $0x12b] sm:$0xff]
      %v2285 = vld [vmem:[#allocation2 + $0x13b] sm:$0xff]
      %v2286 = vld [vmem:[#allocation2 + $0x143] sm:$0xff]
      %v2287 = vld [vmem:[#allocation2 + $0x153] sm:$0xff]
      %v2288 = vld [vmem:[#allocation2 + $0x15b] sm:$0xff]
      %v2289 = vld [vmem:[#allocation2 + $0x16b] sm:$0xff]
      %v2290 = vld [vmem:[#allocation2 + $0x173] sm:$0xff]
      %v2291 = vpack.c.bf16 %v2260, %v2259
      %v2292 = vpack.c.bf16 %v2262, %v2261
      %v2293 = vpack.c.bf16 %v2264, %v2263
      %v2294 = vpack.c.bf16 %v2266, %v2265
      %v2295 = vpack.c.bf16 %v2268, %v2267
      %v2296 = vpack.c.bf16 %v2270, %v2269
      %v2297 = vpack.c.bf16 %v2272, %v2271
      %v2298 = vpack.c.bf16 %v2274, %v2273
      %v2299 = vpack.c.bf16 %v2276, %v2275
      %v2300 = vpack.c.bf16 %v2278, %v2277
      %v2301 = vpack.c.bf16 %v2280, %v2279
      %v2302 = vpack.c.bf16 %v2282, %v2281
      %v2303 = vpack.c.bf16 %v2284, %v2283
      %v2304 = vpack.c.bf16 %v2286, %v2285
      %v2305 = vpack.c.bf16 %v2288, %v2287
      %v2306 = vpack.c.bf16 %v2290, %v2289
      %s2307 = scalar_lea.vmem %s3, 48
      %v2308 = vld [vmem:[%s2307] sm:$0xf]
      %v2309 = vld [vmem:[%s2307 + $0x4] sm:$0xf]
      %v2310 = vld [vmem:[%s2307 + $0x8] sm:$0xf]
      %v2311 = vld [vmem:[%s2307 + $0xc] sm:$0xf]
      %v2316 = vunpack.c.l.b16 %v2308
      %v2317 = vunpack.c.l.b16 %v2309
      %v2318 = vunpack.c.l.b16 %v2310
      %v2319 = vunpack.c.l.b16 %v2311
      %v2320 = vpack.c.b16 %v2317, %v2316
      %v2321 = vpack.c.b16 %v2319, %v2318
      %v2325 = vsel %vm1305, %v2291, 0
      %v2328 = vsel %vm1305, %v2292, 0
      %v2331 = vsel %vm1305, %v2293, 0
      %v2334 = vsel %vm1305, %v2294, 0
      %v2337 = vsel %vm1305, %v2295, 0
      %v2340 = vsel %vm1305, %v2296, 0
      %v2343 = vsel %vm1305, %v2297, 0
      %v2346 = vsel %vm1305, %v2298, 0
      %v2349 = vsel %vm1305, %v2299, 0
      %v2352 = vsel %vm1305, %v2300, 0
      %v2355 = vsel %vm1305, %v2301, 0
      %v2358 = vsel %vm1305, %v2302, 0
      %v2361 = vsel %vm1305, %v2303, 0
      %v2364 = vsel %vm1305, %v2304, 0
      %v2367 = vsel %vm1305, %v2305, 0
      %v2370 = vsel %vm1305, %v2306, 0
      %2372 = vmatpush.bf16.msra.mxu0 0
      %2373 = vmatpush.bf16.msra.mxu0 0
      %2374 = vmatpush.bf16.msra.mxu0 0
      %2375 = vmatpush.bf16.msra.mxu0 0
      %2376 = vmatpush.bf16.msra.mxu0 0
      %2377 = vmatpush.bf16.msra.mxu0 0
      %2378 = vmatpush.bf16.msra.mxu0 %v2321
      %2379 = vmatpush.bf16.msra.mxu0 %v2320
      %2380 = vmatmul.bf16.gmra.mxu0 %v2325
      %v2381 = vpop.f32.mrf.mxu0
      %v2382 = vadd.f32 0.0, %v2381
      %v2383 = vpop.f32.mrf.mxu0
      %v2384 = vadd.f32 0.0, %v2383
      %2385 = vmatmul.bf16.gmra.mxu0 %v2328
      %v2386 = vpop.f32.mrf.mxu0
      %v2387 = vadd.f32 0.0, %v2386
      %v2388 = vpop.f32.mrf.mxu0
      %v2389 = vadd.f32 0.0, %v2388
      %2390 = vmatmul.bf16.gmra.mxu0 %v2331
      %v2391 = vpop.f32.mrf.mxu0
      %v2392 = vadd.f32 0.0, %v2391
      %v2393 = vpop.f32.mrf.mxu0
      %v2394 = vadd.f32 0.0, %v2393
      %2395 = vmatmul.bf16.gmra.mxu0 %v2334
      %v2396 = vpop.f32.mrf.mxu0
      %v2397 = vadd.f32 0.0, %v2396
      %v2398 = vpop.f32.mrf.mxu0
      %v2399 = vadd.f32 0.0, %v2398
      %2400 = vmatmul.bf16.gmra.mxu0 %v2337
      %v2401 = vpop.f32.mrf.mxu0
      %v2402 = vadd.f32 0.0, %v2401
      %v2403 = vpop.f32.mrf.mxu0
      %v2404 = vadd.f32 0.0, %v2403
      %2405 = vmatmul.bf16.gmra.mxu0 %v2340
      %v2406 = vpop.f32.mrf.mxu0
      %v2407 = vadd.f32 0.0, %v2406
      %v2408 = vpop.f32.mrf.mxu0
      %v2409 = vadd.f32 0.0, %v2408
      %2410 = vmatmul.bf16.gmra.mxu0 %v2343
      %v2411 = vpop.f32.mrf.mxu0
      %v2412 = vadd.f32 0.0, %v2411
      %v2413 = vpop.f32.mrf.mxu0
      %v2414 = vadd.f32 0.0, %v2413
      %2415 = vmatmul.bf16.gmra.mxu0 %v2346
      %v2416 = vpop.f32.mrf.mxu0
      %v2417 = vadd.f32 0.0, %v2416
      %v2418 = vpop.f32.mrf.mxu0
      %v2419 = vadd.f32 0.0, %v2418
      %2420 = vmatmul.bf16.gmra.mxu0 %v2349
      %v2421 = vpop.f32.mrf.mxu0
      %v2422 = vadd.f32 0.0, %v2421
      %v2423 = vpop.f32.mrf.mxu0
      %v2424 = vadd.f32 0.0, %v2423
      %2425 = vmatmul.bf16.gmra.mxu0 %v2352
      %v2426 = vpop.f32.mrf.mxu0
      %v2427 = vadd.f32 0.0, %v2426
      %v2428 = vpop.f32.mrf.mxu0
      %v2429 = vadd.f32 0.0, %v2428
      %2430 = vmatmul.bf16.gmra.mxu0 %v2355
      %v2431 = vpop.f32.mrf.mxu0
      %v2432 = vadd.f32 0.0, %v2431
      %v2433 = vpop.f32.mrf.mxu0
      %v2434 = vadd.f32 0.0, %v2433
      %2435 = vmatmul.bf16.gmra.mxu0 %v2358
      %v2436 = vpop.f32.mrf.mxu0
      %v2437 = vadd.f32 0.0, %v2436
      %v2438 = vpop.f32.mrf.mxu0
      %v2439 = vadd.f32 0.0, %v2438
      %2440 = vmatmul.bf16.gmra.mxu0 %v2361
      %v2441 = vpop.f32.mrf.mxu0
      %v2442 = vadd.f32 0.0, %v2441
      %v2443 = vpop.f32.mrf.mxu0
      %v2444 = vadd.f32 0.0, %v2443
      %2445 = vmatmul.bf16.gmra.mxu0 %v2364
      %v2446 = vpop.f32.mrf.mxu0
      %v2447 = vadd.f32 0.0, %v2446
      %v2448 = vpop.f32.mrf.mxu0
      %v2449 = vadd.f32 0.0, %v2448
      %2450 = vmatmul.bf16.gmra.mxu0 %v2367
      %v2451 = vpop.f32.mrf.mxu0
      %v2452 = vadd.f32 0.0, %v2451
      %v2453 = vpop.f32.mrf.mxu0
      %v2454 = vadd.f32 0.0, %v2453
      %2455 = vmatmul.bf16.gmra.mxu0 %v2370
      %v2456 = vpop.f32.mrf.mxu0
      %v2457 = vadd.f32 0.0, %v2456
      %v2458 = vpop.f32.mrf.mxu0
      %v2459 = vadd.f32 0.0, %v2458
      %2460 = vdwg.mxu0
      %v2461 = vadd.f32 %v2227, %v2382
      %v2462 = vadd.f32 %v2228, %v2384
      %v2463 = vadd.f32 %v2229, %v2387
      %v2464 = vadd.f32 %v2230, %v2389
      %v2465 = vadd.f32 %v2231, %v2392
      %v2466 = vadd.f32 %v2232, %v2394
      %v2467 = vadd.f32 %v2233, %v2397
      %v2468 = vadd.f32 %v2234, %v2399
      %v2469 = vadd.f32 %v2235, %v2402
      %v2470 = vadd.f32 %v2236, %v2404
      %v2471 = vadd.f32 %v2237, %v2407
      %v2472 = vadd.f32 %v2238, %v2409
      %v2473 = vadd.f32 %v2239, %v2412
      %v2474 = vadd.f32 %v2240, %v2414
      %v2475 = vadd.f32 %v2241, %v2417
      %v2476 = vadd.f32 %v2242, %v2419
      %v2477 = vadd.f32 %v2243, %v2422
      %v2478 = vadd.f32 %v2244, %v2424
      %v2479 = vadd.f32 %v2245, %v2427
      %v2480 = vadd.f32 %v2246, %v2429
      %v2481 = vadd.f32 %v2247, %v2432
      %v2482 = vadd.f32 %v2248, %v2434
      %v2483 = vadd.f32 %v2249, %v2437
      %v2484 = vadd.f32 %v2250, %v2439
      %v2485 = vadd.f32 %v2251, %v2442
      %v2486 = vadd.f32 %v2252, %v2444
      %v2487 = vadd.f32 %v2253, %v2447
      %v2488 = vadd.f32 %v2254, %v2449
      %v2489 = vadd.f32 %v2255, %v2452
      %v2490 = vadd.f32 %v2256, %v2454
      %v2491 = vadd.f32 %v2257, %v2457
      %v2492 = vadd.f32 %v2258, %v2459
      %v2493 = vld [vmem:[#allocation2 + $0x4] sm:$0xff]
      %v2494 = vld [vmem:[#allocation2 + $0xc] sm:$0xff]
      %v2495 = vld [vmem:[#allocation2 + $0x1c] sm:$0xff]
      %v2496 = vld [vmem:[#allocation2 + $0x24] sm:$0xff]
      %v2497 = vld [vmem:[#allocation2 + $0x34] sm:$0xff]
      %v2498 = vld [vmem:[#allocation2 + $0x3c] sm:$0xff]
      %v2499 = vld [vmem:[#allocation2 + $0x4c] sm:$0xff]
      %v2500 = vld [vmem:[#allocation2 + $0x54] sm:$0xff]
      %v2501 = vld [vmem:[#allocation2 + $0x64] sm:$0xff]
      %v2502 = vld [vmem:[#allocation2 + $0x6c] sm:$0xff]
      %v2503 = vld [vmem:[#allocation2 + $0x7c] sm:$0xff]
      %v2504 = vld [vmem:[#allocation2 + $0x84] sm:$0xff]
      %v2505 = vld [vmem:[#allocation2 + $0x94] sm:$0xff]
      %v2506 = vld [vmem:[#allocation2 + $0x9c] sm:$0xff]
      %v2507 = vld [vmem:[#allocation2 + $0xac] sm:$0xff]
      %v2508 = vld [vmem:[#allocation2 + $0xb4] sm:$0xff]
      %v2509 = vld [vmem:[#allocation2 + $0xc4] sm:$0xff]
      %v2510 = vld [vmem:[#allocation2 + $0xcc] sm:$0xff]
      %v2511 = vld [vmem:[#allocation2 + $0xdc] sm:$0xff]
      %v2512 = vld [vmem:[#allocation2 + $0xe4] sm:$0xff]
      %v2513 = vld [vmem:[#allocation2 + $0xf4] sm:$0xff]
      %v2514 = vld [vmem:[#allocation2 + $0xfc] sm:$0xff]
      %v2515 = vld [vmem:[#allocation2 + $0x10c] sm:$0xff]
      %v2516 = vld [vmem:[#allocation2 + $0x114] sm:$0xff]
      %v2517 = vld [vmem:[#allocation2 + $0x124] sm:$0xff]
      %v2518 = vld [vmem:[#allocation2 + $0x12c] sm:$0xff]
      %v2519 = vld [vmem:[#allocation2 + $0x13c] sm:$0xff]
      %v2520 = vld [vmem:[#allocation2 + $0x144] sm:$0xff]
      %v2521 = vld [vmem:[#allocation2 + $0x154] sm:$0xff]
      %v2522 = vld [vmem:[#allocation2 + $0x15c] sm:$0xff]
      %v2523 = vld [vmem:[#allocation2 + $0x16c] sm:$0xff]
      %v2524 = vld [vmem:[#allocation2 + $0x174] sm:$0xff]
      %v2525 = vpack.c.bf16 %v2494, %v2493
      %v2526 = vpack.c.bf16 %v2496, %v2495
      %v2527 = vpack.c.bf16 %v2498, %v2497
      %v2528 = vpack.c.bf16 %v2500, %v2499
      %v2529 = vpack.c.bf16 %v2502, %v2501
      %v2530 = vpack.c.bf16 %v2504, %v2503
      %v2531 = vpack.c.bf16 %v2506, %v2505
      %v2532 = vpack.c.bf16 %v2508, %v2507
      %v2533 = vpack.c.bf16 %v2510, %v2509
      %v2534 = vpack.c.bf16 %v2512, %v2511
      %v2535 = vpack.c.bf16 %v2514, %v2513
      %v2536 = vpack.c.bf16 %v2516, %v2515
      %v2537 = vpack.c.bf16 %v2518, %v2517
      %v2538 = vpack.c.bf16 %v2520, %v2519
      %v2539 = vpack.c.bf16 %v2522, %v2521
      %v2540 = vpack.c.bf16 %v2524, %v2523
      %s2541 = scalar_lea.vmem %s3, 64
      %v2542 = vld [vmem:[%s2541] sm:$0xf]
      %v2543 = vld [vmem:[%s2541 + $0x4] sm:$0xf]
      %v2544 = vld [vmem:[%s2541 + $0x8] sm:$0xf]
      %v2545 = vld [vmem:[%s2541 + $0xc] sm:$0xf]
      %v2550 = vunpack.c.l.b16 %v2542
      %v2551 = vunpack.c.l.b16 %v2543
      %v2552 = vunpack.c.l.b16 %v2544
      %v2553 = vunpack.c.l.b16 %v2545
      %v2554 = vpack.c.b16 %v2551, %v2550
      %v2555 = vpack.c.b16 %v2553, %v2552
      %v2559 = vsel %vm1305, %v2525, 0
      %v2562 = vsel %vm1305, %v2526, 0
      %v2565 = vsel %vm1305, %v2527, 0
      %v2568 = vsel %vm1305, %v2528, 0
      %v2571 = vsel %vm1305, %v2529, 0
      %v2574 = vsel %vm1305, %v2530, 0
      %v2577 = vsel %vm1305, %v2531, 0
      %v2580 = vsel %vm1305, %v2532, 0
      %v2583 = vsel %vm1305, %v2533, 0
      %v2586 = vsel %vm1305, %v2534, 0
      %v2589 = vsel %vm1305, %v2535, 0
      %v2592 = vsel %vm1305, %v2536, 0
      %v2595 = vsel %vm1305, %v2537, 0
      %v2598 = vsel %vm1305, %v2538, 0
      %v2601 = vsel %vm1305, %v2539, 0
      %v2604 = vsel %vm1305, %v2540, 0
      %2606 = vmatpush.bf16.msra.mxu0 0
      %2607 = vmatpush.bf16.msra.mxu0 0
      %2608 = vmatpush.bf16.msra.mxu0 0
      %2609 = vmatpush.bf16.msra.mxu0 0
      %2610 = vmatpush.bf16.msra.mxu0 0
      %2611 = vmatpush.bf16.msra.mxu0 0
      %2612 = vmatpush.bf16.msra.mxu0 %v2555
      %2613 = vmatpush.bf16.msra.mxu0 %v2554
      %2614 = vmatmul.bf16.gmra.mxu0 %v2559
      %v2615 = vpop.f32.mrf.mxu0
      %v2616 = vadd.f32 0.0, %v2615
      %v2617 = vpop.f32.mrf.mxu0
      %v2618 = vadd.f32 0.0, %v2617
      %2619 = vmatmul.bf16.gmra.mxu0 %v2562
      %v2620 = vpop.f32.mrf.mxu0
      %v2621 = vadd.f32 0.0, %v2620
      %v2622 = vpop.f32.mrf.mxu0
      %v2623 = vadd.f32 0.0, %v2622
      %2624 = vmatmul.bf16.gmra.mxu0 %v2565
      %v2625 = vpop.f32.mrf.mxu0
      %v2626 = vadd.f32 0.0, %v2625
      %v2627 = vpop.f32.mrf.mxu0
      %v2628 = vadd.f32 0.0, %v2627
      %2629 = vmatmul.bf16.gmra.mxu0 %v2568
      %v2630 = vpop.f32.mrf.mxu0
      %v2631 = vadd.f32 0.0, %v2630
      %v2632 = vpop.f32.mrf.mxu0
      %v2633 = vadd.f32 0.0, %v2632
      %2634 = vmatmul.bf16.gmra.mxu0 %v2571
      %v2635 = vpop.f32.mrf.mxu0
      %v2636 = vadd.f32 0.0, %v2635
      %v2637 = vpop.f32.mrf.mxu0
      %v2638 = vadd.f32 0.0, %v2637
      %2639 = vmatmul.bf16.gmra.mxu0 %v2574
      %v2640 = vpop.f32.mrf.mxu0
      %v2641 = vadd.f32 0.0, %v2640
      %v2642 = vpop.f32.mrf.mxu0
      %v2643 = vadd.f32 0.0, %v2642
      %2644 = vmatmul.bf16.gmra.mxu0 %v2577
      %v2645 = vpop.f32.mrf.mxu0
      %v2646 = vadd.f32 0.0, %v2645
      %v2647 = vpop.f32.mrf.mxu0
      %v2648 = vadd.f32 0.0, %v2647
      %2649 = vmatmul.bf16.gmra.mxu0 %v2580
      %v2650 = vpop.f32.mrf.mxu0
      %v2651 = vadd.f32 0.0, %v2650
      %v2652 = vpop.f32.mrf.mxu0
      %v2653 = vadd.f32 0.0, %v2652
      %2654 = vmatmul.bf16.gmra.mxu0 %v2583
      %v2655 = vpop.f32.mrf.mxu0
      %v2656 = vadd.f32 0.0, %v2655
      %v2657 = vpop.f32.mrf.mxu0
      %v2658 = vadd.f32 0.0, %v2657
      %2659 = vmatmul.bf16.gmra.mxu0 %v2586
      %v2660 = vpop.f32.mrf.mxu0
      %v2661 = vadd.f32 0.0, %v2660
      %v2662 = vpop.f32.mrf.mxu0
      %v2663 = vadd.f32 0.0, %v2662
      %2664 = vmatmul.bf16.gmra.mxu0 %v2589
      %v2665 = vpop.f32.mrf.mxu0
      %v2666 = vadd.f32 0.0, %v2665
      %v2667 = vpop.f32.mrf.mxu0
      %v2668 = vadd.f32 0.0, %v2667
      %2669 = vmatmul.bf16.gmra.mxu0 %v2592
      %v2670 = vpop.f32.mrf.mxu0
      %v2671 = vadd.f32 0.0, %v2670
      %v2672 = vpop.f32.mrf.mxu0
      %v2673 = vadd.f32 0.0, %v2672
      %2674 = vmatmul.bf16.gmra.mxu0 %v2595
      %v2675 = vpop.f32.mrf.mxu0
      %v2676 = vadd.f32 0.0, %v2675
      %v2677 = vpop.f32.mrf.mxu0
      %v2678 = vadd.f32 0.0, %v2677
      %2679 = vmatmul.bf16.gmra.mxu0 %v2598
      %v2680 = vpop.f32.mrf.mxu0
      %v2681 = vadd.f32 0.0, %v2680
      %v2682 = vpop.f32.mrf.mxu0
      %v2683 = vadd.f32 0.0, %v2682
      %2684 = vmatmul.bf16.gmra.mxu0 %v2601
      %v2685 = vpop.f32.mrf.mxu0
      %v2686 = vadd.f32 0.0, %v2685
      %v2687 = vpop.f32.mrf.mxu0
      %v2688 = vadd.f32 0.0, %v2687
      %2689 = vmatmul.bf16.gmra.mxu0 %v2604
      %v2690 = vpop.f32.mrf.mxu0
      %v2691 = vadd.f32 0.0, %v2690
      %v2692 = vpop.f32.mrf.mxu0
      %v2693 = vadd.f32 0.0, %v2692
      %2694 = vdwg.mxu0
      %v2695 = vadd.f32 %v2461, %v2616
      %v2696 = vadd.f32 %v2462, %v2618
      %v2697 = vadd.f32 %v2463, %v2621
      %v2698 = vadd.f32 %v2464, %v2623
      %v2699 = vadd.f32 %v2465, %v2626
      %v2700 = vadd.f32 %v2466, %v2628
      %v2701 = vadd.f32 %v2467, %v2631
      %v2702 = vadd.f32 %v2468, %v2633
      %v2703 = vadd.f32 %v2469, %v2636
      %v2704 = vadd.f32 %v2470, %v2638
      %v2705 = vadd.f32 %v2471, %v2641
      %v2706 = vadd.f32 %v2472, %v2643
      %v2707 = vadd.f32 %v2473, %v2646
      %v2708 = vadd.f32 %v2474, %v2648
      %v2709 = vadd.f32 %v2475, %v2651
      %v2710 = vadd.f32 %v2476, %v2653
      %v2711 = vadd.f32 %v2477, %v2656
      %v2712 = vadd.f32 %v2478, %v2658
      %v2713 = vadd.f32 %v2479, %v2661
      %v2714 = vadd.f32 %v2480, %v2663
      %v2715 = vadd.f32 %v2481, %v2666
      %v2716 = vadd.f32 %v2482, %v2668
      %v2717 = vadd.f32 %v2483, %v2671
      %v2718 = vadd.f32 %v2484, %v2673
      %v2719 = vadd.f32 %v2485, %v2676
      %v2720 = vadd.f32 %v2486, %v2678
      %v2721 = vadd.f32 %v2487, %v2681
      %v2722 = vadd.f32 %v2488, %v2683
      %v2723 = vadd.f32 %v2489, %v2686
      %v2724 = vadd.f32 %v2490, %v2688
      %v2725 = vadd.f32 %v2491, %v2691
      %v2726 = vadd.f32 %v2492, %v2693
      %s2727 = scalar_lea.vmem [#allocation2], 24
      %v2728 = vld [vmem:[%s2727] sm:$0xff]
      %v2729 = vld [vmem:[%s2727 + $0x8] sm:$0xff]
      %v2730 = vld [vmem:[%s2727 + $0x18] sm:$0xff]
      %v2731 = vld [vmem:[%s2727 + $0x20] sm:$0xff]
      %v2732 = vld [vmem:[%s2727 + $0x30] sm:$0xff]
      %v2733 = vld [vmem:[%s2727 + $0x38] sm:$0xff]
      %v2734 = vld [vmem:[%s2727 + $0x48] sm:$0xff]
      %v2735 = vld [vmem:[%s2727 + $0x50] sm:$0xff]
      %v2736 = vld [vmem:[%s2727 + $0x60] sm:$0xff]
      %v2737 = vld [vmem:[%s2727 + $0x68] sm:$0xff]
      %v2738 = vld [vmem:[%s2727 + $0x78] sm:$0xff]
      %v2739 = vld [vmem:[%s2727 + $0x80] sm:$0xff]
      %v2740 = vld [vmem:[%s2727 + $0x90] sm:$0xff]
      %v2741 = vld [vmem:[%s2727 + $0x98] sm:$0xff]
      %v2742 = vld [vmem:[%s2727 + $0xa8] sm:$0xff]
      %v2743 = vld [vmem:[%s2727 + $0xb0] sm:$0xff]
      %v2744 = vld [vmem:[%s2727 + $0xc0] sm:$0xff]
      %v2745 = vld [vmem:[%s2727 + $0xc8] sm:$0xff]
      %v2746 = vld [vmem:[%s2727 + $0xd8] sm:$0xff]
      %v2747 = vld [vmem:[%s2727 + $0xe0] sm:$0xff]
      %v2748 = vld [vmem:[%s2727 + $0xf0] sm:$0xff]
      %v2749 = vld [vmem:[%s2727 + $0xf8] sm:$0xff]
      %v2750 = vld [vmem:[%s2727 + $0x108] sm:$0xff]
      %v2751 = vld [vmem:[%s2727 + $0x110] sm:$0xff]
      %v2752 = vld [vmem:[%s2727 + $0x120] sm:$0xff]
      %v2753 = vld [vmem:[%s2727 + $0x128] sm:$0xff]
      %v2754 = vld [vmem:[%s2727 + $0x138] sm:$0xff]
      %v2755 = vld [vmem:[%s2727 + $0x140] sm:$0xff]
      %v2756 = vld [vmem:[%s2727 + $0x150] sm:$0xff]
      %v2757 = vld [vmem:[%s2727 + $0x158] sm:$0xff]
      %v2758 = vld [vmem:[%s2727 + $0x168] sm:$0xff]
      %v2759 = vld [vmem:[%s2727 + $0x170] sm:$0xff]
      %v2760 = vpack.c.bf16 %v2729, %v2728
      %v2761 = vpack.c.bf16 %v2731, %v2730
      %v2762 = vpack.c.bf16 %v2733, %v2732
      %v2763 = vpack.c.bf16 %v2735, %v2734
      %v2764 = vpack.c.bf16 %v2737, %v2736
      %v2765 = vpack.c.bf16 %v2739, %v2738
      %v2766 = vpack.c.bf16 %v2741, %v2740
      %v2767 = vpack.c.bf16 %v2743, %v2742
      %v2768 = vpack.c.bf16 %v2745, %v2744
      %v2769 = vpack.c.bf16 %v2747, %v2746
      %v2770 = vpack.c.bf16 %v2749, %v2748
      %v2771 = vpack.c.bf16 %v2751, %v2750
      %v2772 = vpack.c.bf16 %v2753, %v2752
      %v2773 = vpack.c.bf16 %v2755, %v2754
      %v2774 = vpack.c.bf16 %v2757, %v2756
      %v2775 = vpack.c.bf16 %v2759, %v2758
      %s2776 = scalar_lea.vmem %s3, 80
      %v2777 = vld [vmem:[%s2776] sm:$0xf]
      %v2778 = vld [vmem:[%s2776 + $0x4] sm:$0xf]
      %v2779 = vld [vmem:[%s2776 + $0x8] sm:$0xf]
      %v2780 = vld [vmem:[%s2776 + $0xc] sm:$0xf]
      %v2785 = vunpack.c.l.b16 %v2777
      %v2786 = vunpack.c.l.b16 %v2778
      %v2787 = vunpack.c.l.b16 %v2779
      %v2788 = vunpack.c.l.b16 %v2780
      %v2789 = vpack.c.b16 %v2786, %v2785
      %v2790 = vpack.c.b16 %v2788, %v2787
      %v2794 = vsel %vm1305, %v2760, 0
      %v2797 = vsel %vm1305, %v2761, 0
      %v2800 = vsel %vm1305, %v2762, 0
      %v2803 = vsel %vm1305, %v2763, 0
      %v2806 = vsel %vm1305, %v2764, 0
      %v2809 = vsel %vm1305, %v2765, 0
      %v2812 = vsel %vm1305, %v2766, 0
      %v2815 = vsel %vm1305, %v2767, 0
      %v2818 = vsel %vm1305, %v2768, 0
      %v2821 = vsel %vm1305, %v2769, 0
      %v2824 = vsel %vm1305, %v2770, 0
      %v2827 = vsel %vm1305, %v2771, 0
      %v2830 = vsel %vm1305, %v2772, 0
      %v2833 = vsel %vm1305, %v2773, 0
      %v2836 = vsel %vm1305, %v2774, 0
      %v2839 = vsel %vm1305, %v2775, 0
      %2841 = vmatpush.bf16.msra.mxu0 0
      %2842 = vmatpush.bf16.msra.mxu0 0
      %2843 = vmatpush.bf16.msra.mxu0 0
      %2844 = vmatpush.bf16.msra.mxu0 0
      %2845 = vmatpush.bf16.msra.mxu0 0
      %2846 = vmatpush.bf16.msra.mxu0 0
      %2847 = vmatpush.bf16.msra.mxu0 %v2790
      %2848 = vmatpush.bf16.msra.mxu0 %v2789
      %2849 = vmatmul.bf16.gmra.mxu0 %v2794
      %v2850 = vpop.f32.mrf.mxu0
      %v2851 = vadd.f32 0.0, %v2850
      %v2852 = vpop.f32.mrf.mxu0
      %v2853 = vadd.f32 0.0, %v2852
      %2854 = vmatmul.bf16.gmra.mxu0 %v2797
      %v2855 = vpop.f32.mrf.mxu0
      %v2856 = vadd.f32 0.0, %v2855
      %v2857 = vpop.f32.mrf.mxu0
      %v2858 = vadd.f32 0.0, %v2857
      %2859 = vmatmul.bf16.gmra.mxu0 %v2800
      %v2860 = vpop.f32.mrf.mxu0
      %v2861 = vadd.f32 0.0, %v2860
      %v2862 = vpop.f32.mrf.mxu0
      %v2863 = vadd.f32 0.0, %v2862
      %2864 = vmatmul.bf16.gmra.mxu0 %v2803
      %v2865 = vpop.f32.mrf.mxu0
      %v2866 = vadd.f32 0.0, %v2865
      %v2867 = vpop.f32.mrf.mxu0
      %v2868 = vadd.f32 0.0, %v2867
      %2869 = vmatmul.bf16.gmra.mxu0 %v2806
      %v2870 = vpop.f32.mrf.mxu0
      %v2871 = vadd.f32 0.0, %v2870
      %v2872 = vpop.f32.mrf.mxu0
      %v2873 = vadd.f32 0.0, %v2872
      %2874 = vmatmul.bf16.gmra.mxu0 %v2809
      %v2875 = vpop.f32.mrf.mxu0
      %v2876 = vadd.f32 0.0, %v2875
      %v2877 = vpop.f32.mrf.mxu0
      %v2878 = vadd.f32 0.0, %v2877
      %2879 = vmatmul.bf16.gmra.mxu0 %v2812
      %v2880 = vpop.f32.mrf.mxu0
      %v2881 = vadd.f32 0.0, %v2880
      %v2882 = vpop.f32.mrf.mxu0
      %v2883 = vadd.f32 0.0, %v2882
      %2884 = vmatmul.bf16.gmra.mxu0 %v2815
      %v2885 = vpop.f32.mrf.mxu0
      %v2886 = vadd.f32 0.0, %v2885
      %v2887 = vpop.f32.mrf.mxu0
      %v2888 = vadd.f32 0.0, %v2887
      %2889 = vmatmul.bf16.gmra.mxu0 %v2818
      %v2890 = vpop.f32.mrf.mxu0
      %v2891 = vadd.f32 0.0, %v2890
      %v2892 = vpop.f32.mrf.mxu0
      %v2893 = vadd.f32 0.0, %v2892
      %2894 = vmatmul.bf16.gmra.mxu0 %v2821
      %v2895 = vpop.f32.mrf.mxu0
      %v2896 = vadd.f32 0.0, %v2895
      %v2897 = vpop.f32.mrf.mxu0
      %v2898 = vadd.f32 0.0, %v2897
      %2899 = vmatmul.bf16.gmra.mxu0 %v2824
      %v2900 = vpop.f32.mrf.mxu0
      %v2901 = vadd.f32 0.0, %v2900
      %v2902 = vpop.f32.mrf.mxu0
      %v2903 = vadd.f32 0.0, %v2902
      %2904 = vmatmul.bf16.gmra.mxu0 %v2827
      %v2905 = vpop.f32.mrf.mxu0
      %v2906 = vadd.f32 0.0, %v2905
      %v2907 = vpop.f32.mrf.mxu0
      %v2908 = vadd.f32 0.0, %v2907
      %2909 = vmatmul.bf16.gmra.mxu0 %v2830
      %v2910 = vpop.f32.mrf.mxu0
      %v2911 = vadd.f32 0.0, %v2910
      %v2912 = vpop.f32.mrf.mxu0
      %v2913 = vadd.f32 0.0, %v2912
      %2914 = vmatmul.bf16.gmra.mxu0 %v2833
      %v2915 = vpop.f32.mrf.mxu0
      %v2916 = vadd.f32 0.0, %v2915
      %v2917 = vpop.f32.mrf.mxu0
      %v2918 = vadd.f32 0.0, %v2917
      %2919 = vmatmul.bf16.gmra.mxu0 %v2836
      %v2920 = vpop.f32.mrf.mxu0
      %v2921 = vadd.f32 0.0, %v2920
      %v2922 = vpop.f32.mrf.mxu0
      %v2923 = vadd.f32 0.0, %v2922
      %2924 = vmatmul.bf16.gmra.mxu0 %v2839
      %v2925 = vpop.f32.mrf.mxu0
      %v2926 = vadd.f32 0.0, %v2925
      %v2927 = vpop.f32.mrf.mxu0
      %v2928 = vadd.f32 0.0, %v2927
      %2929 = vdwg.mxu0
      %v2930 = vadd.f32 %v2695, %v2851
      %v2931 = vadd.f32 %v2696, %v2853
      %v2932 = vadd.f32 %v2697, %v2856
      %v2933 = vadd.f32 %v2698, %v2858
      %v2934 = vadd.f32 %v2699, %v2861
      %v2935 = vadd.f32 %v2700, %v2863
      %v2936 = vadd.f32 %v2701, %v2866
      %v2937 = vadd.f32 %v2702, %v2868
      %v2938 = vadd.f32 %v2703, %v2871
      %v2939 = vadd.f32 %v2704, %v2873
      %v2940 = vadd.f32 %v2705, %v2876
      %v2941 = vadd.f32 %v2706, %v2878
      %v2942 = vadd.f32 %v2707, %v2881
      %v2943 = vadd.f32 %v2708, %v2883
      %v2944 = vadd.f32 %v2709, %v2886
      %v2945 = vadd.f32 %v2710, %v2888
      %v2946 = vadd.f32 %v2711, %v2891
      %v2947 = vadd.f32 %v2712, %v2893
      %v2948 = vadd.f32 %v2713, %v2896
      %v2949 = vadd.f32 %v2714, %v2898
      %v2950 = vadd.f32 %v2715, %v2901
      %v2951 = vadd.f32 %v2716, %v2903
      %v2952 = vadd.f32 %v2717, %v2906
      %v2953 = vadd.f32 %v2718, %v2908
      %v2954 = vadd.f32 %v2719, %v2911
      %v2955 = vadd.f32 %v2720, %v2913
      %v2956 = vadd.f32 %v2721, %v2916
      %v2957 = vadd.f32 %v2722, %v2918
      %v2958 = vadd.f32 %v2723, %v2921
      %v2959 = vadd.f32 %v2724, %v2923
      %v2960 = vadd.f32 %v2725, %v2926
      %v2961 = vadd.f32 %v2726, %v2928
      %v2962 = vld [vmem:[%s2727 + $0x1] sm:$0xff]
      %v2963 = vld [vmem:[%s2727 + $0x9] sm:$0xff]
      %v2964 = vld [vmem:[%s2727 + $0x19] sm:$0xff]
      %v2965 = vld [vmem:[%s2727 + $0x21] sm:$0xff]
      %v2966 = vld [vmem:[%s2727 + $0x31] sm:$0xff]
      %v2967 = vld [vmem:[%s2727 + $0x39] sm:$0xff]
      %v2968 = vld [vmem:[%s2727 + $0x49] sm:$0xff]
      %v2969 = vld [vmem:[%s2727 + $0x51] sm:$0xff]
      %v2970 = vld [vmem:[%s2727 + $0x61] sm:$0xff]
      %v2971 = vld [vmem:[%s2727 + $0x69] sm:$0xff]
      %v2972 = vld [vmem:[%s2727 + $0x79] sm:$0xff]
      %v2973 = vld [vmem:[%s2727 + $0x81] sm:$0xff]
      %v2974 = vld [vmem:[%s2727 + $0x91] sm:$0xff]
      %v2975 = vld [vmem:[%s2727 + $0x99] sm:$0xff]
      %v2976 = vld [vmem:[%s2727 + $0xa9] sm:$0xff]
      %v2977 = vld [vmem:[%s2727 + $0xb1] sm:$0xff]
      %v2978 = vld [vmem:[%s2727 + $0xc1] sm:$0xff]
      %v2979 = vld [vmem:[%s2727 + $0xc9] sm:$0xff]
      %v2980 = vld [vmem:[%s2727 + $0xd9] sm:$0xff]
      %v2981 = vld [vmem:[%s2727 + $0xe1] sm:$0xff]
      %v2982 = vld [vmem:[%s2727 + $0xf1] sm:$0xff]
      %v2983 = vld [vmem:[%s2727 + $0xf9] sm:$0xff]
      %v2984 = vld [vmem:[%s2727 + $0x109] sm:$0xff]
      %v2985 = vld [vmem:[%s2727 + $0x111] sm:$0xff]
      %v2986 = vld [vmem:[%s2727 + $0x121] sm:$0xff]
      %v2987 = vld [vmem:[%s2727 + $0x129] sm:$0xff]
      %v2988 = vld [vmem:[%s2727 + $0x139] sm:$0xff]
      %v2989 = vld [vmem:[%s2727 + $0x141] sm:$0xff]
      %v2990 = vld [vmem:[%s2727 + $0x151] sm:$0xff]
      %v2991 = vld [vmem:[%s2727 + $0x159] sm:$0xff]
      %v2992 = vld [vmem:[%s2727 + $0x169] sm:$0xff]
      %v2993 = vld [vmem:[%s2727 + $0x171] sm:$0xff]
      %v2994 = vpack.c.bf16 %v2963, %v2962
      %v2995 = vpack.c.bf16 %v2965, %v2964
      %v2996 = vpack.c.bf16 %v2967, %v2966
      %v2997 = vpack.c.bf16 %v2969, %v2968
      %v2998 = vpack.c.bf16 %v2971, %v2970
      %v2999 = vpack.c.bf16 %v2973, %v2972
      %v3000 = vpack.c.bf16 %v2975, %v2974
      %v3001 = vpack.c.bf16 %v2977, %v2976
      %v3002 = vpack.c.bf16 %v2979, %v2978
      %v3003 = vpack.c.bf16 %v2981, %v2980
      %v3004 = vpack.c.bf16 %v2983, %v2982
      %v3005 = vpack.c.bf16 %v2985, %v2984
      %v3006 = vpack.c.bf16 %v2987, %v2986
      %v3007 = vpack.c.bf16 %v2989, %v2988
      %v3008 = vpack.c.bf16 %v2991, %v2990
      %v3009 = vpack.c.bf16 %v2993, %v2992
      %s3010 = scalar_lea.vmem %s3, 96
      %v3011 = vld [vmem:[%s3010] sm:$0xf]
      %v3012 = vld [vmem:[%s3010 + $0x4] sm:$0xf]
      %v3013 = vld [vmem:[%s3010 + $0x8] sm:$0xf]
      %v3014 = vld [vmem:[%s3010 + $0xc] sm:$0xf]
      %v3019 = vunpack.c.l.b16 %v3011
      %v3020 = vunpack.c.l.b16 %v3012
      %v3021 = vunpack.c.l.b16 %v3013
      %v3022 = vunpack.c.l.b16 %v3014
      %v3023 = vpack.c.b16 %v3020, %v3019
      %v3024 = vpack.c.b16 %v3022, %v3021
      %v3028 = vsel %vm1305, %v2994, 0
      %v3031 = vsel %vm1305, %v2995, 0
      %v3034 = vsel %vm1305, %v2996, 0
      %v3037 = vsel %vm1305, %v2997, 0
      %v3040 = vsel %vm1305, %v2998, 0
      %v3043 = vsel %vm1305, %v2999, 0
      %v3046 = vsel %vm1305, %v3000, 0
      %v3049 = vsel %vm1305, %v3001, 0
      %v3052 = vsel %vm1305, %v3002, 0
      %v3055 = vsel %vm1305, %v3003, 0
      %v3058 = vsel %vm1305, %v3004, 0
      %v3061 = vsel %vm1305, %v3005, 0
      %v3064 = vsel %vm1305, %v3006, 0
      %v3067 = vsel %vm1305, %v3007, 0
      %v3070 = vsel %vm1305, %v3008, 0
      %v3073 = vsel %vm1305, %v3009, 0
      %3075 = vmatpush.bf16.msra.mxu0 0
      %3076 = vmatpush.bf16.msra.mxu0 0
      %3077 = vmatpush.bf16.msra.mxu0 0
      %3078 = vmatpush.bf16.msra.mxu0 0
      %3079 = vmatpush.bf16.msra.mxu0 0
      %3080 = vmatpush.bf16.msra.mxu0 0
      %3081 = vmatpush.bf16.msra.mxu0 %v3024
      %3082 = vmatpush.bf16.msra.mxu0 %v3023
      %3083 = vmatmul.bf16.gmra.mxu0 %v3028
      %v3084 = vpop.f32.mrf.mxu0
      %v3085 = vadd.f32 0.0, %v3084
      %v3086 = vpop.f32.mrf.mxu0
      %v3087 = vadd.f32 0.0, %v3086
      %3088 = vmatmul.bf16.gmra.mxu0 %v3031
      %v3089 = vpop.f32.mrf.mxu0
      %v3090 = vadd.f32 0.0, %v3089
      %v3091 = vpop.f32.mrf.mxu0
      %v3092 = vadd.f32 0.0, %v3091
      %3093 = vmatmul.bf16.gmra.mxu0 %v3034
      %v3094 = vpop.f32.mrf.mxu0
      %v3095 = vadd.f32 0.0, %v3094
      %v3096 = vpop.f32.mrf.mxu0
      %v3097 = vadd.f32 0.0, %v3096
      %3098 = vmatmul.bf16.gmra.mxu0 %v3037
      %v3099 = vpop.f32.mrf.mxu0
      %v3100 = vadd.f32 0.0, %v3099
      %v3101 = vpop.f32.mrf.mxu0
      %v3102 = vadd.f32 0.0, %v3101
      %3103 = vmatmul.bf16.gmra.mxu0 %v3040
      %v3104 = vpop.f32.mrf.mxu0
      %v3105 = vadd.f32 0.0, %v3104
      %v3106 = vpop.f32.mrf.mxu0
      %v3107 = vadd.f32 0.0, %v3106
      %3108 = vmatmul.bf16.gmra.mxu0 %v3043
      %v3109 = vpop.f32.mrf.mxu0
      %v3110 = vadd.f32 0.0, %v3109
      %v3111 = vpop.f32.mrf.mxu0
      %v3112 = vadd.f32 0.0, %v3111
      %3113 = vmatmul.bf16.gmra.mxu0 %v3046
      %v3114 = vpop.f32.mrf.mxu0
      %v3115 = vadd.f32 0.0, %v3114
      %v3116 = vpop.f32.mrf.mxu0
      %v3117 = vadd.f32 0.0, %v3116
      %3118 = vmatmul.bf16.gmra.mxu0 %v3049
      %v3119 = vpop.f32.mrf.mxu0
      %v3120 = vadd.f32 0.0, %v3119
      %v3121 = vpop.f32.mrf.mxu0
      %v3122 = vadd.f32 0.0, %v3121
      %3123 = vmatmul.bf16.gmra.mxu0 %v3052
      %v3124 = vpop.f32.mrf.mxu0
      %v3125 = vadd.f32 0.0, %v3124
      %v3126 = vpop.f32.mrf.mxu0
      %v3127 = vadd.f32 0.0, %v3126
      %3128 = vmatmul.bf16.gmra.mxu0 %v3055
      %v3129 = vpop.f32.mrf.mxu0
      %v3130 = vadd.f32 0.0, %v3129
      %v3131 = vpop.f32.mrf.mxu0
      %v3132 = vadd.f32 0.0, %v3131
      %3133 = vmatmul.bf16.gmra.mxu0 %v3058
      %v3134 = vpop.f32.mrf.mxu0
      %v3135 = vadd.f32 0.0, %v3134
      %v3136 = vpop.f32.mrf.mxu0
      %v3137 = vadd.f32 0.0, %v3136
      %3138 = vmatmul.bf16.gmra.mxu0 %v3061
      %v3139 = vpop.f32.mrf.mxu0
      %v3140 = vadd.f32 0.0, %v3139
      %v3141 = vpop.f32.mrf.mxu0
      %v3142 = vadd.f32 0.0, %v3141
      %3143 = vmatmul.bf16.gmra.mxu0 %v3064
      %v3144 = vpop.f32.mrf.mxu0
      %v3145 = vadd.f32 0.0, %v3144
      %v3146 = vpop.f32.mrf.mxu0
      %v3147 = vadd.f32 0.0, %v3146
      %3148 = vmatmul.bf16.gmra.mxu0 %v3067
      %v3149 = vpop.f32.mrf.mxu0
      %v3150 = vadd.f32 0.0, %v3149
      %v3151 = vpop.f32.mrf.mxu0
      %v3152 = vadd.f32 0.0, %v3151
      %3153 = vmatmul.bf16.gmra.mxu0 %v3070
      %v3154 = vpop.f32.mrf.mxu0
      %v3155 = vadd.f32 0.0, %v3154
      %v3156 = vpop.f32.mrf.mxu0
      %v3157 = vadd.f32 0.0, %v3156
      %3158 = vmatmul.bf16.gmra.mxu0 %v3073
      %v3159 = vpop.f32.mrf.mxu0
      %v3160 = vadd.f32 0.0, %v3159
      %v3161 = vpop.f32.mrf.mxu0
      %v3162 = vadd.f32 0.0, %v3161
      %3163 = vdwg.mxu0
      %v3164 = vadd.f32 %v2930, %v3085
      %v3165 = vadd.f32 %v2931, %v3087
      %v3166 = vadd.f32 %v2932, %v3090
      %v3167 = vadd.f32 %v2933, %v3092
      %v3168 = vadd.f32 %v2934, %v3095
      %v3169 = vadd.f32 %v2935, %v3097
      %v3170 = vadd.f32 %v2936, %v3100
      %v3171 = vadd.f32 %v2937, %v3102
      %v3172 = vadd.f32 %v2938, %v3105
      %v3173 = vadd.f32 %v2939, %v3107
      %v3174 = vadd.f32 %v2940, %v3110
      %v3175 = vadd.f32 %v2941, %v3112
      %v3176 = vadd.f32 %v2942, %v3115
      %v3177 = vadd.f32 %v2943, %v3117
      %v3178 = vadd.f32 %v2944, %v3120
      %v3179 = vadd.f32 %v2945, %v3122
      %v3180 = vadd.f32 %v2946, %v3125
      %v3181 = vadd.f32 %v2947, %v3127
      %v3182 = vadd.f32 %v2948, %v3130
      %v3183 = vadd.f32 %v2949, %v3132
      %v3184 = vadd.f32 %v2950, %v3135
      %v3185 = vadd.f32 %v2951, %v3137
      %v3186 = vadd.f32 %v2952, %v3140
      %v3187 = vadd.f32 %v2953, %v3142
      %v3188 = vadd.f32 %v2954, %v3145
      %v3189 = vadd.f32 %v2955, %v3147
      %v3190 = vadd.f32 %v2956, %v3150
      %v3191 = vadd.f32 %v2957, %v3152
      %v3192 = vadd.f32 %v2958, %v3155
      %v3193 = vadd.f32 %v2959, %v3157
      %v3194 = vadd.f32 %v2960, %v3160
      %v3195 = vadd.f32 %v2961, %v3162
      %v3196 = vld [vmem:[%s2727 + $0x2] sm:$0xff]
      %v3197 = vld [vmem:[%s2727 + $0xa] sm:$0xff]
      %v3198 = vld [vmem:[%s2727 + $0x1a] sm:$0xff]
      %v3199 = vld [vmem:[%s2727 + $0x22] sm:$0xff]
      %v3200 = vld [vmem:[%s2727 + $0x32] sm:$0xff]
      %v3201 = vld [vmem:[%s2727 + $0x3a] sm:$0xff]
      %v3202 = vld [vmem:[%s2727 + $0x4a] sm:$0xff]
      %v3203 = vld [vmem:[%s2727 + $0x52] sm:$0xff]
      %v3204 = vld [vmem:[%s2727 + $0x62] sm:$0xff]
      %v3205 = vld [vmem:[%s2727 + $0x6a] sm:$0xff]
      %v3206 = vld [vmem:[%s2727 + $0x7a] sm:$0xff]
      %v3207 = vld [vmem:[%s2727 + $0x82] sm:$0xff]
      %v3208 = vld [vmem:[%s2727 + $0x92] sm:$0xff]
      %v3209 = vld [vmem:[%s2727 + $0x9a] sm:$0xff]
      %v3210 = vld [vmem:[%s2727 + $0xaa] sm:$0xff]
      %v3211 = vld [vmem:[%s2727 + $0xb2] sm:$0xff]
      %v3212 = vld [vmem:[%s2727 + $0xc2] sm:$0xff]
      %v3213 = vld [vmem:[%s2727 + $0xca] sm:$0xff]
      %v3214 = vld [vmem:[%s2727 + $0xda] sm:$0xff]
      %v3215 = vld [vmem:[%s2727 + $0xe2] sm:$0xff]
      %v3216 = vld [vmem:[%s2727 + $0xf2] sm:$0xff]
      %v3217 = vld [vmem:[%s2727 + $0xfa] sm:$0xff]
      %v3218 = vld [vmem:[%s2727 + $0x10a] sm:$0xff]
      %v3219 = vld [vmem:[%s2727 + $0x112] sm:$0xff]
      %v3220 = vld [vmem:[%s2727 + $0x122] sm:$0xff]
      %v3221 = vld [vmem:[%s2727 + $0x12a] sm:$0xff]
      %v3222 = vld [vmem:[%s2727 + $0x13a] sm:$0xff]
      %v3223 = vld [vmem:[%s2727 + $0x142] sm:$0xff]
      %v3224 = vld [vmem:[%s2727 + $0x152] sm:$0xff]
      %v3225 = vld [vmem:[%s2727 + $0x15a] sm:$0xff]
      %v3226 = vld [vmem:[%s2727 + $0x16a] sm:$0xff]
      %v3227 = vld [vmem:[%s2727 + $0x172] sm:$0xff]
      %v3228 = vpack.c.bf16 %v3197, %v3196
      %v3229 = vpack.c.bf16 %v3199, %v3198
      %v3230 = vpack.c.bf16 %v3201, %v3200
      %v3231 = vpack.c.bf16 %v3203, %v3202
      %v3232 = vpack.c.bf16 %v3205, %v3204
      %v3233 = vpack.c.bf16 %v3207, %v3206
      %v3234 = vpack.c.bf16 %v3209, %v3208
      %v3235 = vpack.c.bf16 %v3211, %v3210
      %v3236 = vpack.c.bf16 %v3213, %v3212
      %v3237 = vpack.c.bf16 %v3215, %v3214
      %v3238 = vpack.c.bf16 %v3217, %v3216
      %v3239 = vpack.c.bf16 %v3219, %v3218
      %v3240 = vpack.c.bf16 %v3221, %v3220
      %v3241 = vpack.c.bf16 %v3223, %v3222
      %v3242 = vpack.c.bf16 %v3225, %v3224
      %v3243 = vpack.c.bf16 %v3227, %v3226
      %s3244 = scalar_lea.vmem %s3, 112
      %v3245 = vld [vmem:[%s3244] sm:$0xf]
      %v3246 = vld [vmem:[%s3244 + $0x4] sm:$0xf]
      %v3247 = vld [vmem:[%s3244 + $0x8] sm:$0xf]
      %v3248 = vld [vmem:[%s3244 + $0xc] sm:$0xf]
      %v3253 = vunpack.c.l.b16 %v3245
      %v3254 = vunpack.c.l.b16 %v3246
      %v3255 = vunpack.c.l.b16 %v3247
      %v3256 = vunpack.c.l.b16 %v3248
      %v3257 = vpack.c.b16 %v3254, %v3253
      %v3258 = vpack.c.b16 %v3256, %v3255
      %v3262 = vsel %vm1305, %v3228, 0
      %v3265 = vsel %vm1305, %v3229, 0
      %v3268 = vsel %vm1305, %v3230, 0
      %v3271 = vsel %vm1305, %v3231, 0
      %v3274 = vsel %vm1305, %v3232, 0
      %v3277 = vsel %vm1305, %v3233, 0
      %v3280 = vsel %vm1305, %v3234, 0
      %v3283 = vsel %vm1305, %v3235, 0
      %v3286 = vsel %vm1305, %v3236, 0
      %v3289 = vsel %vm1305, %v3237, 0
      %v3292 = vsel %vm1305, %v3238, 0
      %v3295 = vsel %vm1305, %v3239, 0
      %v3298 = vsel %vm1305, %v3240, 0
      %v3301 = vsel %vm1305, %v3241, 0
      %v3304 = vsel %vm1305, %v3242, 0
      %v3307 = vsel %vm1305, %v3243, 0
      %3309 = vmatpush.bf16.msra.mxu0 0
      %3310 = vmatpush.bf16.msra.mxu0 0
      %3311 = vmatpush.bf16.msra.mxu0 0
      %3312 = vmatpush.bf16.msra.mxu0 0
      %3313 = vmatpush.bf16.msra.mxu0 0
      %3314 = vmatpush.bf16.msra.mxu0 0
      %3315 = vmatpush.bf16.msra.mxu0 %v3258
      %3316 = vmatpush.bf16.msra.mxu0 %v3257
      %3317 = vmatmul.bf16.gmra.mxu0 %v3262
      %v3318 = vpop.f32.mrf.mxu0
      %v3319 = vadd.f32 0.0, %v3318
      %v3320 = vpop.f32.mrf.mxu0
      %v3321 = vadd.f32 0.0, %v3320
      %3322 = vmatmul.bf16.gmra.mxu0 %v3265
      %v3323 = vpop.f32.mrf.mxu0
      %v3324 = vadd.f32 0.0, %v3323
      %v3325 = vpop.f32.mrf.mxu0
      %v3326 = vadd.f32 0.0, %v3325
      %3327 = vmatmul.bf16.gmra.mxu0 %v3268
      %v3328 = vpop.f32.mrf.mxu0
      %v3329 = vadd.f32 0.0, %v3328
      %v3330 = vpop.f32.mrf.mxu0
      %v3331 = vadd.f32 0.0, %v3330
      %3332 = vmatmul.bf16.gmra.mxu0 %v3271
      %v3333 = vpop.f32.mrf.mxu0
      %v3334 = vadd.f32 0.0, %v3333
      %v3335 = vpop.f32.mrf.mxu0
      %v3336 = vadd.f32 0.0, %v3335
      %3337 = vmatmul.bf16.gmra.mxu0 %v3274
      %v3338 = vpop.f32.mrf.mxu0
      %v3339 = vadd.f32 0.0, %v3338
      %v3340 = vpop.f32.mrf.mxu0
      %v3341 = vadd.f32 0.0, %v3340
      %3342 = vmatmul.bf16.gmra.mxu0 %v3277
      %v3343 = vpop.f32.mrf.mxu0
      %v3344 = vadd.f32 0.0, %v3343
      %v3345 = vpop.f32.mrf.mxu0
      %v3346 = vadd.f32 0.0, %v3345
      %3347 = vmatmul.bf16.gmra.mxu0 %v3280
      %v3348 = vpop.f32.mrf.mxu0
      %v3349 = vadd.f32 0.0, %v3348
      %v3350 = vpop.f32.mrf.mxu0
      %v3351 = vadd.f32 0.0, %v3350
      %3352 = vmatmul.bf16.gmra.mxu0 %v3283
      %v3353 = vpop.f32.mrf.mxu0
      %v3354 = vadd.f32 0.0, %v3353
      %v3355 = vpop.f32.mrf.mxu0
      %v3356 = vadd.f32 0.0, %v3355
      %3357 = vmatmul.bf16.gmra.mxu0 %v3286
      %v3358 = vpop.f32.mrf.mxu0
      %v3359 = vadd.f32 0.0, %v3358
      %v3360 = vpop.f32.mrf.mxu0
      %v3361 = vadd.f32 0.0, %v3360
      %3362 = vmatmul.bf16.gmra.mxu0 %v3289
      %v3363 = vpop.f32.mrf.mxu0
      %v3364 = vadd.f32 0.0, %v3363
      %v3365 = vpop.f32.mrf.mxu0
      %v3366 = vadd.f32 0.0, %v3365
      %3367 = vmatmul.bf16.gmra.mxu0 %v3292
      %v3368 = vpop.f32.mrf.mxu0
      %v3369 = vadd.f32 0.0, %v3368
      %v3370 = vpop.f32.mrf.mxu0
      %v3371 = vadd.f32 0.0, %v3370
      %3372 = vmatmul.bf16.gmra.mxu0 %v3295
      %v3373 = vpop.f32.mrf.mxu0
      %v3374 = vadd.f32 0.0, %v3373
      %v3375 = vpop.f32.mrf.mxu0
      %v3376 = vadd.f32 0.0, %v3375
      %3377 = vmatmul.bf16.gmra.mxu0 %v3298
      %v3378 = vpop.f32.mrf.mxu0
      %v3379 = vadd.f32 0.0, %v3378
      %v3380 = vpop.f32.mrf.mxu0
      %v3381 = vadd.f32 0.0, %v3380
      %3382 = vmatmul.bf16.gmra.mxu0 %v3301
      %v3383 = vpop.f32.mrf.mxu0
      %v3384 = vadd.f32 0.0, %v3383
      %v3385 = vpop.f32.mrf.mxu0
      %v3386 = vadd.f32 0.0, %v3385
      %3387 = vmatmul.bf16.gmra.mxu0 %v3304
      %v3388 = vpop.f32.mrf.mxu0
      %v3389 = vadd.f32 0.0, %v3388
      %v3390 = vpop.f32.mrf.mxu0
      %v3391 = vadd.f32 0.0, %v3390
      %3392 = vmatmul.bf16.gmra.mxu0 %v3307
      %v3393 = vpop.f32.mrf.mxu0
      %v3394 = vadd.f32 0.0, %v3393
      %v3395 = vpop.f32.mrf.mxu0
      %v3396 = vadd.f32 0.0, %v3395
      %3397 = vdwg.mxu0
      %v3398 = vadd.f32 %v3164, %v3319
      %v3399 = vadd.f32 %v3165, %v3321
      %v3400 = vadd.f32 %v3166, %v3324
      %v3401 = vadd.f32 %v3167, %v3326
      %v3402 = vadd.f32 %v3168, %v3329
      %v3403 = vadd.f32 %v3169, %v3331
      %v3404 = vadd.f32 %v3170, %v3334
      %v3405 = vadd.f32 %v3171, %v3336
      %v3406 = vadd.f32 %v3172, %v3339
      %v3407 = vadd.f32 %v3173, %v3341
      %v3408 = vadd.f32 %v3174, %v3344
      %v3409 = vadd.f32 %v3175, %v3346
      %v3410 = vadd.f32 %v3176, %v3349
      %v3411 = vadd.f32 %v3177, %v3351
      %v3412 = vadd.f32 %v3178, %v3354
      %v3413 = vadd.f32 %v3179, %v3356
      %v3414 = vadd.f32 %v3180, %v3359
      %v3415 = vadd.f32 %v3181, %v3361
      %v3416 = vadd.f32 %v3182, %v3364
      %v3417 = vadd.f32 %v3183, %v3366
      %v3418 = vadd.f32 %v3184, %v3369
      %v3419 = vadd.f32 %v3185, %v3371
      %v3420 = vadd.f32 %v3186, %v3374
      %v3421 = vadd.f32 %v3187, %v3376
      %v3422 = vadd.f32 %v3188, %v3379
      %v3423 = vadd.f32 %v3189, %v3381
      %v3424 = vadd.f32 %v3190, %v3384
      %v3425 = vadd.f32 %v3191, %v3386
      %v3426 = vadd.f32 %v3192, %v3389
      %v3427 = vadd.f32 %v3193, %v3391
      %v3428 = vadd.f32 %v3194, %v3394
      %v3429 = vadd.f32 %v3195, %v3396
      %v3430 = vld [vmem:[%s2727 + $0x3] sm:$0xff]
      %v3431 = vld [vmem:[%s2727 + $0xb] sm:$0xff]
      %v3432 = vld [vmem:[%s2727 + $0x1b] sm:$0xff]
      %v3433 = vld [vmem:[%s2727 + $0x23] sm:$0xff]
      %v3434 = vld [vmem:[%s2727 + $0x33] sm:$0xff]
      %v3435 = vld [vmem:[%s2727 + $0x3b] sm:$0xff]
      %v3436 = vld [vmem:[%s2727 + $0x4b] sm:$0xff]
      %v3437 = vld [vmem:[%s2727 + $0x53] sm:$0xff]
      %v3438 = vld [vmem:[%s2727 + $0x63] sm:$0xff]
      %v3439 = vld [vmem:[%s2727 + $0x6b] sm:$0xff]
      %v3440 = vld [vmem:[%s2727 + $0x7b] sm:$0xff]
      %v3441 = vld [vmem:[%s2727 + $0x83] sm:$0xff]
      %v3442 = vld [vmem:[%s2727 + $0x93] sm:$0xff]
      %v3443 = vld [vmem:[%s2727 + $0x9b] sm:$0xff]
      %v3444 = vld [vmem:[%s2727 + $0xab] sm:$0xff]
      %v3445 = vld [vmem:[%s2727 + $0xb3] sm:$0xff]
      %v3446 = vld [vmem:[%s2727 + $0xc3] sm:$0xff]
      %v3447 = vld [vmem:[%s2727 + $0xcb] sm:$0xff]
      %v3448 = vld [vmem:[%s2727 + $0xdb] sm:$0xff]
      %v3449 = vld [vmem:[%s2727 + $0xe3] sm:$0xff]
      %v3450 = vld [vmem:[%s2727 + $0xf3] sm:$0xff]
      %v3451 = vld [vmem:[%s2727 + $0xfb] sm:$0xff]
      %v3452 = vld [vmem:[%s2727 + $0x10b] sm:$0xff]
      %v3453 = vld [vmem:[%s2727 + $0x113] sm:$0xff]
      %v3454 = vld [vmem:[%s2727 + $0x123] sm:$0xff]
      %v3455 = vld [vmem:[%s2727 + $0x12b] sm:$0xff]
      %v3456 = vld [vmem:[%s2727 + $0x13b] sm:$0xff]
      %v3457 = vld [vmem:[%s2727 + $0x143] sm:$0xff]
      %v3458 = vld [vmem:[%s2727 + $0x153] sm:$0xff]
      %v3459 = vld [vmem:[%s2727 + $0x15b] sm:$0xff]
      %v3460 = vld [vmem:[%s2727 + $0x16b] sm:$0xff]
      %v3461 = vld [vmem:[%s2727 + $0x173] sm:$0xff]
      %v3462 = vpack.c.bf16 %v3431, %v3430
      %v3463 = vpack.c.bf16 %v3433, %v3432
      %v3464 = vpack.c.bf16 %v3435, %v3434
      %v3465 = vpack.c.bf16 %v3437, %v3436
      %v3466 = vpack.c.bf16 %v3439, %v3438
      %v3467 = vpack.c.bf16 %v3441, %v3440
      %v3468 = vpack.c.bf16 %v3443, %v3442
      %v3469 = vpack.c.bf16 %v3445, %v3444
      %v3470 = vpack.c.bf16 %v3447, %v3446
      %v3471 = vpack.c.bf16 %v3449, %v3448
      %v3472 = vpack.c.bf16 %v3451, %v3450
      %v3473 = vpack.c.bf16 %v3453, %v3452
      %v3474 = vpack.c.bf16 %v3455, %v3454
      %v3475 = vpack.c.bf16 %v3457, %v3456
      %v3476 = vpack.c.bf16 %v3459, %v3458
      %v3477 = vpack.c.bf16 %v3461, %v3460
      %s3478 = scalar_lea.vmem %s3, 128
      %v3479 = vld [vmem:[%s3478] sm:$0xf]
      %v3480 = vld [vmem:[%s3478 + $0x4] sm:$0xf]
      %v3481 = vld [vmem:[%s3478 + $0x8] sm:$0xf]
      %v3482 = vld [vmem:[%s3478 + $0xc] sm:$0xf]
      %v3487 = vunpack.c.l.b16 %v3479
      %v3488 = vunpack.c.l.b16 %v3480
      %v3489 = vunpack.c.l.b16 %v3481
      %v3490 = vunpack.c.l.b16 %v3482
      %v3491 = vpack.c.b16 %v3488, %v3487
      %v3492 = vpack.c.b16 %v3490, %v3489
      %v3496 = vsel %vm1305, %v3462, 0
      %v3499 = vsel %vm1305, %v3463, 0
      %v3502 = vsel %vm1305, %v3464, 0
      %v3505 = vsel %vm1305, %v3465, 0
      %v3508 = vsel %vm1305, %v3466, 0
      %v3511 = vsel %vm1305, %v3467, 0
      %v3514 = vsel %vm1305, %v3468, 0
      %v3517 = vsel %vm1305, %v3469, 0
      %v3520 = vsel %vm1305, %v3470, 0
      %v3523 = vsel %vm1305, %v3471, 0
      %v3526 = vsel %vm1305, %v3472, 0
      %v3529 = vsel %vm1305, %v3473, 0
      %v3532 = vsel %vm1305, %v3474, 0
      %v3535 = vsel %vm1305, %v3475, 0
      %v3538 = vsel %vm1305, %v3476, 0
      %v3541 = vsel %vm1305, %v3477, 0
      %3543 = vmatpush.bf16.msra.mxu0 0
      %3544 = vmatpush.bf16.msra.mxu0 0
      %3545 = vmatpush.bf16.msra.mxu0 0
      %3546 = vmatpush.bf16.msra.mxu0 0
      %3547 = vmatpush.bf16.msra.mxu0 0
      %3548 = vmatpush.bf16.msra.mxu0 0
      %3549 = vmatpush.bf16.msra.mxu0 %v3492
      %3550 = vmatpush.bf16.msra.mxu0 %v3491
      %3551 = vmatmul.bf16.gmra.mxu0 %v3496
      %v3552 = vpop.f32.mrf.mxu0
      %v3553 = vadd.f32 0.0, %v3552
      %v3554 = vpop.f32.mrf.mxu0
      %v3555 = vadd.f32 0.0, %v3554
      %3556 = vmatmul.bf16.gmra.mxu0 %v3499
      %v3557 = vpop.f32.mrf.mxu0
      %v3558 = vadd.f32 0.0, %v3557
      %v3559 = vpop.f32.mrf.mxu0
      %v3560 = vadd.f32 0.0, %v3559
      %3561 = vmatmul.bf16.gmra.mxu0 %v3502
      %v3562 = vpop.f32.mrf.mxu0
      %v3563 = vadd.f32 0.0, %v3562
      %v3564 = vpop.f32.mrf.mxu0
      %v3565 = vadd.f32 0.0, %v3564
      %3566 = vmatmul.bf16.gmra.mxu0 %v3505
      %v3567 = vpop.f32.mrf.mxu0
      %v3568 = vadd.f32 0.0, %v3567
      %v3569 = vpop.f32.mrf.mxu0
      %v3570 = vadd.f32 0.0, %v3569
      %3571 = vmatmul.bf16.gmra.mxu0 %v3508
      %v3572 = vpop.f32.mrf.mxu0
      %v3573 = vadd.f32 0.0, %v3572
      %v3574 = vpop.f32.mrf.mxu0
      %v3575 = vadd.f32 0.0, %v3574
      %3576 = vmatmul.bf16.gmra.mxu0 %v3511
      %v3577 = vpop.f32.mrf.mxu0
      %v3578 = vadd.f32 0.0, %v3577
      %v3579 = vpop.f32.mrf.mxu0
      %v3580 = vadd.f32 0.0, %v3579
      %3581 = vmatmul.bf16.gmra.mxu0 %v3514
      %v3582 = vpop.f32.mrf.mxu0
      %v3583 = vadd.f32 0.0, %v3582
      %v3584 = vpop.f32.mrf.mxu0
      %v3585 = vadd.f32 0.0, %v3584
      %3586 = vmatmul.bf16.gmra.mxu0 %v3517
      %v3587 = vpop.f32.mrf.mxu0
      %v3588 = vadd.f32 0.0, %v3587
      %v3589 = vpop.f32.mrf.mxu0
      %v3590 = vadd.f32 0.0, %v3589
      %3591 = vmatmul.bf16.gmra.mxu0 %v3520
      %v3592 = vpop.f32.mrf.mxu0
      %v3593 = vadd.f32 0.0, %v3592
      %v3594 = vpop.f32.mrf.mxu0
      %v3595 = vadd.f32 0.0, %v3594
      %3596 = vmatmul.bf16.gmra.mxu0 %v3523
      %v3597 = vpop.f32.mrf.mxu0
      %v3598 = vadd.f32 0.0, %v3597
      %v3599 = vpop.f32.mrf.mxu0
      %v3600 = vadd.f32 0.0, %v3599
      %3601 = vmatmul.bf16.gmra.mxu0 %v3526
      %v3602 = vpop.f32.mrf.mxu0
      %v3603 = vadd.f32 0.0, %v3602
      %v3604 = vpop.f32.mrf.mxu0
      %v3605 = vadd.f32 0.0, %v3604
      %3606 = vmatmul.bf16.gmra.mxu0 %v3529
      %v3607 = vpop.f32.mrf.mxu0
      %v3608 = vadd.f32 0.0, %v3607
      %v3609 = vpop.f32.mrf.mxu0
      %v3610 = vadd.f32 0.0, %v3609
      %3611 = vmatmul.bf16.gmra.mxu0 %v3532
      %v3612 = vpop.f32.mrf.mxu0
      %v3613 = vadd.f32 0.0, %v3612
      %v3614 = vpop.f32.mrf.mxu0
      %v3615 = vadd.f32 0.0, %v3614
      %3616 = vmatmul.bf16.gmra.mxu0 %v3535
      %v3617 = vpop.f32.mrf.mxu0
      %v3618 = vadd.f32 0.0, %v3617
      %v3619 = vpop.f32.mrf.mxu0
      %v3620 = vadd.f32 0.0, %v3619
      %3621 = vmatmul.bf16.gmra.mxu0 %v3538
      %v3622 = vpop.f32.mrf.mxu0
      %v3623 = vadd.f32 0.0, %v3622
      %v3624 = vpop.f32.mrf.mxu0
      %v3625 = vadd.f32 0.0, %v3624
      %3626 = vmatmul.bf16.gmra.mxu0 %v3541
      %v3627 = vpop.f32.mrf.mxu0
      %v3628 = vadd.f32 0.0, %v3627
      %v3629 = vpop.f32.mrf.mxu0
      %v3630 = vadd.f32 0.0, %v3629
      %3631 = vdwg.mxu0
      %v3632 = vadd.f32 %v3398, %v3553
      %v3633 = vadd.f32 %v3399, %v3555
      %v3634 = vadd.f32 %v3400, %v3558
      %v3635 = vadd.f32 %v3401, %v3560
      %v3636 = vadd.f32 %v3402, %v3563
      %v3637 = vadd.f32 %v3403, %v3565
      %v3638 = vadd.f32 %v3404, %v3568
      %v3639 = vadd.f32 %v3405, %v3570
      %v3640 = vadd.f32 %v3406, %v3573
      %v3641 = vadd.f32 %v3407, %v3575
      %v3642 = vadd.f32 %v3408, %v3578
      %v3643 = vadd.f32 %v3409, %v3580
      %v3644 = vadd.f32 %v3410, %v3583
      %v3645 = vadd.f32 %v3411, %v3585
      %v3646 = vadd.f32 %v3412, %v3588
      %v3647 = vadd.f32 %v3413, %v3590
      %v3648 = vadd.f32 %v3414, %v3593
      %v3649 = vadd.f32 %v3415, %v3595
      %v3650 = vadd.f32 %v3416, %v3598
      %v3651 = vadd.f32 %v3417, %v3600
      %v3652 = vadd.f32 %v3418, %v3603
      %v3653 = vadd.f32 %v3419, %v3605
      %v3654 = vadd.f32 %v3420, %v3608
      %v3655 = vadd.f32 %v3421, %v3610
      %v3656 = vadd.f32 %v3422, %v3613
      %v3657 = vadd.f32 %v3423, %v3615
      %v3658 = vadd.f32 %v3424, %v3618
      %v3659 = vadd.f32 %v3425, %v3620
      %v3660 = vadd.f32 %v3426, %v3623
      %v3661 = vadd.f32 %v3427, %v3625
      %v3662 = vadd.f32 %v3428, %v3628
      %v3663 = vadd.f32 %v3429, %v3630
      %v3664 = vld [vmem:[%s2727 + $0x4] sm:$0xff]
      %v3665 = vld [vmem:[%s2727 + $0xc] sm:$0xff]
      %v3666 = vld [vmem:[%s2727 + $0x1c] sm:$0xff]
      %v3667 = vld [vmem:[%s2727 + $0x24] sm:$0xff]
      %v3668 = vld [vmem:[%s2727 + $0x34] sm:$0xff]
      %v3669 = vld [vmem:[%s2727 + $0x3c] sm:$0xff]
      %v3670 = vld [vmem:[%s2727 + $0x4c] sm:$0xff]
      %v3671 = vld [vmem:[%s2727 + $0x54] sm:$0xff]
      %v3672 = vld [vmem:[%s2727 + $0x64] sm:$0xff]
      %v3673 = vld [vmem:[%s2727 + $0x6c] sm:$0xff]
      %v3674 = vld [vmem:[%s2727 + $0x7c] sm:$0xff]
      %v3675 = vld [vmem:[%s2727 + $0x84] sm:$0xff]
      %v3676 = vld [vmem:[%s2727 + $0x94] sm:$0xff]
      %v3677 = vld [vmem:[%s2727 + $0x9c] sm:$0xff]
      %v3678 = vld [vmem:[%s2727 + $0xac] sm:$0xff]
      %v3679 = vld [vmem:[%s2727 + $0xb4] sm:$0xff]
      %v3680 = vld [vmem:[%s2727 + $0xc4] sm:$0xff]
      %v3681 = vld [vmem:[%s2727 + $0xcc] sm:$0xff]
      %v3682 = vld [vmem:[%s2727 + $0xdc] sm:$0xff]
      %v3683 = vld [vmem:[%s2727 + $0xe4] sm:$0xff]
      %v3684 = vld [vmem:[%s2727 + $0xf4] sm:$0xff]
      %v3685 = vld [vmem:[%s2727 + $0xfc] sm:$0xff]
      %v3686 = vld [vmem:[%s2727 + $0x10c] sm:$0xff]
      %v3687 = vld [vmem:[%s2727 + $0x114] sm:$0xff]
      %v3688 = vld [vmem:[%s2727 + $0x124] sm:$0xff]
      %v3689 = vld [vmem:[%s2727 + $0x12c] sm:$0xff]
      %v3690 = vld [vmem:[%s2727 + $0x13c] sm:$0xff]
      %v3691 = vld [vmem:[%s2727 + $0x144] sm:$0xff]
      %v3692 = vld [vmem:[%s2727 + $0x154] sm:$0xff]
      %v3693 = vld [vmem:[%s2727 + $0x15c] sm:$0xff]
      %v3694 = vld [vmem:[%s2727 + $0x16c] sm:$0xff]
      %v3695 = vld [vmem:[%s2727 + $0x174] sm:$0xff]
      %v3696 = vpack.c.bf16 %v3665, %v3664
      %v3697 = vpack.c.bf16 %v3667, %v3666
      %v3698 = vpack.c.bf16 %v3669, %v3668
      %v3699 = vpack.c.bf16 %v3671, %v3670
      %v3700 = vpack.c.bf16 %v3673, %v3672
      %v3701 = vpack.c.bf16 %v3675, %v3674
      %v3702 = vpack.c.bf16 %v3677, %v3676
      %v3703 = vpack.c.bf16 %v3679, %v3678
      %v3704 = vpack.c.bf16 %v3681, %v3680
      %v3705 = vpack.c.bf16 %v3683, %v3682
      %v3706 = vpack.c.bf16 %v3685, %v3684
      %v3707 = vpack.c.bf16 %v3687, %v3686
      %v3708 = vpack.c.bf16 %v3689, %v3688
      %v3709 = vpack.c.bf16 %v3691, %v3690
      %v3710 = vpack.c.bf16 %v3693, %v3692
      %v3711 = vpack.c.bf16 %v3695, %v3694
      %s3712 = scalar_lea.vmem %s3, 144
      %v3713 = vld [vmem:[%s3712] sm:$0xf]
      %v3714 = vld [vmem:[%s3712 + $0x4] sm:$0xf]
      %v3715 = vld [vmem:[%s3712 + $0x8] sm:$0xf]
      %v3716 = vld [vmem:[%s3712 + $0xc] sm:$0xf]
      %v3721 = vunpack.c.l.b16 %v3713
      %v3722 = vunpack.c.l.b16 %v3714
      %v3723 = vunpack.c.l.b16 %v3715
      %v3724 = vunpack.c.l.b16 %v3716
      %v3725 = vpack.c.b16 %v3722, %v3721
      %v3726 = vpack.c.b16 %v3724, %v3723
      %v3730 = vsel %vm1305, %v3696, 0
      %v3733 = vsel %vm1305, %v3697, 0
      %v3736 = vsel %vm1305, %v3698, 0
      %v3739 = vsel %vm1305, %v3699, 0
      %v3742 = vsel %vm1305, %v3700, 0
      %v3745 = vsel %vm1305, %v3701, 0
      %v3748 = vsel %vm1305, %v3702, 0
      %v3751 = vsel %vm1305, %v3703, 0
      %v3754 = vsel %vm1305, %v3704, 0
      %v3757 = vsel %vm1305, %v3705, 0
      %v3760 = vsel %vm1305, %v3706, 0
      %v3763 = vsel %vm1305, %v3707, 0
      %v3766 = vsel %vm1305, %v3708, 0
      %v3769 = vsel %vm1305, %v3709, 0
      %v3772 = vsel %vm1305, %v3710, 0
      %v3775 = vsel %vm1305, %v3711, 0
      %3777 = vmatpush.bf16.msra.mxu0 0
      %3778 = vmatpush.bf16.msra.mxu0 0
      %3779 = vmatpush.bf16.msra.mxu0 0
      %3780 = vmatpush.bf16.msra.mxu0 0
      %3781 = vmatpush.bf16.msra.mxu0 0
      %3782 = vmatpush.bf16.msra.mxu0 0
      %3783 = vmatpush.bf16.msra.mxu0 %v3726
      %3784 = vmatpush.bf16.msra.mxu0 %v3725
      %3785 = vmatmul.bf16.gmra.mxu0 %v3730
      %v3786 = vpop.f32.mrf.mxu0
      %v3787 = vadd.f32 0.0, %v3786
      %v3788 = vpop.f32.mrf.mxu0
      %v3789 = vadd.f32 0.0, %v3788
      %3790 = vmatmul.bf16.gmra.mxu0 %v3733
      %v3791 = vpop.f32.mrf.mxu0
      %v3792 = vadd.f32 0.0, %v3791
      %v3793 = vpop.f32.mrf.mxu0
      %v3794 = vadd.f32 0.0, %v3793
      %3795 = vmatmul.bf16.gmra.mxu0 %v3736
      %v3796 = vpop.f32.mrf.mxu0
      %v3797 = vadd.f32 0.0, %v3796
      %v3798 = vpop.f32.mrf.mxu0
      %v3799 = vadd.f32 0.0, %v3798
      %3800 = vmatmul.bf16.gmra.mxu0 %v3739
      %v3801 = vpop.f32.mrf.mxu0
      %v3802 = vadd.f32 0.0, %v3801
      %v3803 = vpop.f32.mrf.mxu0
      %v3804 = vadd.f32 0.0, %v3803
      %3805 = vmatmul.bf16.gmra.mxu0 %v3742
      %v3806 = vpop.f32.mrf.mxu0
      %v3807 = vadd.f32 0.0, %v3806
      %v3808 = vpop.f32.mrf.mxu0
      %v3809 = vadd.f32 0.0, %v3808
      %3810 = vmatmul.bf16.gmra.mxu0 %v3745
      %v3811 = vpop.f32.mrf.mxu0
      %v3812 = vadd.f32 0.0, %v3811
      %v3813 = vpop.f32.mrf.mxu0
      %v3814 = vadd.f32 0.0, %v3813
      %3815 = vmatmul.bf16.gmra.mxu0 %v3748
      %v3816 = vpop.f32.mrf.mxu0
      %v3817 = vadd.f32 0.0, %v3816
      %v3818 = vpop.f32.mrf.mxu0
      %v3819 = vadd.f32 0.0, %v3818
      %3820 = vmatmul.bf16.gmra.mxu0 %v3751
      %v3821 = vpop.f32.mrf.mxu0
      %v3822 = vadd.f32 0.0, %v3821
      %v3823 = vpop.f32.mrf.mxu0
      %v3824 = vadd.f32 0.0, %v3823
      %3825 = vmatmul.bf16.gmra.mxu0 %v3754
      %v3826 = vpop.f32.mrf.mxu0
      %v3827 = vadd.f32 0.0, %v3826
      %v3828 = vpop.f32.mrf.mxu0
      %v3829 = vadd.f32 0.0, %v3828
      %3830 = vmatmul.bf16.gmra.mxu0 %v3757
      %v3831 = vpop.f32.mrf.mxu0
      %v3832 = vadd.f32 0.0, %v3831
      %v3833 = vpop.f32.mrf.mxu0
      %v3834 = vadd.f32 0.0, %v3833
      %3835 = vmatmul.bf16.gmra.mxu0 %v3760
      %v3836 = vpop.f32.mrf.mxu0
      %v3837 = vadd.f32 0.0, %v3836
      %v3838 = vpop.f32.mrf.mxu0
      %v3839 = vadd.f32 0.0, %v3838
      %3840 = vmatmul.bf16.gmra.mxu0 %v3763
      %v3841 = vpop.f32.mrf.mxu0
      %v3842 = vadd.f32 0.0, %v3841
      %v3843 = vpop.f32.mrf.mxu0
      %v3844 = vadd.f32 0.0, %v3843
      %3845 = vmatmul.bf16.gmra.mxu0 %v3766
      %v3846 = vpop.f32.mrf.mxu0
      %v3847 = vadd.f32 0.0, %v3846
      %v3848 = vpop.f32.mrf.mxu0
      %v3849 = vadd.f32 0.0, %v3848
      %3850 = vmatmul.bf16.gmra.mxu0 %v3769
      %v3851 = vpop.f32.mrf.mxu0
      %v3852 = vadd.f32 0.0, %v3851
      %v3853 = vpop.f32.mrf.mxu0
      %v3854 = vadd.f32 0.0, %v3853
      %3855 = vmatmul.bf16.gmra.mxu0 %v3772
      %v3856 = vpop.f32.mrf.mxu0
      %v3857 = vadd.f32 0.0, %v3856
      %v3858 = vpop.f32.mrf.mxu0
      %v3859 = vadd.f32 0.0, %v3858
      %3860 = vmatmul.bf16.gmra.mxu0 %v3775
      %v3861 = vpop.f32.mrf.mxu0
      %v3862 = vadd.f32 0.0, %v3861
      %v3863 = vpop.f32.mrf.mxu0
      %v3864 = vadd.f32 0.0, %v3863
      %3865 = vdwg.mxu0
      %v3866 = vadd.f32 %v3632, %v3787
      %v3867 = vadd.f32 %v3633, %v3789
      %v3868 = vadd.f32 %v3634, %v3792
      %v3869 = vadd.f32 %v3635, %v3794
      %v3870 = vadd.f32 %v3636, %v3797
      %v3871 = vadd.f32 %v3637, %v3799
      %v3872 = vadd.f32 %v3638, %v3802
      %v3873 = vadd.f32 %v3639, %v3804
      %v3874 = vadd.f32 %v3640, %v3807
      %v3875 = vadd.f32 %v3641, %v3809
      %v3876 = vadd.f32 %v3642, %v3812
      %v3877 = vadd.f32 %v3643, %v3814
      %v3878 = vadd.f32 %v3644, %v3817
      %v3879 = vadd.f32 %v3645, %v3819
      %v3880 = vadd.f32 %v3646, %v3822
      %v3881 = vadd.f32 %v3647, %v3824
      %v3882 = vadd.f32 %v3648, %v3827
      %v3883 = vadd.f32 %v3649, %v3829
      %v3884 = vadd.f32 %v3650, %v3832
      %v3885 = vadd.f32 %v3651, %v3834
      %v3886 = vadd.f32 %v3652, %v3837
      %v3887 = vadd.f32 %v3653, %v3839
      %v3888 = vadd.f32 %v3654, %v3842
      %v3889 = vadd.f32 %v3655, %v3844
      %v3890 = vadd.f32 %v3656, %v3847
      %v3891 = vadd.f32 %v3657, %v3849
      %v3892 = vadd.f32 %v3658, %v3852
      %v3893 = vadd.f32 %v3659, %v3854
      %v3894 = vadd.f32 %v3660, %v3857
      %v3895 = vadd.f32 %v3661, %v3859
      %v3896 = vadd.f32 %v3662, %v3862
      %v3897 = vadd.f32 %v3663, %v3864
      %v3898 = vld [vmem:[%s1589] sm:$0xff]
      %v3899 = vld [vmem:[%s1589 + $0x8] sm:$0xff]
      %v3900 = vld [vmem:[%s1589 + $0x18] sm:$0xff]
      %v3901 = vld [vmem:[%s1589 + $0x20] sm:$0xff]
      %v3902 = vld [vmem:[%s1589 + $0x30] sm:$0xff]
      %v3903 = vld [vmem:[%s1589 + $0x38] sm:$0xff]
      %v3904 = vld [vmem:[%s1589 + $0x48] sm:$0xff]
      %v3905 = vld [vmem:[%s1589 + $0x50] sm:$0xff]
      %v3906 = vld [vmem:[%s1589 + $0x60] sm:$0xff]
      %v3907 = vld [vmem:[%s1589 + $0x68] sm:$0xff]
      %v3908 = vld [vmem:[%s1589 + $0x78] sm:$0xff]
      %v3909 = vld [vmem:[%s1589 + $0x80] sm:$0xff]
      %v3910 = vld [vmem:[%s1589 + $0x90] sm:$0xff]
      %v3911 = vld [vmem:[%s1589 + $0x98] sm:$0xff]
      %v3912 = vld [vmem:[%s1589 + $0xa8] sm:$0xff]
      %v3913 = vld [vmem:[%s1589 + $0xb0] sm:$0xff]
      %v3914 = vld [vmem:[%s1589 + $0xc0] sm:$0xff]
      %v3915 = vld [vmem:[%s1589 + $0xc8] sm:$0xff]
      %v3916 = vld [vmem:[%s1589 + $0xd8] sm:$0xff]
      %v3917 = vld [vmem:[%s1589 + $0xe0] sm:$0xff]
      %v3918 = vld [vmem:[%s1589 + $0xf0] sm:$0xff]
      %v3919 = vld [vmem:[%s1589 + $0xf8] sm:$0xff]
      %v3920 = vld [vmem:[%s1589 + $0x108] sm:$0xff]
      %v3921 = vld [vmem:[%s1589 + $0x110] sm:$0xff]
      %v3922 = vld [vmem:[%s1589 + $0x120] sm:$0xff]
      %v3923 = vld [vmem:[%s1589 + $0x128] sm:$0xff]
      %v3924 = vld [vmem:[%s1589 + $0x138] sm:$0xff]
      %v3925 = vld [vmem:[%s1589 + $0x140] sm:$0xff]
      %v3926 = vld [vmem:[%s1589 + $0x150] sm:$0xff]
      %v3927 = vld [vmem:[%s1589 + $0x158] sm:$0xff]
      %v3928 = vld [vmem:[%s1589 + $0x168] sm:$0xff]
      %v3929 = vld [vmem:[%s1589 + $0x170] sm:$0xff]
      %v3930 = vpack.c.bf16 %v3899, %v3898
      %v3931 = vpack.c.bf16 %v3901, %v3900
      %v3932 = vpack.c.bf16 %v3903, %v3902
      %v3933 = vpack.c.bf16 %v3905, %v3904
      %v3934 = vpack.c.bf16 %v3907, %v3906
      %v3935 = vpack.c.bf16 %v3909, %v3908
      %v3936 = vpack.c.bf16 %v3911, %v3910
      %v3937 = vpack.c.bf16 %v3913, %v3912
      %v3938 = vpack.c.bf16 %v3915, %v3914
      %v3939 = vpack.c.bf16 %v3917, %v3916
      %v3940 = vpack.c.bf16 %v3919, %v3918
      %v3941 = vpack.c.bf16 %v3921, %v3920
      %v3942 = vpack.c.bf16 %v3923, %v3922
      %v3943 = vpack.c.bf16 %v3925, %v3924
      %v3944 = vpack.c.bf16 %v3927, %v3926
      %v3945 = vpack.c.bf16 %v3929, %v3928
      %s3946 = scalar_lea.vmem %s3, 160
      %v3947 = vld [vmem:[%s3946] sm:$0xf]
      %v3948 = vld [vmem:[%s3946 + $0x4] sm:$0xf]
      %v3949 = vld [vmem:[%s3946 + $0x8] sm:$0xf]
      %v3950 = vld [vmem:[%s3946 + $0xc] sm:$0xf]
      %v3955 = vunpack.c.l.b16 %v3947
      %v3956 = vunpack.c.l.b16 %v3948
      %v3957 = vunpack.c.l.b16 %v3949
      %v3958 = vunpack.c.l.b16 %v3950
      %v3959 = vpack.c.b16 %v3956, %v3955
      %v3960 = vpack.c.b16 %v3958, %v3957
      %v3964 = vsel %vm1305, %v3930, 0
      %v3967 = vsel %vm1305, %v3931, 0
      %v3970 = vsel %vm1305, %v3932, 0
      %v3973 = vsel %vm1305, %v3933, 0
      %v3976 = vsel %vm1305, %v3934, 0
      %v3979 = vsel %vm1305, %v3935, 0
      %v3982 = vsel %vm1305, %v3936, 0
      %v3985 = vsel %vm1305, %v3937, 0
      %v3988 = vsel %vm1305, %v3938, 0
      %v3991 = vsel %vm1305, %v3939, 0
      %v3994 = vsel %vm1305, %v3940, 0
      %v3997 = vsel %vm1305, %v3941, 0
      %v4000 = vsel %vm1305, %v3942, 0
      %v4003 = vsel %vm1305, %v3943, 0
      %v4006 = vsel %vm1305, %v3944, 0
      %v4009 = vsel %vm1305, %v3945, 0
      %4011 = vmatpush.bf16.msra.mxu0 0
      %4012 = vmatpush.bf16.msra.mxu0 0
      %4013 = vmatpush.bf16.msra.mxu0 0
      %4014 = vmatpush.bf16.msra.mxu0 0
      %4015 = vmatpush.bf16.msra.mxu0 0
      %4016 = vmatpush.bf16.msra.mxu0 0
      %4017 = vmatpush.bf16.msra.mxu0 %v3960
      %4018 = vmatpush.bf16.msra.mxu0 %v3959
      %4019 = vmatmul.bf16.gmra.mxu0 %v3964
      %v4020 = vpop.f32.mrf.mxu0
      %v4021 = vadd.f32 0.0, %v4020
      %v4022 = vpop.f32.mrf.mxu0
      %v4023 = vadd.f32 0.0, %v4022
      %4024 = vmatmul.bf16.gmra.mxu0 %v3967
      %v4025 = vpop.f32.mrf.mxu0
      %v4026 = vadd.f32 0.0, %v4025
      %v4027 = vpop.f32.mrf.mxu0
      %v4028 = vadd.f32 0.0, %v4027
      %4029 = vmatmul.bf16.gmra.mxu0 %v3970
      %v4030 = vpop.f32.mrf.mxu0
      %v4031 = vadd.f32 0.0, %v4030
      %v4032 = vpop.f32.mrf.mxu0
      %v4033 = vadd.f32 0.0, %v4032
      %4034 = vmatmul.bf16.gmra.mxu0 %v3973
      %v4035 = vpop.f32.mrf.mxu0
      %v4036 = vadd.f32 0.0, %v4035
      %v4037 = vpop.f32.mrf.mxu0
      %v4038 = vadd.f32 0.0, %v4037
      %4039 = vmatmul.bf16.gmra.mxu0 %v3976
      %v4040 = vpop.f32.mrf.mxu0
      %v4041 = vadd.f32 0.0, %v4040
      %v4042 = vpop.f32.mrf.mxu0
      %v4043 = vadd.f32 0.0, %v4042
      %4044 = vmatmul.bf16.gmra.mxu0 %v3979
      %v4045 = vpop.f32.mrf.mxu0
      %v4046 = vadd.f32 0.0, %v4045
      %v4047 = vpop.f32.mrf.mxu0
      %v4048 = vadd.f32 0.0, %v4047
      %4049 = vmatmul.bf16.gmra.mxu0 %v3982
      %v4050 = vpop.f32.mrf.mxu0
      %v4051 = vadd.f32 0.0, %v4050
      %v4052 = vpop.f32.mrf.mxu0
      %v4053 = vadd.f32 0.0, %v4052
      %4054 = vmatmul.bf16.gmra.mxu0 %v3985
      %v4055 = vpop.f32.mrf.mxu0
      %v4056 = vadd.f32 0.0, %v4055
      %v4057 = vpop.f32.mrf.mxu0
      %v4058 = vadd.f32 0.0, %v4057
      %4059 = vmatmul.bf16.gmra.mxu0 %v3988
      %v4060 = vpop.f32.mrf.mxu0
      %v4061 = vadd.f32 0.0, %v4060
      %v4062 = vpop.f32.mrf.mxu0
      %v4063 = vadd.f32 0.0, %v4062
      %4064 = vmatmul.bf16.gmra.mxu0 %v3991
      %v4065 = vpop.f32.mrf.mxu0
      %v4066 = vadd.f32 0.0, %v4065
      %v4067 = vpop.f32.mrf.mxu0
      %v4068 = vadd.f32 0.0, %v4067
      %4069 = vmatmul.bf16.gmra.mxu0 %v3994
      %v4070 = vpop.f32.mrf.mxu0
      %v4071 = vadd.f32 0.0, %v4070
      %v4072 = vpop.f32.mrf.mxu0
      %v4073 = vadd.f32 0.0, %v4072
      %4074 = vmatmul.bf16.gmra.mxu0 %v3997
      %v4075 = vpop.f32.mrf.mxu0
      %v4076 = vadd.f32 0.0, %v4075
      %v4077 = vpop.f32.mrf.mxu0
      %v4078 = vadd.f32 0.0, %v4077
      %4079 = vmatmul.bf16.gmra.mxu0 %v4000
      %v4080 = vpop.f32.mrf.mxu0
      %v4081 = vadd.f32 0.0, %v4080
      %v4082 = vpop.f32.mrf.mxu0
      %v4083 = vadd.f32 0.0, %v4082
      %4084 = vmatmul.bf16.gmra.mxu0 %v4003
      %v4085 = vpop.f32.mrf.mxu0
      %v4086 = vadd.f32 0.0, %v4085
      %v4087 = vpop.f32.mrf.mxu0
      %v4088 = vadd.f32 0.0, %v4087
      %4089 = vmatmul.bf16.gmra.mxu0 %v4006
      %v4090 = vpop.f32.mrf.mxu0
      %v4091 = vadd.f32 0.0, %v4090
      %v4092 = vpop.f32.mrf.mxu0
      %v4093 = vadd.f32 0.0, %v4092
      %4094 = vmatmul.bf16.gmra.mxu0 %v4009
      %v4095 = vpop.f32.mrf.mxu0
      %v4096 = vadd.f32 0.0, %v4095
      %v4097 = vpop.f32.mrf.mxu0
      %v4098 = vadd.f32 0.0, %v4097
      %4099 = vdwg.mxu0
      %v4100 = vadd.f32 %v3866, %v4021
      %v4101 = vadd.f32 %v3867, %v4023
      %v4102 = vadd.f32 %v3868, %v4026
      %v4103 = vadd.f32 %v3869, %v4028
      %v4104 = vadd.f32 %v3870, %v4031
      %v4105 = vadd.f32 %v3871, %v4033
      %v4106 = vadd.f32 %v3872, %v4036
      %v4107 = vadd.f32 %v3873, %v4038
      %v4108 = vadd.f32 %v3874, %v4041
      %v4109 = vadd.f32 %v3875, %v4043
      %v4110 = vadd.f32 %v3876, %v4046
      %v4111 = vadd.f32 %v3877, %v4048
      %v4112 = vadd.f32 %v3878, %v4051
      %v4113 = vadd.f32 %v3879, %v4053
      %v4114 = vadd.f32 %v3880, %v4056
      %v4115 = vadd.f32 %v3881, %v4058
      %v4116 = vadd.f32 %v3882, %v4061
      %v4117 = vadd.f32 %v3883, %v4063
      %v4118 = vadd.f32 %v3884, %v4066
      %v4119 = vadd.f32 %v3885, %v4068
      %v4120 = vadd.f32 %v3886, %v4071
      %v4121 = vadd.f32 %v3887, %v4073
      %v4122 = vadd.f32 %v3888, %v4076
      %v4123 = vadd.f32 %v3889, %v4078
      %v4124 = vadd.f32 %v3890, %v4081
      %v4125 = vadd.f32 %v3891, %v4083
      %v4126 = vadd.f32 %v3892, %v4086
      %v4127 = vadd.f32 %v3893, %v4088
      %v4128 = vadd.f32 %v3894, %v4091
      %v4129 = vadd.f32 %v3895, %v4093
      %v4130 = vadd.f32 %v3896, %v4096
      %v4131 = vadd.f32 %v3897, %v4098
      %v4132 = vld [vmem:[%s1589 + $0x1] sm:$0xff]
      %v4133 = vld [vmem:[%s1589 + $0x9] sm:$0xff]
      %v4134 = vld [vmem:[%s1589 + $0x19] sm:$0xff]
      %v4135 = vld [vmem:[%s1589 + $0x21] sm:$0xff]
      %v4136 = vld [vmem:[%s1589 + $0x31] sm:$0xff]
      %v4137 = vld [vmem:[%s1589 + $0x39] sm:$0xff]
      %v4138 = vld [vmem:[%s1589 + $0x49] sm:$0xff]
      %v4139 = vld [vmem:[%s1589 + $0x51] sm:$0xff]
      %v4140 = vld [vmem:[%s1589 + $0x61] sm:$0xff]
      %v4141 = vld [vmem:[%s1589 + $0x69] sm:$0xff]
      %v4142 = vld [vmem:[%s1589 + $0x79] sm:$0xff]
      %v4143 = vld [vmem:[%s1589 + $0x81] sm:$0xff]
      %v4144 = vld [vmem:[%s1589 + $0x91] sm:$0xff]
      %v4145 = vld [vmem:[%s1589 + $0x99] sm:$0xff]
      %v4146 = vld [vmem:[%s1589 + $0xa9] sm:$0xff]
      %v4147 = vld [vmem:[%s1589 + $0xb1] sm:$0xff]
      %v4148 = vld [vmem:[%s1589 + $0xc1] sm:$0xff]
      %v4149 = vld [vmem:[%s1589 + $0xc9] sm:$0xff]
      %v4150 = vld [vmem:[%s1589 + $0xd9] sm:$0xff]
      %v4151 = vld [vmem:[%s1589 + $0xe1] sm:$0xff]
      %v4152 = vld [vmem:[%s1589 + $0xf1] sm:$0xff]
      %v4153 = vld [vmem:[%s1589 + $0xf9] sm:$0xff]
      %v4154 = vld [vmem:[%s1589 + $0x109] sm:$0xff]
      %v4155 = vld [vmem:[%s1589 + $0x111] sm:$0xff]
      %v4156 = vld [vmem:[%s1589 + $0x121] sm:$0xff]
      %v4157 = vld [vmem:[%s1589 + $0x129] sm:$0xff]
      %v4158 = vld [vmem:[%s1589 + $0x139] sm:$0xff]
      %v4159 = vld [vmem:[%s1589 + $0x141] sm:$0xff]
      %v4160 = vld [vmem:[%s1589 + $0x151] sm:$0xff]
      %v4161 = vld [vmem:[%s1589 + $0x159] sm:$0xff]
      %v4162 = vld [vmem:[%s1589 + $0x169] sm:$0xff]
      %v4163 = vld [vmem:[%s1589 + $0x171] sm:$0xff]
      %v4164 = vpack.c.bf16 %v4133, %v4132
      %v4165 = vpack.c.bf16 %v4135, %v4134
      %v4166 = vpack.c.bf16 %v4137, %v4136
      %v4167 = vpack.c.bf16 %v4139, %v4138
      %v4168 = vpack.c.bf16 %v4141, %v4140
      %v4169 = vpack.c.bf16 %v4143, %v4142
      %v4170 = vpack.c.bf16 %v4145, %v4144
      %v4171 = vpack.c.bf16 %v4147, %v4146
      %v4172 = vpack.c.bf16 %v4149, %v4148
      %v4173 = vpack.c.bf16 %v4151, %v4150
      %v4174 = vpack.c.bf16 %v4153, %v4152
      %v4175 = vpack.c.bf16 %v4155, %v4154
      %v4176 = vpack.c.bf16 %v4157, %v4156
      %v4177 = vpack.c.bf16 %v4159, %v4158
      %v4178 = vpack.c.bf16 %v4161, %v4160
      %v4179 = vpack.c.bf16 %v4163, %v4162
      %s4180 = scalar_lea.vmem %s3, 176
      %v4181 = vld [vmem:[%s4180] sm:$0xf]
      %v4182 = vld [vmem:[%s4180 + $0x4] sm:$0xf]
      %v4183 = vld [vmem:[%s4180 + $0x8] sm:$0xf]
      %v4184 = vld [vmem:[%s4180 + $0xc] sm:$0xf]
      %v4189 = vunpack.c.l.b16 %v4181
      %v4190 = vunpack.c.l.b16 %v4182
      %v4191 = vunpack.c.l.b16 %v4183
      %v4192 = vunpack.c.l.b16 %v4184
      %v4193 = vpack.c.b16 %v4190, %v4189
      %v4194 = vpack.c.b16 %v4192, %v4191
      %v4198 = vsel %vm1305, %v4164, 0
      %v4201 = vsel %vm1305, %v4165, 0
      %v4204 = vsel %vm1305, %v4166, 0
      %v4207 = vsel %vm1305, %v4167, 0
      %v4210 = vsel %vm1305, %v4168, 0
      %v4213 = vsel %vm1305, %v4169, 0
      %v4216 = vsel %vm1305, %v4170, 0
      %v4219 = vsel %vm1305, %v4171, 0
      %v4222 = vsel %vm1305, %v4172, 0
      %v4225 = vsel %vm1305, %v4173, 0
      %v4228 = vsel %vm1305, %v4174, 0
      %v4231 = vsel %vm1305, %v4175, 0
      %v4234 = vsel %vm1305, %v4176, 0
      %v4237 = vsel %vm1305, %v4177, 0
      %v4240 = vsel %vm1305, %v4178, 0
      %v4243 = vsel %vm1305, %v4179, 0
      %4245 = vmatpush.bf16.msra.mxu0 0
      %4246 = vmatpush.bf16.msra.mxu0 0
      %4247 = vmatpush.bf16.msra.mxu0 0
      %4248 = vmatpush.bf16.msra.mxu0 0
      %4249 = vmatpush.bf16.msra.mxu0 0
      %4250 = vmatpush.bf16.msra.mxu0 0
      %4251 = vmatpush.bf16.msra.mxu0 %v4194
      %4252 = vmatpush.bf16.msra.mxu0 %v4193
      %4253 = vmatmul.bf16.gmra.mxu0 %v4198
      %v4254 = vpop.f32.mrf.mxu0
      %v4255 = vadd.f32 0.0, %v4254
      %v4256 = vpop.f32.mrf.mxu0
      %v4257 = vadd.f32 0.0, %v4256
      %4258 = vmatmul.bf16.gmra.mxu0 %v4201
      %v4259 = vpop.f32.mrf.mxu0
      %v4260 = vadd.f32 0.0, %v4259
      %v4261 = vpop.f32.mrf.mxu0
      %v4262 = vadd.f32 0.0, %v4261
      %4263 = vmatmul.bf16.gmra.mxu0 %v4204
      %v4264 = vpop.f32.mrf.mxu0
      %v4265 = vadd.f32 0.0, %v4264
      %v4266 = vpop.f32.mrf.mxu0
      %v4267 = vadd.f32 0.0, %v4266
      %4268 = vmatmul.bf16.gmra.mxu0 %v4207
      %v4269 = vpop.f32.mrf.mxu0
      %v4270 = vadd.f32 0.0, %v4269
      %v4271 = vpop.f32.mrf.mxu0
      %v4272 = vadd.f32 0.0, %v4271
      %4273 = vmatmul.bf16.gmra.mxu0 %v4210
      %v4274 = vpop.f32.mrf.mxu0
      %v4275 = vadd.f32 0.0, %v4274
      %v4276 = vpop.f32.mrf.mxu0
      %v4277 = vadd.f32 0.0, %v4276
      %4278 = vmatmul.bf16.gmra.mxu0 %v4213
      %v4279 = vpop.f32.mrf.mxu0
      %v4280 = vadd.f32 0.0, %v4279
      %v4281 = vpop.f32.mrf.mxu0
      %v4282 = vadd.f32 0.0, %v4281
      %4283 = vmatmul.bf16.gmra.mxu0 %v4216
      %v4284 = vpop.f32.mrf.mxu0
      %v4285 = vadd.f32 0.0, %v4284
      %v4286 = vpop.f32.mrf.mxu0
      %v4287 = vadd.f32 0.0, %v4286
      %4288 = vmatmul.bf16.gmra.mxu0 %v4219
      %v4289 = vpop.f32.mrf.mxu0
      %v4290 = vadd.f32 0.0, %v4289
      %v4291 = vpop.f32.mrf.mxu0
      %v4292 = vadd.f32 0.0, %v4291
      %4293 = vmatmul.bf16.gmra.mxu0 %v4222
      %v4294 = vpop.f32.mrf.mxu0
      %v4295 = vadd.f32 0.0, %v4294
      %v4296 = vpop.f32.mrf.mxu0
      %v4297 = vadd.f32 0.0, %v4296
      %4298 = vmatmul.bf16.gmra.mxu0 %v4225
      %v4299 = vpop.f32.mrf.mxu0
      %v4300 = vadd.f32 0.0, %v4299
      %v4301 = vpop.f32.mrf.mxu0
      %v4302 = vadd.f32 0.0, %v4301
      %4303 = vmatmul.bf16.gmra.mxu0 %v4228
      %v4304 = vpop.f32.mrf.mxu0
      %v4305 = vadd.f32 0.0, %v4304
      %v4306 = vpop.f32.mrf.mxu0
      %v4307 = vadd.f32 0.0, %v4306
      %4308 = vmatmul.bf16.gmra.mxu0 %v4231
      %v4309 = vpop.f32.mrf.mxu0
      %v4310 = vadd.f32 0.0, %v4309
      %v4311 = vpop.f32.mrf.mxu0
      %v4312 = vadd.f32 0.0, %v4311
      %4313 = vmatmul.bf16.gmra.mxu0 %v4234
      %v4314 = vpop.f32.mrf.mxu0
      %v4315 = vadd.f32 0.0, %v4314
      %v4316 = vpop.f32.mrf.mxu0
      %v4317 = vadd.f32 0.0, %v4316
      %4318 = vmatmul.bf16.gmra.mxu0 %v4237
      %v4319 = vpop.f32.mrf.mxu0
      %v4320 = vadd.f32 0.0, %v4319
      %v4321 = vpop.f32.mrf.mxu0
      %v4322 = vadd.f32 0.0, %v4321
      %4323 = vmatmul.bf16.gmra.mxu0 %v4240
      %v4324 = vpop.f32.mrf.mxu0
      %v4325 = vadd.f32 0.0, %v4324
      %v4326 = vpop.f32.mrf.mxu0
      %v4327 = vadd.f32 0.0, %v4326
      %4328 = vmatmul.bf16.gmra.mxu0 %v4243
      %v4329 = vpop.f32.mrf.mxu0
      %v4330 = vadd.f32 0.0, %v4329
      %v4331 = vpop.f32.mrf.mxu0
      %v4332 = vadd.f32 0.0, %v4331
      %4333 = vdwg.mxu0
      %v4334 = vadd.f32 %v4100, %v4255
      %v4335 = vadd.f32 %v4101, %v4257
      %v4336 = vadd.f32 %v4102, %v4260
      %v4337 = vadd.f32 %v4103, %v4262
      %v4338 = vadd.f32 %v4104, %v4265
      %v4339 = vadd.f32 %v4105, %v4267
      %v4340 = vadd.f32 %v4106, %v4270
      %v4341 = vadd.f32 %v4107, %v4272
      %v4342 = vadd.f32 %v4108, %v4275
      %v4343 = vadd.f32 %v4109, %v4277
      %v4344 = vadd.f32 %v4110, %v4280
      %v4345 = vadd.f32 %v4111, %v4282
      %v4346 = vadd.f32 %v4112, %v4285
      %v4347 = vadd.f32 %v4113, %v4287
      %v4348 = vadd.f32 %v4114, %v4290
      %v4349 = vadd.f32 %v4115, %v4292
      %v4350 = vadd.f32 %v4116, %v4295
      %v4351 = vadd.f32 %v4117, %v4297
      %v4352 = vadd.f32 %v4118, %v4300
      %v4353 = vadd.f32 %v4119, %v4302
      %v4354 = vadd.f32 %v4120, %v4305
      %v4355 = vadd.f32 %v4121, %v4307
      %v4356 = vadd.f32 %v4122, %v4310
      %v4357 = vadd.f32 %v4123, %v4312
      %v4358 = vadd.f32 %v4124, %v4315
      %v4359 = vadd.f32 %v4125, %v4317
      %v4360 = vadd.f32 %v4126, %v4320
      %v4361 = vadd.f32 %v4127, %v4322
      %v4362 = vadd.f32 %v4128, %v4325
      %v4363 = vadd.f32 %v4129, %v4327
      %v4364 = vadd.f32 %v4130, %v4330
      %v4365 = vadd.f32 %v4131, %v4332
      %v4366 = vld [vmem:[%s1589 + $0x2] sm:$0xff]
      %v4367 = vld [vmem:[%s1589 + $0xa] sm:$0xff]
      %v4368 = vld [vmem:[%s1589 + $0x1a] sm:$0xff]
      %v4369 = vld [vmem:[%s1589 + $0x22] sm:$0xff]
      %v4370 = vld [vmem:[%s1589 + $0x32] sm:$0xff]
      %v4371 = vld [vmem:[%s1589 + $0x3a] sm:$0xff]
      %v4372 = vld [vmem:[%s1589 + $0x4a] sm:$0xff]
      %v4373 = vld [vmem:[%s1589 + $0x52] sm:$0xff]
      %v4374 = vld [vmem:[%s1589 + $0x62] sm:$0xff]
      %v4375 = vld [vmem:[%s1589 + $0x6a] sm:$0xff]
      %v4376 = vld [vmem:[%s1589 + $0x7a] sm:$0xff]
      %v4377 = vld [vmem:[%s1589 + $0x82] sm:$0xff]
      %v4378 = vld [vmem:[%s1589 + $0x92] sm:$0xff]
      %v4379 = vld [vmem:[%s1589 + $0x9a] sm:$0xff]
      %v4380 = vld [vmem:[%s1589 + $0xaa] sm:$0xff]
      %v4381 = vld [vmem:[%s1589 + $0xb2] sm:$0xff]
      %v4382 = vld [vmem:[%s1589 + $0xc2] sm:$0xff]
      %v4383 = vld [vmem:[%s1589 + $0xca] sm:$0xff]
      %v4384 = vld [vmem:[%s1589 + $0xda] sm:$0xff]
      %v4385 = vld [vmem:[%s1589 + $0xe2] sm:$0xff]
      %v4386 = vld [vmem:[%s1589 + $0xf2] sm:$0xff]
      %v4387 = vld [vmem:[%s1589 + $0xfa] sm:$0xff]
      %v4388 = vld [vmem:[%s1589 + $0x10a] sm:$0xff]
      %v4389 = vld [vmem:[%s1589 + $0x112] sm:$0xff]
      %v4390 = vld [vmem:[%s1589 + $0x122] sm:$0xff]
      %v4391 = vld [vmem:[%s1589 + $0x12a] sm:$0xff]
      %v4392 = vld [vmem:[%s1589 + $0x13a] sm:$0xff]
      %v4393 = vld [vmem:[%s1589 + $0x142] sm:$0xff]
      %v4394 = vld [vmem:[%s1589 + $0x152] sm:$0xff]
      %v4395 = vld [vmem:[%s1589 + $0x15a] sm:$0xff]
      %v4396 = vld [vmem:[%s1589 + $0x16a] sm:$0xff]
      %v4397 = vld [vmem:[%s1589 + $0x172] sm:$0xff]
      %v4398 = vpack.c.bf16 %v4367, %v4366
      %v4399 = vpack.c.bf16 %v4369, %v4368
      %v4400 = vpack.c.bf16 %v4371, %v4370
      %v4401 = vpack.c.bf16 %v4373, %v4372
      %v4402 = vpack.c.bf16 %v4375, %v4374
      %v4403 = vpack.c.bf16 %v4377, %v4376
      %v4404 = vpack.c.bf16 %v4379, %v4378
      %v4405 = vpack.c.bf16 %v4381, %v4380
      %v4406 = vpack.c.bf16 %v4383, %v4382
      %v4407 = vpack.c.bf16 %v4385, %v4384
      %v4408 = vpack.c.bf16 %v4387, %v4386
      %v4409 = vpack.c.bf16 %v4389, %v4388
      %v4410 = vpack.c.bf16 %v4391, %v4390
      %v4411 = vpack.c.bf16 %v4393, %v4392
      %v4412 = vpack.c.bf16 %v4395, %v4394
      %v4413 = vpack.c.bf16 %v4397, %v4396
      %s4414 = scalar_lea.vmem %s3, 192
      %v4415 = vld [vmem:[%s4414] sm:$0xf]
      %v4416 = vld [vmem:[%s4414 + $0x4] sm:$0xf]
      %v4417 = vld [vmem:[%s4414 + $0x8] sm:$0xf]
      %v4418 = vld [vmem:[%s4414 + $0xc] sm:$0xf]
      %v4423 = vunpack.c.l.b16 %v4415
      %v4424 = vunpack.c.l.b16 %v4416
      %v4425 = vunpack.c.l.b16 %v4417
      %v4426 = vunpack.c.l.b16 %v4418
      %v4427 = vpack.c.b16 %v4424, %v4423
      %v4428 = vpack.c.b16 %v4426, %v4425
      %v4432 = vsel %vm1305, %v4398, 0
      %v4435 = vsel %vm1305, %v4399, 0
      %v4438 = vsel %vm1305, %v4400, 0
      %v4441 = vsel %vm1305, %v4401, 0
      %v4444 = vsel %vm1305, %v4402, 0
      %v4447 = vsel %vm1305, %v4403, 0
      %v4450 = vsel %vm1305, %v4404, 0
      %v4453 = vsel %vm1305, %v4405, 0
      %v4456 = vsel %vm1305, %v4406, 0
      %v4459 = vsel %vm1305, %v4407, 0
      %v4462 = vsel %vm1305, %v4408, 0
      %v4465 = vsel %vm1305, %v4409, 0
      %v4468 = vsel %vm1305, %v4410, 0
      %v4471 = vsel %vm1305, %v4411, 0
      %v4474 = vsel %vm1305, %v4412, 0
      %v4477 = vsel %vm1305, %v4413, 0
      %4479 = vmatpush.bf16.msra.mxu0 0
      %4480 = vmatpush.bf16.msra.mxu0 0
      %4481 = vmatpush.bf16.msra.mxu0 0
      %4482 = vmatpush.bf16.msra.mxu0 0
      %4483 = vmatpush.bf16.msra.mxu0 0
      %4484 = vmatpush.bf16.msra.mxu0 0
      %4485 = vmatpush.bf16.msra.mxu0 %v4428
      %4486 = vmatpush.bf16.msra.mxu0 %v4427
      %4487 = vmatmul.bf16.gmra.mxu0 %v4432
      %v4488 = vpop.f32.mrf.mxu0
      %v4489 = vadd.f32 0.0, %v4488
      %v4490 = vpop.f32.mrf.mxu0
      %v4491 = vadd.f32 0.0, %v4490
      %4492 = vmatmul.bf16.gmra.mxu0 %v4435
      %v4493 = vpop.f32.mrf.mxu0
      %v4494 = vadd.f32 0.0, %v4493
      %v4495 = vpop.f32.mrf.mxu0
      %v4496 = vadd.f32 0.0, %v4495
      %4497 = vmatmul.bf16.gmra.mxu0 %v4438
      %v4498 = vpop.f32.mrf.mxu0
      %v4499 = vadd.f32 0.0, %v4498
      %v4500 = vpop.f32.mrf.mxu0
      %v4501 = vadd.f32 0.0, %v4500
      %4502 = vmatmul.bf16.gmra.mxu0 %v4441
      %v4503 = vpop.f32.mrf.mxu0
      %v4504 = vadd.f32 0.0, %v4503
      %v4505 = vpop.f32.mrf.mxu0
      %v4506 = vadd.f32 0.0, %v4505
      %4507 = vmatmul.bf16.gmra.mxu0 %v4444
      %v4508 = vpop.f32.mrf.mxu0
      %v4509 = vadd.f32 0.0, %v4508
      %v4510 = vpop.f32.mrf.mxu0
      %v4511 = vadd.f32 0.0, %v4510
      %4512 = vmatmul.bf16.gmra.mxu0 %v4447
      %v4513 = vpop.f32.mrf.mxu0
      %v4514 = vadd.f32 0.0, %v4513
      %v4515 = vpop.f32.mrf.mxu0
      %v4516 = vadd.f32 0.0, %v4515
      %4517 = vmatmul.bf16.gmra.mxu0 %v4450
      %v4518 = vpop.f32.mrf.mxu0
      %v4519 = vadd.f32 0.0, %v4518
      %v4520 = vpop.f32.mrf.mxu0
      %v4521 = vadd.f32 0.0, %v4520
      %4522 = vmatmul.bf16.gmra.mxu0 %v4453
      %v4523 = vpop.f32.mrf.mxu0
      %v4524 = vadd.f32 0.0, %v4523
      %v4525 = vpop.f32.mrf.mxu0
      %v4526 = vadd.f32 0.0, %v4525
      %4527 = vmatmul.bf16.gmra.mxu0 %v4456
      %v4528 = vpop.f32.mrf.mxu0
      %v4529 = vadd.f32 0.0, %v4528
      %v4530 = vpop.f32.mrf.mxu0
      %v4531 = vadd.f32 0.0, %v4530
      %4532 = vmatmul.bf16.gmra.mxu0 %v4459
      %v4533 = vpop.f32.mrf.mxu0
      %v4534 = vadd.f32 0.0, %v4533
      %v4535 = vpop.f32.mrf.mxu0
      %v4536 = vadd.f32 0.0, %v4535
      %4537 = vmatmul.bf16.gmra.mxu0 %v4462
      %v4538 = vpop.f32.mrf.mxu0
      %v4539 = vadd.f32 0.0, %v4538
      %v4540 = vpop.f32.mrf.mxu0
      %v4541 = vadd.f32 0.0, %v4540
      %4542 = vmatmul.bf16.gmra.mxu0 %v4465
      %v4543 = vpop.f32.mrf.mxu0
      %v4544 = vadd.f32 0.0, %v4543
      %v4545 = vpop.f32.mrf.mxu0
      %v4546 = vadd.f32 0.0, %v4545
      %4547 = vmatmul.bf16.gmra.mxu0 %v4468
      %v4548 = vpop.f32.mrf.mxu0
      %v4549 = vadd.f32 0.0, %v4548
      %v4550 = vpop.f32.mrf.mxu0
      %v4551 = vadd.f32 0.0, %v4550
      %4552 = vmatmul.bf16.gmra.mxu0 %v4471
      %v4553 = vpop.f32.mrf.mxu0
      %v4554 = vadd.f32 0.0, %v4553
      %v4555 = vpop.f32.mrf.mxu0
      %v4556 = vadd.f32 0.0, %v4555
      %4557 = vmatmul.bf16.gmra.mxu0 %v4474
      %v4558 = vpop.f32.mrf.mxu0
      %v4559 = vadd.f32 0.0, %v4558
      %v4560 = vpop.f32.mrf.mxu0
      %v4561 = vadd.f32 0.0, %v4560
      %4562 = vmatmul.bf16.gmra.mxu0 %v4477
      %v4563 = vpop.f32.mrf.mxu0
      %v4564 = vadd.f32 0.0, %v4563
      %v4565 = vpop.f32.mrf.mxu0
      %v4566 = vadd.f32 0.0, %v4565
      %4567 = vdwg.mxu0
      %v4568 = vadd.f32 %v4334, %v4489
      %v4569 = vadd.f32 %v4335, %v4491
      %v4570 = vadd.f32 %v4336, %v4494
      %v4571 = vadd.f32 %v4337, %v4496
      %v4572 = vadd.f32 %v4338, %v4499
      %v4573 = vadd.f32 %v4339, %v4501
      %v4574 = vadd.f32 %v4340, %v4504
      %v4575 = vadd.f32 %v4341, %v4506
      %v4576 = vadd.f32 %v4342, %v4509
      %v4577 = vadd.f32 %v4343, %v4511
      %v4578 = vadd.f32 %v4344, %v4514
      %v4579 = vadd.f32 %v4345, %v4516
      %v4580 = vadd.f32 %v4346, %v4519
      %v4581 = vadd.f32 %v4347, %v4521
      %v4582 = vadd.f32 %v4348, %v4524
      %v4583 = vadd.f32 %v4349, %v4526
      %v4584 = vadd.f32 %v4350, %v4529
      %v4585 = vadd.f32 %v4351, %v4531
      %v4586 = vadd.f32 %v4352, %v4534
      %v4587 = vadd.f32 %v4353, %v4536
      %v4588 = vadd.f32 %v4354, %v4539
      %v4589 = vadd.f32 %v4355, %v4541
      %v4590 = vadd.f32 %v4356, %v4544
      %v4591 = vadd.f32 %v4357, %v4546
      %v4592 = vadd.f32 %v4358, %v4549
      %v4593 = vadd.f32 %v4359, %v4551
      %v4594 = vadd.f32 %v4360, %v4554
      %v4595 = vadd.f32 %v4361, %v4556
      %v4596 = vadd.f32 %v4362, %v4559
      %v4597 = vadd.f32 %v4363, %v4561
      %v4598 = vadd.f32 %v4364, %v4564
      %v4599 = vadd.f32 %v4365, %v4566
      %v4600 = vld [vmem:[%s1589 + $0x3] sm:$0xff]
      %v4601 = vld [vmem:[%s1589 + $0xb] sm:$0xff]
      %v4602 = vld [vmem:[%s1589 + $0x1b] sm:$0xff]
      %v4603 = vld [vmem:[%s1589 + $0x23] sm:$0xff]
      %v4604 = vld [vmem:[%s1589 + $0x33] sm:$0xff]
      %v4605 = vld [vmem:[%s1589 + $0x3b] sm:$0xff]
      %v4606 = vld [vmem:[%s1589 + $0x4b] sm:$0xff]
      %v4607 = vld [vmem:[%s1589 + $0x53] sm:$0xff]
      %v4608 = vld [vmem:[%s1589 + $0x63] sm:$0xff]
      %v4609 = vld [vmem:[%s1589 + $0x6b] sm:$0xff]
      %v4610 = vld [vmem:[%s1589 + $0x7b] sm:$0xff]
      %v4611 = vld [vmem:[%s1589 + $0x83] sm:$0xff]
      %v4612 = vld [vmem:[%s1589 + $0x93] sm:$0xff]
      %v4613 = vld [vmem:[%s1589 + $0x9b] sm:$0xff]
      %v4614 = vld [vmem:[%s1589 + $0xab] sm:$0xff]
      %v4615 = vld [vmem:[%s1589 + $0xb3] sm:$0xff]
      %v4616 = vld [vmem:[%s1589 + $0xc3] sm:$0xff]
      %v4617 = vld [vmem:[%s1589 + $0xcb] sm:$0xff]
      %v4618 = vld [vmem:[%s1589 + $0xdb] sm:$0xff]
      %v4619 = vld [vmem:[%s1589 + $0xe3] sm:$0xff]
      %v4620 = vld [vmem:[%s1589 + $0xf3] sm:$0xff]
      %v4621 = vld [vmem:[%s1589 + $0xfb] sm:$0xff]
      %v4622 = vld [vmem:[%s1589 + $0x10b] sm:$0xff]
      %v4623 = vld [vmem:[%s1589 + $0x113] sm:$0xff]
      %v4624 = vld [vmem:[%s1589 + $0x123] sm:$0xff]
      %v4625 = vld [vmem:[%s1589 + $0x12b] sm:$0xff]
      %v4626 = vld [vmem:[%s1589 + $0x13b] sm:$0xff]
      %v4627 = vld [vmem:[%s1589 + $0x143] sm:$0xff]
      %v4628 = vld [vmem:[%s1589 + $0x153] sm:$0xff]
      %v4629 = vld [vmem:[%s1589 + $0x15b] sm:$0xff]
      %v4630 = vld [vmem:[%s1589 + $0x16b] sm:$0xff]
      %v4631 = vld [vmem:[%s1589 + $0x173] sm:$0xff]
      %v4632 = vpack.c.bf16 %v4601, %v4600
      %v4633 = vpack.c.bf16 %v4603, %v4602
      %v4634 = vpack.c.bf16 %v4605, %v4604
      %v4635 = vpack.c.bf16 %v4607, %v4606
      %v4636 = vpack.c.bf16 %v4609, %v4608
      %v4637 = vpack.c.bf16 %v4611, %v4610
      %v4638 = vpack.c.bf16 %v4613, %v4612
      %v4639 = vpack.c.bf16 %v4615, %v4614
      %v4640 = vpack.c.bf16 %v4617, %v4616
      %v4641 = vpack.c.bf16 %v4619, %v4618
      %v4642 = vpack.c.bf16 %v4621, %v4620
      %v4643 = vpack.c.bf16 %v4623, %v4622
      %v4644 = vpack.c.bf16 %v4625, %v4624
      %v4645 = vpack.c.bf16 %v4627, %v4626
      %v4646 = vpack.c.bf16 %v4629, %v4628
      %v4647 = vpack.c.bf16 %v4631, %v4630
      %s4648 = scalar_lea.vmem %s3, 208
      %v4649 = vld [vmem:[%s4648] sm:$0xf]
      %v4650 = vld [vmem:[%s4648 + $0x4] sm:$0xf]
      %v4651 = vld [vmem:[%s4648 + $0x8] sm:$0xf]
      %v4652 = vld [vmem:[%s4648 + $0xc] sm:$0xf]
      %v4657 = vunpack.c.l.b16 %v4649
      %v4658 = vunpack.c.l.b16 %v4650
      %v4659 = vunpack.c.l.b16 %v4651
      %v4660 = vunpack.c.l.b16 %v4652
      %v4661 = vpack.c.b16 %v4658, %v4657
      %v4662 = vpack.c.b16 %v4660, %v4659
      %v4666 = vsel %vm1305, %v4632, 0
      %v4669 = vsel %vm1305, %v4633, 0
      %v4672 = vsel %vm1305, %v4634, 0
      %v4675 = vsel %vm1305, %v4635, 0
      %v4678 = vsel %vm1305, %v4636, 0
      %v4681 = vsel %vm1305, %v4637, 0
      %v4684 = vsel %vm1305, %v4638, 0
      %v4687 = vsel %vm1305, %v4639, 0
      %v4690 = vsel %vm1305, %v4640, 0
      %v4693 = vsel %vm1305, %v4641, 0
      %v4696 = vsel %vm1305, %v4642, 0
      %v4699 = vsel %vm1305, %v4643, 0
      %v4702 = vsel %vm1305, %v4644, 0
      %v4705 = vsel %vm1305, %v4645, 0
      %v4708 = vsel %vm1305, %v4646, 0
      %v4711 = vsel %vm1305, %v4647, 0
      %4713 = vmatpush.bf16.msra.mxu0 0
      %4714 = vmatpush.bf16.msra.mxu0 0
      %4715 = vmatpush.bf16.msra.mxu0 0
      %4716 = vmatpush.bf16.msra.mxu0 0
      %4717 = vmatpush.bf16.msra.mxu0 0
      %4718 = vmatpush.bf16.msra.mxu0 0
      %4719 = vmatpush.bf16.msra.mxu0 %v4662
      %4720 = vmatpush.bf16.msra.mxu0 %v4661
      %4721 = vmatmul.bf16.gmra.mxu0 %v4666
      %v4722 = vpop.f32.mrf.mxu0
      %v4723 = vadd.f32 0.0, %v4722
      %v4724 = vpop.f32.mrf.mxu0
      %v4725 = vadd.f32 0.0, %v4724
      %4726 = vmatmul.bf16.gmra.mxu0 %v4669
      %v4727 = vpop.f32.mrf.mxu0
      %v4728 = vadd.f32 0.0, %v4727
      %v4729 = vpop.f32.mrf.mxu0
      %v4730 = vadd.f32 0.0, %v4729
      %4731 = vmatmul.bf16.gmra.mxu0 %v4672
      %v4732 = vpop.f32.mrf.mxu0
      %v4733 = vadd.f32 0.0, %v4732
      %v4734 = vpop.f32.mrf.mxu0
      %v4735 = vadd.f32 0.0, %v4734
      %4736 = vmatmul.bf16.gmra.mxu0 %v4675
      %v4737 = vpop.f32.mrf.mxu0
      %v4738 = vadd.f32 0.0, %v4737
      %v4739 = vpop.f32.mrf.mxu0
      %v4740 = vadd.f32 0.0, %v4739
      %4741 = vmatmul.bf16.gmra.mxu0 %v4678
      %v4742 = vpop.f32.mrf.mxu0
      %v4743 = vadd.f32 0.0, %v4742
      %v4744 = vpop.f32.mrf.mxu0
      %v4745 = vadd.f32 0.0, %v4744
      %4746 = vmatmul.bf16.gmra.mxu0 %v4681
      %v4747 = vpop.f32.mrf.mxu0
      %v4748 = vadd.f32 0.0, %v4747
      %v4749 = vpop.f32.mrf.mxu0
      %v4750 = vadd.f32 0.0, %v4749
      %4751 = vmatmul.bf16.gmra.mxu0 %v4684
      %v4752 = vpop.f32.mrf.mxu0
      %v4753 = vadd.f32 0.0, %v4752
      %v4754 = vpop.f32.mrf.mxu0
      %v4755 = vadd.f32 0.0, %v4754
      %4756 = vmatmul.bf16.gmra.mxu0 %v4687
      %v4757 = vpop.f32.mrf.mxu0
      %v4758 = vadd.f32 0.0, %v4757
      %v4759 = vpop.f32.mrf.mxu0
      %v4760 = vadd.f32 0.0, %v4759
      %4761 = vmatmul.bf16.gmra.mxu0 %v4690
      %v4762 = vpop.f32.mrf.mxu0
      %v4763 = vadd.f32 0.0, %v4762
      %v4764 = vpop.f32.mrf.mxu0
      %v4765 = vadd.f32 0.0, %v4764
      %4766 = vmatmul.bf16.gmra.mxu0 %v4693
      %v4767 = vpop.f32.mrf.mxu0
      %v4768 = vadd.f32 0.0, %v4767
      %v4769 = vpop.f32.mrf.mxu0
      %v4770 = vadd.f32 0.0, %v4769
      %4771 = vmatmul.bf16.gmra.mxu0 %v4696
      %v4772 = vpop.f32.mrf.mxu0
      %v4773 = vadd.f32 0.0, %v4772
      %v4774 = vpop.f32.mrf.mxu0
      %v4775 = vadd.f32 0.0, %v4774
      %4776 = vmatmul.bf16.gmra.mxu0 %v4699
      %v4777 = vpop.f32.mrf.mxu0
      %v4778 = vadd.f32 0.0, %v4777
      %v4779 = vpop.f32.mrf.mxu0
      %v4780 = vadd.f32 0.0, %v4779
      %4781 = vmatmul.bf16.gmra.mxu0 %v4702
      %v4782 = vpop.f32.mrf.mxu0
      %v4783 = vadd.f32 0.0, %v4782
      %v4784 = vpop.f32.mrf.mxu0
      %v4785 = vadd.f32 0.0, %v4784
      %4786 = vmatmul.bf16.gmra.mxu0 %v4705
      %v4787 = vpop.f32.mrf.mxu0
      %v4788 = vadd.f32 0.0, %v4787
      %v4789 = vpop.f32.mrf.mxu0
      %v4790 = vadd.f32 0.0, %v4789
      %4791 = vmatmul.bf16.gmra.mxu0 %v4708
      %v4792 = vpop.f32.mrf.mxu0
      %v4793 = vadd.f32 0.0, %v4792
      %v4794 = vpop.f32.mrf.mxu0
      %v4795 = vadd.f32 0.0, %v4794
      %4796 = vmatmul.bf16.gmra.mxu0 %v4711
      %v4797 = vpop.f32.mrf.mxu0
      %v4798 = vadd.f32 0.0, %v4797
      %v4799 = vpop.f32.mrf.mxu0
      %v4800 = vadd.f32 0.0, %v4799
      %4801 = vdwg.mxu0
      %v4802 = vadd.f32 %v4568, %v4723
      %v4803 = vadd.f32 %v4569, %v4725
      %v4804 = vadd.f32 %v4570, %v4728
      %v4805 = vadd.f32 %v4571, %v4730
      %v4806 = vadd.f32 %v4572, %v4733
      %v4807 = vadd.f32 %v4573, %v4735
      %v4808 = vadd.f32 %v4574, %v4738
      %v4809 = vadd.f32 %v4575, %v4740
      %v4810 = vadd.f32 %v4576, %v4743
      %v4811 = vadd.f32 %v4577, %v4745
      %v4812 = vadd.f32 %v4578, %v4748
      %v4813 = vadd.f32 %v4579, %v4750
      %v4814 = vadd.f32 %v4580, %v4753
      %v4815 = vadd.f32 %v4581, %v4755
      %v4816 = vadd.f32 %v4582, %v4758
      %v4817 = vadd.f32 %v4583, %v4760
      %v4818 = vadd.f32 %v4584, %v4763
      %v4819 = vadd.f32 %v4585, %v4765
      %v4820 = vadd.f32 %v4586, %v4768
      %v4821 = vadd.f32 %v4587, %v4770
      %v4822 = vadd.f32 %v4588, %v4773
      %v4823 = vadd.f32 %v4589, %v4775
      %v4824 = vadd.f32 %v4590, %v4778
      %v4825 = vadd.f32 %v4591, %v4780
      %v4826 = vadd.f32 %v4592, %v4783
      %v4827 = vadd.f32 %v4593, %v4785
      %v4828 = vadd.f32 %v4594, %v4788
      %v4829 = vadd.f32 %v4595, %v4790
      %v4830 = vadd.f32 %v4596, %v4793
      %v4831 = vadd.f32 %v4597, %v4795
      %v4832 = vadd.f32 %v4598, %v4798
      %v4833 = vadd.f32 %v4599, %v4800
      %v4834 = vld [vmem:[%s1589 + $0x4] sm:$0xff]
      %v4835 = vld [vmem:[%s1589 + $0xc] sm:$0xff]
      %v4836 = vld [vmem:[%s1589 + $0x1c] sm:$0xff]
      %v4837 = vld [vmem:[%s1589 + $0x24] sm:$0xff]
      %v4838 = vld [vmem:[%s1589 + $0x34] sm:$0xff]
      %v4839 = vld [vmem:[%s1589 + $0x3c] sm:$0xff]
      %v4840 = vld [vmem:[%s1589 + $0x4c] sm:$0xff]
      %v4841 = vld [vmem:[%s1589 + $0x54] sm:$0xff]
      %v4842 = vld [vmem:[%s1589 + $0x64] sm:$0xff]
      %v4843 = vld [vmem:[%s1589 + $0x6c] sm:$0xff]
      %v4844 = vld [vmem:[%s1589 + $0x7c] sm:$0xff]
      %v4845 = vld [vmem:[%s1589 + $0x84] sm:$0xff]
      %v4846 = vld [vmem:[%s1589 + $0x94] sm:$0xff]
      %v4847 = vld [vmem:[%s1589 + $0x9c] sm:$0xff]
      %v4848 = vld [vmem:[%s1589 + $0xac] sm:$0xff]
      %v4849 = vld [vmem:[%s1589 + $0xb4] sm:$0xff]
      %v4850 = vld [vmem:[%s1589 + $0xc4] sm:$0xff]
      %v4851 = vld [vmem:[%s1589 + $0xcc] sm:$0xff]
      %v4852 = vld [vmem:[%s1589 + $0xdc] sm:$0xff]
      %v4853 = vld [vmem:[%s1589 + $0xe4] sm:$0xff]
      %v4854 = vld [vmem:[%s1589 + $0xf4] sm:$0xff]
      %v4855 = vld [vmem:[%s1589 + $0xfc] sm:$0xff]
      %v4856 = vld [vmem:[%s1589 + $0x10c] sm:$0xff]
      %v4857 = vld [vmem:[%s1589 + $0x114] sm:$0xff]
      %v4858 = vld [vmem:[%s1589 + $0x124] sm:$0xff]
      %v4859 = vld [vmem:[%s1589 + $0x12c] sm:$0xff]
      %v4860 = vld [vmem:[%s1589 + $0x13c] sm:$0xff]
      %v4861 = vld [vmem:[%s1589 + $0x144] sm:$0xff]
      %v4862 = vld [vmem:[%s1589 + $0x154] sm:$0xff]
      %v4863 = vld [vmem:[%s1589 + $0x15c] sm:$0xff]
      %v4864 = vld [vmem:[%s1589 + $0x16c] sm:$0xff]
      %v4865 = vld [vmem:[%s1589 + $0x174] sm:$0xff]
      %v4866 = vpack.c.bf16 %v4835, %v4834
      %v4867 = vpack.c.bf16 %v4837, %v4836
      %v4868 = vpack.c.bf16 %v4839, %v4838
      %v4869 = vpack.c.bf16 %v4841, %v4840
      %v4870 = vpack.c.bf16 %v4843, %v4842
      %v4871 = vpack.c.bf16 %v4845, %v4844
      %v4872 = vpack.c.bf16 %v4847, %v4846
      %v4873 = vpack.c.bf16 %v4849, %v4848
      %v4874 = vpack.c.bf16 %v4851, %v4850
      %v4875 = vpack.c.bf16 %v4853, %v4852
      %v4876 = vpack.c.bf16 %v4855, %v4854
      %v4877 = vpack.c.bf16 %v4857, %v4856
      %v4878 = vpack.c.bf16 %v4859, %v4858
      %v4879 = vpack.c.bf16 %v4861, %v4860
      %v4880 = vpack.c.bf16 %v4863, %v4862
      %v4881 = vpack.c.bf16 %v4865, %v4864
      %s4882 = scalar_lea.vmem %s3, 224
      %v4883 = vld [vmem:[%s4882] sm:$0xf]
      %v4884 = vld [vmem:[%s4882 + $0x4] sm:$0xf]
      %v4885 = vld [vmem:[%s4882 + $0x8] sm:$0xf]
      %v4886 = vld [vmem:[%s4882 + $0xc] sm:$0xf]
      %v4891 = vunpack.c.l.b16 %v4883
      %v4892 = vunpack.c.l.b16 %v4884
      %v4893 = vunpack.c.l.b16 %v4885
      %v4894 = vunpack.c.l.b16 %v4886
      %v4895 = vpack.c.b16 %v4892, %v4891
      %v4896 = vpack.c.b16 %v4894, %v4893
      %v4900 = vsel %vm1305, %v4866, 0
      %v4903 = vsel %vm1305, %v4867, 0
      %v4906 = vsel %vm1305, %v4868, 0
      %v4909 = vsel %vm1305, %v4869, 0
      %v4912 = vsel %vm1305, %v4870, 0
      %v4915 = vsel %vm1305, %v4871, 0
      %v4918 = vsel %vm1305, %v4872, 0
      %v4921 = vsel %vm1305, %v4873, 0
      %v4924 = vsel %vm1305, %v4874, 0
      %v4927 = vsel %vm1305, %v4875, 0
      %v4930 = vsel %vm1305, %v4876, 0
      %v4933 = vsel %vm1305, %v4877, 0
      %v4936 = vsel %vm1305, %v4878, 0
      %v4939 = vsel %vm1305, %v4879, 0
      %v4942 = vsel %vm1305, %v4880, 0
      %v4945 = vsel %vm1305, %v4881, 0
      %4947 = vmatpush.bf16.msra.mxu0 0
      %4948 = vmatpush.bf16.msra.mxu0 0
      %4949 = vmatpush.bf16.msra.mxu0 0
      %4950 = vmatpush.bf16.msra.mxu0 0
      %4951 = vmatpush.bf16.msra.mxu0 0
      %4952 = vmatpush.bf16.msra.mxu0 0
      %4953 = vmatpush.bf16.msra.mxu0 %v4896
      %4954 = vmatpush.bf16.msra.mxu0 %v4895
      %4955 = vmatmul.bf16.gmra.mxu0 %v4900
      %v4956 = vpop.f32.mrf.mxu0
      %v4957 = vadd.f32 0.0, %v4956
      %v4958 = vpop.f32.mrf.mxu0
      %v4959 = vadd.f32 0.0, %v4958
      %4960 = vmatmul.bf16.gmra.mxu0 %v4903
      %v4961 = vpop.f32.mrf.mxu0
      %v4962 = vadd.f32 0.0, %v4961
      %v4963 = vpop.f32.mrf.mxu0
      %v4964 = vadd.f32 0.0, %v4963
      %4965 = vmatmul.bf16.gmra.mxu0 %v4906
      %v4966 = vpop.f32.mrf.mxu0
      %v4967 = vadd.f32 0.0, %v4966
      %v4968 = vpop.f32.mrf.mxu0
      %v4969 = vadd.f32 0.0, %v4968
      %4970 = vmatmul.bf16.gmra.mxu0 %v4909
      %v4971 = vpop.f32.mrf.mxu0
      %v4972 = vadd.f32 0.0, %v4971
      %v4973 = vpop.f32.mrf.mxu0
      %v4974 = vadd.f32 0.0, %v4973
      %4975 = vmatmul.bf16.gmra.mxu0 %v4912
      %v4976 = vpop.f32.mrf.mxu0
      %v4977 = vadd.f32 0.0, %v4976
      %v4978 = vpop.f32.mrf.mxu0
      %v4979 = vadd.f32 0.0, %v4978
      %4980 = vmatmul.bf16.gmra.mxu0 %v4915
      %v4981 = vpop.f32.mrf.mxu0
      %v4982 = vadd.f32 0.0, %v4981
      %v4983 = vpop.f32.mrf.mxu0
      %v4984 = vadd.f32 0.0, %v4983
      %4985 = vmatmul.bf16.gmra.mxu0 %v4918
      %v4986 = vpop.f32.mrf.mxu0
      %v4987 = vadd.f32 0.0, %v4986
      %v4988 = vpop.f32.mrf.mxu0
      %v4989 = vadd.f32 0.0, %v4988
      %4990 = vmatmul.bf16.gmra.mxu0 %v4921
      %v4991 = vpop.f32.mrf.mxu0
      %v4992 = vadd.f32 0.0, %v4991
      %v4993 = vpop.f32.mrf.mxu0
      %v4994 = vadd.f32 0.0, %v4993
      %4995 = vmatmul.bf16.gmra.mxu0 %v4924
      %v4996 = vpop.f32.mrf.mxu0
      %v4997 = vadd.f32 0.0, %v4996
      %v4998 = vpop.f32.mrf.mxu0
      %v4999 = vadd.f32 0.0, %v4998
      %5000 = vmatmul.bf16.gmra.mxu0 %v4927
      %v5001 = vpop.f32.mrf.mxu0
      %v5002 = vadd.f32 0.0, %v5001
      %v5003 = vpop.f32.mrf.mxu0
      %v5004 = vadd.f32 0.0, %v5003
      %5005 = vmatmul.bf16.gmra.mxu0 %v4930
      %v5006 = vpop.f32.mrf.mxu0
      %v5007 = vadd.f32 0.0, %v5006
      %v5008 = vpop.f32.mrf.mxu0
      %v5009 = vadd.f32 0.0, %v5008
      %5010 = vmatmul.bf16.gmra.mxu0 %v4933
      %v5011 = vpop.f32.mrf.mxu0
      %v5012 = vadd.f32 0.0, %v5011
      %v5013 = vpop.f32.mrf.mxu0
      %v5014 = vadd.f32 0.0, %v5013
      %5015 = vmatmul.bf16.gmra.mxu0 %v4936
      %v5016 = vpop.f32.mrf.mxu0
      %v5017 = vadd.f32 0.0, %v5016
      %v5018 = vpop.f32.mrf.mxu0
      %v5019 = vadd.f32 0.0, %v5018
      %5020 = vmatmul.bf16.gmra.mxu0 %v4939
      %v5021 = vpop.f32.mrf.mxu0
      %v5022 = vadd.f32 0.0, %v5021
      %v5023 = vpop.f32.mrf.mxu0
      %v5024 = vadd.f32 0.0, %v5023
      %5025 = vmatmul.bf16.gmra.mxu0 %v4942
      %v5026 = vpop.f32.mrf.mxu0
      %v5027 = vadd.f32 0.0, %v5026
      %v5028 = vpop.f32.mrf.mxu0
      %v5029 = vadd.f32 0.0, %v5028
      %5030 = vmatmul.bf16.gmra.mxu0 %v4945
      %v5031 = vpop.f32.mrf.mxu0
      %v5032 = vadd.f32 0.0, %v5031
      %v5033 = vpop.f32.mrf.mxu0
      %v5034 = vadd.f32 0.0, %v5033
      %5035 = vdwg.mxu0
      %v5036 = vadd.f32 %v4802, %v4957
      %v5037 = vadd.f32 %v4803, %v4959
      %v5038 = vadd.f32 %v4804, %v4962
      %v5039 = vadd.f32 %v4805, %v4964
      %v5040 = vadd.f32 %v4806, %v4967
      %v5041 = vadd.f32 %v4807, %v4969
      %v5042 = vadd.f32 %v4808, %v4972
      %v5043 = vadd.f32 %v4809, %v4974
      %v5044 = vadd.f32 %v4810, %v4977
      %v5045 = vadd.f32 %v4811, %v4979
      %v5046 = vadd.f32 %v4812, %v4982
      %v5047 = vadd.f32 %v4813, %v4984
      %v5048 = vadd.f32 %v4814, %v4987
      %v5049 = vadd.f32 %v4815, %v4989
      %v5050 = vadd.f32 %v4816, %v4992
      %v5051 = vadd.f32 %v4817, %v4994
      %v5052 = vadd.f32 %v4818, %v4997
      %v5053 = vadd.f32 %v4819, %v4999
      %v5054 = vadd.f32 %v4820, %v5002
      %v5055 = vadd.f32 %v4821, %v5004
      %v5056 = vadd.f32 %v4822, %v5007
      %v5057 = vadd.f32 %v4823, %v5009
      %v5058 = vadd.f32 %v4824, %v5012
      %v5059 = vadd.f32 %v4825, %v5014
      %v5060 = vadd.f32 %v4826, %v5017
      %v5061 = vadd.f32 %v4827, %v5019
      %v5062 = vadd.f32 %v4828, %v5022
      %v5063 = vadd.f32 %v4829, %v5024
      %v5064 = vadd.f32 %v4830, %v5027
      %v5065 = vadd.f32 %v4831, %v5029
      %v5066 = vadd.f32 %v4832, %v5032
      %v5067 = vadd.f32 %v4833, %v5034
      %s5068 = scalar_lea.vmem [#allocation2], 72
      %v5069 = vld [vmem:[%s5068] sm:$0xff]
      %v5070 = vld [vmem:[%s5068 + $0x8] sm:$0xff]
      %v5071 = vld [vmem:[%s5068 + $0x18] sm:$0xff]
      %v5072 = vld [vmem:[%s5068 + $0x20] sm:$0xff]
      %v5073 = vld [vmem:[%s5068 + $0x30] sm:$0xff]
      %v5074 = vld [vmem:[%s5068 + $0x38] sm:$0xff]
      %v5075 = vld [vmem:[%s5068 + $0x48] sm:$0xff]
      %v5076 = vld [vmem:[%s5068 + $0x50] sm:$0xff]
      %v5077 = vld [vmem:[%s5068 + $0x60] sm:$0xff]
      %v5078 = vld [vmem:[%s5068 + $0x68] sm:$0xff]
      %v5079 = vld [vmem:[%s5068 + $0x78] sm:$0xff]
      %v5080 = vld [vmem:[%s5068 + $0x80] sm:$0xff]
      %v5081 = vld [vmem:[%s5068 + $0x90] sm:$0xff]
      %v5082 = vld [vmem:[%s5068 + $0x98] sm:$0xff]
      %v5083 = vld [vmem:[%s5068 + $0xa8] sm:$0xff]
      %v5084 = vld [vmem:[%s5068 + $0xb0] sm:$0xff]
      %v5085 = vld [vmem:[%s5068 + $0xc0] sm:$0xff]
      %v5086 = vld [vmem:[%s5068 + $0xc8] sm:$0xff]
      %v5087 = vld [vmem:[%s5068 + $0xd8] sm:$0xff]
      %v5088 = vld [vmem:[%s5068 + $0xe0] sm:$0xff]
      %v5089 = vld [vmem:[%s5068 + $0xf0] sm:$0xff]
      %v5090 = vld [vmem:[%s5068 + $0xf8] sm:$0xff]
      %v5091 = vld [vmem:[%s5068 + $0x108] sm:$0xff]
      %v5092 = vld [vmem:[%s5068 + $0x110] sm:$0xff]
      %v5093 = vld [vmem:[%s5068 + $0x120] sm:$0xff]
      %v5094 = vld [vmem:[%s5068 + $0x128] sm:$0xff]
      %v5095 = vld [vmem:[%s5068 + $0x138] sm:$0xff]
      %v5096 = vld [vmem:[%s5068 + $0x140] sm:$0xff]
      %v5097 = vld [vmem:[%s5068 + $0x150] sm:$0xff]
      %v5098 = vld [vmem:[%s5068 + $0x158] sm:$0xff]
      %v5099 = vld [vmem:[%s5068 + $0x168] sm:$0xff]
      %v5100 = vld [vmem:[%s5068 + $0x170] sm:$0xff]
      %v5101 = vpack.c.bf16 %v5070, %v5069
      %v5102 = vpack.c.bf16 %v5072, %v5071
      %v5103 = vpack.c.bf16 %v5074, %v5073
      %v5104 = vpack.c.bf16 %v5076, %v5075
      %v5105 = vpack.c.bf16 %v5078, %v5077
      %v5106 = vpack.c.bf16 %v5080, %v5079
      %v5107 = vpack.c.bf16 %v5082, %v5081
      %v5108 = vpack.c.bf16 %v5084, %v5083
      %v5109 = vpack.c.bf16 %v5086, %v5085
      %v5110 = vpack.c.bf16 %v5088, %v5087
      %v5111 = vpack.c.bf16 %v5090, %v5089
      %v5112 = vpack.c.bf16 %v5092, %v5091
      %v5113 = vpack.c.bf16 %v5094, %v5093
      %v5114 = vpack.c.bf16 %v5096, %v5095
      %v5115 = vpack.c.bf16 %v5098, %v5097
      %v5116 = vpack.c.bf16 %v5100, %v5099
      %s5117 = scalar_lea.vmem %s3, 240
      %v5118 = vld [vmem:[%s5117] sm:$0xf]
      %v5119 = vld [vmem:[%s5117 + $0x4] sm:$0xf]
      %v5120 = vld [vmem:[%s5117 + $0x8] sm:$0xf]
      %v5121 = vld [vmem:[%s5117 + $0xc] sm:$0xf]
      %v5126 = vunpack.c.l.b16 %v5118
      %v5127 = vunpack.c.l.b16 %v5119
      %v5128 = vunpack.c.l.b16 %v5120
      %v5129 = vunpack.c.l.b16 %v5121
      %v5130 = vpack.c.b16 %v5127, %v5126
      %v5131 = vpack.c.b16 %v5129, %v5128
      %v5135 = vsel %vm1305, %v5101, 0
      %v5138 = vsel %vm1305, %v5102, 0
      %v5141 = vsel %vm1305, %v5103, 0
      %v5144 = vsel %vm1305, %v5104, 0
      %v5147 = vsel %vm1305, %v5105, 0
      %v5150 = vsel %vm1305, %v5106, 0
      %v5153 = vsel %vm1305, %v5107, 0
      %v5156 = vsel %vm1305, %v5108, 0
      %v5159 = vsel %vm1305, %v5109, 0
      %v5162 = vsel %vm1305, %v5110, 0
      %v5165 = vsel %vm1305, %v5111, 0
      %v5168 = vsel %vm1305, %v5112, 0
      %v5171 = vsel %vm1305, %v5113, 0
      %v5174 = vsel %vm1305, %v5114, 0
      %v5177 = vsel %vm1305, %v5115, 0
      %v5180 = vsel %vm1305, %v5116, 0
      %5182 = vmatpush.bf16.msra.mxu0 0
      %5183 = vmatpush.bf16.msra.mxu0 0
      %5184 = vmatpush.bf16.msra.mxu0 0
      %5185 = vmatpush.bf16.msra.mxu0 0
      %5186 = vmatpush.bf16.msra.mxu0 0
      %5187 = vmatpush.bf16.msra.mxu0 0
      %5188 = vmatpush.bf16.msra.mxu0 %v5131
      %5189 = vmatpush.bf16.msra.mxu0 %v5130
      %5190 = vmatmul.bf16.gmra.mxu0 %v5135
      %v5191 = vpop.f32.mrf.mxu0
      %v5192 = vadd.f32 0.0, %v5191
      %v5193 = vpop.f32.mrf.mxu0
      %v5194 = vadd.f32 0.0, %v5193
      %5195 = vmatmul.bf16.gmra.mxu0 %v5138
      %v5196 = vpop.f32.mrf.mxu0
      %v5197 = vadd.f32 0.0, %v5196
      %v5198 = vpop.f32.mrf.mxu0
      %v5199 = vadd.f32 0.0, %v5198
      %5200 = vmatmul.bf16.gmra.mxu0 %v5141
      %v5201 = vpop.f32.mrf.mxu0
      %v5202 = vadd.f32 0.0, %v5201
      %v5203 = vpop.f32.mrf.mxu0
      %v5204 = vadd.f32 0.0, %v5203
      %5205 = vmatmul.bf16.gmra.mxu0 %v5144
      %v5206 = vpop.f32.mrf.mxu0
      %v5207 = vadd.f32 0.0, %v5206
      %v5208 = vpop.f32.mrf.mxu0
      %v5209 = vadd.f32 0.0, %v5208
      %5210 = vmatmul.bf16.gmra.mxu0 %v5147
      %v5211 = vpop.f32.mrf.mxu0
      %v5212 = vadd.f32 0.0, %v5211
      %v5213 = vpop.f32.mrf.mxu0
      %v5214 = vadd.f32 0.0, %v5213
      %5215 = vmatmul.bf16.gmra.mxu0 %v5150
      %v5216 = vpop.f32.mrf.mxu0
      %v5217 = vadd.f32 0.0, %v5216
      %v5218 = vpop.f32.mrf.mxu0
      %v5219 = vadd.f32 0.0, %v5218
      %5220 = vmatmul.bf16.gmra.mxu0 %v5153
      %v5221 = vpop.f32.mrf.mxu0
      %v5222 = vadd.f32 0.0, %v5221
      %v5223 = vpop.f32.mrf.mxu0
      %v5224 = vadd.f32 0.0, %v5223
      %5225 = vmatmul.bf16.gmra.mxu0 %v5156
      %v5226 = vpop.f32.mrf.mxu0
      %v5227 = vadd.f32 0.0, %v5226
      %v5228 = vpop.f32.mrf.mxu0
      %v5229 = vadd.f32 0.0, %v5228
      %5230 = vmatmul.bf16.gmra.mxu0 %v5159
      %v5231 = vpop.f32.mrf.mxu0
      %v5232 = vadd.f32 0.0, %v5231
      %v5233 = vpop.f32.mrf.mxu0
      %v5234 = vadd.f32 0.0, %v5233
      %5235 = vmatmul.bf16.gmra.mxu0 %v5162
      %v5236 = vpop.f32.mrf.mxu0
      %v5237 = vadd.f32 0.0, %v5236
      %v5238 = vpop.f32.mrf.mxu0
      %v5239 = vadd.f32 0.0, %v5238
      %5240 = vmatmul.bf16.gmra.mxu0 %v5165
      %v5241 = vpop.f32.mrf.mxu0
      %v5242 = vadd.f32 0.0, %v5241
      %v5243 = vpop.f32.mrf.mxu0
      %v5244 = vadd.f32 0.0, %v5243
      %5245 = vmatmul.bf16.gmra.mxu0 %v5168
      %v5246 = vpop.f32.mrf.mxu0
      %v5247 = vadd.f32 0.0, %v5246
      %v5248 = vpop.f32.mrf.mxu0
      %v5249 = vadd.f32 0.0, %v5248
      %5250 = vmatmul.bf16.gmra.mxu0 %v5171
      %v5251 = vpop.f32.mrf.mxu0
      %v5252 = vadd.f32 0.0, %v5251
      %v5253 = vpop.f32.mrf.mxu0
      %v5254 = vadd.f32 0.0, %v5253
      %5255 = vmatmul.bf16.gmra.mxu0 %v5174
      %v5256 = vpop.f32.mrf.mxu0
      %v5257 = vadd.f32 0.0, %v5256
      %v5258 = vpop.f32.mrf.mxu0
      %v5259 = vadd.f32 0.0, %v5258
      %5260 = vmatmul.bf16.gmra.mxu0 %v5177
      %v5261 = vpop.f32.mrf.mxu0
      %v5262 = vadd.f32 0.0, %v5261
      %v5263 = vpop.f32.mrf.mxu0
      %v5264 = vadd.f32 0.0, %v5263
      %5265 = vmatmul.bf16.gmra.mxu0 %v5180
      %v5266 = vpop.f32.mrf.mxu0
      %v5267 = vadd.f32 0.0, %v5266
      %v5268 = vpop.f32.mrf.mxu0
      %v5269 = vadd.f32 0.0, %v5268
      %5270 = vdwg.mxu0
      %v5271 = vadd.f32 %v5036, %v5192
      %v5272 = vadd.f32 %v5037, %v5194
      %v5273 = vadd.f32 %v5038, %v5197
      %v5274 = vadd.f32 %v5039, %v5199
      %v5275 = vadd.f32 %v5040, %v5202
      %v5276 = vadd.f32 %v5041, %v5204
      %v5277 = vadd.f32 %v5042, %v5207
      %v5278 = vadd.f32 %v5043, %v5209
      %v5279 = vadd.f32 %v5044, %v5212
      %v5280 = vadd.f32 %v5045, %v5214
      %v5281 = vadd.f32 %v5046, %v5217
      %v5282 = vadd.f32 %v5047, %v5219
      %v5283 = vadd.f32 %v5048, %v5222
      %v5284 = vadd.f32 %v5049, %v5224
      %v5285 = vadd.f32 %v5050, %v5227
      %v5286 = vadd.f32 %v5051, %v5229
      %v5287 = vadd.f32 %v5052, %v5232
      %v5288 = vadd.f32 %v5053, %v5234
      %v5289 = vadd.f32 %v5054, %v5237
      %v5290 = vadd.f32 %v5055, %v5239
      %v5291 = vadd.f32 %v5056, %v5242
      %v5292 = vadd.f32 %v5057, %v5244
      %v5293 = vadd.f32 %v5058, %v5247
      %v5294 = vadd.f32 %v5059, %v5249
      %v5295 = vadd.f32 %v5060, %v5252
      %v5296 = vadd.f32 %v5061, %v5254
      %v5297 = vadd.f32 %v5062, %v5257
      %v5298 = vadd.f32 %v5063, %v5259
      %v5299 = vadd.f32 %v5064, %v5262
      %v5300 = vadd.f32 %v5065, %v5264
      %v5301 = vadd.f32 %v5066, %v5267
      %v5302 = vadd.f32 %v5067, %v5269
      %v5303 = vld [vmem:[%s5068 + $0x1] sm:$0xff]
      %v5304 = vld [vmem:[%s5068 + $0x9] sm:$0xff]
      %v5305 = vld [vmem:[%s5068 + $0x19] sm:$0xff]
      %v5306 = vld [vmem:[%s5068 + $0x21] sm:$0xff]
      %v5307 = vld [vmem:[%s5068 + $0x31] sm:$0xff]
      %v5308 = vld [vmem:[%s5068 + $0x39] sm:$0xff]
      %v5309 = vld [vmem:[%s5068 + $0x49] sm:$0xff]
      %v5310 = vld [vmem:[%s5068 + $0x51] sm:$0xff]
      %v5311 = vld [vmem:[%s5068 + $0x61] sm:$0xff]
      %v5312 = vld [vmem:[%s5068 + $0x69] sm:$0xff]
      %v5313 = vld [vmem:[%s5068 + $0x79] sm:$0xff]
      %v5314 = vld [vmem:[%s5068 + $0x81] sm:$0xff]
      %v5315 = vld [vmem:[%s5068 + $0x91] sm:$0xff]
      %v5316 = vld [vmem:[%s5068 + $0x99] sm:$0xff]
      %v5317 = vld [vmem:[%s5068 + $0xa9] sm:$0xff]
      %v5318 = vld [vmem:[%s5068 + $0xb1] sm:$0xff]
      %v5319 = vld [vmem:[%s5068 + $0xc1] sm:$0xff]
      %v5320 = vld [vmem:[%s5068 + $0xc9] sm:$0xff]
      %v5321 = vld [vmem:[%s5068 + $0xd9] sm:$0xff]
      %v5322 = vld [vmem:[%s5068 + $0xe1] sm:$0xff]
      %v5323 = vld [vmem:[%s5068 + $0xf1] sm:$0xff]
      %v5324 = vld [vmem:[%s5068 + $0xf9] sm:$0xff]
      %v5325 = vld [vmem:[%s5068 + $0x109] sm:$0xff]
      %v5326 = vld [vmem:[%s5068 + $0x111] sm:$0xff]
      %v5327 = vld [vmem:[%s5068 + $0x121] sm:$0xff]
      %v5328 = vld [vmem:[%s5068 + $0x129] sm:$0xff]
      %v5329 = vld [vmem:[%s5068 + $0x139] sm:$0xff]
      %v5330 = vld [vmem:[%s5068 + $0x141] sm:$0xff]
      %v5331 = vld [vmem:[%s5068 + $0x151] sm:$0xff]
      %v5332 = vld [vmem:[%s5068 + $0x159] sm:$0xff]
      %v5333 = vld [vmem:[%s5068 + $0x169] sm:$0xff]
      %v5334 = vld [vmem:[%s5068 + $0x171] sm:$0xff]
      %v5335 = vpack.c.bf16 %v5304, %v5303
      %v5336 = vpack.c.bf16 %v5306, %v5305
      %v5337 = vpack.c.bf16 %v5308, %v5307
      %v5338 = vpack.c.bf16 %v5310, %v5309
      %v5339 = vpack.c.bf16 %v5312, %v5311
      %v5340 = vpack.c.bf16 %v5314, %v5313
      %v5341 = vpack.c.bf16 %v5316, %v5315
      %v5342 = vpack.c.bf16 %v5318, %v5317
      %v5343 = vpack.c.bf16 %v5320, %v5319
      %v5344 = vpack.c.bf16 %v5322, %v5321
      %v5345 = vpack.c.bf16 %v5324, %v5323
      %v5346 = vpack.c.bf16 %v5326, %v5325
      %v5347 = vpack.c.bf16 %v5328, %v5327
      %v5348 = vpack.c.bf16 %v5330, %v5329
      %v5349 = vpack.c.bf16 %v5332, %v5331
      %v5350 = vpack.c.bf16 %v5334, %v5333
      %s5351 = scalar_lea.vmem %s3, 256
      %v5352 = vld [vmem:[%s5351] sm:$0xf]
      %v5353 = vld [vmem:[%s5351 + $0x4] sm:$0xf]
      %v5354 = vld [vmem:[%s5351 + $0x8] sm:$0xf]
      %v5355 = vld [vmem:[%s5351 + $0xc] sm:$0xf]
      %v5360 = vunpack.c.l.b16 %v5352
      %v5361 = vunpack.c.l.b16 %v5353
      %v5362 = vunpack.c.l.b16 %v5354
      %v5363 = vunpack.c.l.b16 %v5355
      %v5364 = vpack.c.b16 %v5361, %v5360
      %v5365 = vpack.c.b16 %v5363, %v5362
      %v5369 = vsel %vm1305, %v5335, 0
      %v5372 = vsel %vm1305, %v5336, 0
      %v5375 = vsel %vm1305, %v5337, 0
      %v5378 = vsel %vm1305, %v5338, 0
      %v5381 = vsel %vm1305, %v5339, 0
      %v5384 = vsel %vm1305, %v5340, 0
      %v5387 = vsel %vm1305, %v5341, 0
      %v5390 = vsel %vm1305, %v5342, 0
      %v5393 = vsel %vm1305, %v5343, 0
      %v5396 = vsel %vm1305, %v5344, 0
      %v5399 = vsel %vm1305, %v5345, 0
      %v5402 = vsel %vm1305, %v5346, 0
      %v5405 = vsel %vm1305, %v5347, 0
      %v5408 = vsel %vm1305, %v5348, 0
      %v5411 = vsel %vm1305, %v5349, 0
      %v5414 = vsel %vm1305, %v5350, 0
      %5416 = vmatpush.bf16.msra.mxu0 0
      %5417 = vmatpush.bf16.msra.mxu0 0
      %5418 = vmatpush.bf16.msra.mxu0 0
      %5419 = vmatpush.bf16.msra.mxu0 0
      %5420 = vmatpush.bf16.msra.mxu0 0
      %5421 = vmatpush.bf16.msra.mxu0 0
      %5422 = vmatpush.bf16.msra.mxu0 %v5365
      %5423 = vmatpush.bf16.msra.mxu0 %v5364
      %5424 = vmatmul.bf16.gmra.mxu0 %v5369
      %v5425 = vpop.f32.mrf.mxu0
      %v5426 = vadd.f32 0.0, %v5425
      %v5427 = vpop.f32.mrf.mxu0
      %v5428 = vadd.f32 0.0, %v5427
      %5429 = vmatmul.bf16.gmra.mxu0 %v5372
      %v5430 = vpop.f32.mrf.mxu0
      %v5431 = vadd.f32 0.0, %v5430
      %v5432 = vpop.f32.mrf.mxu0
      %v5433 = vadd.f32 0.0, %v5432
      %5434 = vmatmul.bf16.gmra.mxu0 %v5375
      %v5435 = vpop.f32.mrf.mxu0
      %v5436 = vadd.f32 0.0, %v5435
      %v5437 = vpop.f32.mrf.mxu0
      %v5438 = vadd.f32 0.0, %v5437
      %5439 = vmatmul.bf16.gmra.mxu0 %v5378
      %v5440 = vpop.f32.mrf.mxu0
      %v5441 = vadd.f32 0.0, %v5440
      %v5442 = vpop.f32.mrf.mxu0
      %v5443 = vadd.f32 0.0, %v5442
      %5444 = vmatmul.bf16.gmra.mxu0 %v5381
      %v5445 = vpop.f32.mrf.mxu0
      %v5446 = vadd.f32 0.0, %v5445
      %v5447 = vpop.f32.mrf.mxu0
      %v5448 = vadd.f32 0.0, %v5447
      %5449 = vmatmul.bf16.gmra.mxu0 %v5384
      %v5450 = vpop.f32.mrf.mxu0
      %v5451 = vadd.f32 0.0, %v5450
      %v5452 = vpop.f32.mrf.mxu0
      %v5453 = vadd.f32 0.0, %v5452
      %5454 = vmatmul.bf16.gmra.mxu0 %v5387
      %v5455 = vpop.f32.mrf.mxu0
      %v5456 = vadd.f32 0.0, %v5455
      %v5457 = vpop.f32.mrf.mxu0
      %v5458 = vadd.f32 0.0, %v5457
      %5459 = vmatmul.bf16.gmra.mxu0 %v5390
      %v5460 = vpop.f32.mrf.mxu0
      %v5461 = vadd.f32 0.0, %v5460
      %v5462 = vpop.f32.mrf.mxu0
      %v5463 = vadd.f32 0.0, %v5462
      %5464 = vmatmul.bf16.gmra.mxu0 %v5393
      %v5465 = vpop.f32.mrf.mxu0
      %v5466 = vadd.f32 0.0, %v5465
      %v5467 = vpop.f32.mrf.mxu0
      %v5468 = vadd.f32 0.0, %v5467
      %5469 = vmatmul.bf16.gmra.mxu0 %v5396
      %v5470 = vpop.f32.mrf.mxu0
      %v5471 = vadd.f32 0.0, %v5470
      %v5472 = vpop.f32.mrf.mxu0
      %v5473 = vadd.f32 0.0, %v5472
      %5474 = vmatmul.bf16.gmra.mxu0 %v5399
      %v5475 = vpop.f32.mrf.mxu0
      %v5476 = vadd.f32 0.0, %v5475
      %v5477 = vpop.f32.mrf.mxu0
      %v5478 = vadd.f32 0.0, %v5477
      %5479 = vmatmul.bf16.gmra.mxu0 %v5402
      %v5480 = vpop.f32.mrf.mxu0
      %v5481 = vadd.f32 0.0, %v5480
      %v5482 = vpop.f32.mrf.mxu0
      %v5483 = vadd.f32 0.0, %v5482
      %5484 = vmatmul.bf16.gmra.mxu0 %v5405
      %v5485 = vpop.f32.mrf.mxu0
      %v5486 = vadd.f32 0.0, %v5485
      %v5487 = vpop.f32.mrf.mxu0
      %v5488 = vadd.f32 0.0, %v5487
      %5489 = vmatmul.bf16.gmra.mxu0 %v5408
      %v5490 = vpop.f32.mrf.mxu0
      %v5491 = vadd.f32 0.0, %v5490
      %v5492 = vpop.f32.mrf.mxu0
      %v5493 = vadd.f32 0.0, %v5492
      %5494 = vmatmul.bf16.gmra.mxu0 %v5411
      %v5495 = vpop.f32.mrf.mxu0
      %v5496 = vadd.f32 0.0, %v5495
      %v5497 = vpop.f32.mrf.mxu0
      %v5498 = vadd.f32 0.0, %v5497
      %5499 = vmatmul.bf16.gmra.mxu0 %v5414
      %v5500 = vpop.f32.mrf.mxu0
      %v5501 = vadd.f32 0.0, %v5500
      %v5502 = vpop.f32.mrf.mxu0
      %v5503 = vadd.f32 0.0, %v5502
      %5504 = vdwg.mxu0
      %v5505 = vadd.f32 %v5271, %v5426
      %v5506 = vadd.f32 %v5272, %v5428
      %v5507 = vadd.f32 %v5273, %v5431
      %v5508 = vadd.f32 %v5274, %v5433
      %v5509 = vadd.f32 %v5275, %v5436
      %v5510 = vadd.f32 %v5276, %v5438
      %v5511 = vadd.f32 %v5277, %v5441
      %v5512 = vadd.f32 %v5278, %v5443
      %v5513 = vadd.f32 %v5279, %v5446
      %v5514 = vadd.f32 %v5280, %v5448
      %v5515 = vadd.f32 %v5281, %v5451
      %v5516 = vadd.f32 %v5282, %v5453
      %v5517 = vadd.f32 %v5283, %v5456
      %v5518 = vadd.f32 %v5284, %v5458
      %v5519 = vadd.f32 %v5285, %v5461
      %v5520 = vadd.f32 %v5286, %v5463
      %v5521 = vadd.f32 %v5287, %v5466
      %v5522 = vadd.f32 %v5288, %v5468
      %v5523 = vadd.f32 %v5289, %v5471
      %v5524 = vadd.f32 %v5290, %v5473
      %v5525 = vadd.f32 %v5291, %v5476
      %v5526 = vadd.f32 %v5292, %v5478
      %v5527 = vadd.f32 %v5293, %v5481
      %v5528 = vadd.f32 %v5294, %v5483
      %v5529 = vadd.f32 %v5295, %v5486
      %v5530 = vadd.f32 %v5296, %v5488
      %v5531 = vadd.f32 %v5297, %v5491
      %v5532 = vadd.f32 %v5298, %v5493
      %v5533 = vadd.f32 %v5299, %v5496
      %v5534 = vadd.f32 %v5300, %v5498
      %v5535 = vadd.f32 %v5301, %v5501
      %v5536 = vadd.f32 %v5302, %v5503
      %v5537 = vld [vmem:[%s5068 + $0x2] sm:$0xff]
      %v5538 = vld [vmem:[%s5068 + $0xa] sm:$0xff]
      %v5539 = vld [vmem:[%s5068 + $0x1a] sm:$0xff]
      %v5540 = vld [vmem:[%s5068 + $0x22] sm:$0xff]
      %v5541 = vld [vmem:[%s5068 + $0x32] sm:$0xff]
      %v5542 = vld [vmem:[%s5068 + $0x3a] sm:$0xff]
      %v5543 = vld [vmem:[%s5068 + $0x4a] sm:$0xff]
      %v5544 = vld [vmem:[%s5068 + $0x52] sm:$0xff]
      %v5545 = vld [vmem:[%s5068 + $0x62] sm:$0xff]
      %v5546 = vld [vmem:[%s5068 + $0x6a] sm:$0xff]
      %v5547 = vld [vmem:[%s5068 + $0x7a] sm:$0xff]
      %v5548 = vld [vmem:[%s5068 + $0x82] sm:$0xff]
      %v5549 = vld [vmem:[%s5068 + $0x92] sm:$0xff]
      %v5550 = vld [vmem:[%s5068 + $0x9a] sm:$0xff]
      %v5551 = vld [vmem:[%s5068 + $0xaa] sm:$0xff]
      %v5552 = vld [vmem:[%s5068 + $0xb2] sm:$0xff]
      %v5553 = vld [vmem:[%s5068 + $0xc2] sm:$0xff]
      %v5554 = vld [vmem:[%s5068 + $0xca] sm:$0xff]
      %v5555 = vld [vmem:[%s5068 + $0xda] sm:$0xff]
      %v5556 = vld [vmem:[%s5068 + $0xe2] sm:$0xff]
      %v5557 = vld [vmem:[%s5068 + $0xf2] sm:$0xff]
      %v5558 = vld [vmem:[%s5068 + $0xfa] sm:$0xff]
      %v5559 = vld [vmem:[%s5068 + $0x10a] sm:$0xff]
      %v5560 = vld [vmem:[%s5068 + $0x112] sm:$0xff]
      %v5561 = vld [vmem:[%s5068 + $0x122] sm:$0xff]
      %v5562 = vld [vmem:[%s5068 + $0x12a] sm:$0xff]
      %v5563 = vld [vmem:[%s5068 + $0x13a] sm:$0xff]
      %v5564 = vld [vmem:[%s5068 + $0x142] sm:$0xff]
      %v5565 = vld [vmem:[%s5068 + $0x152] sm:$0xff]
      %v5566 = vld [vmem:[%s5068 + $0x15a] sm:$0xff]
      %v5567 = vld [vmem:[%s5068 + $0x16a] sm:$0xff]
      %v5568 = vld [vmem:[%s5068 + $0x172] sm:$0xff]
      %v5569 = vpack.c.bf16 %v5538, %v5537
      %v5570 = vpack.c.bf16 %v5540, %v5539
      %v5571 = vpack.c.bf16 %v5542, %v5541
      %v5572 = vpack.c.bf16 %v5544, %v5543
      %v5573 = vpack.c.bf16 %v5546, %v5545
      %v5574 = vpack.c.bf16 %v5548, %v5547
      %v5575 = vpack.c.bf16 %v5550, %v5549
      %v5576 = vpack.c.bf16 %v5552, %v5551
      %v5577 = vpack.c.bf16 %v5554, %v5553
      %v5578 = vpack.c.bf16 %v5556, %v5555
      %v5579 = vpack.c.bf16 %v5558, %v5557
      %v5580 = vpack.c.bf16 %v5560, %v5559
      %v5581 = vpack.c.bf16 %v5562, %v5561
      %v5582 = vpack.c.bf16 %v5564, %v5563
      %v5583 = vpack.c.bf16 %v5566, %v5565
      %v5584 = vpack.c.bf16 %v5568, %v5567
      %s5585 = scalar_lea.vmem %s3, 272
      %v5586 = vld [vmem:[%s5585] sm:$0xf]
      %v5587 = vld [vmem:[%s5585 + $0x4] sm:$0xf]
      %v5588 = vld [vmem:[%s5585 + $0x8] sm:$0xf]
      %v5589 = vld [vmem:[%s5585 + $0xc] sm:$0xf]
      %v5594 = vunpack.c.l.b16 %v5586
      %v5595 = vunpack.c.l.b16 %v5587
      %v5596 = vunpack.c.l.b16 %v5588
      %v5597 = vunpack.c.l.b16 %v5589
      %v5598 = vpack.c.b16 %v5595, %v5594
      %v5599 = vpack.c.b16 %v5597, %v5596
      %v5603 = vsel %vm1305, %v5569, 0
      %v5606 = vsel %vm1305, %v5570, 0
      %v5609 = vsel %vm1305, %v5571, 0
      %v5612 = vsel %vm1305, %v5572, 0
      %v5615 = vsel %vm1305, %v5573, 0
      %v5618 = vsel %vm1305, %v5574, 0
      %v5621 = vsel %vm1305, %v5575, 0
      %v5624 = vsel %vm1305, %v5576, 0
      %v5627 = vsel %vm1305, %v5577, 0
      %v5630 = vsel %vm1305, %v5578, 0
      %v5633 = vsel %vm1305, %v5579, 0
      %v5636 = vsel %vm1305, %v5580, 0
      %v5639 = vsel %vm1305, %v5581, 0
      %v5642 = vsel %vm1305, %v5582, 0
      %v5645 = vsel %vm1305, %v5583, 0
      %v5648 = vsel %vm1305, %v5584, 0
      %5650 = vmatpush.bf16.msra.mxu0 0
      %5651 = vmatpush.bf16.msra.mxu0 0
      %5652 = vmatpush.bf16.msra.mxu0 0
      %5653 = vmatpush.bf16.msra.mxu0 0
      %5654 = vmatpush.bf16.msra.mxu0 0
      %5655 = vmatpush.bf16.msra.mxu0 0
      %5656 = vmatpush.bf16.msra.mxu0 %v5599
      %5657 = vmatpush.bf16.msra.mxu0 %v5598
      %5658 = vmatmul.bf16.gmra.mxu0 %v5603
      %v5659 = vpop.f32.mrf.mxu0
      %v5660 = vadd.f32 0.0, %v5659
      %v5661 = vpop.f32.mrf.mxu0
      %v5662 = vadd.f32 0.0, %v5661
      %5663 = vmatmul.bf16.gmra.mxu0 %v5606
      %v5664 = vpop.f32.mrf.mxu0
      %v5665 = vadd.f32 0.0, %v5664
      %v5666 = vpop.f32.mrf.mxu0
      %v5667 = vadd.f32 0.0, %v5666
      %5668 = vmatmul.bf16.gmra.mxu0 %v5609
      %v5669 = vpop.f32.mrf.mxu0
      %v5670 = vadd.f32 0.0, %v5669
      %v5671 = vpop.f32.mrf.mxu0
      %v5672 = vadd.f32 0.0, %v5671
      %5673 = vmatmul.bf16.gmra.mxu0 %v5612
      %v5674 = vpop.f32.mrf.mxu0
      %v5675 = vadd.f32 0.0, %v5674
      %v5676 = vpop.f32.mrf.mxu0
      %v5677 = vadd.f32 0.0, %v5676
      %5678 = vmatmul.bf16.gmra.mxu0 %v5615
      %v5679 = vpop.f32.mrf.mxu0
      %v5680 = vadd.f32 0.0, %v5679
      %v5681 = vpop.f32.mrf.mxu0
      %v5682 = vadd.f32 0.0, %v5681
      %5683 = vmatmul.bf16.gmra.mxu0 %v5618
      %v5684 = vpop.f32.mrf.mxu0
      %v5685 = vadd.f32 0.0, %v5684
      %v5686 = vpop.f32.mrf.mxu0
      %v5687 = vadd.f32 0.0, %v5686
      %5688 = vmatmul.bf16.gmra.mxu0 %v5621
      %v5689 = vpop.f32.mrf.mxu0
      %v5690 = vadd.f32 0.0, %v5689
      %v5691 = vpop.f32.mrf.mxu0
      %v5692 = vadd.f32 0.0, %v5691
      %5693 = vmatmul.bf16.gmra.mxu0 %v5624
      %v5694 = vpop.f32.mrf.mxu0
      %v5695 = vadd.f32 0.0, %v5694
      %v5696 = vpop.f32.mrf.mxu0
      %v5697 = vadd.f32 0.0, %v5696
      %5698 = vmatmul.bf16.gmra.mxu0 %v5627
      %v5699 = vpop.f32.mrf.mxu0
      %v5700 = vadd.f32 0.0, %v5699
      %v5701 = vpop.f32.mrf.mxu0
      %v5702 = vadd.f32 0.0, %v5701
      %5703 = vmatmul.bf16.gmra.mxu0 %v5630
      %v5704 = vpop.f32.mrf.mxu0
      %v5705 = vadd.f32 0.0, %v5704
      %v5706 = vpop.f32.mrf.mxu0
      %v5707 = vadd.f32 0.0, %v5706
      %5708 = vmatmul.bf16.gmra.mxu0 %v5633
      %v5709 = vpop.f32.mrf.mxu0
      %v5710 = vadd.f32 0.0, %v5709
      %v5711 = vpop.f32.mrf.mxu0
      %v5712 = vadd.f32 0.0, %v5711
      %5713 = vmatmul.bf16.gmra.mxu0 %v5636
      %v5714 = vpop.f32.mrf.mxu0
      %v5715 = vadd.f32 0.0, %v5714
      %v5716 = vpop.f32.mrf.mxu0
      %v5717 = vadd.f32 0.0, %v5716
      %5718 = vmatmul.bf16.gmra.mxu0 %v5639
      %v5719 = vpop.f32.mrf.mxu0
      %v5720 = vadd.f32 0.0, %v5719
      %v5721 = vpop.f32.mrf.mxu0
      %v5722 = vadd.f32 0.0, %v5721
      %5723 = vmatmul.bf16.gmra.mxu0 %v5642
      %v5724 = vpop.f32.mrf.mxu0
      %v5725 = vadd.f32 0.0, %v5724
      %v5726 = vpop.f32.mrf.mxu0
      %v5727 = vadd.f32 0.0, %v5726
      %5728 = vmatmul.bf16.gmra.mxu0 %v5645
      %v5729 = vpop.f32.mrf.mxu0
      %v5730 = vadd.f32 0.0, %v5729
      %v5731 = vpop.f32.mrf.mxu0
      %v5732 = vadd.f32 0.0, %v5731
      %5733 = vmatmul.bf16.gmra.mxu0 %v5648
      %v5734 = vpop.f32.mrf.mxu0
      %v5735 = vadd.f32 0.0, %v5734
      %v5736 = vpop.f32.mrf.mxu0
      %v5737 = vadd.f32 0.0, %v5736
      %5738 = vdwg.mxu0
      %v5739 = vadd.f32 %v5505, %v5660
      %v5740 = vadd.f32 %v5506, %v5662
      %v5741 = vadd.f32 %v5507, %v5665
      %v5742 = vadd.f32 %v5508, %v5667
      %v5743 = vadd.f32 %v5509, %v5670
      %v5744 = vadd.f32 %v5510, %v5672
      %v5745 = vadd.f32 %v5511, %v5675
      %v5746 = vadd.f32 %v5512, %v5677
      %v5747 = vadd.f32 %v5513, %v5680
      %v5748 = vadd.f32 %v5514, %v5682
      %v5749 = vadd.f32 %v5515, %v5685
      %v5750 = vadd.f32 %v5516, %v5687
      %v5751 = vadd.f32 %v5517, %v5690
      %v5752 = vadd.f32 %v5518, %v5692
      %v5753 = vadd.f32 %v5519, %v5695
      %v5754 = vadd.f32 %v5520, %v5697
      %v5755 = vadd.f32 %v5521, %v5700
      %v5756 = vadd.f32 %v5522, %v5702
      %v5757 = vadd.f32 %v5523, %v5705
      %v5758 = vadd.f32 %v5524, %v5707
      %v5759 = vadd.f32 %v5525, %v5710
      %v5760 = vadd.f32 %v5526, %v5712
      %v5761 = vadd.f32 %v5527, %v5715
      %v5762 = vadd.f32 %v5528, %v5717
      %v5763 = vadd.f32 %v5529, %v5720
      %v5764 = vadd.f32 %v5530, %v5722
      %v5765 = vadd.f32 %v5531, %v5725
      %v5766 = vadd.f32 %v5532, %v5727
      %v5767 = vadd.f32 %v5533, %v5730
      %v5768 = vadd.f32 %v5534, %v5732
      %v5769 = vadd.f32 %v5535, %v5735
      %v5770 = vadd.f32 %v5536, %v5737
      %v5771 = vld [vmem:[%s5068 + $0x3] sm:$0xff]
      %v5772 = vld [vmem:[%s5068 + $0xb] sm:$0xff]
      %v5773 = vld [vmem:[%s5068 + $0x1b] sm:$0xff]
      %v5774 = vld [vmem:[%s5068 + $0x23] sm:$0xff]
      %v5775 = vld [vmem:[%s5068 + $0x33] sm:$0xff]
      %v5776 = vld [vmem:[%s5068 + $0x3b] sm:$0xff]
      %v5777 = vld [vmem:[%s5068 + $0x4b] sm:$0xff]
      %v5778 = vld [vmem:[%s5068 + $0x53] sm:$0xff]
      %v5779 = vld [vmem:[%s5068 + $0x63] sm:$0xff]
      %v5780 = vld [vmem:[%s5068 + $0x6b] sm:$0xff]
      %v5781 = vld [vmem:[%s5068 + $0x7b] sm:$0xff]
      %v5782 = vld [vmem:[%s5068 + $0x83] sm:$0xff]
      %v5783 = vld [vmem:[%s5068 + $0x93] sm:$0xff]
      %v5784 = vld [vmem:[%s5068 + $0x9b] sm:$0xff]
      %v5785 = vld [vmem:[%s5068 + $0xab] sm:$0xff]
      %v5786 = vld [vmem:[%s5068 + $0xb3] sm:$0xff]
      %v5787 = vld [vmem:[%s5068 + $0xc3] sm:$0xff]
      %v5788 = vld [vmem:[%s5068 + $0xcb] sm:$0xff]
      %v5789 = vld [vmem:[%s5068 + $0xdb] sm:$0xff]
      %v5790 = vld [vmem:[%s5068 + $0xe3] sm:$0xff]
      %v5791 = vld [vmem:[%s5068 + $0xf3] sm:$0xff]
      %v5792 = vld [vmem:[%s5068 + $0xfb] sm:$0xff]
      %v5793 = vld [vmem:[%s5068 + $0x10b] sm:$0xff]
      %v5794 = vld [vmem:[%s5068 + $0x113] sm:$0xff]
      %v5795 = vld [vmem:[%s5068 + $0x123] sm:$0xff]
      %v5796 = vld [vmem:[%s5068 + $0x12b] sm:$0xff]
      %v5797 = vld [vmem:[%s5068 + $0x13b] sm:$0xff]
      %v5798 = vld [vmem:[%s5068 + $0x143] sm:$0xff]
      %v5799 = vld [vmem:[%s5068 + $0x153] sm:$0xff]
      %v5800 = vld [vmem:[%s5068 + $0x15b] sm:$0xff]
      %v5801 = vld [vmem:[%s5068 + $0x16b] sm:$0xff]
      %v5802 = vld [vmem:[%s5068 + $0x173] sm:$0xff]
      %v5803 = vpack.c.bf16 %v5772, %v5771
      %v5804 = vpack.c.bf16 %v5774, %v5773
      %v5805 = vpack.c.bf16 %v5776, %v5775
      %v5806 = vpack.c.bf16 %v5778, %v5777
      %v5807 = vpack.c.bf16 %v5780, %v5779
      %v5808 = vpack.c.bf16 %v5782, %v5781
      %v5809 = vpack.c.bf16 %v5784, %v5783
      %v5810 = vpack.c.bf16 %v5786, %v5785
      %v5811 = vpack.c.bf16 %v5788, %v5787
      %v5812 = vpack.c.bf16 %v5790, %v5789
      %v5813 = vpack.c.bf16 %v5792, %v5791
      %v5814 = vpack.c.bf16 %v5794, %v5793
      %v5815 = vpack.c.bf16 %v5796, %v5795
      %v5816 = vpack.c.bf16 %v5798, %v5797
      %v5817 = vpack.c.bf16 %v5800, %v5799
      %v5818 = vpack.c.bf16 %v5802, %v5801
      %s5819 = scalar_lea.vmem %s3, 288
      %v5820 = vld [vmem:[%s5819] sm:$0xf]
      %v5821 = vld [vmem:[%s5819 + $0x4] sm:$0xf]
      %v5822 = vld [vmem:[%s5819 + $0x8] sm:$0xf]
      %v5823 = vld [vmem:[%s5819 + $0xc] sm:$0xf]
      %v5828 = vunpack.c.l.b16 %v5820
      %v5829 = vunpack.c.l.b16 %v5821
      %v5830 = vunpack.c.l.b16 %v5822
      %v5831 = vunpack.c.l.b16 %v5823
      %v5832 = vpack.c.b16 %v5829, %v5828
      %v5833 = vpack.c.b16 %v5831, %v5830
      %v5837 = vsel %vm1305, %v5803, 0
      %v5840 = vsel %vm1305, %v5804, 0
      %v5843 = vsel %vm1305, %v5805, 0
      %v5846 = vsel %vm1305, %v5806, 0
      %v5849 = vsel %vm1305, %v5807, 0
      %v5852 = vsel %vm1305, %v5808, 0
      %v5855 = vsel %vm1305, %v5809, 0
      %v5858 = vsel %vm1305, %v5810, 0
      %v5861 = vsel %vm1305, %v5811, 0
      %v5864 = vsel %vm1305, %v5812, 0
      %v5867 = vsel %vm1305, %v5813, 0
      %v5870 = vsel %vm1305, %v5814, 0
      %v5873 = vsel %vm1305, %v5815, 0
      %v5876 = vsel %vm1305, %v5816, 0
      %v5879 = vsel %vm1305, %v5817, 0
      %v5882 = vsel %vm1305, %v5818, 0
      %5884 = vmatpush.bf16.msra.mxu0 0
      %5885 = vmatpush.bf16.msra.mxu0 0
      %5886 = vmatpush.bf16.msra.mxu0 0
      %5887 = vmatpush.bf16.msra.mxu0 0
      %5888 = vmatpush.bf16.msra.mxu0 0
      %5889 = vmatpush.bf16.msra.mxu0 0
      %5890 = vmatpush.bf16.msra.mxu0 %v5833
      %5891 = vmatpush.bf16.msra.mxu0 %v5832
      %5892 = vmatmul.bf16.gmra.mxu0 %v5837
      %v5893 = vpop.f32.mrf.mxu0
      %v5894 = vadd.f32 0.0, %v5893
      %v5895 = vpop.f32.mrf.mxu0
      %v5896 = vadd.f32 0.0, %v5895
      %5897 = vmatmul.bf16.gmra.mxu0 %v5840
      %v5898 = vpop.f32.mrf.mxu0
      %v5899 = vadd.f32 0.0, %v5898
      %v5900 = vpop.f32.mrf.mxu0
      %v5901 = vadd.f32 0.0, %v5900
      %5902 = vmatmul.bf16.gmra.mxu0 %v5843
      %v5903 = vpop.f32.mrf.mxu0
      %v5904 = vadd.f32 0.0, %v5903
      %v5905 = vpop.f32.mrf.mxu0
      %v5906 = vadd.f32 0.0, %v5905
      %5907 = vmatmul.bf16.gmra.mxu0 %v5846
      %v5908 = vpop.f32.mrf.mxu0
      %v5909 = vadd.f32 0.0, %v5908
      %v5910 = vpop.f32.mrf.mxu0
      %v5911 = vadd.f32 0.0, %v5910
      %5912 = vmatmul.bf16.gmra.mxu0 %v5849
      %v5913 = vpop.f32.mrf.mxu0
      %v5914 = vadd.f32 0.0, %v5913
      %v5915 = vpop.f32.mrf.mxu0
      %v5916 = vadd.f32 0.0, %v5915
      %5917 = vmatmul.bf16.gmra.mxu0 %v5852
      %v5918 = vpop.f32.mrf.mxu0
      %v5919 = vadd.f32 0.0, %v5918
      %v5920 = vpop.f32.mrf.mxu0
      %v5921 = vadd.f32 0.0, %v5920
      %5922 = vmatmul.bf16.gmra.mxu0 %v5855
      %v5923 = vpop.f32.mrf.mxu0
      %v5924 = vadd.f32 0.0, %v5923
      %v5925 = vpop.f32.mrf.mxu0
      %v5926 = vadd.f32 0.0, %v5925
      %5927 = vmatmul.bf16.gmra.mxu0 %v5858
      %v5928 = vpop.f32.mrf.mxu0
      %v5929 = vadd.f32 0.0, %v5928
      %v5930 = vpop.f32.mrf.mxu0
      %v5931 = vadd.f32 0.0, %v5930
      %5932 = vmatmul.bf16.gmra.mxu0 %v5861
      %v5933 = vpop.f32.mrf.mxu0
      %v5934 = vadd.f32 0.0, %v5933
      %v5935 = vpop.f32.mrf.mxu0
      %v5936 = vadd.f32 0.0, %v5935
      %5937 = vmatmul.bf16.gmra.mxu0 %v5864
      %v5938 = vpop.f32.mrf.mxu0
      %v5939 = vadd.f32 0.0, %v5938
      %v5940 = vpop.f32.mrf.mxu0
      %v5941 = vadd.f32 0.0, %v5940
      %5942 = vmatmul.bf16.gmra.mxu0 %v5867
      %v5943 = vpop.f32.mrf.mxu0
      %v5944 = vadd.f32 0.0, %v5943
      %v5945 = vpop.f32.mrf.mxu0
      %v5946 = vadd.f32 0.0, %v5945
      %5947 = vmatmul.bf16.gmra.mxu0 %v5870
      %v5948 = vpop.f32.mrf.mxu0
      %v5949 = vadd.f32 0.0, %v5948
      %v5950 = vpop.f32.mrf.mxu0
      %v5951 = vadd.f32 0.0, %v5950
      %5952 = vmatmul.bf16.gmra.mxu0 %v5873
      %v5953 = vpop.f32.mrf.mxu0
      %v5954 = vadd.f32 0.0, %v5953
      %v5955 = vpop.f32.mrf.mxu0
      %v5956 = vadd.f32 0.0, %v5955
      %5957 = vmatmul.bf16.gmra.mxu0 %v5876
      %v5958 = vpop.f32.mrf.mxu0
      %v5959 = vadd.f32 0.0, %v5958
      %v5960 = vpop.f32.mrf.mxu0
      %v5961 = vadd.f32 0.0, %v5960
      %5962 = vmatmul.bf16.gmra.mxu0 %v5879
      %v5963 = vpop.f32.mrf.mxu0
      %v5964 = vadd.f32 0.0, %v5963
      %v5965 = vpop.f32.mrf.mxu0
      %v5966 = vadd.f32 0.0, %v5965
      %5967 = vmatmul.bf16.gmra.mxu0 %v5882
      %v5968 = vpop.f32.mrf.mxu0
      %v5969 = vadd.f32 0.0, %v5968
      %v5970 = vpop.f32.mrf.mxu0
      %v5971 = vadd.f32 0.0, %v5970
      %5972 = vdwg.mxu0
      %v5973 = vadd.f32 %v5739, %v5894
      %v5974 = vadd.f32 %v5740, %v5896
      %v5975 = vadd.f32 %v5741, %v5899
      %v5976 = vadd.f32 %v5742, %v5901
      %v5977 = vadd.f32 %v5743, %v5904
      %v5978 = vadd.f32 %v5744, %v5906
      %v5979 = vadd.f32 %v5745, %v5909
      %v5980 = vadd.f32 %v5746, %v5911
      %v5981 = vadd.f32 %v5747, %v5914
      %v5982 = vadd.f32 %v5748, %v5916
      %v5983 = vadd.f32 %v5749, %v5919
      %v5984 = vadd.f32 %v5750, %v5921
      %v5985 = vadd.f32 %v5751, %v5924
      %v5986 = vadd.f32 %v5752, %v5926
      %v5987 = vadd.f32 %v5753, %v5929
      %v5988 = vadd.f32 %v5754, %v5931
      %v5989 = vadd.f32 %v5755, %v5934
      %v5990 = vadd.f32 %v5756, %v5936
      %v5991 = vadd.f32 %v5757, %v5939
      %v5992 = vadd.f32 %v5758, %v5941
      %v5993 = vadd.f32 %v5759, %v5944
      %v5994 = vadd.f32 %v5760, %v5946
      %v5995 = vadd.f32 %v5761, %v5949
      %v5996 = vadd.f32 %v5762, %v5951
      %v5997 = vadd.f32 %v5763, %v5954
      %v5998 = vadd.f32 %v5764, %v5956
      %v5999 = vadd.f32 %v5765, %v5959
      %v6000 = vadd.f32 %v5766, %v5961
      %v6001 = vadd.f32 %v5767, %v5964
      %v6002 = vadd.f32 %v5768, %v5966
      %v6003 = vadd.f32 %v5769, %v5969
      %v6004 = vadd.f32 %v5770, %v5971
      %v6005 = vld [vmem:[%s5068 + $0x4] sm:$0xff]
      %v6006 = vld [vmem:[%s5068 + $0xc] sm:$0xff]
      %v6007 = vld [vmem:[%s5068 + $0x1c] sm:$0xff]
      %v6008 = vld [vmem:[%s5068 + $0x24] sm:$0xff]
      %v6009 = vld [vmem:[%s5068 + $0x34] sm:$0xff]
      %v6010 = vld [vmem:[%s5068 + $0x3c] sm:$0xff]
      %v6011 = vld [vmem:[%s5068 + $0x4c] sm:$0xff]
      %v6012 = vld [vmem:[%s5068 + $0x54] sm:$0xff]
      %v6013 = vld [vmem:[%s5068 + $0x64] sm:$0xff]
      %v6014 = vld [vmem:[%s5068 + $0x6c] sm:$0xff]
      %v6015 = vld [vmem:[%s5068 + $0x7c] sm:$0xff]
      %v6016 = vld [vmem:[%s5068 + $0x84] sm:$0xff]
      %v6017 = vld [vmem:[%s5068 + $0x94] sm:$0xff]
      %v6018 = vld [vmem:[%s5068 + $0x9c] sm:$0xff]
      %v6019 = vld [vmem:[%s5068 + $0xac] sm:$0xff]
      %v6020 = vld [vmem:[%s5068 + $0xb4] sm:$0xff]
      %v6021 = vld [vmem:[%s5068 + $0xc4] sm:$0xff]
      %v6022 = vld [vmem:[%s5068 + $0xcc] sm:$0xff]
      %v6023 = vld [vmem:[%s5068 + $0xdc] sm:$0xff]
      %v6024 = vld [vmem:[%s5068 + $0xe4] sm:$0xff]
      %v6025 = vld [vmem:[%s5068 + $0xf4] sm:$0xff]
      %v6026 = vld [vmem:[%s5068 + $0xfc] sm:$0xff]
      %v6027 = vld [vmem:[%s5068 + $0x10c] sm:$0xff]
      %v6028 = vld [vmem:[%s5068 + $0x114] sm:$0xff]
      %v6029 = vld [vmem:[%s5068 + $0x124] sm:$0xff]
      %v6030 = vld [vmem:[%s5068 + $0x12c] sm:$0xff]
      %v6031 = vld [vmem:[%s5068 + $0x13c] sm:$0xff]
      %v6032 = vld [vmem:[%s5068 + $0x144] sm:$0xff]
      %v6033 = vld [vmem:[%s5068 + $0x154] sm:$0xff]
      %v6034 = vld [vmem:[%s5068 + $0x15c] sm:$0xff]
      %v6035 = vld [vmem:[%s5068 + $0x16c] sm:$0xff]
      %v6036 = vld [vmem:[%s5068 + $0x174] sm:$0xff]
      %v6037 = vpack.c.bf16 %v6006, %v6005
      %v6038 = vpack.c.bf16 %v6008, %v6007
      %v6039 = vpack.c.bf16 %v6010, %v6009
      %v6040 = vpack.c.bf16 %v6012, %v6011
      %v6041 = vpack.c.bf16 %v6014, %v6013
      %v6042 = vpack.c.bf16 %v6016, %v6015
      %v6043 = vpack.c.bf16 %v6018, %v6017
      %v6044 = vpack.c.bf16 %v6020, %v6019
      %v6045 = vpack.c.bf16 %v6022, %v6021
      %v6046 = vpack.c.bf16 %v6024, %v6023
      %v6047 = vpack.c.bf16 %v6026, %v6025
      %v6048 = vpack.c.bf16 %v6028, %v6027
      %v6049 = vpack.c.bf16 %v6030, %v6029
      %v6050 = vpack.c.bf16 %v6032, %v6031
      %v6051 = vpack.c.bf16 %v6034, %v6033
      %v6052 = vpack.c.bf16 %v6036, %v6035
      %s6053 = scalar_lea.vmem %s3, 304
      %v6054 = vld [vmem:[%s6053] sm:$0xf]
      %v6055 = vld [vmem:[%s6053 + $0x4] sm:$0xf]
      %v6056 = vld [vmem:[%s6053 + $0x8] sm:$0xf]
      %v6057 = vld [vmem:[%s6053 + $0xc] sm:$0xf]
      %v6062 = vunpack.c.l.b16 %v6054
      %v6063 = vunpack.c.l.b16 %v6055
      %v6064 = vunpack.c.l.b16 %v6056
      %v6065 = vunpack.c.l.b16 %v6057
      %v6066 = vpack.c.b16 %v6063, %v6062
      %v6067 = vpack.c.b16 %v6065, %v6064
      %v6071 = vsel %vm1305, %v6037, 0
      %v6074 = vsel %vm1305, %v6038, 0
      %v6077 = vsel %vm1305, %v6039, 0
      %v6080 = vsel %vm1305, %v6040, 0
      %v6083 = vsel %vm1305, %v6041, 0
      %v6086 = vsel %vm1305, %v6042, 0
      %v6089 = vsel %vm1305, %v6043, 0
      %v6092 = vsel %vm1305, %v6044, 0
      %v6095 = vsel %vm1305, %v6045, 0
      %v6098 = vsel %vm1305, %v6046, 0
      %v6101 = vsel %vm1305, %v6047, 0
      %v6104 = vsel %vm1305, %v6048, 0
      %v6107 = vsel %vm1305, %v6049, 0
      %v6110 = vsel %vm1305, %v6050, 0
      %v6113 = vsel %vm1305, %v6051, 0
      %v6116 = vsel %vm1305, %v6052, 0
      %6118 = vmatpush.bf16.msra.mxu0 0
      %6119 = vmatpush.bf16.msra.mxu0 0
      %6120 = vmatpush.bf16.msra.mxu0 0
      %6121 = vmatpush.bf16.msra.mxu0 0
      %6122 = vmatpush.bf16.msra.mxu0 0
      %6123 = vmatpush.bf16.msra.mxu0 0
      %6124 = vmatpush.bf16.msra.mxu0 %v6067
      %6125 = vmatpush.bf16.msra.mxu0 %v6066
      %6126 = vmatmul.bf16.gmra.mxu0 %v6071
      %v6127 = vpop.f32.mrf.mxu0
      %v6128 = vadd.f32 0.0, %v6127
      %v6129 = vpop.f32.mrf.mxu0
      %v6130 = vadd.f32 0.0, %v6129
      %6131 = vmatmul.bf16.gmra.mxu0 %v6074
      %v6132 = vpop.f32.mrf.mxu0
      %v6133 = vadd.f32 0.0, %v6132
      %v6134 = vpop.f32.mrf.mxu0
      %v6135 = vadd.f32 0.0, %v6134
      %6136 = vmatmul.bf16.gmra.mxu0 %v6077
      %v6137 = vpop.f32.mrf.mxu0
      %v6138 = vadd.f32 0.0, %v6137
      %v6139 = vpop.f32.mrf.mxu0
      %v6140 = vadd.f32 0.0, %v6139
      %6141 = vmatmul.bf16.gmra.mxu0 %v6080
      %v6142 = vpop.f32.mrf.mxu0
      %v6143 = vadd.f32 0.0, %v6142
      %v6144 = vpop.f32.mrf.mxu0
      %v6145 = vadd.f32 0.0, %v6144
      %6146 = vmatmul.bf16.gmra.mxu0 %v6083
      %v6147 = vpop.f32.mrf.mxu0
      %v6148 = vadd.f32 0.0, %v6147
      %v6149 = vpop.f32.mrf.mxu0
      %v6150 = vadd.f32 0.0, %v6149
      %6151 = vmatmul.bf16.gmra.mxu0 %v6086
      %v6152 = vpop.f32.mrf.mxu0
      %v6153 = vadd.f32 0.0, %v6152
      %v6154 = vpop.f32.mrf.mxu0
      %v6155 = vadd.f32 0.0, %v6154
      %6156 = vmatmul.bf16.gmra.mxu0 %v6089
      %v6157 = vpop.f32.mrf.mxu0
      %v6158 = vadd.f32 0.0, %v6157
      %v6159 = vpop.f32.mrf.mxu0
      %v6160 = vadd.f32 0.0, %v6159
      %6161 = vmatmul.bf16.gmra.mxu0 %v6092
      %v6162 = vpop.f32.mrf.mxu0
      %v6163 = vadd.f32 0.0, %v6162
      %v6164 = vpop.f32.mrf.mxu0
      %v6165 = vadd.f32 0.0, %v6164
      %6166 = vmatmul.bf16.gmra.mxu0 %v6095
      %v6167 = vpop.f32.mrf.mxu0
      %v6168 = vadd.f32 0.0, %v6167
      %v6169 = vpop.f32.mrf.mxu0
      %v6170 = vadd.f32 0.0, %v6169
      %6171 = vmatmul.bf16.gmra.mxu0 %v6098
      %v6172 = vpop.f32.mrf.mxu0
      %v6173 = vadd.f32 0.0, %v6172
      %v6174 = vpop.f32.mrf.mxu0
      %v6175 = vadd.f32 0.0, %v6174
      %6176 = vmatmul.bf16.gmra.mxu0 %v6101
      %v6177 = vpop.f32.mrf.mxu0
      %v6178 = vadd.f32 0.0, %v6177
      %v6179 = vpop.f32.mrf.mxu0
      %v6180 = vadd.f32 0.0, %v6179
      %6181 = vmatmul.bf16.gmra.mxu0 %v6104
      %v6182 = vpop.f32.mrf.mxu0
      %v6183 = vadd.f32 0.0, %v6182
      %v6184 = vpop.f32.mrf.mxu0
      %v6185 = vadd.f32 0.0, %v6184
      %6186 = vmatmul.bf16.gmra.mxu0 %v6107
      %v6187 = vpop.f32.mrf.mxu0
      %v6188 = vadd.f32 0.0, %v6187
      %v6189 = vpop.f32.mrf.mxu0
      %v6190 = vadd.f32 0.0, %v6189
      %6191 = vmatmul.bf16.gmra.mxu0 %v6110
      %v6192 = vpop.f32.mrf.mxu0
      %v6193 = vadd.f32 0.0, %v6192
      %v6194 = vpop.f32.mrf.mxu0
      %v6195 = vadd.f32 0.0, %v6194
      %6196 = vmatmul.bf16.gmra.mxu0 %v6113
      %v6197 = vpop.f32.mrf.mxu0
      %v6198 = vadd.f32 0.0, %v6197
      %v6199 = vpop.f32.mrf.mxu0
      %v6200 = vadd.f32 0.0, %v6199
      %6201 = vmatmul.bf16.gmra.mxu0 %v6116
      %v6202 = vpop.f32.mrf.mxu0
      %v6203 = vadd.f32 0.0, %v6202
      %v6204 = vpop.f32.mrf.mxu0
      %v6205 = vadd.f32 0.0, %v6204
      %6206 = vdwg.mxu0
      %v6207 = vadd.f32 %v5973, %v6128
      %v6208 = vadd.f32 %v5974, %v6130
      %v6209 = vadd.f32 %v5975, %v6133
      %v6210 = vadd.f32 %v5976, %v6135
      %v6211 = vadd.f32 %v5977, %v6138
      %v6212 = vadd.f32 %v5978, %v6140
      %v6213 = vadd.f32 %v5979, %v6143
      %v6214 = vadd.f32 %v5980, %v6145
      %v6215 = vadd.f32 %v5981, %v6148
      %v6216 = vadd.f32 %v5982, %v6150
      %v6217 = vadd.f32 %v5983, %v6153
      %v6218 = vadd.f32 %v5984, %v6155
      %v6219 = vadd.f32 %v5985, %v6158
      %v6220 = vadd.f32 %v5986, %v6160
      %v6221 = vadd.f32 %v5987, %v6163
      %v6222 = vadd.f32 %v5988, %v6165
      %v6223 = vadd.f32 %v5989, %v6168
      %v6224 = vadd.f32 %v5990, %v6170
      %v6225 = vadd.f32 %v5991, %v6173
      %v6226 = vadd.f32 %v5992, %v6175
      %v6227 = vadd.f32 %v5993, %v6178
      %v6228 = vadd.f32 %v5994, %v6180
      %v6229 = vadd.f32 %v5995, %v6183
      %v6230 = vadd.f32 %v5996, %v6185
      %v6231 = vadd.f32 %v5997, %v6188
      %v6232 = vadd.f32 %v5998, %v6190
      %v6233 = vadd.f32 %v5999, %v6193
      %v6234 = vadd.f32 %v6000, %v6195
      %v6235 = vadd.f32 %v6001, %v6198
      %v6236 = vadd.f32 %v6002, %v6200
      %v6237 = vadd.f32 %v6003, %v6203
      %v6238 = vadd.f32 %v6004, %v6205
      %s6239 = scalar_lea.vmem [#allocation2], 96
      %v6240 = vld [vmem:[%s6239] sm:$0xff]
      %v6241 = vld [vmem:[%s6239 + $0x8] sm:$0xff]
      %v6242 = vld [vmem:[%s6239 + $0x18] sm:$0xff]
      %v6243 = vld [vmem:[%s6239 + $0x20] sm:$0xff]
      %v6244 = vld [vmem:[%s6239 + $0x30] sm:$0xff]
      %v6245 = vld [vmem:[%s6239 + $0x38] sm:$0xff]
      %v6246 = vld [vmem:[%s6239 + $0x48] sm:$0xff]
      %v6247 = vld [vmem:[%s6239 + $0x50] sm:$0xff]
      %v6248 = vld [vmem:[%s6239 + $0x60] sm:$0xff]
      %v6249 = vld [vmem:[%s6239 + $0x68] sm:$0xff]
      %v6250 = vld [vmem:[%s6239 + $0x78] sm:$0xff]
      %v6251 = vld [vmem:[%s6239 + $0x80] sm:$0xff]
      %v6252 = vld [vmem:[%s6239 + $0x90] sm:$0xff]
      %v6253 = vld [vmem:[%s6239 + $0x98] sm:$0xff]
      %v6254 = vld [vmem:[%s6239 + $0xa8] sm:$0xff]
      %v6255 = vld [vmem:[%s6239 + $0xb0] sm:$0xff]
      %v6256 = vld [vmem:[%s6239 + $0xc0] sm:$0xff]
      %v6257 = vld [vmem:[%s6239 + $0xc8] sm:$0xff]
      %v6258 = vld [vmem:[%s6239 + $0xd8] sm:$0xff]
      %v6259 = vld [vmem:[%s6239 + $0xe0] sm:$0xff]
      %v6260 = vld [vmem:[%s6239 + $0xf0] sm:$0xff]
      %v6261 = vld [vmem:[%s6239 + $0xf8] sm:$0xff]
      %v6262 = vld [vmem:[%s6239 + $0x108] sm:$0xff]
      %v6263 = vld [vmem:[%s6239 + $0x110] sm:$0xff]
      %v6264 = vld [vmem:[%s6239 + $0x120] sm:$0xff]
      %v6265 = vld [vmem:[%s6239 + $0x128] sm:$0xff]
      %v6266 = vld [vmem:[%s6239 + $0x138] sm:$0xff]
      %v6267 = vld [vmem:[%s6239 + $0x140] sm:$0xff]
      %v6268 = vld [vmem:[%s6239 + $0x150] sm:$0xff]
      %v6269 = vld [vmem:[%s6239 + $0x158] sm:$0xff]
      %v6270 = vld [vmem:[%s6239 + $0x168] sm:$0xff]
      %v6271 = vld [vmem:[%s6239 + $0x170] sm:$0xff]
      %v6272 = vpack.c.bf16 %v6241, %v6240
      %v6273 = vpack.c.bf16 %v6243, %v6242
      %v6274 = vpack.c.bf16 %v6245, %v6244
      %v6275 = vpack.c.bf16 %v6247, %v6246
      %v6276 = vpack.c.bf16 %v6249, %v6248
      %v6277 = vpack.c.bf16 %v6251, %v6250
      %v6278 = vpack.c.bf16 %v6253, %v6252
      %v6279 = vpack.c.bf16 %v6255, %v6254
      %v6280 = vpack.c.bf16 %v6257, %v6256
      %v6281 = vpack.c.bf16 %v6259, %v6258
      %v6282 = vpack.c.bf16 %v6261, %v6260
      %v6283 = vpack.c.bf16 %v6263, %v6262
      %v6284 = vpack.c.bf16 %v6265, %v6264
      %v6285 = vpack.c.bf16 %v6267, %v6266
      %v6286 = vpack.c.bf16 %v6269, %v6268
      %v6287 = vpack.c.bf16 %v6271, %v6270
      %s6288 = scalar_lea.vmem %s3, 320
      %v6289 = vld [vmem:[%s6288] sm:$0xf]
      %v6290 = vld [vmem:[%s6288 + $0x4] sm:$0xf]
      %v6291 = vld [vmem:[%s6288 + $0x8] sm:$0xf]
      %v6292 = vld [vmem:[%s6288 + $0xc] sm:$0xf]
      %v6297 = vunpack.c.l.b16 %v6289
      %v6298 = vunpack.c.l.b16 %v6290
      %v6299 = vunpack.c.l.b16 %v6291
      %v6300 = vunpack.c.l.b16 %v6292
      %v6301 = vpack.c.b16 %v6298, %v6297
      %v6302 = vpack.c.b16 %v6300, %v6299
      %v6306 = vsel %vm1305, %v6272, 0
      %v6309 = vsel %vm1305, %v6273, 0
      %v6312 = vsel %vm1305, %v6274, 0
      %v6315 = vsel %vm1305, %v6275, 0
      %v6318 = vsel %vm1305, %v6276, 0
      %v6321 = vsel %vm1305, %v6277, 0
      %v6324 = vsel %vm1305, %v6278, 0
      %v6327 = vsel %vm1305, %v6279, 0
      %v6330 = vsel %vm1305, %v6280, 0
      %v6333 = vsel %vm1305, %v6281, 0
      %v6336 = vsel %vm1305, %v6282, 0
      %v6339 = vsel %vm1305, %v6283, 0
      %v6342 = vsel %vm1305, %v6284, 0
      %v6345 = vsel %vm1305, %v6285, 0
      %v6348 = vsel %vm1305, %v6286, 0
      %v6351 = vsel %vm1305, %v6287, 0
      %6353 = vmatpush.bf16.msra.mxu0 0
      %6354 = vmatpush.bf16.msra.mxu0 0
      %6355 = vmatpush.bf16.msra.mxu0 0
      %6356 = vmatpush.bf16.msra.mxu0 0
      %6357 = vmatpush.bf16.msra.mxu0 0
      %6358 = vmatpush.bf16.msra.mxu0 0
      %6359 = vmatpush.bf16.msra.mxu0 %v6302
      %6360 = vmatpush.bf16.msra.mxu0 %v6301
      %6361 = vmatmul.bf16.gmra.mxu0 %v6306
      %v6362 = vpop.f32.mrf.mxu0
      %v6363 = vadd.f32 0.0, %v6362
      %v6364 = vpop.f32.mrf.mxu0
      %v6365 = vadd.f32 0.0, %v6364
      %6366 = vmatmul.bf16.gmra.mxu0 %v6309
      %v6367 = vpop.f32.mrf.mxu0
      %v6368 = vadd.f32 0.0, %v6367
      %v6369 = vpop.f32.mrf.mxu0
      %v6370 = vadd.f32 0.0, %v6369
      %6371 = vmatmul.bf16.gmra.mxu0 %v6312
      %v6372 = vpop.f32.mrf.mxu0
      %v6373 = vadd.f32 0.0, %v6372
      %v6374 = vpop.f32.mrf.mxu0
      %v6375 = vadd.f32 0.0, %v6374
      %6376 = vmatmul.bf16.gmra.mxu0 %v6315
      %v6377 = vpop.f32.mrf.mxu0
      %v6378 = vadd.f32 0.0, %v6377
      %v6379 = vpop.f32.mrf.mxu0
      %v6380 = vadd.f32 0.0, %v6379
      %6381 = vmatmul.bf16.gmra.mxu0 %v6318
      %v6382 = vpop.f32.mrf.mxu0
      %v6383 = vadd.f32 0.0, %v6382
      %v6384 = vpop.f32.mrf.mxu0
      %v6385 = vadd.f32 0.0, %v6384
      %6386 = vmatmul.bf16.gmra.mxu0 %v6321
      %v6387 = vpop.f32.mrf.mxu0
      %v6388 = vadd.f32 0.0, %v6387
      %v6389 = vpop.f32.mrf.mxu0
      %v6390 = vadd.f32 0.0, %v6389
      %6391 = vmatmul.bf16.gmra.mxu0 %v6324
      %v6392 = vpop.f32.mrf.mxu0
      %v6393 = vadd.f32 0.0, %v6392
      %v6394 = vpop.f32.mrf.mxu0
      %v6395 = vadd.f32 0.0, %v6394
      %6396 = vmatmul.bf16.gmra.mxu0 %v6327
      %v6397 = vpop.f32.mrf.mxu0
      %v6398 = vadd.f32 0.0, %v6397
      %v6399 = vpop.f32.mrf.mxu0
      %v6400 = vadd.f32 0.0, %v6399
      %6401 = vmatmul.bf16.gmra.mxu0 %v6330
      %v6402 = vpop.f32.mrf.mxu0
      %v6403 = vadd.f32 0.0, %v6402
      %v6404 = vpop.f32.mrf.mxu0
      %v6405 = vadd.f32 0.0, %v6404
      %6406 = vmatmul.bf16.gmra.mxu0 %v6333
      %v6407 = vpop.f32.mrf.mxu0
      %v6408 = vadd.f32 0.0, %v6407
      %v6409 = vpop.f32.mrf.mxu0
      %v6410 = vadd.f32 0.0, %v6409
      %6411 = vmatmul.bf16.gmra.mxu0 %v6336
      %v6412 = vpop.f32.mrf.mxu0
      %v6413 = vadd.f32 0.0, %v6412
      %v6414 = vpop.f32.mrf.mxu0
      %v6415 = vadd.f32 0.0, %v6414
      %6416 = vmatmul.bf16.gmra.mxu0 %v6339
      %v6417 = vpop.f32.mrf.mxu0
      %v6418 = vadd.f32 0.0, %v6417
      %v6419 = vpop.f32.mrf.mxu0
      %v6420 = vadd.f32 0.0, %v6419
      %6421 = vmatmul.bf16.gmra.mxu0 %v6342
      %v6422 = vpop.f32.mrf.mxu0
      %v6423 = vadd.f32 0.0, %v6422
      %v6424 = vpop.f32.mrf.mxu0
      %v6425 = vadd.f32 0.0, %v6424
      %6426 = vmatmul.bf16.gmra.mxu0 %v6345
      %v6427 = vpop.f32.mrf.mxu0
      %v6428 = vadd.f32 0.0, %v6427
      %v6429 = vpop.f32.mrf.mxu0
      %v6430 = vadd.f32 0.0, %v6429
      %6431 = vmatmul.bf16.gmra.mxu0 %v6348
      %v6432 = vpop.f32.mrf.mxu0
      %v6433 = vadd.f32 0.0, %v6432
      %v6434 = vpop.f32.mrf.mxu0
      %v6435 = vadd.f32 0.0, %v6434
      %6436 = vmatmul.bf16.gmra.mxu0 %v6351
      %v6437 = vpop.f32.mrf.mxu0
      %v6438 = vadd.f32 0.0, %v6437
      %v6439 = vpop.f32.mrf.mxu0
      %v6440 = vadd.f32 0.0, %v6439
      %6441 = vdwg.mxu0
      %v6442 = vadd.f32 %v6207, %v6363
      %v6443 = vadd.f32 %v6208, %v6365
      %v6444 = vadd.f32 %v6209, %v6368
      %v6445 = vadd.f32 %v6210, %v6370
      %v6446 = vadd.f32 %v6211, %v6373
      %v6447 = vadd.f32 %v6212, %v6375
      %v6448 = vadd.f32 %v6213, %v6378
      %v6449 = vadd.f32 %v6214, %v6380
      %v6450 = vadd.f32 %v6215, %v6383
      %v6451 = vadd.f32 %v6216, %v6385
      %v6452 = vadd.f32 %v6217, %v6388
      %v6453 = vadd.f32 %v6218, %v6390
      %v6454 = vadd.f32 %v6219, %v6393
      %v6455 = vadd.f32 %v6220, %v6395
      %v6456 = vadd.f32 %v6221, %v6398
      %v6457 = vadd.f32 %v6222, %v6400
      %v6458 = vadd.f32 %v6223, %v6403
      %v6459 = vadd.f32 %v6224, %v6405
      %v6460 = vadd.f32 %v6225, %v6408
      %v6461 = vadd.f32 %v6226, %v6410
      %v6462 = vadd.f32 %v6227, %v6413
      %v6463 = vadd.f32 %v6228, %v6415
      %v6464 = vadd.f32 %v6229, %v6418
      %v6465 = vadd.f32 %v6230, %v6420
      %v6466 = vadd.f32 %v6231, %v6423
      %v6467 = vadd.f32 %v6232, %v6425
      %v6468 = vadd.f32 %v6233, %v6428
      %v6469 = vadd.f32 %v6234, %v6430
      %v6470 = vadd.f32 %v6235, %v6433
      %v6471 = vadd.f32 %v6236, %v6435
      %v6472 = vadd.f32 %v6237, %v6438
      %v6473 = vadd.f32 %v6238, %v6440
      %v6474 = vld [vmem:[%s6239 + $0x1] sm:$0xff]
      %v6475 = vld [vmem:[%s6239 + $0x9] sm:$0xff]
      %v6476 = vld [vmem:[%s6239 + $0x19] sm:$0xff]
      %v6477 = vld [vmem:[%s6239 + $0x21] sm:$0xff]
      %v6478 = vld [vmem:[%s6239 + $0x31] sm:$0xff]
      %v6479 = vld [vmem:[%s6239 + $0x39] sm:$0xff]
      %v6480 = vld [vmem:[%s6239 + $0x49] sm:$0xff]
      %v6481 = vld [vmem:[%s6239 + $0x51] sm:$0xff]
      %v6482 = vld [vmem:[%s6239 + $0x61] sm:$0xff]
      %v6483 = vld [vmem:[%s6239 + $0x69] sm:$0xff]
      %v6484 = vld [vmem:[%s6239 + $0x79] sm:$0xff]
      %v6485 = vld [vmem:[%s6239 + $0x81] sm:$0xff]
      %v6486 = vld [vmem:[%s6239 + $0x91] sm:$0xff]
      %v6487 = vld [vmem:[%s6239 + $0x99] sm:$0xff]
      %v6488 = vld [vmem:[%s6239 + $0xa9] sm:$0xff]
      %v6489 = vld [vmem:[%s6239 + $0xb1] sm:$0xff]
      %v6490 = vld [vmem:[%s6239 + $0xc1] sm:$0xff]
      %v6491 = vld [vmem:[%s6239 + $0xc9] sm:$0xff]
      %v6492 = vld [vmem:[%s6239 + $0xd9] sm:$0xff]
      %v6493 = vld [vmem:[%s6239 + $0xe1] sm:$0xff]
      %v6494 = vld [vmem:[%s6239 + $0xf1] sm:$0xff]
      %v6495 = vld [vmem:[%s6239 + $0xf9] sm:$0xff]
      %v6496 = vld [vmem:[%s6239 + $0x109] sm:$0xff]
      %v6497 = vld [vmem:[%s6239 + $0x111] sm:$0xff]
      %v6498 = vld [vmem:[%s6239 + $0x121] sm:$0xff]
      %v6499 = vld [vmem:[%s6239 + $0x129] sm:$0xff]
      %v6500 = vld [vmem:[%s6239 + $0x139] sm:$0xff]
      %v6501 = vld [vmem:[%s6239 + $0x141] sm:$0xff]
      %v6502 = vld [vmem:[%s6239 + $0x151] sm:$0xff]
      %v6503 = vld [vmem:[%s6239 + $0x159] sm:$0xff]
      %v6504 = vld [vmem:[%s6239 + $0x169] sm:$0xff]
      %v6505 = vld [vmem:[%s6239 + $0x171] sm:$0xff]
      %v6506 = vpack.c.bf16 %v6475, %v6474
      %v6507 = vpack.c.bf16 %v6477, %v6476
      %v6508 = vpack.c.bf16 %v6479, %v6478
      %v6509 = vpack.c.bf16 %v6481, %v6480
      %v6510 = vpack.c.bf16 %v6483, %v6482
      %v6511 = vpack.c.bf16 %v6485, %v6484
      %v6512 = vpack.c.bf16 %v6487, %v6486
      %v6513 = vpack.c.bf16 %v6489, %v6488
      %v6514 = vpack.c.bf16 %v6491, %v6490
      %v6515 = vpack.c.bf16 %v6493, %v6492
      %v6516 = vpack.c.bf16 %v6495, %v6494
      %v6517 = vpack.c.bf16 %v6497, %v6496
      %v6518 = vpack.c.bf16 %v6499, %v6498
      %v6519 = vpack.c.bf16 %v6501, %v6500
      %v6520 = vpack.c.bf16 %v6503, %v6502
      %v6521 = vpack.c.bf16 %v6505, %v6504
      %s6522 = scalar_lea.vmem %s3, 336
      %v6523 = vld [vmem:[%s6522] sm:$0xf]
      %v6524 = vld [vmem:[%s6522 + $0x4] sm:$0xf]
      %v6525 = vld [vmem:[%s6522 + $0x8] sm:$0xf]
      %v6526 = vld [vmem:[%s6522 + $0xc] sm:$0xf]
      %v6531 = vunpack.c.l.b16 %v6523
      %v6532 = vunpack.c.l.b16 %v6524
      %v6533 = vunpack.c.l.b16 %v6525
      %v6534 = vunpack.c.l.b16 %v6526
      %v6535 = vpack.c.b16 %v6532, %v6531
      %v6536 = vpack.c.b16 %v6534, %v6533
      %v6540 = vsel %vm1305, %v6506, 0
      %v6543 = vsel %vm1305, %v6507, 0
      %v6546 = vsel %vm1305, %v6508, 0
      %v6549 = vsel %vm1305, %v6509, 0
      %v6552 = vsel %vm1305, %v6510, 0
      %v6555 = vsel %vm1305, %v6511, 0
      %v6558 = vsel %vm1305, %v6512, 0
      %v6561 = vsel %vm1305, %v6513, 0
      %v6564 = vsel %vm1305, %v6514, 0
      %v6567 = vsel %vm1305, %v6515, 0
      %v6570 = vsel %vm1305, %v6516, 0
      %v6573 = vsel %vm1305, %v6517, 0
      %v6576 = vsel %vm1305, %v6518, 0
      %v6579 = vsel %vm1305, %v6519, 0
      %v6582 = vsel %vm1305, %v6520, 0
      %v6585 = vsel %vm1305, %v6521, 0
      %6587 = vmatpush.bf16.msra.mxu0 0
      %6588 = vmatpush.bf16.msra.mxu0 0
      %6589 = vmatpush.bf16.msra.mxu0 0
      %6590 = vmatpush.bf16.msra.mxu0 0
      %6591 = vmatpush.bf16.msra.mxu0 0
      %6592 = vmatpush.bf16.msra.mxu0 0
      %6593 = vmatpush.bf16.msra.mxu0 %v6536
      %6594 = vmatpush.bf16.msra.mxu0 %v6535
      %6595 = vmatmul.bf16.gmra.mxu0 %v6540
      %v6596 = vpop.f32.mrf.mxu0
      %v6597 = vadd.f32 0.0, %v6596
      %v6598 = vpop.f32.mrf.mxu0
      %v6599 = vadd.f32 0.0, %v6598
      %6600 = vmatmul.bf16.gmra.mxu0 %v6543
      %v6601 = vpop.f32.mrf.mxu0
      %v6602 = vadd.f32 0.0, %v6601
      %v6603 = vpop.f32.mrf.mxu0
      %v6604 = vadd.f32 0.0, %v6603
      %6605 = vmatmul.bf16.gmra.mxu0 %v6546
      %v6606 = vpop.f32.mrf.mxu0
      %v6607 = vadd.f32 0.0, %v6606
      %v6608 = vpop.f32.mrf.mxu0
      %v6609 = vadd.f32 0.0, %v6608
      %6610 = vmatmul.bf16.gmra.mxu0 %v6549
      %v6611 = vpop.f32.mrf.mxu0
      %v6612 = vadd.f32 0.0, %v6611
      %v6613 = vpop.f32.mrf.mxu0
      %v6614 = vadd.f32 0.0, %v6613
      %6615 = vmatmul.bf16.gmra.mxu0 %v6552
      %v6616 = vpop.f32.mrf.mxu0
      %v6617 = vadd.f32 0.0, %v6616
      %v6618 = vpop.f32.mrf.mxu0
      %v6619 = vadd.f32 0.0, %v6618
      %6620 = vmatmul.bf16.gmra.mxu0 %v6555
      %v6621 = vpop.f32.mrf.mxu0
      %v6622 = vadd.f32 0.0, %v6621
      %v6623 = vpop.f32.mrf.mxu0
      %v6624 = vadd.f32 0.0, %v6623
      %6625 = vmatmul.bf16.gmra.mxu0 %v6558
      %v6626 = vpop.f32.mrf.mxu0
      %v6627 = vadd.f32 0.0, %v6626
      %v6628 = vpop.f32.mrf.mxu0
      %v6629 = vadd.f32 0.0, %v6628
      %6630 = vmatmul.bf16.gmra.mxu0 %v6561
      %v6631 = vpop.f32.mrf.mxu0
      %v6632 = vadd.f32 0.0, %v6631
      %v6633 = vpop.f32.mrf.mxu0
      %v6634 = vadd.f32 0.0, %v6633
      %6635 = vmatmul.bf16.gmra.mxu0 %v6564
      %v6636 = vpop.f32.mrf.mxu0
      %v6637 = vadd.f32 0.0, %v6636
      %v6638 = vpop.f32.mrf.mxu0
      %v6639 = vadd.f32 0.0, %v6638
      %6640 = vmatmul.bf16.gmra.mxu0 %v6567
      %v6641 = vpop.f32.mrf.mxu0
      %v6642 = vadd.f32 0.0, %v6641
      %v6643 = vpop.f32.mrf.mxu0
      %v6644 = vadd.f32 0.0, %v6643
      %6645 = vmatmul.bf16.gmra.mxu0 %v6570
      %v6646 = vpop.f32.mrf.mxu0
      %v6647 = vadd.f32 0.0, %v6646
      %v6648 = vpop.f32.mrf.mxu0
      %v6649 = vadd.f32 0.0, %v6648
      %6650 = vmatmul.bf16.gmra.mxu0 %v6573
      %v6651 = vpop.f32.mrf.mxu0
      %v6652 = vadd.f32 0.0, %v6651
      %v6653 = vpop.f32.mrf.mxu0
      %v6654 = vadd.f32 0.0, %v6653
      %6655 = vmatmul.bf16.gmra.mxu0 %v6576
      %v6656 = vpop.f32.mrf.mxu0
      %v6657 = vadd.f32 0.0, %v6656
      %v6658 = vpop.f32.mrf.mxu0
      %v6659 = vadd.f32 0.0, %v6658
      %6660 = vmatmul.bf16.gmra.mxu0 %v6579
      %v6661 = vpop.f32.mrf.mxu0
      %v6662 = vadd.f32 0.0, %v6661
      %v6663 = vpop.f32.mrf.mxu0
      %v6664 = vadd.f32 0.0, %v6663
      %6665 = vmatmul.bf16.gmra.mxu0 %v6582
      %v6666 = vpop.f32.mrf.mxu0
      %v6667 = vadd.f32 0.0, %v6666
      %v6668 = vpop.f32.mrf.mxu0
      %v6669 = vadd.f32 0.0, %v6668
      %6670 = vmatmul.bf16.gmra.mxu0 %v6585
      %v6671 = vpop.f32.mrf.mxu0
      %v6672 = vadd.f32 0.0, %v6671
      %v6673 = vpop.f32.mrf.mxu0
      %v6674 = vadd.f32 0.0, %v6673
      %6675 = vdwg.mxu0
      %v6676 = vadd.f32 %v6442, %v6597
      %v6677 = vadd.f32 %v6443, %v6599
      %v6678 = vadd.f32 %v6444, %v6602
      %v6679 = vadd.f32 %v6445, %v6604
      %v6680 = vadd.f32 %v6446, %v6607
      %v6681 = vadd.f32 %v6447, %v6609
      %v6682 = vadd.f32 %v6448, %v6612
      %v6683 = vadd.f32 %v6449, %v6614
      %v6684 = vadd.f32 %v6450, %v6617
      %v6685 = vadd.f32 %v6451, %v6619
      %v6686 = vadd.f32 %v6452, %v6622
      %v6687 = vadd.f32 %v6453, %v6624
      %v6688 = vadd.f32 %v6454, %v6627
      %v6689 = vadd.f32 %v6455, %v6629
      %v6690 = vadd.f32 %v6456, %v6632
      %v6691 = vadd.f32 %v6457, %v6634
      %v6692 = vadd.f32 %v6458, %v6637
      %v6693 = vadd.f32 %v6459, %v6639
      %v6694 = vadd.f32 %v6460, %v6642
      %v6695 = vadd.f32 %v6461, %v6644
      %v6696 = vadd.f32 %v6462, %v6647
      %v6697 = vadd.f32 %v6463, %v6649
      %v6698 = vadd.f32 %v6464, %v6652
      %v6699 = vadd.f32 %v6465, %v6654
      %v6700 = vadd.f32 %v6466, %v6657
      %v6701 = vadd.f32 %v6467, %v6659
      %v6702 = vadd.f32 %v6468, %v6662
      %v6703 = vadd.f32 %v6469, %v6664
      %v6704 = vadd.f32 %v6470, %v6667
      %v6705 = vadd.f32 %v6471, %v6669
      %v6706 = vadd.f32 %v6472, %v6672
      %v6707 = vadd.f32 %v6473, %v6674
      %v6708 = vld [vmem:[%s6239 + $0x2] sm:$0xff]
      %v6709 = vld [vmem:[%s6239 + $0xa] sm:$0xff]
      %v6710 = vld [vmem:[%s6239 + $0x1a] sm:$0xff]
      %v6711 = vld [vmem:[%s6239 + $0x22] sm:$0xff]
      %v6712 = vld [vmem:[%s6239 + $0x32] sm:$0xff]
      %v6713 = vld [vmem:[%s6239 + $0x3a] sm:$0xff]
      %v6714 = vld [vmem:[%s6239 + $0x4a] sm:$0xff]
      %v6715 = vld [vmem:[%s6239 + $0x52] sm:$0xff]
      %v6716 = vld [vmem:[%s6239 + $0x62] sm:$0xff]
      %v6717 = vld [vmem:[%s6239 + $0x6a] sm:$0xff]
      %v6718 = vld [vmem:[%s6239 + $0x7a] sm:$0xff]
      %v6719 = vld [vmem:[%s6239 + $0x82] sm:$0xff]
      %v6720 = vld [vmem:[%s6239 + $0x92] sm:$0xff]
      %v6721 = vld [vmem:[%s6239 + $0x9a] sm:$0xff]
      %v6722 = vld [vmem:[%s6239 + $0xaa] sm:$0xff]
      %v6723 = vld [vmem:[%s6239 + $0xb2] sm:$0xff]
      %v6724 = vld [vmem:[%s6239 + $0xc2] sm:$0xff]
      %v6725 = vld [vmem:[%s6239 + $0xca] sm:$0xff]
      %v6726 = vld [vmem:[%s6239 + $0xda] sm:$0xff]
      %v6727 = vld [vmem:[%s6239 + $0xe2] sm:$0xff]
      %v6728 = vld [vmem:[%s6239 + $0xf2] sm:$0xff]
      %v6729 = vld [vmem:[%s6239 + $0xfa] sm:$0xff]
      %v6730 = vld [vmem:[%s6239 + $0x10a] sm:$0xff]
      %v6731 = vld [vmem:[%s6239 + $0x112] sm:$0xff]
      %v6732 = vld [vmem:[%s6239 + $0x122] sm:$0xff]
      %v6733 = vld [vmem:[%s6239 + $0x12a] sm:$0xff]
      %v6734 = vld [vmem:[%s6239 + $0x13a] sm:$0xff]
      %v6735 = vld [vmem:[%s6239 + $0x142] sm:$0xff]
      %v6736 = vld [vmem:[%s6239 + $0x152] sm:$0xff]
      %v6737 = vld [vmem:[%s6239 + $0x15a] sm:$0xff]
      %v6738 = vld [vmem:[%s6239 + $0x16a] sm:$0xff]
      %v6739 = vld [vmem:[%s6239 + $0x172] sm:$0xff]
      %v6740 = vpack.c.bf16 %v6709, %v6708
      %v6741 = vpack.c.bf16 %v6711, %v6710
      %v6742 = vpack.c.bf16 %v6713, %v6712
      %v6743 = vpack.c.bf16 %v6715, %v6714
      %v6744 = vpack.c.bf16 %v6717, %v6716
      %v6745 = vpack.c.bf16 %v6719, %v6718
      %v6746 = vpack.c.bf16 %v6721, %v6720
      %v6747 = vpack.c.bf16 %v6723, %v6722
      %v6748 = vpack.c.bf16 %v6725, %v6724
      %v6749 = vpack.c.bf16 %v6727, %v6726
      %v6750 = vpack.c.bf16 %v6729, %v6728
      %v6751 = vpack.c.bf16 %v6731, %v6730
      %v6752 = vpack.c.bf16 %v6733, %v6732
      %v6753 = vpack.c.bf16 %v6735, %v6734
      %v6754 = vpack.c.bf16 %v6737, %v6736
      %v6755 = vpack.c.bf16 %v6739, %v6738
      %s6756 = scalar_lea.vmem %s3, 352
      %v6757 = vld [vmem:[%s6756] sm:$0xf]
      %v6758 = vld [vmem:[%s6756 + $0x4] sm:$0xf]
      %v6759 = vld [vmem:[%s6756 + $0x8] sm:$0xf]
      %v6760 = vld [vmem:[%s6756 + $0xc] sm:$0xf]
      %v6765 = vunpack.c.l.b16 %v6757
      %v6766 = vunpack.c.l.b16 %v6758
      %v6767 = vunpack.c.l.b16 %v6759
      %v6768 = vunpack.c.l.b16 %v6760
      %v6769 = vpack.c.b16 %v6766, %v6765
      %v6770 = vpack.c.b16 %v6768, %v6767
      %v6774 = vsel %vm1305, %v6740, 0
      %v6777 = vsel %vm1305, %v6741, 0
      %v6780 = vsel %vm1305, %v6742, 0
      %v6783 = vsel %vm1305, %v6743, 0
      %v6786 = vsel %vm1305, %v6744, 0
      %v6789 = vsel %vm1305, %v6745, 0
      %v6792 = vsel %vm1305, %v6746, 0
      %v6795 = vsel %vm1305, %v6747, 0
      %v6798 = vsel %vm1305, %v6748, 0
      %v6801 = vsel %vm1305, %v6749, 0
      %v6804 = vsel %vm1305, %v6750, 0
      %v6807 = vsel %vm1305, %v6751, 0
      %v6810 = vsel %vm1305, %v6752, 0
      %v6813 = vsel %vm1305, %v6753, 0
      %v6816 = vsel %vm1305, %v6754, 0
      %v6819 = vsel %vm1305, %v6755, 0
      %6821 = vmatpush.bf16.msra.mxu0 0
      %6822 = vmatpush.bf16.msra.mxu0 0
      %6823 = vmatpush.bf16.msra.mxu0 0
      %6824 = vmatpush.bf16.msra.mxu0 0
      %6825 = vmatpush.bf16.msra.mxu0 0
      %6826 = vmatpush.bf16.msra.mxu0 0
      %6827 = vmatpush.bf16.msra.mxu0 %v6770
      %6828 = vmatpush.bf16.msra.mxu0 %v6769
      %6829 = vmatmul.bf16.gmra.mxu0 %v6774
      %v6830 = vpop.f32.mrf.mxu0
      %v6831 = vadd.f32 0.0, %v6830
      %v6832 = vpop.f32.mrf.mxu0
      %v6833 = vadd.f32 0.0, %v6832
      %6834 = vmatmul.bf16.gmra.mxu0 %v6777
      %v6835 = vpop.f32.mrf.mxu0
      %v6836 = vadd.f32 0.0, %v6835
      %v6837 = vpop.f32.mrf.mxu0
      %v6838 = vadd.f32 0.0, %v6837
      %6839 = vmatmul.bf16.gmra.mxu0 %v6780
      %v6840 = vpop.f32.mrf.mxu0
      %v6841 = vadd.f32 0.0, %v6840
      %v6842 = vpop.f32.mrf.mxu0
      %v6843 = vadd.f32 0.0, %v6842
      %6844 = vmatmul.bf16.gmra.mxu0 %v6783
      %v6845 = vpop.f32.mrf.mxu0
      %v6846 = vadd.f32 0.0, %v6845
      %v6847 = vpop.f32.mrf.mxu0
      %v6848 = vadd.f32 0.0, %v6847
      %6849 = vmatmul.bf16.gmra.mxu0 %v6786
      %v6850 = vpop.f32.mrf.mxu0
      %v6851 = vadd.f32 0.0, %v6850
      %v6852 = vpop.f32.mrf.mxu0
      %v6853 = vadd.f32 0.0, %v6852
      %6854 = vmatmul.bf16.gmra.mxu0 %v6789
      %v6855 = vpop.f32.mrf.mxu0
      %v6856 = vadd.f32 0.0, %v6855
      %v6857 = vpop.f32.mrf.mxu0
      %v6858 = vadd.f32 0.0, %v6857
      %6859 = vmatmul.bf16.gmra.mxu0 %v6792
      %v6860 = vpop.f32.mrf.mxu0
      %v6861 = vadd.f32 0.0, %v6860
      %v6862 = vpop.f32.mrf.mxu0
      %v6863 = vadd.f32 0.0, %v6862
      %6864 = vmatmul.bf16.gmra.mxu0 %v6795
      %v6865 = vpop.f32.mrf.mxu0
      %v6866 = vadd.f32 0.0, %v6865
      %v6867 = vpop.f32.mrf.mxu0
      %v6868 = vadd.f32 0.0, %v6867
      %6869 = vmatmul.bf16.gmra.mxu0 %v6798
      %v6870 = vpop.f32.mrf.mxu0
      %v6871 = vadd.f32 0.0, %v6870
      %v6872 = vpop.f32.mrf.mxu0
      %v6873 = vadd.f32 0.0, %v6872
      %6874 = vmatmul.bf16.gmra.mxu0 %v6801
      %v6875 = vpop.f32.mrf.mxu0
      %v6876 = vadd.f32 0.0, %v6875
      %v6877 = vpop.f32.mrf.mxu0
      %v6878 = vadd.f32 0.0, %v6877
      %6879 = vmatmul.bf16.gmra.mxu0 %v6804
      %v6880 = vpop.f32.mrf.mxu0
      %v6881 = vadd.f32 0.0, %v6880
      %v6882 = vpop.f32.mrf.mxu0
      %v6883 = vadd.f32 0.0, %v6882
      %6884 = vmatmul.bf16.gmra.mxu0 %v6807
      %v6885 = vpop.f32.mrf.mxu0
      %v6886 = vadd.f32 0.0, %v6885
      %v6887 = vpop.f32.mrf.mxu0
      %v6888 = vadd.f32 0.0, %v6887
      %6889 = vmatmul.bf16.gmra.mxu0 %v6810
      %v6890 = vpop.f32.mrf.mxu0
      %v6891 = vadd.f32 0.0, %v6890
      %v6892 = vpop.f32.mrf.mxu0
      %v6893 = vadd.f32 0.0, %v6892
      %6894 = vmatmul.bf16.gmra.mxu0 %v6813
      %v6895 = vpop.f32.mrf.mxu0
      %v6896 = vadd.f32 0.0, %v6895
      %v6897 = vpop.f32.mrf.mxu0
      %v6898 = vadd.f32 0.0, %v6897
      %6899 = vmatmul.bf16.gmra.mxu0 %v6816
      %v6900 = vpop.f32.mrf.mxu0
      %v6901 = vadd.f32 0.0, %v6900
      %v6902 = vpop.f32.mrf.mxu0
      %v6903 = vadd.f32 0.0, %v6902
      %6904 = vmatmul.bf16.gmra.mxu0 %v6819
      %v6905 = vpop.f32.mrf.mxu0
      %v6906 = vadd.f32 0.0, %v6905
      %v6907 = vpop.f32.mrf.mxu0
      %v6908 = vadd.f32 0.0, %v6907
      %6909 = vdwg.mxu0
      %v6910 = vadd.f32 %v6676, %v6831
      %v6911 = vadd.f32 %v6677, %v6833
      %v6912 = vadd.f32 %v6678, %v6836
      %v6913 = vadd.f32 %v6679, %v6838
      %v6914 = vadd.f32 %v6680, %v6841
      %v6915 = vadd.f32 %v6681, %v6843
      %v6916 = vadd.f32 %v6682, %v6846
      %v6917 = vadd.f32 %v6683, %v6848
      %v6918 = vadd.f32 %v6684, %v6851
      %v6919 = vadd.f32 %v6685, %v6853
      %v6920 = vadd.f32 %v6686, %v6856
      %v6921 = vadd.f32 %v6687, %v6858
      %v6922 = vadd.f32 %v6688, %v6861
      %v6923 = vadd.f32 %v6689, %v6863
      %v6924 = vadd.f32 %v6690, %v6866
      %v6925 = vadd.f32 %v6691, %v6868
      %v6926 = vadd.f32 %v6692, %v6871
      %v6927 = vadd.f32 %v6693, %v6873
      %v6928 = vadd.f32 %v6694, %v6876
      %v6929 = vadd.f32 %v6695, %v6878
      %v6930 = vadd.f32 %v6696, %v6881
      %v6931 = vadd.f32 %v6697, %v6883
      %v6932 = vadd.f32 %v6698, %v6886
      %v6933 = vadd.f32 %v6699, %v6888
      %v6934 = vadd.f32 %v6700, %v6891
      %v6935 = vadd.f32 %v6701, %v6893
      %v6936 = vadd.f32 %v6702, %v6896
      %v6937 = vadd.f32 %v6703, %v6898
      %v6938 = vadd.f32 %v6704, %v6901
      %v6939 = vadd.f32 %v6705, %v6903
      %v6940 = vadd.f32 %v6706, %v6906
      %v6941 = vadd.f32 %v6707, %v6908
      %v6942 = vld [vmem:[%s6239 + $0x3] sm:$0xff]
      %v6943 = vld [vmem:[%s6239 + $0xb] sm:$0xff]
      %v6944 = vld [vmem:[%s6239 + $0x1b] sm:$0xff]
      %v6945 = vld [vmem:[%s6239 + $0x23] sm:$0xff]
      %v6946 = vld [vmem:[%s6239 + $0x33] sm:$0xff]
      %v6947 = vld [vmem:[%s6239 + $0x3b] sm:$0xff]
      %v6948 = vld [vmem:[%s6239 + $0x4b] sm:$0xff]
      %v6949 = vld [vmem:[%s6239 + $0x53] sm:$0xff]
      %v6950 = vld [vmem:[%s6239 + $0x63] sm:$0xff]
      %v6951 = vld [vmem:[%s6239 + $0x6b] sm:$0xff]
      %v6952 = vld [vmem:[%s6239 + $0x7b] sm:$0xff]
      %v6953 = vld [vmem:[%s6239 + $0x83] sm:$0xff]
      %v6954 = vld [vmem:[%s6239 + $0x93] sm:$0xff]
      %v6955 = vld [vmem:[%s6239 + $0x9b] sm:$0xff]
      %v6956 = vld [vmem:[%s6239 + $0xab] sm:$0xff]
      %v6957 = vld [vmem:[%s6239 + $0xb3] sm:$0xff]
      %v6958 = vld [vmem:[%s6239 + $0xc3] sm:$0xff]
      %v6959 = vld [vmem:[%s6239 + $0xcb] sm:$0xff]
      %v6960 = vld [vmem:[%s6239 + $0xdb] sm:$0xff]
      %v6961 = vld [vmem:[%s6239 + $0xe3] sm:$0xff]
      %v6962 = vld [vmem:[%s6239 + $0xf3] sm:$0xff]
      %v6963 = vld [vmem:[%s6239 + $0xfb] sm:$0xff]
      %v6964 = vld [vmem:[%s6239 + $0x10b] sm:$0xff]
      %v6965 = vld [vmem:[%s6239 + $0x113] sm:$0xff]
      %v6966 = vld [vmem:[%s6239 + $0x123] sm:$0xff]
      %v6967 = vld [vmem:[%s6239 + $0x12b] sm:$0xff]
      %v6968 = vld [vmem:[%s6239 + $0x13b] sm:$0xff]
      %v6969 = vld [vmem:[%s6239 + $0x143] sm:$0xff]
      %v6970 = vld [vmem:[%s6239 + $0x153] sm:$0xff]
      %v6971 = vld [vmem:[%s6239 + $0x15b] sm:$0xff]
      %v6972 = vld [vmem:[%s6239 + $0x16b] sm:$0xff]
      %v6973 = vld [vmem:[%s6239 + $0x173] sm:$0xff]
      %v6974 = vpack.c.bf16 %v6943, %v6942
      %v6975 = vpack.c.bf16 %v6945, %v6944
      %v6976 = vpack.c.bf16 %v6947, %v6946
      %v6977 = vpack.c.bf16 %v6949, %v6948
      %v6978 = vpack.c.bf16 %v6951, %v6950
      %v6979 = vpack.c.bf16 %v6953, %v6952
      %v6980 = vpack.c.bf16 %v6955, %v6954
      %v6981 = vpack.c.bf16 %v6957, %v6956
      %v6982 = vpack.c.bf16 %v6959, %v6958
      %v6983 = vpack.c.bf16 %v6961, %v6960
      %v6984 = vpack.c.bf16 %v6963, %v6962
      %v6985 = vpack.c.bf16 %v6965, %v6964
      %v6986 = vpack.c.bf16 %v6967, %v6966
      %v6987 = vpack.c.bf16 %v6969, %v6968
      %v6988 = vpack.c.bf16 %v6971, %v6970
      %v6989 = vpack.c.bf16 %v6973, %v6972
      %s6990 = scalar_lea.vmem %s3, 368
      %v6991 = vld [vmem:[%s6990] sm:$0xf]
      %v6992 = vld [vmem:[%s6990 + $0x4] sm:$0xf]
      %v6993 = vld [vmem:[%s6990 + $0x8] sm:$0xf]
      %v6994 = vld [vmem:[%s6990 + $0xc] sm:$0xf]
      %v6999 = vunpack.c.l.b16 %v6991
      %v7000 = vunpack.c.l.b16 %v6992
      %v7001 = vunpack.c.l.b16 %v6993
      %v7002 = vunpack.c.l.b16 %v6994
      %v7003 = vpack.c.b16 %v7000, %v6999
      %v7004 = vpack.c.b16 %v7002, %v7001
      %v7008 = vsel %vm1305, %v6974, 0
      %v7011 = vsel %vm1305, %v6975, 0
      %v7014 = vsel %vm1305, %v6976, 0
      %v7017 = vsel %vm1305, %v6977, 0
      %v7020 = vsel %vm1305, %v6978, 0
      %v7023 = vsel %vm1305, %v6979, 0
      %v7026 = vsel %vm1305, %v6980, 0
      %v7029 = vsel %vm1305, %v6981, 0
      %v7032 = vsel %vm1305, %v6982, 0
      %v7035 = vsel %vm1305, %v6983, 0
      %v7038 = vsel %vm1305, %v6984, 0
      %v7041 = vsel %vm1305, %v6985, 0
      %v7044 = vsel %vm1305, %v6986, 0
      %v7047 = vsel %vm1305, %v6987, 0
      %v7050 = vsel %vm1305, %v6988, 0
      %v7053 = vsel %vm1305, %v6989, 0
      %7055 = vmatpush.bf16.msra.mxu0 0
      %7056 = vmatpush.bf16.msra.mxu0 0
      %7057 = vmatpush.bf16.msra.mxu0 0
      %7058 = vmatpush.bf16.msra.mxu0 0
      %7059 = vmatpush.bf16.msra.mxu0 0
      %7060 = vmatpush.bf16.msra.mxu0 0
      %7061 = vmatpush.bf16.msra.mxu0 %v7004
      %7062 = vmatpush.bf16.msra.mxu0 %v7003
      %7063 = vmatmul.bf16.gmra.mxu0 %v7008
      %v7064 = vpop.f32.mrf.mxu0
      %v7065 = vadd.f32 0.0, %v7064
      %v7066 = vpop.f32.mrf.mxu0
      %v7067 = vadd.f32 0.0, %v7066
      %7068 = vmatmul.bf16.gmra.mxu0 %v7011
      %v7069 = vpop.f32.mrf.mxu0
      %v7070 = vadd.f32 0.0, %v7069
      %v7071 = vpop.f32.mrf.mxu0
      %v7072 = vadd.f32 0.0, %v7071
      %7073 = vmatmul.bf16.gmra.mxu0 %v7014
      %v7074 = vpop.f32.mrf.mxu0
      %v7075 = vadd.f32 0.0, %v7074
      %v7076 = vpop.f32.mrf.mxu0
      %v7077 = vadd.f32 0.0, %v7076
      %7078 = vmatmul.bf16.gmra.mxu0 %v7017
      %v7079 = vpop.f32.mrf.mxu0
      %v7080 = vadd.f32 0.0, %v7079
      %v7081 = vpop.f32.mrf.mxu0
      %v7082 = vadd.f32 0.0, %v7081
      %7083 = vmatmul.bf16.gmra.mxu0 %v7020
      %v7084 = vpop.f32.mrf.mxu0
      %v7085 = vadd.f32 0.0, %v7084
      %v7086 = vpop.f32.mrf.mxu0
      %v7087 = vadd.f32 0.0, %v7086
      %7088 = vmatmul.bf16.gmra.mxu0 %v7023
      %v7089 = vpop.f32.mrf.mxu0
      %v7090 = vadd.f32 0.0, %v7089
      %v7091 = vpop.f32.mrf.mxu0
      %v7092 = vadd.f32 0.0, %v7091
      %7093 = vmatmul.bf16.gmra.mxu0 %v7026
      %v7094 = vpop.f32.mrf.mxu0
      %v7095 = vadd.f32 0.0, %v7094
      %v7096 = vpop.f32.mrf.mxu0
      %v7097 = vadd.f32 0.0, %v7096
      %7098 = vmatmul.bf16.gmra.mxu0 %v7029
      %v7099 = vpop.f32.mrf.mxu0
      %v7100 = vadd.f32 0.0, %v7099
      %v7101 = vpop.f32.mrf.mxu0
      %v7102 = vadd.f32 0.0, %v7101
      %7103 = vmatmul.bf16.gmra.mxu0 %v7032
      %v7104 = vpop.f32.mrf.mxu0
      %v7105 = vadd.f32 0.0, %v7104
      %v7106 = vpop.f32.mrf.mxu0
      %v7107 = vadd.f32 0.0, %v7106
      %7108 = vmatmul.bf16.gmra.mxu0 %v7035
      %v7109 = vpop.f32.mrf.mxu0
      %v7110 = vadd.f32 0.0, %v7109
      %v7111 = vpop.f32.mrf.mxu0
      %v7112 = vadd.f32 0.0, %v7111
      %7113 = vmatmul.bf16.gmra.mxu0 %v7038
      %v7114 = vpop.f32.mrf.mxu0
      %v7115 = vadd.f32 0.0, %v7114
      %v7116 = vpop.f32.mrf.mxu0
      %v7117 = vadd.f32 0.0, %v7116
      %7118 = vmatmul.bf16.gmra.mxu0 %v7041
      %v7119 = vpop.f32.mrf.mxu0
      %v7120 = vadd.f32 0.0, %v7119
      %v7121 = vpop.f32.mrf.mxu0
      %v7122 = vadd.f32 0.0, %v7121
      %7123 = vmatmul.bf16.gmra.mxu0 %v7044
      %v7124 = vpop.f32.mrf.mxu0
      %v7125 = vadd.f32 0.0, %v7124
      %v7126 = vpop.f32.mrf.mxu0
      %v7127 = vadd.f32 0.0, %v7126
      %7128 = vmatmul.bf16.gmra.mxu0 %v7047
      %v7129 = vpop.f32.mrf.mxu0
      %v7130 = vadd.f32 0.0, %v7129
      %v7131 = vpop.f32.mrf.mxu0
      %v7132 = vadd.f32 0.0, %v7131
      %7133 = vmatmul.bf16.gmra.mxu0 %v7050
      %v7134 = vpop.f32.mrf.mxu0
      %v7135 = vadd.f32 0.0, %v7134
      %v7136 = vpop.f32.mrf.mxu0
      %v7137 = vadd.f32 0.0, %v7136
      %7138 = vmatmul.bf16.gmra.mxu0 %v7053
      %v7139 = vpop.f32.mrf.mxu0
      %v7140 = vadd.f32 0.0, %v7139
      %v7141 = vpop.f32.mrf.mxu0
      %v7142 = vadd.f32 0.0, %v7141
      %7143 = vdwg.mxu0
      %v7144 = vadd.f32 %v6910, %v7065
      %v7145 = vadd.f32 %v6911, %v7067
      %v7146 = vadd.f32 %v6912, %v7070
      %v7147 = vadd.f32 %v6913, %v7072
      %v7148 = vadd.f32 %v6914, %v7075
      %v7149 = vadd.f32 %v6915, %v7077
      %v7150 = vadd.f32 %v6916, %v7080
      %v7151 = vadd.f32 %v6917, %v7082
      %v7152 = vadd.f32 %v6918, %v7085
      %v7153 = vadd.f32 %v6919, %v7087
      %v7154 = vadd.f32 %v6920, %v7090
      %v7155 = vadd.f32 %v6921, %v7092
      %v7156 = vadd.f32 %v6922, %v7095
      %v7157 = vadd.f32 %v6923, %v7097
      %v7158 = vadd.f32 %v6924, %v7100
      %v7159 = vadd.f32 %v6925, %v7102
      %v7160 = vadd.f32 %v6926, %v7105
      %v7161 = vadd.f32 %v6927, %v7107
      %v7162 = vadd.f32 %v6928, %v7110
      %v7163 = vadd.f32 %v6929, %v7112
      %v7164 = vadd.f32 %v6930, %v7115
      %v7165 = vadd.f32 %v6931, %v7117
      %v7166 = vadd.f32 %v6932, %v7120
      %v7167 = vadd.f32 %v6933, %v7122
      %v7168 = vadd.f32 %v6934, %v7125
      %v7169 = vadd.f32 %v6935, %v7127
      %v7170 = vadd.f32 %v6936, %v7130
      %v7171 = vadd.f32 %v6937, %v7132
      %v7172 = vadd.f32 %v6938, %v7135
      %v7173 = vadd.f32 %v6939, %v7137
      %v7174 = vadd.f32 %v6940, %v7140
      %v7175 = vadd.f32 %v6941, %v7142
      %v7176 = vld [vmem:[%s6239 + $0x4] sm:$0xff]
      %v7177 = vld [vmem:[%s6239 + $0xc] sm:$0xff]
      %v7178 = vld [vmem:[%s6239 + $0x1c] sm:$0xff]
      %v7179 = vld [vmem:[%s6239 + $0x24] sm:$0xff]
      %v7180 = vld [vmem:[%s6239 + $0x34] sm:$0xff]
      %v7181 = vld [vmem:[%s6239 + $0x3c] sm:$0xff]
      %v7182 = vld [vmem:[%s6239 + $0x4c] sm:$0xff]
      %v7183 = vld [vmem:[%s6239 + $0x54] sm:$0xff]
      %v7184 = vld [vmem:[%s6239 + $0x64] sm:$0xff]
      %v7185 = vld [vmem:[%s6239 + $0x6c] sm:$0xff]
      %v7186 = vld [vmem:[%s6239 + $0x7c] sm:$0xff]
      %v7187 = vld [vmem:[%s6239 + $0x84] sm:$0xff]
      %v7188 = vld [vmem:[%s6239 + $0x94] sm:$0xff]
      %v7189 = vld [vmem:[%s6239 + $0x9c] sm:$0xff]
      %v7190 = vld [vmem:[%s6239 + $0xac] sm:$0xff]
      %v7191 = vld [vmem:[%s6239 + $0xb4] sm:$0xff]
      %v7192 = vld [vmem:[%s6239 + $0xc4] sm:$0xff]
      %v7193 = vld [vmem:[%s6239 + $0xcc] sm:$0xff]
      %v7194 = vld [vmem:[%s6239 + $0xdc] sm:$0xff]
      %v7195 = vld [vmem:[%s6239 + $0xe4] sm:$0xff]
      %v7196 = vld [vmem:[%s6239 + $0xf4] sm:$0xff]
      %v7197 = vld [vmem:[%s6239 + $0xfc] sm:$0xff]
      %v7198 = vld [vmem:[%s6239 + $0x10c] sm:$0xff]
      %v7199 = vld [vmem:[%s6239 + $0x114] sm:$0xff]
      %v7200 = vld [vmem:[%s6239 + $0x124] sm:$0xff]
      %v7201 = vld [vmem:[%s6239 + $0x12c] sm:$0xff]
      %v7202 = vld [vmem:[%s6239 + $0x13c] sm:$0xff]
      %v7203 = vld [vmem:[%s6239 + $0x144] sm:$0xff]
      %v7204 = vld [vmem:[%s6239 + $0x154] sm:$0xff]
      %v7205 = vld [vmem:[%s6239 + $0x15c] sm:$0xff]
      %v7206 = vld [vmem:[%s6239 + $0x16c] sm:$0xff]
      %v7207 = vld [vmem:[%s6239 + $0x174] sm:$0xff]
      %v7208 = vpack.c.bf16 %v7177, %v7176
      %v7209 = vpack.c.bf16 %v7179, %v7178
      %v7210 = vpack.c.bf16 %v7181, %v7180
      %v7211 = vpack.c.bf16 %v7183, %v7182
      %v7212 = vpack.c.bf16 %v7185, %v7184
      %v7213 = vpack.c.bf16 %v7187, %v7186
      %v7214 = vpack.c.bf16 %v7189, %v7188
      %v7215 = vpack.c.bf16 %v7191, %v7190
      %v7216 = vpack.c.bf16 %v7193, %v7192
      %v7217 = vpack.c.bf16 %v7195, %v7194
      %v7218 = vpack.c.bf16 %v7197, %v7196
      %v7219 = vpack.c.bf16 %v7199, %v7198
      %v7220 = vpack.c.bf16 %v7201, %v7200
      %v7221 = vpack.c.bf16 %v7203, %v7202
      %v7222 = vpack.c.bf16 %v7205, %v7204
      %v7223 = vpack.c.bf16 %v7207, %v7206
      %s7224 = scalar_lea.vmem %s3, 384
      %v7225 = vld [vmem:[%s7224] sm:$0xf]
      %v7226 = vld [vmem:[%s7224 + $0x4] sm:$0xf]
      %v7227 = vld [vmem:[%s7224 + $0x8] sm:$0xf]
      %v7228 = vld [vmem:[%s7224 + $0xc] sm:$0xf]
      %v7233 = vunpack.c.l.b16 %v7225
      %v7234 = vunpack.c.l.b16 %v7226
      %v7235 = vunpack.c.l.b16 %v7227
      %v7236 = vunpack.c.l.b16 %v7228
      %v7237 = vpack.c.b16 %v7234, %v7233
      %v7238 = vpack.c.b16 %v7236, %v7235
      %v7242 = vsel %vm1305, %v7208, 0
      %v7245 = vsel %vm1305, %v7209, 0
      %v7248 = vsel %vm1305, %v7210, 0
      %v7251 = vsel %vm1305, %v7211, 0
      %v7254 = vsel %vm1305, %v7212, 0
      %v7257 = vsel %vm1305, %v7213, 0
      %v7260 = vsel %vm1305, %v7214, 0
      %v7263 = vsel %vm1305, %v7215, 0
      %v7266 = vsel %vm1305, %v7216, 0
      %v7269 = vsel %vm1305, %v7217, 0
      %v7272 = vsel %vm1305, %v7218, 0
      %v7275 = vsel %vm1305, %v7219, 0
      %v7278 = vsel %vm1305, %v7220, 0
      %v7281 = vsel %vm1305, %v7221, 0
      %v7284 = vsel %vm1305, %v7222, 0
      %v7287 = vsel %vm1305, %v7223, 0
      %7289 = vmatpush.bf16.msra.mxu0 0
      %7290 = vmatpush.bf16.msra.mxu0 0
      %7291 = vmatpush.bf16.msra.mxu0 0
      %7292 = vmatpush.bf16.msra.mxu0 0
      %7293 = vmatpush.bf16.msra.mxu0 0
      %7294 = vmatpush.bf16.msra.mxu0 0
      %7295 = vmatpush.bf16.msra.mxu0 %v7238
      %7296 = vmatpush.bf16.msra.mxu0 %v7237
      %7297 = vmatmul.bf16.gmra.mxu0 %v7242
      %v7298 = vpop.f32.mrf.mxu0
      %v7299 = vadd.f32 0.0, %v7298
      %v7300 = vpop.f32.mrf.mxu0
      %v7301 = vadd.f32 0.0, %v7300
      %7302 = vmatmul.bf16.gmra.mxu0 %v7245
      %v7303 = vpop.f32.mrf.mxu0
      %v7304 = vadd.f32 0.0, %v7303
      %v7305 = vpop.f32.mrf.mxu0
      %v7306 = vadd.f32 0.0, %v7305
      %7307 = vmatmul.bf16.gmra.mxu0 %v7248
      %v7308 = vpop.f32.mrf.mxu0
      %v7309 = vadd.f32 0.0, %v7308
      %v7310 = vpop.f32.mrf.mxu0
      %v7311 = vadd.f32 0.0, %v7310
      %7312 = vmatmul.bf16.gmra.mxu0 %v7251
      %v7313 = vpop.f32.mrf.mxu0
      %v7314 = vadd.f32 0.0, %v7313
      %v7315 = vpop.f32.mrf.mxu0
      %v7316 = vadd.f32 0.0, %v7315
      %7317 = vmatmul.bf16.gmra.mxu0 %v7254
      %v7318 = vpop.f32.mrf.mxu0
      %v7319 = vadd.f32 0.0, %v7318
      %v7320 = vpop.f32.mrf.mxu0
      %v7321 = vadd.f32 0.0, %v7320
      %7322 = vmatmul.bf16.gmra.mxu0 %v7257
      %v7323 = vpop.f32.mrf.mxu0
      %v7324 = vadd.f32 0.0, %v7323
      %v7325 = vpop.f32.mrf.mxu0
      %v7326 = vadd.f32 0.0, %v7325
      %7327 = vmatmul.bf16.gmra.mxu0 %v7260
      %v7328 = vpop.f32.mrf.mxu0
      %v7329 = vadd.f32 0.0, %v7328
      %v7330 = vpop.f32.mrf.mxu0
      %v7331 = vadd.f32 0.0, %v7330
      %7332 = vmatmul.bf16.gmra.mxu0 %v7263
      %v7333 = vpop.f32.mrf.mxu0
      %v7334 = vadd.f32 0.0, %v7333
      %v7335 = vpop.f32.mrf.mxu0
      %v7336 = vadd.f32 0.0, %v7335
      %7337 = vmatmul.bf16.gmra.mxu0 %v7266
      %v7338 = vpop.f32.mrf.mxu0
      %v7339 = vadd.f32 0.0, %v7338
      %v7340 = vpop.f32.mrf.mxu0
      %v7341 = vadd.f32 0.0, %v7340
      %7342 = vmatmul.bf16.gmra.mxu0 %v7269
      %v7343 = vpop.f32.mrf.mxu0
      %v7344 = vadd.f32 0.0, %v7343
      %v7345 = vpop.f32.mrf.mxu0
      %v7346 = vadd.f32 0.0, %v7345
      %7347 = vmatmul.bf16.gmra.mxu0 %v7272
      %v7348 = vpop.f32.mrf.mxu0
      %v7349 = vadd.f32 0.0, %v7348
      %v7350 = vpop.f32.mrf.mxu0
      %v7351 = vadd.f32 0.0, %v7350
      %7352 = vmatmul.bf16.gmra.mxu0 %v7275
      %v7353 = vpop.f32.mrf.mxu0
      %v7354 = vadd.f32 0.0, %v7353
      %v7355 = vpop.f32.mrf.mxu0
      %v7356 = vadd.f32 0.0, %v7355
      %7357 = vmatmul.bf16.gmra.mxu0 %v7278
      %v7358 = vpop.f32.mrf.mxu0
      %v7359 = vadd.f32 0.0, %v7358
      %v7360 = vpop.f32.mrf.mxu0
      %v7361 = vadd.f32 0.0, %v7360
      %7362 = vmatmul.bf16.gmra.mxu0 %v7281
      %v7363 = vpop.f32.mrf.mxu0
      %v7364 = vadd.f32 0.0, %v7363
      %v7365 = vpop.f32.mrf.mxu0
      %v7366 = vadd.f32 0.0, %v7365
      %7367 = vmatmul.bf16.gmra.mxu0 %v7284
      %v7368 = vpop.f32.mrf.mxu0
      %v7369 = vadd.f32 0.0, %v7368
      %v7370 = vpop.f32.mrf.mxu0
      %v7371 = vadd.f32 0.0, %v7370
      %7372 = vmatmul.bf16.gmra.mxu0 %v7287
      %v7373 = vpop.f32.mrf.mxu0
      %v7374 = vadd.f32 0.0, %v7373
      %v7375 = vpop.f32.mrf.mxu0
      %v7376 = vadd.f32 0.0, %v7375
      %7377 = vdwg.mxu0
      %v7378 = vadd.f32 %v7144, %v7299
      %v7379 = vadd.f32 %v7145, %v7301
      %v7380 = vadd.f32 %v7146, %v7304
      %v7381 = vadd.f32 %v7147, %v7306
      %v7382 = vadd.f32 %v7148, %v7309
      %v7383 = vadd.f32 %v7149, %v7311
      %v7384 = vadd.f32 %v7150, %v7314
      %v7385 = vadd.f32 %v7151, %v7316
      %v7386 = vadd.f32 %v7152, %v7319
      %v7387 = vadd.f32 %v7153, %v7321
      %v7388 = vadd.f32 %v7154, %v7324
      %v7389 = vadd.f32 %v7155, %v7326
      %v7390 = vadd.f32 %v7156, %v7329
      %v7391 = vadd.f32 %v7157, %v7331
      %v7392 = vadd.f32 %v7158, %v7334
      %v7393 = vadd.f32 %v7159, %v7336
      %v7394 = vadd.f32 %v7160, %v7339
      %v7395 = vadd.f32 %v7161, %v7341
      %v7396 = vadd.f32 %v7162, %v7344
      %v7397 = vadd.f32 %v7163, %v7346
      %v7398 = vadd.f32 %v7164, %v7349
      %v7399 = vadd.f32 %v7165, %v7351
      %v7400 = vadd.f32 %v7166, %v7354
      %v7401 = vadd.f32 %v7167, %v7356
      %v7402 = vadd.f32 %v7168, %v7359
      %v7403 = vadd.f32 %v7169, %v7361
      %v7404 = vadd.f32 %v7170, %v7364
      %v7405 = vadd.f32 %v7171, %v7366
      %v7406 = vadd.f32 %v7172, %v7369
      %v7407 = vadd.f32 %v7173, %v7371
      %v7408 = vadd.f32 %v7174, %v7374
      %v7409 = vadd.f32 %v7175, %v7376
      %v7410 = vld [vmem:[%s4] sm:$0x1]
      %v7412 = vperm.slane %v7410, 0
      %v7414 = vadd.f32 %v7378, %v7412
      %v7415 = vadd.f32 %v7379, %v7412
      %v7416 = vadd.f32 %v7380, %v7412
      %v7417 = vadd.f32 %v7381, %v7412
      %v7418 = vadd.f32 %v7382, %v7412
      %v7419 = vadd.f32 %v7383, %v7412
      %v7420 = vadd.f32 %v7384, %v7412
      %v7421 = vadd.f32 %v7385, %v7412
      %v7422 = vadd.f32 %v7386, %v7412
      %v7423 = vadd.f32 %v7387, %v7412
      %v7424 = vadd.f32 %v7388, %v7412
      %v7425 = vadd.f32 %v7389, %v7412
      %v7426 = vadd.f32 %v7390, %v7412
      %v7427 = vadd.f32 %v7391, %v7412
      %v7428 = vadd.f32 %v7392, %v7412
      %v7429 = vadd.f32 %v7393, %v7412
      %v7430 = vadd.f32 %v7394, %v7412
      %v7431 = vadd.f32 %v7395, %v7412
      %v7432 = vadd.f32 %v7396, %v7412
      %v7433 = vadd.f32 %v7397, %v7412
      %v7434 = vadd.f32 %v7398, %v7412
      %v7435 = vadd.f32 %v7399, %v7412
      %v7436 = vadd.f32 %v7400, %v7412
      %v7437 = vadd.f32 %v7401, %v7412
      %v7438 = vadd.f32 %v7402, %v7412
      %v7439 = vadd.f32 %v7403, %v7412
      %v7440 = vadd.f32 %v7404, %v7412
      %v7441 = vadd.f32 %v7405, %v7412
      %v7442 = vadd.f32 %v7406, %v7412
      %v7443 = vadd.f32 %v7407, %v7412
      %v7444 = vadd.f32 %v7408, %v7412
      %v7445 = vadd.f32 %v7409, %v7412
      %v7446 = vmax.f32 %v7414, %v7416
      %v7447 = vmax.f32 %v7415, %v7417
      %v7448 = vmax.f32 %v7418, %v7420
      %v7449 = vmax.f32 %v7419, %v7421
      %v7450 = vmax.f32 %v7422, %v7424
      %v7451 = vmax.f32 %v7423, %v7425
      %v7452 = vmax.f32 %v7426, %v7428
      %v7453 = vmax.f32 %v7427, %v7429
      %v7454 = vmax.f32 %v7430, %v7432
      %v7455 = vmax.f32 %v7431, %v7433
      %v7456 = vmax.f32 %v7434, %v7436
      %v7457 = vmax.f32 %v7435, %v7437
      %v7458 = vmax.f32 %v7438, %v7440
      %v7459 = vmax.f32 %v7439, %v7441
      %v7460 = vmax.f32 %v7442, %v7444
      %v7461 = vmax.f32 %v7443, %v7445
      %7462 = vst.msk [vmem:[#allocation5] sm:$0xff] %vm1305, %v7446
      %7463 = vst.msk [vmem:[#allocation5 + $0x8] sm:$0xff] %vm1305, %v7447
      %7464 = vst.msk [vmem:[#allocation5 + $0x10] sm:$0xff] %vm1305, %v7448
      %7465 = vst.msk [vmem:[#allocation5 + $0x18] sm:$0xff] %vm1305, %v7449
      %7466 = vst.msk [vmem:[#allocation5 + $0x20] sm:$0xff] %vm1305, %v7450
      %7467 = vst.msk [vmem:[#allocation5 + $0x28] sm:$0xff] %vm1305, %v7451
      %7468 = vst.msk [vmem:[#allocation5 + $0x30] sm:$0xff] %vm1305, %v7452
      %7469 = vst.msk [vmem:[#allocation5 + $0x38] sm:$0xff] %vm1305, %v7453
      %7470 = vst.msk [vmem:[#allocation5 + $0x40] sm:$0xff] %vm1305, %v7454
      %7471 = vst.msk [vmem:[#allocation5 + $0x48] sm:$0xff] %vm1305, %v7455
      %7472 = vst.msk [vmem:[#allocation5 + $0x50] sm:$0xff] %vm1305, %v7456
      %7473 = vst.msk [vmem:[#allocation5 + $0x58] sm:$0xff] %vm1305, %v7457
      %7474 = vst.msk [vmem:[#allocation5 + $0x60] sm:$0xff] %vm1305, %v7458
      %7475 = vst.msk [vmem:[#allocation5 + $0x68] sm:$0xff] %vm1305, %v7459
      %7476 = vst.msk [vmem:[#allocation5 + $0x70] sm:$0xff] %vm1305, %v7460
      %7477 = vst.msk [vmem:[#allocation5 + $0x78] sm:$0xff] %vm1305, %v7461
      %v7478 = vld [vmem:[#allocation5] ss:$2 sm:$0xff]
      %s7479 = scalar_lea.vmem [#allocation5], 16
      %v7480 = vld [vmem:[%s7479] ss:$2 sm:$0xff]
      %s7481 = scalar_lea.vmem [#allocation5], 32
      %v7482 = vld [vmem:[%s7481] ss:$2 sm:$0xff]
      %s7483 = scalar_lea.vmem [#allocation5], 48
      %v7484 = vld [vmem:[%s7483] ss:$2 sm:$0xff]
      %s7485 = scalar_lea.vmem [#allocation5], 64
      %v7486 = vld [vmem:[%s7485] ss:$2 sm:$0xff]
      %s7487 = scalar_lea.vmem [#allocation5], 80
      %v7488 = vld [vmem:[%s7487] ss:$2 sm:$0xff]
      %s7489 = scalar_lea.vmem [#allocation5], 96
      %v7490 = vld [vmem:[%s7489] ss:$2 sm:$0xff]
      %s7491 = scalar_lea.vmem [#allocation5], 112
      %v7492 = vld [vmem:[%s7491] ss:$2 sm:$0xff]
      %s7493 = scalar_lea.vmem [#allocation5], 1
      %v7494 = vld [vmem:[%s7493] ss:$2 sm:$0xff]
      %s7495 = scalar_lea.vmem [#allocation5], 17
      %v7496 = vld [vmem:[%s7495] ss:$2 sm:$0xff]
      %s7497 = scalar_lea.vmem [#allocation5], 33
      %v7498 = vld [vmem:[%s7497] ss:$2 sm:$0xff]
      %s7499 = scalar_lea.vmem [#allocation5], 49
      %v7500 = vld [vmem:[%s7499] ss:$2 sm:$0xff]
      %s7501 = scalar_lea.vmem [#allocation5], 65
      %v7502 = vld [vmem:[%s7501] ss:$2 sm:$0xff]
      %s7503 = scalar_lea.vmem [#allocation5], 81
      %v7504 = vld [vmem:[%s7503] ss:$2 sm:$0xff]
      %s7505 = scalar_lea.vmem [#allocation5], 97
      %v7506 = vld [vmem:[%s7505] ss:$2 sm:$0xff]
      %s7507 = scalar_lea.vmem [#allocation5], 113
      %v7508 = vld [vmem:[%s7507] ss:$2 sm:$0xff]
      %v7509 = vmax.f32 %v7478, %v7494
      %v7510 = vmax.f32 %v7480, %v7496
      %v7511 = vmax.f32 %v7482, %v7498
      %v7512 = vmax.f32 %v7484, %v7500
      %v7513 = vmax.f32 %v7486, %v7502
      %v7514 = vmax.f32 %v7488, %v7504
      %v7515 = vmax.f32 %v7490, %v7506
      %v7516 = vmax.f32 %v7492, %v7508
      %7517 = vst.msk [vmem:[#allocation3] sm:$0xff] %vm1305, 0.0
      %7518 = vst.msk [vmem:[#allocation3 + $0x8] sm:$0xff] %vm1305, 0.0
      %7519 = vst.msk [vmem:[#allocation3 + $0x10] sm:$0xff] %vm1305, 0.0
      %7520 = vst.msk [vmem:[#allocation3 + $0x18] sm:$0xff] %vm1305, 0.0
      %7521 = vst.msk [vmem:[#allocation3 + $0x20] sm:$0xff] %vm1305, 0.0
      %7522 = vst.msk [vmem:[#allocation3 + $0x28] sm:$0xff] %vm1305, 0.0
      %7523 = vst.msk [vmem:[#allocation3 + $0x30] sm:$0xff] %vm1305, 0.0
      %7524 = vst.msk [vmem:[#allocation3 + $0x38] sm:$0xff] %vm1305, 0.0
      %7525 = vst.msk [vmem:[#allocation3 + $0x40] sm:$0xff] %vm1305, 0.0
      %7526 = vst.msk [vmem:[#allocation3 + $0x48] sm:$0xff] %vm1305, 0.0
      %7527 = vst.msk [vmem:[#allocation3 + $0x50] sm:$0xff] %vm1305, 0.0
      %7528 = vst.msk [vmem:[#allocation3 + $0x58] sm:$0xff] %vm1305, 0.0
      %7529 = vst.msk [vmem:[#allocation3 + $0x60] sm:$0xff] %vm1305, 0.0
      %7530 = vst.msk [vmem:[#allocation3 + $0x68] sm:$0xff] %vm1305, 0.0
      %7531 = vst.msk [vmem:[#allocation3 + $0x70] sm:$0xff] %vm1305, 0.0
      %7532 = vst.msk [vmem:[#allocation3 + $0x78] sm:$0xff] %vm1305, 0.0
      %7533 = vst.msk [vmem:[#allocation3 + $0x80] sm:$0xff] %vm1305, 0.0
      %7534 = vst.msk [vmem:[#allocation3 + $0x88] sm:$0xff] %vm1305, 0.0
      %7535 = vst.msk [vmem:[#allocation3 + $0x90] sm:$0xff] %vm1305, 0.0
      %7536 = vst.msk [vmem:[#allocation3 + $0x98] sm:$0xff] %vm1305, 0.0
      %7537 = vst.msk [vmem:[#allocation3 + $0xa0] sm:$0xff] %vm1305, 0.0
      %7538 = vst.msk [vmem:[#allocation3 + $0xa8] sm:$0xff] %vm1305, 0.0
      %7539 = vst.msk [vmem:[#allocation3 + $0xb0] sm:$0xff] %vm1305, 0.0
      %7540 = vst.msk [vmem:[#allocation3 + $0xb8] sm:$0xff] %vm1305, 0.0
      %s7541 = scalar_lea.vmem [#allocation3], 32
      %7542 = vst.msk [vmem:[%s7541 + $0x2] sm:$0xff] %vm1305, %v7509
      %7543 = vst.msk [vmem:[%s7541 + $0x12] sm:$0xff] %vm1305, %v7510
      %7544 = vst.msk [vmem:[%s7541 + $0x22] sm:$0xff] %vm1305, %v7511
      %7545 = vst.msk [vmem:[%s7541 + $0x32] sm:$0xff] %vm1305, %v7512
      %7546 = vst.msk [vmem:[%s7541 + $0x42] sm:$0xff] %vm1305, %v7513
      %7547 = vst.msk [vmem:[%s7541 + $0x52] sm:$0xff] %vm1305, %v7514
      %7548 = vst.msk [vmem:[%s7541 + $0x62] sm:$0xff] %vm1305, %v7515
      %7549 = vst.msk [vmem:[%s7541 + $0x72] sm:$0xff] %vm1305, %v7516
      %v7550 = vld [vmem:[#allocation3] sm:$0xff]
      %v7551 = vld [vmem:[#allocation3 + $0x10] sm:$0xff]
      %v7552 = vld [vmem:[#allocation3 + $0x20] sm:$0xff]
      %v7553 = vld [vmem:[#allocation3 + $0x30] sm:$0xff]
      %v7554 = vld [vmem:[#allocation3 + $0x40] sm:$0xff]
      %v7555 = vld [vmem:[#allocation3 + $0x50] sm:$0xff]
      %v7556 = vld [vmem:[#allocation3 + $0x60] sm:$0xff]
      %v7557 = vld [vmem:[#allocation3 + $0x70] sm:$0xff]
      %v7558 = vpack.c.bf16 %v7551, %v7550
      %v7559 = vpack.c.bf16 %v7553, %v7552
      %v7560 = vpack.c.bf16 %v7555, %v7554
      %v7561 = vpack.c.bf16 %v7557, %v7556
      %v7562 = vld [vmem:[%s5] sm:$0xf]
      %v7563 = vld [vmem:[%s5 + $0x4] sm:$0xf]
      %v7564 = vld [vmem:[%s5 + $0x8] sm:$0xf]
      %v7565 = vld [vmem:[%s5 + $0xc] sm:$0xf]
      %v7566 = vld [vmem:[#allocation3 + $0x1] sm:$0xff]
      %v7567 = vld [vmem:[#allocation3 + $0x11] sm:$0xff]
      %v7568 = vld [vmem:[#allocation3 + $0x21] sm:$0xff]
      %v7569 = vld [vmem:[#allocation3 + $0x31] sm:$0xff]
      %v7570 = vld [vmem:[#allocation3 + $0x41] sm:$0xff]
      %v7571 = vld [vmem:[#allocation3 + $0x51] sm:$0xff]
      %v7572 = vld [vmem:[#allocation3 + $0x61] sm:$0xff]
      %v7573 = vld [vmem:[#allocation3 + $0x71] sm:$0xff]
      %v7574 = vpack.c.bf16 %v7567, %v7566
      %v7575 = vpack.c.bf16 %v7569, %v7568
      %v7576 = vpack.c.bf16 %v7571, %v7570
      %v7577 = vpack.c.bf16 %v7573, %v7572
      %s7578 = scalar_lea.vmem %s5, 16
      %v7579 = vld [vmem:[%s7578] sm:$0xf]
      %v7580 = vld [vmem:[%s7578 + $0x4] sm:$0xf]
      %v7581 = vld [vmem:[%s7578 + $0x8] sm:$0xf]
      %v7582 = vld [vmem:[%s7578 + $0xc] sm:$0xf]
      %v7587 = vunpack.c.l.b16 %v7579
      %v7588 = vunpack.c.l.b16 %v7580
      %v7589 = vunpack.c.l.b16 %v7581
      %v7590 = vunpack.c.l.b16 %v7582
      %v7591 = vpack.c.b16 %v7588, %v7587
      %v7592 = vpack.c.b16 %v7590, %v7589
      %v7596 = vsel %vm1305, %v7574, 0
      %v7599 = vsel %vm1305, %v7575, 0
      %v7602 = vsel %vm1305, %v7576, 0
      %v7605 = vsel %vm1305, %v7577, 0
      %7607 = vmatpush.bf16.msra.mxu0 0
      %7608 = vmatpush.bf16.msra.mxu0 0
      %7609 = vmatpush.bf16.msra.mxu0 0
      %7610 = vmatpush.bf16.msra.mxu0 0
      %7611 = vmatpush.bf16.msra.mxu0 0
      %7612 = vmatpush.bf16.msra.mxu0 0
      %7613 = vmatpush.bf16.msra.mxu0 %v7592
      %7614 = vmatpush.bf16.msra.mxu0 %v7591
      %7615 = vmatmul.bf16.gmra.mxu0 %v7596
      %v7616 = vpop.f32.mrf.mxu0
      %v7617 = vadd.f32 0.0, %v7616
      %v7618 = vpop.f32.mrf.mxu0
      %v7619 = vadd.f32 0.0, %v7618
      %7620 = vmatmul.bf16.gmra.mxu0 %v7599
      %v7621 = vpop.f32.mrf.mxu0
      %v7622 = vadd.f32 0.0, %v7621
      %v7623 = vpop.f32.mrf.mxu0
      %v7624 = vadd.f32 0.0, %v7623
      %7625 = vmatmul.bf16.gmra.mxu0 %v7602
      %v7626 = vpop.f32.mrf.mxu0
      %v7627 = vadd.f32 0.0, %v7626
      %v7628 = vpop.f32.mrf.mxu0
      %v7629 = vadd.f32 0.0, %v7628
      %7630 = vmatmul.bf16.gmra.mxu0 %v7605
      %v7631 = vpop.f32.mrf.mxu0
      %v7632 = vadd.f32 0.0, %v7631
      %v7633 = vpop.f32.mrf.mxu0
      %v7634 = vadd.f32 0.0, %v7633
      %7635 = vdwg.mxu0
      %v7640 = vunpack.c.l.b16 %v7562
      %v7641 = vunpack.c.l.b16 %v7563
      %v7642 = vunpack.c.l.b16 %v7564
      %v7643 = vunpack.c.l.b16 %v7565
      %v7644 = vpack.c.b16 %v7641, %v7640
      %v7645 = vpack.c.b16 %v7643, %v7642
      %v7649 = vsel %vm1305, %v7558, 0
      %v7652 = vsel %vm1305, %v7559, 0
      %v7655 = vsel %vm1305, %v7560, 0
      %v7658 = vsel %vm1305, %v7561, 0
      %7660 = vmatpush.bf16.msra.mxu0 0
      %7661 = vmatpush.bf16.msra.mxu0 0
      %7662 = vmatpush.bf16.msra.mxu0 0
      %7663 = vmatpush.bf16.msra.mxu0 0
      %7664 = vmatpush.bf16.msra.mxu0 0
      %7665 = vmatpush.bf16.msra.mxu0 0
      %7666 = vmatpush.bf16.msra.mxu0 %v7645
      %7667 = vmatpush.bf16.msra.mxu0 %v7644
      %7668 = vmatmul.bf16.gmra.mxu0 %v7649
      %v7669 = vpop.f32.mrf.mxu0
      %v7670 = vadd.f32 %v7617, %v7669
      %v7671 = vpop.f32.mrf.mxu0
      %v7672 = vadd.f32 %v7619, %v7671
      %7673 = vmatmul.bf16.gmra.mxu0 %v7652
      %v7674 = vpop.f32.mrf.mxu0
      %v7675 = vadd.f32 %v7622, %v7674
      %v7676 = vpop.f32.mrf.mxu0
      %v7677 = vadd.f32 %v7624, %v7676
      %7678 = vmatmul.bf16.gmra.mxu0 %v7655
      %v7679 = vpop.f32.mrf.mxu0
      %v7680 = vadd.f32 %v7627, %v7679
      %v7681 = vpop.f32.mrf.mxu0
      %v7682 = vadd.f32 %v7629, %v7681
      %7683 = vmatmul.bf16.gmra.mxu0 %v7658
      %v7684 = vpop.f32.mrf.mxu0
      %v7685 = vadd.f32 %v7632, %v7684
      %v7686 = vpop.f32.mrf.mxu0
      %v7687 = vadd.f32 %v7634, %v7686
      %7688 = vdwg.mxu0
      %v7689 = vld [vmem:[#allocation3 + $0x2] sm:$0xff]
      %v7690 = vld [vmem:[#allocation3 + $0x12] sm:$0xff]
      %v7691 = vld [vmem:[#allocation3 + $0x22] sm:$0xff]
      %v7692 = vld [vmem:[#allocation3 + $0x32] sm:$0xff]
      %v7693 = vld [vmem:[#allocation3 + $0x42] sm:$0xff]
      %v7694 = vld [vmem:[#allocation3 + $0x52] sm:$0xff]
      %v7695 = vld [vmem:[#allocation3 + $0x62] sm:$0xff]
      %v7696 = vld [vmem:[#allocation3 + $0x72] sm:$0xff]
      %v7697 = vpack.c.bf16 %v7690, %v7689
      %v7698 = vpack.c.bf16 %v7692, %v7691
      %v7699 = vpack.c.bf16 %v7694, %v7693
      %v7700 = vpack.c.bf16 %v7696, %v7695
      %s7701 = scalar_lea.vmem %s5, 32
      %v7702 = vld [vmem:[%s7701] sm:$0xf]
      %v7703 = vld [vmem:[%s7701 + $0x4] sm:$0xf]
      %v7704 = vld [vmem:[%s7701 + $0x8] sm:$0xf]
      %v7705 = vld [vmem:[%s7701 + $0xc] sm:$0xf]
      %v7710 = vunpack.c.l.b16 %v7702
      %v7711 = vunpack.c.l.b16 %v7703
      %v7712 = vunpack.c.l.b16 %v7704
      %v7713 = vunpack.c.l.b16 %v7705
      %v7714 = vpack.c.b16 %v7711, %v7710
      %v7715 = vpack.c.b16 %v7713, %v7712
      %v7719 = vsel %vm1305, %v7697, 0
      %v7722 = vsel %vm1305, %v7698, 0
      %v7725 = vsel %vm1305, %v7699, 0
      %v7728 = vsel %vm1305, %v7700, 0
      %7730 = vmatpush.bf16.msra.mxu0 0
      %7731 = vmatpush.bf16.msra.mxu0 0
      %7732 = vmatpush.bf16.msra.mxu0 0
      %7733 = vmatpush.bf16.msra.mxu0 0
      %7734 = vmatpush.bf16.msra.mxu0 0
      %7735 = vmatpush.bf16.msra.mxu0 0
      %7736 = vmatpush.bf16.msra.mxu0 %v7715
      %7737 = vmatpush.bf16.msra.mxu0 %v7714
      %7738 = vmatmul.bf16.gmra.mxu0 %v7719
      %v7739 = vpop.f32.mrf.mxu0
      %v7740 = vadd.f32 0.0, %v7739
      %v7741 = vpop.f32.mrf.mxu0
      %v7742 = vadd.f32 0.0, %v7741
      %7743 = vmatmul.bf16.gmra.mxu0 %v7722
      %v7744 = vpop.f32.mrf.mxu0
      %v7745 = vadd.f32 0.0, %v7744
      %v7746 = vpop.f32.mrf.mxu0
      %v7747 = vadd.f32 0.0, %v7746
      %7748 = vmatmul.bf16.gmra.mxu0 %v7725
      %v7749 = vpop.f32.mrf.mxu0
      %v7750 = vadd.f32 0.0, %v7749
      %v7751 = vpop.f32.mrf.mxu0
      %v7752 = vadd.f32 0.0, %v7751
      %7753 = vmatmul.bf16.gmra.mxu0 %v7728
      %v7754 = vpop.f32.mrf.mxu0
      %v7755 = vadd.f32 0.0, %v7754
      %v7756 = vpop.f32.mrf.mxu0
      %v7757 = vadd.f32 0.0, %v7756
      %7758 = vdwg.mxu0
      %v7759 = vadd.f32 %v7670, %v7740
      %v7760 = vadd.f32 %v7672, %v7742
      %v7761 = vadd.f32 %v7675, %v7745
      %v7762 = vadd.f32 %v7677, %v7747
      %v7763 = vadd.f32 %v7680, %v7750
      %v7764 = vadd.f32 %v7682, %v7752
      %v7765 = vadd.f32 %v7685, %v7755
      %v7766 = vadd.f32 %v7687, %v7757
      %v7767 = vld [vmem:[#allocation3 + $0x3] sm:$0xff]
      %v7768 = vld [vmem:[#allocation3 + $0x13] sm:$0xff]
      %v7769 = vld [vmem:[#allocation3 + $0x23] sm:$0xff]
      %v7770 = vld [vmem:[#allocation3 + $0x33] sm:$0xff]
      %v7771 = vld [vmem:[#allocation3 + $0x43] sm:$0xff]
      %v7772 = vld [vmem:[#allocation3 + $0x53] sm:$0xff]
      %v7773 = vld [vmem:[#allocation3 + $0x63] sm:$0xff]
      %v7774 = vld [vmem:[#allocation3 + $0x73] sm:$0xff]
      %v7775 = vpack.c.bf16 %v7768, %v7767
      %v7776 = vpack.c.bf16 %v7770, %v7769
      %v7777 = vpack.c.bf16 %v7772, %v7771
      %v7778 = vpack.c.bf16 %v7774, %v7773
      %s7779 = scalar_lea.vmem %s5, 48
      %v7780 = vld [vmem:[%s7779] sm:$0xf]
      %v7781 = vld [vmem:[%s7779 + $0x4] sm:$0xf]
      %v7782 = vld [vmem:[%s7779 + $0x8] sm:$0xf]
      %v7783 = vld [vmem:[%s7779 + $0xc] sm:$0xf]
      %v7788 = vunpack.c.l.b16 %v7780
      %v7789 = vunpack.c.l.b16 %v7781
      %v7790 = vunpack.c.l.b16 %v7782
      %v7791 = vunpack.c.l.b16 %v7783
      %v7792 = vpack.c.b16 %v7789, %v7788
      %v7793 = vpack.c.b16 %v7791, %v7790
      %v7797 = vsel %vm1305, %v7775, 0
      %v7800 = vsel %vm1305, %v7776, 0
      %v7803 = vsel %vm1305, %v7777, 0
      %v7806 = vsel %vm1305, %v7778, 0
      %7808 = vmatpush.bf16.msra.mxu0 0
      %7809 = vmatpush.bf16.msra.mxu0 0
      %7810 = vmatpush.bf16.msra.mxu0 0
      %7811 = vmatpush.bf16.msra.mxu0 0
      %7812 = vmatpush.bf16.msra.mxu0 0
      %7813 = vmatpush.bf16.msra.mxu0 0
      %7814 = vmatpush.bf16.msra.mxu0 %v7793
      %7815 = vmatpush.bf16.msra.mxu0 %v7792
      %7816 = vmatmul.bf16.gmra.mxu0 %v7797
      %v7817 = vpop.f32.mrf.mxu0
      %v7818 = vadd.f32 0.0, %v7817
      %v7819 = vpop.f32.mrf.mxu0
      %v7820 = vadd.f32 0.0, %v7819
      %7821 = vmatmul.bf16.gmra.mxu0 %v7800
      %v7822 = vpop.f32.mrf.mxu0
      %v7823 = vadd.f32 0.0, %v7822
      %v7824 = vpop.f32.mrf.mxu0
      %v7825 = vadd.f32 0.0, %v7824
      %7826 = vmatmul.bf16.gmra.mxu0 %v7803
      %v7827 = vpop.f32.mrf.mxu0
      %v7828 = vadd.f32 0.0, %v7827
      %v7829 = vpop.f32.mrf.mxu0
      %v7830 = vadd.f32 0.0, %v7829
      %7831 = vmatmul.bf16.gmra.mxu0 %v7806
      %v7832 = vpop.f32.mrf.mxu0
      %v7833 = vadd.f32 0.0, %v7832
      %v7834 = vpop.f32.mrf.mxu0
      %v7835 = vadd.f32 0.0, %v7834
      %7836 = vdwg.mxu0
      %v7837 = vadd.f32 %v7759, %v7818
      %v7838 = vadd.f32 %v7760, %v7820
      %v7839 = vadd.f32 %v7761, %v7823
      %v7840 = vadd.f32 %v7762, %v7825
      %v7841 = vadd.f32 %v7763, %v7828
      %v7842 = vadd.f32 %v7764, %v7830
      %v7843 = vadd.f32 %v7765, %v7833
      %v7844 = vadd.f32 %v7766, %v7835
      %v7845 = vld [vmem:[#allocation3 + $0x4] sm:$0xff]
      %v7846 = vld [vmem:[#allocation3 + $0x14] sm:$0xff]
      %v7847 = vld [vmem:[#allocation3 + $0x24] sm:$0xff]
      %v7848 = vld [vmem:[#allocation3 + $0x34] sm:$0xff]
      %v7849 = vld [vmem:[#allocation3 + $0x44] sm:$0xff]
      %v7850 = vld [vmem:[#allocation3 + $0x54] sm:$0xff]
      %v7851 = vld [vmem:[#allocation3 + $0x64] sm:$0xff]
      %v7852 = vld [vmem:[#allocation3 + $0x74] sm:$0xff]
      %v7853 = vpack.c.bf16 %v7846, %v7845
      %v7854 = vpack.c.bf16 %v7848, %v7847
      %v7855 = vpack.c.bf16 %v7850, %v7849
      %v7856 = vpack.c.bf16 %v7852, %v7851
      %s7857 = scalar_lea.vmem %s5, 64
      %v7858 = vld [vmem:[%s7857] sm:$0xf]
      %v7859 = vld [vmem:[%s7857 + $0x4] sm:$0xf]
      %v7860 = vld [vmem:[%s7857 + $0x8] sm:$0xf]
      %v7861 = vld [vmem:[%s7857 + $0xc] sm:$0xf]
      %v7866 = vunpack.c.l.b16 %v7858
      %v7867 = vunpack.c.l.b16 %v7859
      %v7868 = vunpack.c.l.b16 %v7860
      %v7869 = vunpack.c.l.b16 %v7861
      %v7870 = vpack.c.b16 %v7867, %v7866
      %v7871 = vpack.c.b16 %v7869, %v7868
      %v7875 = vsel %vm1305, %v7853, 0
      %v7878 = vsel %vm1305, %v7854, 0
      %v7881 = vsel %vm1305, %v7855, 0
      %v7884 = vsel %vm1305, %v7856, 0
      %7886 = vmatpush.bf16.msra.mxu0 0
      %7887 = vmatpush.bf16.msra.mxu0 0
      %7888 = vmatpush.bf16.msra.mxu0 0
      %7889 = vmatpush.bf16.msra.mxu0 0
      %7890 = vmatpush.bf16.msra.mxu0 0
      %7891 = vmatpush.bf16.msra.mxu0 0
      %7892 = vmatpush.bf16.msra.mxu0 %v7871
      %7893 = vmatpush.bf16.msra.mxu0 %v7870
      %7894 = vmatmul.bf16.gmra.mxu0 %v7875
      %v7895 = vpop.f32.mrf.mxu0
      %v7896 = vadd.f32 0.0, %v7895
      %v7897 = vpop.f32.mrf.mxu0
      %v7898 = vadd.f32 0.0, %v7897
      %7899 = vmatmul.bf16.gmra.mxu0 %v7878
      %v7900 = vpop.f32.mrf.mxu0
      %v7901 = vadd.f32 0.0, %v7900
      %v7902 = vpop.f32.mrf.mxu0
      %v7903 = vadd.f32 0.0, %v7902
      %7904 = vmatmul.bf16.gmra.mxu0 %v7881
      %v7905 = vpop.f32.mrf.mxu0
      %v7906 = vadd.f32 0.0, %v7905
      %v7907 = vpop.f32.mrf.mxu0
      %v7908 = vadd.f32 0.0, %v7907
      %7909 = vmatmul.bf16.gmra.mxu0 %v7884
      %v7910 = vpop.f32.mrf.mxu0
      %v7911 = vadd.f32 0.0, %v7910
      %v7912 = vpop.f32.mrf.mxu0
      %v7913 = vadd.f32 0.0, %v7912
      %7914 = vdwg.mxu0
      %v7915 = vadd.f32 %v7837, %v7896
      %v7916 = vadd.f32 %v7838, %v7898
      %v7917 = vadd.f32 %v7839, %v7901
      %v7918 = vadd.f32 %v7840, %v7903
      %v7919 = vadd.f32 %v7841, %v7906
      %v7920 = vadd.f32 %v7842, %v7908
      %v7921 = vadd.f32 %v7843, %v7911
      %v7922 = vadd.f32 %v7844, %v7913
      %s7923 = scalar_lea.vmem [#allocation3], 16
      %v7924 = vld [vmem:[%s7923] sm:$0xff]
      %v7925 = vld [vmem:[%s7923 + $0x10] sm:$0xff]
      %v7926 = vld [vmem:[%s7923 + $0x20] sm:$0xff]
      %v7927 = vld [vmem:[%s7923 + $0x30] sm:$0xff]
      %v7928 = vld [vmem:[%s7923 + $0x40] sm:$0xff]
      %v7929 = vld [vmem:[%s7923 + $0x50] sm:$0xff]
      %v7930 = vld [vmem:[%s7923 + $0x60] sm:$0xff]
      %v7931 = vld [vmem:[%s7923 + $0x70] sm:$0xff]
      %v7932 = vpack.c.bf16 %v7925, %v7924
      %v7933 = vpack.c.bf16 %v7927, %v7926
      %v7934 = vpack.c.bf16 %v7929, %v7928
      %v7935 = vpack.c.bf16 %v7931, %v7930
      %s7936 = scalar_lea.vmem %s5, 80
      %v7937 = vld [vmem:[%s7936] sm:$0xf]
      %v7938 = vld [vmem:[%s7936 + $0x4] sm:$0xf]
      %v7939 = vld [vmem:[%s7936 + $0x8] sm:$0xf]
      %v7940 = vld [vmem:[%s7936 + $0xc] sm:$0xf]
      %v7945 = vunpack.c.l.b16 %v7937
      %v7946 = vunpack.c.l.b16 %v7938
      %v7947 = vunpack.c.l.b16 %v7939
      %v7948 = vunpack.c.l.b16 %v7940
      %v7949 = vpack.c.b16 %v7946, %v7945
      %v7950 = vpack.c.b16 %v7948, %v7947
      %v7954 = vsel %vm1305, %v7932, 0
      %v7957 = vsel %vm1305, %v7933, 0
      %v7960 = vsel %vm1305, %v7934, 0
      %v7963 = vsel %vm1305, %v7935, 0
      %7965 = vmatpush.bf16.msra.mxu0 0
      %7966 = vmatpush.bf16.msra.mxu0 0
      %7967 = vmatpush.bf16.msra.mxu0 0
      %7968 = vmatpush.bf16.msra.mxu0 0
      %7969 = vmatpush.bf16.msra.mxu0 0
      %7970 = vmatpush.bf16.msra.mxu0 0
      %7971 = vmatpush.bf16.msra.mxu0 %v7950
      %7972 = vmatpush.bf16.msra.mxu0 %v7949
      %7973 = vmatmul.bf16.gmra.mxu0 %v7954
      %v7974 = vpop.f32.mrf.mxu0
      %v7975 = vadd.f32 0.0, %v7974
      %v7976 = vpop.f32.mrf.mxu0
      %v7977 = vadd.f32 0.0, %v7976
      %7978 = vmatmul.bf16.gmra.mxu0 %v7957
      %v7979 = vpop.f32.mrf.mxu0
      %v7980 = vadd.f32 0.0, %v7979
      %v7981 = vpop.f32.mrf.mxu0
      %v7982 = vadd.f32 0.0, %v7981
      %7983 = vmatmul.bf16.gmra.mxu0 %v7960
      %v7984 = vpop.f32.mrf.mxu0
      %v7985 = vadd.f32 0.0, %v7984
      %v7986 = vpop.f32.mrf.mxu0
      %v7987 = vadd.f32 0.0, %v7986
      %7988 = vmatmul.bf16.gmra.mxu0 %v7963
      %v7989 = vpop.f32.mrf.mxu0
      %v7990 = vadd.f32 0.0, %v7989
      %v7991 = vpop.f32.mrf.mxu0
      %v7992 = vadd.f32 0.0, %v7991
      %7993 = vdwg.mxu0
      %v7994 = vadd.f32 %v7915, %v7975
      %v7995 = vadd.f32 %v7916, %v7977
      %v7996 = vadd.f32 %v7917, %v7980
      %v7997 = vadd.f32 %v7918, %v7982
      %v7998 = vadd.f32 %v7919, %v7985
      %v7999 = vadd.f32 %v7920, %v7987
      %v8000 = vadd.f32 %v7921, %v7990
      %v8001 = vadd.f32 %v7922, %v7992
      %v8002 = vld [vmem:[%s7923 + $0x1] sm:$0xff]
      %v8003 = vld [vmem:[%s7923 + $0x11] sm:$0xff]
      %v8004 = vld [vmem:[%s7923 + $0x21] sm:$0xff]
      %v8005 = vld [vmem:[%s7923 + $0x31] sm:$0xff]
      %v8006 = vld [vmem:[%s7923 + $0x41] sm:$0xff]
      %v8007 = vld [vmem:[%s7923 + $0x51] sm:$0xff]
      %v8008 = vld [vmem:[%s7923 + $0x61] sm:$0xff]
      %v8009 = vld [vmem:[%s7923 + $0x71] sm:$0xff]
      %v8010 = vpack.c.bf16 %v8003, %v8002
      %v8011 = vpack.c.bf16 %v8005, %v8004
      %v8012 = vpack.c.bf16 %v8007, %v8006
      %v8013 = vpack.c.bf16 %v8009, %v8008
      %s8014 = scalar_lea.vmem %s5, 96
      %v8015 = vld [vmem:[%s8014] sm:$0xf]
      %v8016 = vld [vmem:[%s8014 + $0x4] sm:$0xf]
      %v8017 = vld [vmem:[%s8014 + $0x8] sm:$0xf]
      %v8018 = vld [vmem:[%s8014 + $0xc] sm:$0xf]
      %v8023 = vunpack.c.l.b16 %v8015
      %v8024 = vunpack.c.l.b16 %v8016
      %v8025 = vunpack.c.l.b16 %v8017
      %v8026 = vunpack.c.l.b16 %v8018
      %v8027 = vpack.c.b16 %v8024, %v8023
      %v8028 = vpack.c.b16 %v8026, %v8025
      %v8032 = vsel %vm1305, %v8010, 0
      %v8035 = vsel %vm1305, %v8011, 0
      %v8038 = vsel %vm1305, %v8012, 0
      %v8041 = vsel %vm1305, %v8013, 0
      %8043 = vmatpush.bf16.msra.mxu0 0
      %8044 = vmatpush.bf16.msra.mxu0 0
      %8045 = vmatpush.bf16.msra.mxu0 0
      %8046 = vmatpush.bf16.msra.mxu0 0
      %8047 = vmatpush.bf16.msra.mxu0 0
      %8048 = vmatpush.bf16.msra.mxu0 0
      %8049 = vmatpush.bf16.msra.mxu0 %v8028
      %8050 = vmatpush.bf16.msra.mxu0 %v8027
      %8051 = vmatmul.bf16.gmra.mxu0 %v8032
      %v8052 = vpop.f32.mrf.mxu0
      %v8053 = vadd.f32 0.0, %v8052
      %v8054 = vpop.f32.mrf.mxu0
      %v8055 = vadd.f32 0.0, %v8054
      %8056 = vmatmul.bf16.gmra.mxu0 %v8035
      %v8057 = vpop.f32.mrf.mxu0
      %v8058 = vadd.f32 0.0, %v8057
      %v8059 = vpop.f32.mrf.mxu0
      %v8060 = vadd.f32 0.0, %v8059
      %8061 = vmatmul.bf16.gmra.mxu0 %v8038
      %v8062 = vpop.f32.mrf.mxu0
      %v8063 = vadd.f32 0.0, %v8062
      %v8064 = vpop.f32.mrf.mxu0
      %v8065 = vadd.f32 0.0, %v8064
      %8066 = vmatmul.bf16.gmra.mxu0 %v8041
      %v8067 = vpop.f32.mrf.mxu0
      %v8068 = vadd.f32 0.0, %v8067
      %v8069 = vpop.f32.mrf.mxu0
      %v8070 = vadd.f32 0.0, %v8069
      %8071 = vdwg.mxu0
      %v8072 = vadd.f32 %v7994, %v8053
      %v8073 = vadd.f32 %v7995, %v8055
      %v8074 = vadd.f32 %v7996, %v8058
      %v8075 = vadd.f32 %v7997, %v8060
      %v8076 = vadd.f32 %v7998, %v8063
      %v8077 = vadd.f32 %v7999, %v8065
      %v8078 = vadd.f32 %v8000, %v8068
      %v8079 = vadd.f32 %v8001, %v8070
      %v8080 = vld [vmem:[%s7923 + $0x2] sm:$0xff]
      %v8081 = vld [vmem:[%s7923 + $0x12] sm:$0xff]
      %v8082 = vld [vmem:[%s7923 + $0x22] sm:$0xff]
      %v8083 = vld [vmem:[%s7923 + $0x32] sm:$0xff]
      %v8084 = vld [vmem:[%s7923 + $0x42] sm:$0xff]
      %v8085 = vld [vmem:[%s7923 + $0x52] sm:$0xff]
      %v8086 = vld [vmem:[%s7923 + $0x62] sm:$0xff]
      %v8087 = vld [vmem:[%s7923 + $0x72] sm:$0xff]
      %v8088 = vpack.c.bf16 %v8081, %v8080
      %v8089 = vpack.c.bf16 %v8083, %v8082
      %v8090 = vpack.c.bf16 %v8085, %v8084
      %v8091 = vpack.c.bf16 %v8087, %v8086
      %s8092 = scalar_lea.vmem %s5, 112
      %v8093 = vld [vmem:[%s8092] sm:$0xf]
      %v8094 = vld [vmem:[%s8092 + $0x4] sm:$0xf]
      %v8095 = vld [vmem:[%s8092 + $0x8] sm:$0xf]
      %v8096 = vld [vmem:[%s8092 + $0xc] sm:$0xf]
      %v8101 = vunpack.c.l.b16 %v8093
      %v8102 = vunpack.c.l.b16 %v8094
      %v8103 = vunpack.c.l.b16 %v8095
      %v8104 = vunpack.c.l.b16 %v8096
      %v8105 = vpack.c.b16 %v8102, %v8101
      %v8106 = vpack.c.b16 %v8104, %v8103
      %v8110 = vsel %vm1305, %v8088, 0
      %v8113 = vsel %vm1305, %v8089, 0
      %v8116 = vsel %vm1305, %v8090, 0
      %v8119 = vsel %vm1305, %v8091, 0
      %8121 = vmatpush.bf16.msra.mxu0 0
      %8122 = vmatpush.bf16.msra.mxu0 0
      %8123 = vmatpush.bf16.msra.mxu0 0
      %8124 = vmatpush.bf16.msra.mxu0 0
      %8125 = vmatpush.bf16.msra.mxu0 0
      %8126 = vmatpush.bf16.msra.mxu0 0
      %8127 = vmatpush.bf16.msra.mxu0 %v8106
      %8128 = vmatpush.bf16.msra.mxu0 %v8105
      %8129 = vmatmul.bf16.gmra.mxu0 %v8110
      %v8130 = vpop.f32.mrf.mxu0
      %v8131 = vadd.f32 0.0, %v8130
      %v8132 = vpop.f32.mrf.mxu0
      %v8133 = vadd.f32 0.0, %v8132
      %8134 = vmatmul.bf16.gmra.mxu0 %v8113
      %v8135 = vpop.f32.mrf.mxu0
      %v8136 = vadd.f32 0.0, %v8135
      %v8137 = vpop.f32.mrf.mxu0
      %v8138 = vadd.f32 0.0, %v8137
      %8139 = vmatmul.bf16.gmra.mxu0 %v8116
      %v8140 = vpop.f32.mrf.mxu0
      %v8141 = vadd.f32 0.0, %v8140
      %v8142 = vpop.f32.mrf.mxu0
      %v8143 = vadd.f32 0.0, %v8142
      %8144 = vmatmul.bf16.gmra.mxu0 %v8119
      %v8145 = vpop.f32.mrf.mxu0
      %v8146 = vadd.f32 0.0, %v8145
      %v8147 = vpop.f32.mrf.mxu0
      %v8148 = vadd.f32 0.0, %v8147
      %8149 = vdwg.mxu0
      %v8150 = vadd.f32 %v8072, %v8131
      %v8151 = vadd.f32 %v8073, %v8133
      %v8152 = vadd.f32 %v8074, %v8136
      %v8153 = vadd.f32 %v8075, %v8138
      %v8154 = vadd.f32 %v8076, %v8141
      %v8155 = vadd.f32 %v8077, %v8143
      %v8156 = vadd.f32 %v8078, %v8146
      %v8157 = vadd.f32 %v8079, %v8148
      %v8158 = vld [vmem:[%s7923 + $0x3] sm:$0xff]
      %v8159 = vld [vmem:[%s7923 + $0x13] sm:$0xff]
      %v8160 = vld [vmem:[%s7923 + $0x23] sm:$0xff]
      %v8161 = vld [vmem:[%s7923 + $0x33] sm:$0xff]
      %v8162 = vld [vmem:[%s7923 + $0x43] sm:$0xff]
      %v8163 = vld [vmem:[%s7923 + $0x53] sm:$0xff]
      %v8164 = vld [vmem:[%s7923 + $0x63] sm:$0xff]
      %v8165 = vld [vmem:[%s7923 + $0x73] sm:$0xff]
      %v8166 = vpack.c.bf16 %v8159, %v8158
      %v8167 = vpack.c.bf16 %v8161, %v8160
      %v8168 = vpack.c.bf16 %v8163, %v8162
      %v8169 = vpack.c.bf16 %v8165, %v8164
      %s8170 = scalar_lea.vmem %s5, 128
      %v8171 = vld [vmem:[%s8170] sm:$0xf]
      %v8172 = vld [vmem:[%s8170 + $0x4] sm:$0xf]
      %v8173 = vld [vmem:[%s8170 + $0x8] sm:$0xf]
      %v8174 = vld [vmem:[%s8170 + $0xc] sm:$0xf]
      %v8179 = vunpack.c.l.b16 %v8171
      %v8180 = vunpack.c.l.b16 %v8172
      %v8181 = vunpack.c.l.b16 %v8173
      %v8182 = vunpack.c.l.b16 %v8174
      %v8183 = vpack.c.b16 %v8180, %v8179
      %v8184 = vpack.c.b16 %v8182, %v8181
      %v8188 = vsel %vm1305, %v8166, 0
      %v8191 = vsel %vm1305, %v8167, 0
      %v8194 = vsel %vm1305, %v8168, 0
      %v8197 = vsel %vm1305, %v8169, 0
      %8199 = vmatpush.bf16.msra.mxu0 0
      %8200 = vmatpush.bf16.msra.mxu0 0
      %8201 = vmatpush.bf16.msra.mxu0 0
      %8202 = vmatpush.bf16.msra.mxu0 0
      %8203 = vmatpush.bf16.msra.mxu0 0
      %8204 = vmatpush.bf16.msra.mxu0 0
      %8205 = vmatpush.bf16.msra.mxu0 %v8184
      %8206 = vmatpush.bf16.msra.mxu0 %v8183
      %8207 = vmatmul.bf16.gmra.mxu0 %v8188
      %v8208 = vpop.f32.mrf.mxu0
      %v8209 = vadd.f32 0.0, %v8208
      %v8210 = vpop.f32.mrf.mxu0
      %v8211 = vadd.f32 0.0, %v8210
      %8212 = vmatmul.bf16.gmra.mxu0 %v8191
      %v8213 = vpop.f32.mrf.mxu0
      %v8214 = vadd.f32 0.0, %v8213
      %v8215 = vpop.f32.mrf.mxu0
      %v8216 = vadd.f32 0.0, %v8215
      %8217 = vmatmul.bf16.gmra.mxu0 %v8194
      %v8218 = vpop.f32.mrf.mxu0
      %v8219 = vadd.f32 0.0, %v8218
      %v8220 = vpop.f32.mrf.mxu0
      %v8221 = vadd.f32 0.0, %v8220
      %8222 = vmatmul.bf16.gmra.mxu0 %v8197
      %v8223 = vpop.f32.mrf.mxu0
      %v8224 = vadd.f32 0.0, %v8223
      %v8225 = vpop.f32.mrf.mxu0
      %v8226 = vadd.f32 0.0, %v8225
      %8227 = vdwg.mxu0
      %v8228 = vadd.f32 %v8150, %v8209
      %v8229 = vadd.f32 %v8151, %v8211
      %v8230 = vadd.f32 %v8152, %v8214
      %v8231 = vadd.f32 %v8153, %v8216
      %v8232 = vadd.f32 %v8154, %v8219
      %v8233 = vadd.f32 %v8155, %v8221
      %v8234 = vadd.f32 %v8156, %v8224
      %v8235 = vadd.f32 %v8157, %v8226
      %v8236 = vld [vmem:[%s7923 + $0x4] sm:$0xff]
      %v8237 = vld [vmem:[%s7923 + $0x14] sm:$0xff]
      %v8238 = vld [vmem:[%s7923 + $0x24] sm:$0xff]
      %v8239 = vld [vmem:[%s7923 + $0x34] sm:$0xff]
      %v8240 = vld [vmem:[%s7923 + $0x44] sm:$0xff]
      %v8241 = vld [vmem:[%s7923 + $0x54] sm:$0xff]
      %v8242 = vld [vmem:[%s7923 + $0x64] sm:$0xff]
      %v8243 = vld [vmem:[%s7923 + $0x74] sm:$0xff]
      %v8244 = vpack.c.bf16 %v8237, %v8236
      %v8245 = vpack.c.bf16 %v8239, %v8238
      %v8246 = vpack.c.bf16 %v8241, %v8240
      %v8247 = vpack.c.bf16 %v8243, %v8242
      %s8248 = scalar_lea.vmem %s5, 144
      %v8249 = vld [vmem:[%s8248] sm:$0xf]
      %v8250 = vld [vmem:[%s8248 + $0x4] sm:$0xf]
      %v8251 = vld [vmem:[%s8248 + $0x8] sm:$0xf]
      %v8252 = vld [vmem:[%s8248 + $0xc] sm:$0xf]
      %v8257 = vunpack.c.l.b16 %v8249
      %v8258 = vunpack.c.l.b16 %v8250
      %v8259 = vunpack.c.l.b16 %v8251
      %v8260 = vunpack.c.l.b16 %v8252
      %v8261 = vpack.c.b16 %v8258, %v8257
      %v8262 = vpack.c.b16 %v8260, %v8259
      %v8266 = vsel %vm1305, %v8244, 0
      %v8269 = vsel %vm1305, %v8245, 0
      %v8272 = vsel %vm1305, %v8246, 0
      %v8275 = vsel %vm1305, %v8247, 0
      %8277 = vmatpush.bf16.msra.mxu0 0
      %8278 = vmatpush.bf16.msra.mxu0 0
      %8279 = vmatpush.bf16.msra.mxu0 0
      %8280 = vmatpush.bf16.msra.mxu0 0
      %8281 = vmatpush.bf16.msra.mxu0 0
      %8282 = vmatpush.bf16.msra.mxu0 0
      %8283 = vmatpush.bf16.msra.mxu0 %v8262
      %8284 = vmatpush.bf16.msra.mxu0 %v8261
      %8285 = vmatmul.bf16.gmra.mxu0 %v8266
      %v8286 = vpop.f32.mrf.mxu0
      %v8287 = vadd.f32 0.0, %v8286
      %v8288 = vpop.f32.mrf.mxu0
      %v8289 = vadd.f32 0.0, %v8288
      %8290 = vmatmul.bf16.gmra.mxu0 %v8269
      %v8291 = vpop.f32.mrf.mxu0
      %v8292 = vadd.f32 0.0, %v8291
      %v8293 = vpop.f32.mrf.mxu0
      %v8294 = vadd.f32 0.0, %v8293
      %8295 = vmatmul.bf16.gmra.mxu0 %v8272
      %v8296 = vpop.f32.mrf.mxu0
      %v8297 = vadd.f32 0.0, %v8296
      %v8298 = vpop.f32.mrf.mxu0
      %v8299 = vadd.f32 0.0, %v8298
      %8300 = vmatmul.bf16.gmra.mxu0 %v8275
      %v8301 = vpop.f32.mrf.mxu0
      %v8302 = vadd.f32 0.0, %v8301
      %v8303 = vpop.f32.mrf.mxu0
      %v8304 = vadd.f32 0.0, %v8303
      %8305 = vdwg.mxu0
      %v8306 = vadd.f32 %v8228, %v8287
      %v8307 = vadd.f32 %v8229, %v8289
      %v8308 = vadd.f32 %v8230, %v8292
      %v8309 = vadd.f32 %v8231, %v8294
      %v8310 = vadd.f32 %v8232, %v8297
      %v8311 = vadd.f32 %v8233, %v8299
      %v8312 = vadd.f32 %v8234, %v8302
      %v8313 = vadd.f32 %v8235, %v8304
      %v8314 = vld [vmem:[%s7541] sm:$0xff]
      %v8315 = vld [vmem:[%s7541 + $0x10] sm:$0xff]
      %v8316 = vld [vmem:[%s7541 + $0x20] sm:$0xff]
      %v8317 = vld [vmem:[%s7541 + $0x30] sm:$0xff]
      %v8318 = vld [vmem:[%s7541 + $0x40] sm:$0xff]
      %v8319 = vld [vmem:[%s7541 + $0x50] sm:$0xff]
      %v8320 = vld [vmem:[%s7541 + $0x60] sm:$0xff]
      %v8321 = vld [vmem:[%s7541 + $0x70] sm:$0xff]
      %v8322 = vpack.c.bf16 %v8315, %v8314
      %v8323 = vpack.c.bf16 %v8317, %v8316
      %v8324 = vpack.c.bf16 %v8319, %v8318
      %v8325 = vpack.c.bf16 %v8321, %v8320
      %s8326 = scalar_lea.vmem %s5, 160
      %v8327 = vld [vmem:[%s8326] sm:$0xf]
      %v8328 = vld [vmem:[%s8326 + $0x4] sm:$0xf]
      %v8329 = vld [vmem:[%s8326 + $0x8] sm:$0xf]
      %v8330 = vld [vmem:[%s8326 + $0xc] sm:$0xf]
      %v8335 = vunpack.c.l.b16 %v8327
      %v8336 = vunpack.c.l.b16 %v8328
      %v8337 = vunpack.c.l.b16 %v8329
      %v8338 = vunpack.c.l.b16 %v8330
      %v8339 = vpack.c.b16 %v8336, %v8335
      %v8340 = vpack.c.b16 %v8338, %v8337
      %v8344 = vsel %vm1305, %v8322, 0
      %v8347 = vsel %vm1305, %v8323, 0
      %v8350 = vsel %vm1305, %v8324, 0
      %v8353 = vsel %vm1305, %v8325, 0
      %8355 = vmatpush.bf16.msra.mxu0 0
      %8356 = vmatpush.bf16.msra.mxu0 0
      %8357 = vmatpush.bf16.msra.mxu0 0
      %8358 = vmatpush.bf16.msra.mxu0 0
      %8359 = vmatpush.bf16.msra.mxu0 0
      %8360 = vmatpush.bf16.msra.mxu0 0
      %8361 = vmatpush.bf16.msra.mxu0 %v8340
      %8362 = vmatpush.bf16.msra.mxu0 %v8339
      %8363 = vmatmul.bf16.gmra.mxu0 %v8344
      %v8364 = vpop.f32.mrf.mxu0
      %v8365 = vadd.f32 0.0, %v8364
      %v8366 = vpop.f32.mrf.mxu0
      %v8367 = vadd.f32 0.0, %v8366
      %8368 = vmatmul.bf16.gmra.mxu0 %v8347
      %v8369 = vpop.f32.mrf.mxu0
      %v8370 = vadd.f32 0.0, %v8369
      %v8371 = vpop.f32.mrf.mxu0
      %v8372 = vadd.f32 0.0, %v8371
      %8373 = vmatmul.bf16.gmra.mxu0 %v8350
      %v8374 = vpop.f32.mrf.mxu0
      %v8375 = vadd.f32 0.0, %v8374
      %v8376 = vpop.f32.mrf.mxu0
      %v8377 = vadd.f32 0.0, %v8376
      %8378 = vmatmul.bf16.gmra.mxu0 %v8353
      %v8379 = vpop.f32.mrf.mxu0
      %v8380 = vadd.f32 0.0, %v8379
      %v8381 = vpop.f32.mrf.mxu0
      %v8382 = vadd.f32 0.0, %v8381
      %8383 = vdwg.mxu0
      %v8384 = vadd.f32 %v8306, %v8365
      %v8385 = vadd.f32 %v8307, %v8367
      %v8386 = vadd.f32 %v8308, %v8370
      %v8387 = vadd.f32 %v8309, %v8372
      %v8388 = vadd.f32 %v8310, %v8375
      %v8389 = vadd.f32 %v8311, %v8377
      %v8390 = vadd.f32 %v8312, %v8380
      %v8391 = vadd.f32 %v8313, %v8382
      %v8392 = vld [vmem:[%s7541 + $0x1] sm:$0xff]
      %v8393 = vld [vmem:[%s7541 + $0x11] sm:$0xff]
      %v8394 = vld [vmem:[%s7541 + $0x21] sm:$0xff]
      %v8395 = vld [vmem:[%s7541 + $0x31] sm:$0xff]
      %v8396 = vld [vmem:[%s7541 + $0x41] sm:$0xff]
      %v8397 = vld [vmem:[%s7541 + $0x51] sm:$0xff]
      %v8398 = vld [vmem:[%s7541 + $0x61] sm:$0xff]
      %v8399 = vld [vmem:[%s7541 + $0x71] sm:$0xff]
      %v8400 = vpack.c.bf16 %v8393, %v8392
      %v8401 = vpack.c.bf16 %v8395, %v8394
      %v8402 = vpack.c.bf16 %v8397, %v8396
      %v8403 = vpack.c.bf16 %v8399, %v8398
      %s8404 = scalar_lea.vmem %s5, 176
      %v8405 = vld [vmem:[%s8404] sm:$0xf]
      %v8406 = vld [vmem:[%s8404 + $0x4] sm:$0xf]
      %v8407 = vld [vmem:[%s8404 + $0x8] sm:$0xf]
      %v8408 = vld [vmem:[%s8404 + $0xc] sm:$0xf]
      %v8413 = vunpack.c.l.b16 %v8405
      %v8414 = vunpack.c.l.b16 %v8406
      %v8415 = vunpack.c.l.b16 %v8407
      %v8416 = vunpack.c.l.b16 %v8408
      %v8417 = vpack.c.b16 %v8414, %v8413
      %v8418 = vpack.c.b16 %v8416, %v8415
      %v8422 = vsel %vm1305, %v8400, 0
      %v8425 = vsel %vm1305, %v8401, 0
      %v8428 = vsel %vm1305, %v8402, 0
      %v8431 = vsel %vm1305, %v8403, 0
      %8433 = vmatpush.bf16.msra.mxu0 0
      %8434 = vmatpush.bf16.msra.mxu0 0
      %8435 = vmatpush.bf16.msra.mxu0 0
      %8436 = vmatpush.bf16.msra.mxu0 0
      %8437 = vmatpush.bf16.msra.mxu0 0
      %8438 = vmatpush.bf16.msra.mxu0 0
      %8439 = vmatpush.bf16.msra.mxu0 %v8418
      %8440 = vmatpush.bf16.msra.mxu0 %v8417
      %8441 = vmatmul.bf16.gmra.mxu0 %v8422
      %v8442 = vpop.f32.mrf.mxu0
      %v8443 = vadd.f32 0.0, %v8442
      %v8444 = vpop.f32.mrf.mxu0
      %v8445 = vadd.f32 0.0, %v8444
      %8446 = vmatmul.bf16.gmra.mxu0 %v8425
      %v8447 = vpop.f32.mrf.mxu0
      %v8448 = vadd.f32 0.0, %v8447
      %v8449 = vpop.f32.mrf.mxu0
      %v8450 = vadd.f32 0.0, %v8449
      %8451 = vmatmul.bf16.gmra.mxu0 %v8428
      %v8452 = vpop.f32.mrf.mxu0
      %v8453 = vadd.f32 0.0, %v8452
      %v8454 = vpop.f32.mrf.mxu0
      %v8455 = vadd.f32 0.0, %v8454
      %8456 = vmatmul.bf16.gmra.mxu0 %v8431
      %v8457 = vpop.f32.mrf.mxu0
      %v8458 = vadd.f32 0.0, %v8457
      %v8459 = vpop.f32.mrf.mxu0
      %v8460 = vadd.f32 0.0, %v8459
      %8461 = vdwg.mxu0
      %v8462 = vadd.f32 %v8384, %v8443
      %v8463 = vadd.f32 %v8385, %v8445
      %v8464 = vadd.f32 %v8386, %v8448
      %v8465 = vadd.f32 %v8387, %v8450
      %v8466 = vadd.f32 %v8388, %v8453
      %v8467 = vadd.f32 %v8389, %v8455
      %v8468 = vadd.f32 %v8390, %v8458
      %v8469 = vadd.f32 %v8391, %v8460
      %v8470 = vld [vmem:[%s7541 + $0x2] sm:$0xff]
      %v8471 = vld [vmem:[%s7541 + $0x12] sm:$0xff]
      %v8472 = vld [vmem:[%s7541 + $0x22] sm:$0xff]
      %v8473 = vld [vmem:[%s7541 + $0x32] sm:$0xff]
      %v8474 = vld [vmem:[%s7541 + $0x42] sm:$0xff]
      %v8475 = vld [vmem:[%s7541 + $0x52] sm:$0xff]
      %v8476 = vld [vmem:[%s7541 + $0x62] sm:$0xff]
      %v8477 = vld [vmem:[%s7541 + $0x72] sm:$0xff]
      %v8478 = vpack.c.bf16 %v8471, %v8470
      %v8479 = vpack.c.bf16 %v8473, %v8472
      %v8480 = vpack.c.bf16 %v8475, %v8474
      %v8481 = vpack.c.bf16 %v8477, %v8476
      %s8482 = scalar_lea.vmem %s5, 192
      %v8483 = vld [vmem:[%s8482] sm:$0xf]
      %v8484 = vld [vmem:[%s8482 + $0x4] sm:$0xf]
      %v8485 = vld [vmem:[%s8482 + $0x8] sm:$0xf]
      %v8486 = vld [vmem:[%s8482 + $0xc] sm:$0xf]
      %v8491 = vunpack.c.l.b16 %v8483
      %v8492 = vunpack.c.l.b16 %v8484
      %v8493 = vunpack.c.l.b16 %v8485
      %v8494 = vunpack.c.l.b16 %v8486
      %v8495 = vpack.c.b16 %v8492, %v8491
      %v8496 = vpack.c.b16 %v8494, %v8493
      %v8500 = vsel %vm1305, %v8478, 0
      %v8503 = vsel %vm1305, %v8479, 0
      %v8506 = vsel %vm1305, %v8480, 0
      %v8509 = vsel %vm1305, %v8481, 0
      %8511 = vmatpush.bf16.msra.mxu0 0
      %8512 = vmatpush.bf16.msra.mxu0 0
      %8513 = vmatpush.bf16.msra.mxu0 0
      %8514 = vmatpush.bf16.msra.mxu0 0
      %8515 = vmatpush.bf16.msra.mxu0 0
      %8516 = vmatpush.bf16.msra.mxu0 0
      %8517 = vmatpush.bf16.msra.mxu0 %v8496
      %8518 = vmatpush.bf16.msra.mxu0 %v8495
      %8519 = vmatmul.bf16.gmra.mxu0 %v8500
      %v8520 = vpop.f32.mrf.mxu0
      %v8521 = vadd.f32 0.0, %v8520
      %v8522 = vpop.f32.mrf.mxu0
      %v8523 = vadd.f32 0.0, %v8522
      %8524 = vmatmul.bf16.gmra.mxu0 %v8503
      %v8525 = vpop.f32.mrf.mxu0
      %v8526 = vadd.f32 0.0, %v8525
      %v8527 = vpop.f32.mrf.mxu0
      %v8528 = vadd.f32 0.0, %v8527
      %8529 = vmatmul.bf16.gmra.mxu0 %v8506
      %v8530 = vpop.f32.mrf.mxu0
      %v8531 = vadd.f32 0.0, %v8530
      %v8532 = vpop.f32.mrf.mxu0
      %v8533 = vadd.f32 0.0, %v8532
      %8534 = vmatmul.bf16.gmra.mxu0 %v8509
      %v8535 = vpop.f32.mrf.mxu0
      %v8536 = vadd.f32 0.0, %v8535
      %v8537 = vpop.f32.mrf.mxu0
      %v8538 = vadd.f32 0.0, %v8537
      %8539 = vdwg.mxu0
      %v8540 = vadd.f32 %v8462, %v8521
      %v8541 = vadd.f32 %v8463, %v8523
      %v8542 = vadd.f32 %v8464, %v8526
      %v8543 = vadd.f32 %v8465, %v8528
      %v8544 = vadd.f32 %v8466, %v8531
      %v8545 = vadd.f32 %v8467, %v8533
      %v8546 = vadd.f32 %v8468, %v8536
      %v8547 = vadd.f32 %v8469, %v8538
      %v8548 = vld [vmem:[%s7541 + $0x3] sm:$0xff]
      %v8549 = vld [vmem:[%s7541 + $0x13] sm:$0xff]
      %v8550 = vld [vmem:[%s7541 + $0x23] sm:$0xff]
      %v8551 = vld [vmem:[%s7541 + $0x33] sm:$0xff]
      %v8552 = vld [vmem:[%s7541 + $0x43] sm:$0xff]
      %v8553 = vld [vmem:[%s7541 + $0x53] sm:$0xff]
      %v8554 = vld [vmem:[%s7541 + $0x63] sm:$0xff]
      %v8555 = vld [vmem:[%s7541 + $0x73] sm:$0xff]
      %v8556 = vpack.c.bf16 %v8549, %v8548
      %v8557 = vpack.c.bf16 %v8551, %v8550
      %v8558 = vpack.c.bf16 %v8553, %v8552
      %v8559 = vpack.c.bf16 %v8555, %v8554
      %s8560 = scalar_lea.vmem %s5, 208
      %v8561 = vld [vmem:[%s8560] sm:$0xf]
      %v8562 = vld [vmem:[%s8560 + $0x4] sm:$0xf]
      %v8563 = vld [vmem:[%s8560 + $0x8] sm:$0xf]
      %v8564 = vld [vmem:[%s8560 + $0xc] sm:$0xf]
      %v8569 = vunpack.c.l.b16 %v8561
      %v8570 = vunpack.c.l.b16 %v8562
      %v8571 = vunpack.c.l.b16 %v8563
      %v8572 = vunpack.c.l.b16 %v8564
      %v8573 = vpack.c.b16 %v8570, %v8569
      %v8574 = vpack.c.b16 %v8572, %v8571
      %v8578 = vsel %vm1305, %v8556, 0
      %v8581 = vsel %vm1305, %v8557, 0
      %v8584 = vsel %vm1305, %v8558, 0
      %v8587 = vsel %vm1305, %v8559, 0
      %8589 = vmatpush.bf16.msra.mxu0 0
      %8590 = vmatpush.bf16.msra.mxu0 0
      %8591 = vmatpush.bf16.msra.mxu0 0
      %8592 = vmatpush.bf16.msra.mxu0 0
      %8593 = vmatpush.bf16.msra.mxu0 0
      %8594 = vmatpush.bf16.msra.mxu0 0
      %8595 = vmatpush.bf16.msra.mxu0 %v8574
      %8596 = vmatpush.bf16.msra.mxu0 %v8573
      %8597 = vmatmul.bf16.gmra.mxu0 %v8578
      %v8598 = vpop.f32.mrf.mxu0
      %v8599 = vadd.f32 0.0, %v8598
      %v8600 = vpop.f32.mrf.mxu0
      %v8601 = vadd.f32 0.0, %v8600
      %8602 = vmatmul.bf16.gmra.mxu0 %v8581
      %v8603 = vpop.f32.mrf.mxu0
      %v8604 = vadd.f32 0.0, %v8603
      %v8605 = vpop.f32.mrf.mxu0
      %v8606 = vadd.f32 0.0, %v8605
      %8607 = vmatmul.bf16.gmra.mxu0 %v8584
      %v8608 = vpop.f32.mrf.mxu0
      %v8609 = vadd.f32 0.0, %v8608
      %v8610 = vpop.f32.mrf.mxu0
      %v8611 = vadd.f32 0.0, %v8610
      %8612 = vmatmul.bf16.gmra.mxu0 %v8587
      %v8613 = vpop.f32.mrf.mxu0
      %v8614 = vadd.f32 0.0, %v8613
      %v8615 = vpop.f32.mrf.mxu0
      %v8616 = vadd.f32 0.0, %v8615
      %8617 = vdwg.mxu0
      %v8618 = vadd.f32 %v8540, %v8599
      %v8619 = vadd.f32 %v8541, %v8601
      %v8620 = vadd.f32 %v8542, %v8604
      %v8621 = vadd.f32 %v8543, %v8606
      %v8622 = vadd.f32 %v8544, %v8609
      %v8623 = vadd.f32 %v8545, %v8611
      %v8624 = vadd.f32 %v8546, %v8614
      %v8625 = vadd.f32 %v8547, %v8616
      %v8626 = vld [vmem:[%s7541 + $0x4] sm:$0xff]
      %v8627 = vld [vmem:[%s7541 + $0x14] sm:$0xff]
      %v8628 = vld [vmem:[%s7541 + $0x24] sm:$0xff]
      %v8629 = vld [vmem:[%s7541 + $0x34] sm:$0xff]
      %v8630 = vld [vmem:[%s7541 + $0x44] sm:$0xff]
      %v8631 = vld [vmem:[%s7541 + $0x54] sm:$0xff]
      %v8632 = vld [vmem:[%s7541 + $0x64] sm:$0xff]
      %v8633 = vld [vmem:[%s7541 + $0x74] sm:$0xff]
      %v8634 = vpack.c.bf16 %v8627, %v8626
      %v8635 = vpack.c.bf16 %v8629, %v8628
      %v8636 = vpack.c.bf16 %v8631, %v8630
      %v8637 = vpack.c.bf16 %v8633, %v8632
      %s8638 = scalar_lea.vmem %s5, 224
      %v8639 = vld [vmem:[%s8638] sm:$0xf]
      %v8640 = vld [vmem:[%s8638 + $0x4] sm:$0xf]
      %v8641 = vld [vmem:[%s8638 + $0x8] sm:$0xf]
      %v8642 = vld [vmem:[%s8638 + $0xc] sm:$0xf]
      %v8647 = vunpack.c.l.b16 %v8639
      %v8648 = vunpack.c.l.b16 %v8640
      %v8649 = vunpack.c.l.b16 %v8641
      %v8650 = vunpack.c.l.b16 %v8642
      %v8651 = vpack.c.b16 %v8648, %v8647
      %v8652 = vpack.c.b16 %v8650, %v8649
      %v8656 = vsel %vm1305, %v8634, 0
      %v8659 = vsel %vm1305, %v8635, 0
      %v8662 = vsel %vm1305, %v8636, 0
      %v8665 = vsel %vm1305, %v8637, 0
      %8667 = vmatpush.bf16.msra.mxu0 0
      %8668 = vmatpush.bf16.msra.mxu0 0
      %8669 = vmatpush.bf16.msra.mxu0 0
      %8670 = vmatpush.bf16.msra.mxu0 0
      %8671 = vmatpush.bf16.msra.mxu0 0
      %8672 = vmatpush.bf16.msra.mxu0 0
      %8673 = vmatpush.bf16.msra.mxu0 %v8652
      %8674 = vmatpush.bf16.msra.mxu0 %v8651
      %8675 = vmatmul.bf16.gmra.mxu0 %v8656
      %v8676 = vpop.f32.mrf.mxu0
      %v8677 = vadd.f32 0.0, %v8676
      %v8678 = vpop.f32.mrf.mxu0
      %v8679 = vadd.f32 0.0, %v8678
      %8680 = vmatmul.bf16.gmra.mxu0 %v8659
      %v8681 = vpop.f32.mrf.mxu0
      %v8682 = vadd.f32 0.0, %v8681
      %v8683 = vpop.f32.mrf.mxu0
      %v8684 = vadd.f32 0.0, %v8683
      %8685 = vmatmul.bf16.gmra.mxu0 %v8662
      %v8686 = vpop.f32.mrf.mxu0
      %v8687 = vadd.f32 0.0, %v8686
      %v8688 = vpop.f32.mrf.mxu0
      %v8689 = vadd.f32 0.0, %v8688
      %8690 = vmatmul.bf16.gmra.mxu0 %v8665
      %v8691 = vpop.f32.mrf.mxu0
      %v8692 = vadd.f32 0.0, %v8691
      %v8693 = vpop.f32.mrf.mxu0
      %v8694 = vadd.f32 0.0, %v8693
      %8695 = vdwg.mxu0
      %v8696 = vadd.f32 %v8618, %v8677
      %v8697 = vadd.f32 %v8619, %v8679
      %v8698 = vadd.f32 %v8620, %v8682
      %v8699 = vadd.f32 %v8621, %v8684
      %v8700 = vadd.f32 %v8622, %v8687
      %v8701 = vadd.f32 %v8623, %v8689
      %v8702 = vadd.f32 %v8624, %v8692
      %v8703 = vadd.f32 %v8625, %v8694
      %s8704 = scalar_lea.vmem [#allocation3], 48
      %v8705 = vld [vmem:[%s8704] sm:$0xff]
      %v8706 = vld [vmem:[%s8704 + $0x10] sm:$0xff]
      %v8707 = vld [vmem:[%s8704 + $0x20] sm:$0xff]
      %v8708 = vld [vmem:[%s8704 + $0x30] sm:$0xff]
      %v8709 = vld [vmem:[%s8704 + $0x40] sm:$0xff]
      %v8710 = vld [vmem:[%s8704 + $0x50] sm:$0xff]
      %v8711 = vld [vmem:[%s8704 + $0x60] sm:$0xff]
      %v8712 = vld [vmem:[%s8704 + $0x70] sm:$0xff]
      %v8713 = vpack.c.bf16 %v8706, %v8705
      %v8714 = vpack.c.bf16 %v8708, %v8707
      %v8715 = vpack.c.bf16 %v8710, %v8709
      %v8716 = vpack.c.bf16 %v8712, %v8711
      %s8717 = scalar_lea.vmem %s5, 240
      %v8718 = vld [vmem:[%s8717] sm:$0xf]
      %v8719 = vld [vmem:[%s8717 + $0x4] sm:$0xf]
      %v8720 = vld [vmem:[%s8717 + $0x8] sm:$0xf]
      %v8721 = vld [vmem:[%s8717 + $0xc] sm:$0xf]
      %v8726 = vunpack.c.l.b16 %v8718
      %v8727 = vunpack.c.l.b16 %v8719
      %v8728 = vunpack.c.l.b16 %v8720
      %v8729 = vunpack.c.l.b16 %v8721
      %v8730 = vpack.c.b16 %v8727, %v8726
      %v8731 = vpack.c.b16 %v8729, %v8728
      %v8735 = vsel %vm1305, %v8713, 0
      %v8738 = vsel %vm1305, %v8714, 0
      %v8741 = vsel %vm1305, %v8715, 0
      %v8744 = vsel %vm1305, %v8716, 0
      %8746 = vmatpush.bf16.msra.mxu0 0
      %8747 = vmatpush.bf16.msra.mxu0 0
      %8748 = vmatpush.bf16.msra.mxu0 0
      %8749 = vmatpush.bf16.msra.mxu0 0
      %8750 = vmatpush.bf16.msra.mxu0 0
      %8751 = vmatpush.bf16.msra.mxu0 0
      %8752 = vmatpush.bf16.msra.mxu0 %v8731
      %8753 = vmatpush.bf16.msra.mxu0 %v8730
      %8754 = vmatmul.bf16.gmra.mxu0 %v8735
      %v8755 = vpop.f32.mrf.mxu0
      %v8756 = vadd.f32 0.0, %v8755
      %v8757 = vpop.f32.mrf.mxu0
      %v8758 = vadd.f32 0.0, %v8757
      %8759 = vmatmul.bf16.gmra.mxu0 %v8738
      %v8760 = vpop.f32.mrf.mxu0
      %v8761 = vadd.f32 0.0, %v8760
      %v8762 = vpop.f32.mrf.mxu0
      %v8763 = vadd.f32 0.0, %v8762
      %8764 = vmatmul.bf16.gmra.mxu0 %v8741
      %v8765 = vpop.f32.mrf.mxu0
      %v8766 = vadd.f32 0.0, %v8765
      %v8767 = vpop.f32.mrf.mxu0
      %v8768 = vadd.f32 0.0, %v8767
      %8769 = vmatmul.bf16.gmra.mxu0 %v8744
      %v8770 = vpop.f32.mrf.mxu0
      %v8771 = vadd.f32 0.0, %v8770
      %v8772 = vpop.f32.mrf.mxu0
      %v8773 = vadd.f32 0.0, %v8772
      %8774 = vdwg.mxu0
      %v8775 = vadd.f32 %v8696, %v8756
      %v8776 = vadd.f32 %v8697, %v8758
      %v8777 = vadd.f32 %v8698, %v8761
      %v8778 = vadd.f32 %v8699, %v8763
      %v8779 = vadd.f32 %v8700, %v8766
      %v8780 = vadd.f32 %v8701, %v8768
      %v8781 = vadd.f32 %v8702, %v8771
      %v8782 = vadd.f32 %v8703, %v8773
      %v8783 = vld [vmem:[%s8704 + $0x1] sm:$0xff]
      %v8784 = vld [vmem:[%s8704 + $0x11] sm:$0xff]
      %v8785 = vld [vmem:[%s8704 + $0x21] sm:$0xff]
      %v8786 = vld [vmem:[%s8704 + $0x31] sm:$0xff]
      %v8787 = vld [vmem:[%s8704 + $0x41] sm:$0xff]
      %v8788 = vld [vmem:[%s8704 + $0x51] sm:$0xff]
      %v8789 = vld [vmem:[%s8704 + $0x61] sm:$0xff]
      %v8790 = vld [vmem:[%s8704 + $0x71] sm:$0xff]
      %v8791 = vpack.c.bf16 %v8784, %v8783
      %v8792 = vpack.c.bf16 %v8786, %v8785
      %v8793 = vpack.c.bf16 %v8788, %v8787
      %v8794 = vpack.c.bf16 %v8790, %v8789
      %s8795 = scalar_lea.vmem %s5, 256
      %v8796 = vld [vmem:[%s8795] sm:$0xf]
      %v8797 = vld [vmem:[%s8795 + $0x4] sm:$0xf]
      %v8798 = vld [vmem:[%s8795 + $0x8] sm:$0xf]
      %v8799 = vld [vmem:[%s8795 + $0xc] sm:$0xf]
      %v8804 = vunpack.c.l.b16 %v8796
      %v8805 = vunpack.c.l.b16 %v8797
      %v8806 = vunpack.c.l.b16 %v8798
      %v8807 = vunpack.c.l.b16 %v8799
      %v8808 = vpack.c.b16 %v8805, %v8804
      %v8809 = vpack.c.b16 %v8807, %v8806
      %v8813 = vsel %vm1305, %v8791, 0
      %v8816 = vsel %vm1305, %v8792, 0
      %v8819 = vsel %vm1305, %v8793, 0
      %v8822 = vsel %vm1305, %v8794, 0
      %8824 = vmatpush.bf16.msra.mxu0 0
      %8825 = vmatpush.bf16.msra.mxu0 0
      %8826 = vmatpush.bf16.msra.mxu0 0
      %8827 = vmatpush.bf16.msra.mxu0 0
      %8828 = vmatpush.bf16.msra.mxu0 0
      %8829 = vmatpush.bf16.msra.mxu0 0
      %8830 = vmatpush.bf16.msra.mxu0 %v8809
      %8831 = vmatpush.bf16.msra.mxu0 %v8808
      %8832 = vmatmul.bf16.gmra.mxu0 %v8813
      %v8833 = vpop.f32.mrf.mxu0
      %v8834 = vadd.f32 0.0, %v8833
      %v8835 = vpop.f32.mrf.mxu0
      %v8836 = vadd.f32 0.0, %v8835
      %8837 = vmatmul.bf16.gmra.mxu0 %v8816
      %v8838 = vpop.f32.mrf.mxu0
      %v8839 = vadd.f32 0.0, %v8838
      %v8840 = vpop.f32.mrf.mxu0
      %v8841 = vadd.f32 0.0, %v8840
      %8842 = vmatmul.bf16.gmra.mxu0 %v8819
      %v8843 = vpop.f32.mrf.mxu0
      %v8844 = vadd.f32 0.0, %v8843
      %v8845 = vpop.f32.mrf.mxu0
      %v8846 = vadd.f32 0.0, %v8845
      %8847 = vmatmul.bf16.gmra.mxu0 %v8822
      %v8848 = vpop.f32.mrf.mxu0
      %v8849 = vadd.f32 0.0, %v8848
      %v8850 = vpop.f32.mrf.mxu0
      %v8851 = vadd.f32 0.0, %v8850
      %8852 = vdwg.mxu0
      %v8853 = vadd.f32 %v8775, %v8834
      %v8854 = vadd.f32 %v8776, %v8836
      %v8855 = vadd.f32 %v8777, %v8839
      %v8856 = vadd.f32 %v8778, %v8841
      %v8857 = vadd.f32 %v8779, %v8844
      %v8858 = vadd.f32 %v8780, %v8846
      %v8859 = vadd.f32 %v8781, %v8849
      %v8860 = vadd.f32 %v8782, %v8851
      %v8861 = vld [vmem:[%s8704 + $0x2] sm:$0xff]
      %v8862 = vld [vmem:[%s8704 + $0x12] sm:$0xff]
      %v8863 = vld [vmem:[%s8704 + $0x22] sm:$0xff]
      %v8864 = vld [vmem:[%s8704 + $0x32] sm:$0xff]
      %v8865 = vld [vmem:[%s8704 + $0x42] sm:$0xff]
      %v8866 = vld [vmem:[%s8704 + $0x52] sm:$0xff]
      %v8867 = vld [vmem:[%s8704 + $0x62] sm:$0xff]
      %v8868 = vld [vmem:[%s8704 + $0x72] sm:$0xff]
      %v8869 = vpack.c.bf16 %v8862, %v8861
      %v8870 = vpack.c.bf16 %v8864, %v8863
      %v8871 = vpack.c.bf16 %v8866, %v8865
      %v8872 = vpack.c.bf16 %v8868, %v8867
      %s8873 = scalar_lea.vmem %s5, 272
      %v8874 = vld [vmem:[%s8873] sm:$0xf]
      %v8875 = vld [vmem:[%s8873 + $0x4] sm:$0xf]
      %v8876 = vld [vmem:[%s8873 + $0x8] sm:$0xf]
      %v8877 = vld [vmem:[%s8873 + $0xc] sm:$0xf]
      %v8882 = vunpack.c.l.b16 %v8874
      %v8883 = vunpack.c.l.b16 %v8875
      %v8884 = vunpack.c.l.b16 %v8876
      %v8885 = vunpack.c.l.b16 %v8877
      %v8886 = vpack.c.b16 %v8883, %v8882
      %v8887 = vpack.c.b16 %v8885, %v8884
      %v8891 = vsel %vm1305, %v8869, 0
      %v8894 = vsel %vm1305, %v8870, 0
      %v8897 = vsel %vm1305, %v8871, 0
      %v8900 = vsel %vm1305, %v8872, 0
      %8902 = vmatpush.bf16.msra.mxu0 0
      %8903 = vmatpush.bf16.msra.mxu0 0
      %8904 = vmatpush.bf16.msra.mxu0 0
      %8905 = vmatpush.bf16.msra.mxu0 0
      %8906 = vmatpush.bf16.msra.mxu0 0
      %8907 = vmatpush.bf16.msra.mxu0 0
      %8908 = vmatpush.bf16.msra.mxu0 %v8887
      %8909 = vmatpush.bf16.msra.mxu0 %v8886
      %8910 = vmatmul.bf16.gmra.mxu0 %v8891
      %v8911 = vpop.f32.mrf.mxu0
      %v8912 = vadd.f32 0.0, %v8911
      %v8913 = vpop.f32.mrf.mxu0
      %v8914 = vadd.f32 0.0, %v8913
      %8915 = vmatmul.bf16.gmra.mxu0 %v8894
      %v8916 = vpop.f32.mrf.mxu0
      %v8917 = vadd.f32 0.0, %v8916
      %v8918 = vpop.f32.mrf.mxu0
      %v8919 = vadd.f32 0.0, %v8918
      %8920 = vmatmul.bf16.gmra.mxu0 %v8897
      %v8921 = vpop.f32.mrf.mxu0
      %v8922 = vadd.f32 0.0, %v8921
      %v8923 = vpop.f32.mrf.mxu0
      %v8924 = vadd.f32 0.0, %v8923
      %8925 = vmatmul.bf16.gmra.mxu0 %v8900
      %v8926 = vpop.f32.mrf.mxu0
      %v8927 = vadd.f32 0.0, %v8926
      %v8928 = vpop.f32.mrf.mxu0
      %v8929 = vadd.f32 0.0, %v8928
      %8930 = vdwg.mxu0
      %v8931 = vadd.f32 %v8853, %v8912
      %v8932 = vadd.f32 %v8854, %v8914
      %v8933 = vadd.f32 %v8855, %v8917
      %v8934 = vadd.f32 %v8856, %v8919
      %v8935 = vadd.f32 %v8857, %v8922
      %v8936 = vadd.f32 %v8858, %v8924
      %v8937 = vadd.f32 %v8859, %v8927
      %v8938 = vadd.f32 %v8860, %v8929
      %v8939 = vld [vmem:[%s8704 + $0x3] sm:$0xff]
      %v8940 = vld [vmem:[%s8704 + $0x13] sm:$0xff]
      %v8941 = vld [vmem:[%s8704 + $0x23] sm:$0xff]
      %v8942 = vld [vmem:[%s8704 + $0x33] sm:$0xff]
      %v8943 = vld [vmem:[%s8704 + $0x43] sm:$0xff]
      %v8944 = vld [vmem:[%s8704 + $0x53] sm:$0xff]
      %v8945 = vld [vmem:[%s8704 + $0x63] sm:$0xff]
      %v8946 = vld [vmem:[%s8704 + $0x73] sm:$0xff]
      %v8947 = vpack.c.bf16 %v8940, %v8939
      %v8948 = vpack.c.bf16 %v8942, %v8941
      %v8949 = vpack.c.bf16 %v8944, %v8943
      %v8950 = vpack.c.bf16 %v8946, %v8945
      %s8951 = scalar_lea.vmem %s5, 288
      %v8952 = vld [vmem:[%s8951] sm:$0xf]
      %v8953 = vld [vmem:[%s8951 + $0x4] sm:$0xf]
      %v8954 = vld [vmem:[%s8951 + $0x8] sm:$0xf]
      %v8955 = vld [vmem:[%s8951 + $0xc] sm:$0xf]
      %v8960 = vunpack.c.l.b16 %v8952
      %v8961 = vunpack.c.l.b16 %v8953
      %v8962 = vunpack.c.l.b16 %v8954
      %v8963 = vunpack.c.l.b16 %v8955
      %v8964 = vpack.c.b16 %v8961, %v8960
      %v8965 = vpack.c.b16 %v8963, %v8962
      %v8969 = vsel %vm1305, %v8947, 0
      %v8972 = vsel %vm1305, %v8948, 0
      %v8975 = vsel %vm1305, %v8949, 0
      %v8978 = vsel %vm1305, %v8950, 0
      %8980 = vmatpush.bf16.msra.mxu0 0
      %8981 = vmatpush.bf16.msra.mxu0 0
      %8982 = vmatpush.bf16.msra.mxu0 0
      %8983 = vmatpush.bf16.msra.mxu0 0
      %8984 = vmatpush.bf16.msra.mxu0 0
      %8985 = vmatpush.bf16.msra.mxu0 0
      %8986 = vmatpush.bf16.msra.mxu0 %v8965
      %8987 = vmatpush.bf16.msra.mxu0 %v8964
      %8988 = vmatmul.bf16.gmra.mxu0 %v8969
      %v8989 = vpop.f32.mrf.mxu0
      %v8990 = vadd.f32 0.0, %v8989
      %v8991 = vpop.f32.mrf.mxu0
      %v8992 = vadd.f32 0.0, %v8991
      %8993 = vmatmul.bf16.gmra.mxu0 %v8972
      %v8994 = vpop.f32.mrf.mxu0
      %v8995 = vadd.f32 0.0, %v8994
      %v8996 = vpop.f32.mrf.mxu0
      %v8997 = vadd.f32 0.0, %v8996
      %8998 = vmatmul.bf16.gmra.mxu0 %v8975
      %v8999 = vpop.f32.mrf.mxu0
      %v9000 = vadd.f32 0.0, %v8999
      %v9001 = vpop.f32.mrf.mxu0
      %v9002 = vadd.f32 0.0, %v9001
      %9003 = vmatmul.bf16.gmra.mxu0 %v8978
      %v9004 = vpop.f32.mrf.mxu0
      %v9005 = vadd.f32 0.0, %v9004
      %v9006 = vpop.f32.mrf.mxu0
      %v9007 = vadd.f32 0.0, %v9006
      %9008 = vdwg.mxu0
      %v9009 = vadd.f32 %v8931, %v8990
      %v9010 = vadd.f32 %v8932, %v8992
      %v9011 = vadd.f32 %v8933, %v8995
      %v9012 = vadd.f32 %v8934, %v8997
      %v9013 = vadd.f32 %v8935, %v9000
      %v9014 = vadd.f32 %v8936, %v9002
      %v9015 = vadd.f32 %v8937, %v9005
      %v9016 = vadd.f32 %v8938, %v9007
      %v9017 = vld [vmem:[%s8704 + $0x4] sm:$0xff]
      %v9018 = vld [vmem:[%s8704 + $0x14] sm:$0xff]
      %v9019 = vld [vmem:[%s8704 + $0x24] sm:$0xff]
      %v9020 = vld [vmem:[%s8704 + $0x34] sm:$0xff]
      %v9021 = vld [vmem:[%s8704 + $0x44] sm:$0xff]
      %v9022 = vld [vmem:[%s8704 + $0x54] sm:$0xff]
      %v9023 = vld [vmem:[%s8704 + $0x64] sm:$0xff]
      %v9024 = vld [vmem:[%s8704 + $0x74] sm:$0xff]
      %v9025 = vpack.c.bf16 %v9018, %v9017
      %v9026 = vpack.c.bf16 %v9020, %v9019
      %v9027 = vpack.c.bf16 %v9022, %v9021
      %v9028 = vpack.c.bf16 %v9024, %v9023
      %s9029 = scalar_lea.vmem %s5, 304
      %v9030 = vld [vmem:[%s9029] sm:$0xf]
      %v9031 = vld [vmem:[%s9029 + $0x4] sm:$0xf]
      %v9032 = vld [vmem:[%s9029 + $0x8] sm:$0xf]
      %v9033 = vld [vmem:[%s9029 + $0xc] sm:$0xf]
      %v9038 = vunpack.c.l.b16 %v9030
      %v9039 = vunpack.c.l.b16 %v9031
      %v9040 = vunpack.c.l.b16 %v9032
      %v9041 = vunpack.c.l.b16 %v9033
      %v9042 = vpack.c.b16 %v9039, %v9038
      %v9043 = vpack.c.b16 %v9041, %v9040
      %v9047 = vsel %vm1305, %v9025, 0
      %v9050 = vsel %vm1305, %v9026, 0
      %v9053 = vsel %vm1305, %v9027, 0
      %v9056 = vsel %vm1305, %v9028, 0
      %9058 = vmatpush.bf16.msra.mxu0 0
      %9059 = vmatpush.bf16.msra.mxu0 0
      %9060 = vmatpush.bf16.msra.mxu0 0
      %9061 = vmatpush.bf16.msra.mxu0 0
      %9062 = vmatpush.bf16.msra.mxu0 0
      %9063 = vmatpush.bf16.msra.mxu0 0
      %9064 = vmatpush.bf16.msra.mxu0 %v9043
      %9065 = vmatpush.bf16.msra.mxu0 %v9042
      %9066 = vmatmul.bf16.gmra.mxu0 %v9047
      %v9067 = vpop.f32.mrf.mxu0
      %v9068 = vadd.f32 0.0, %v9067
      %v9069 = vpop.f32.mrf.mxu0
      %v9070 = vadd.f32 0.0, %v9069
      %9071 = vmatmul.bf16.gmra.mxu0 %v9050
      %v9072 = vpop.f32.mrf.mxu0
      %v9073 = vadd.f32 0.0, %v9072
      %v9074 = vpop.f32.mrf.mxu0
      %v9075 = vadd.f32 0.0, %v9074
      %9076 = vmatmul.bf16.gmra.mxu0 %v9053
      %v9077 = vpop.f32.mrf.mxu0
      %v9078 = vadd.f32 0.0, %v9077
      %v9079 = vpop.f32.mrf.mxu0
      %v9080 = vadd.f32 0.0, %v9079
      %9081 = vmatmul.bf16.gmra.mxu0 %v9056
      %v9082 = vpop.f32.mrf.mxu0
      %v9083 = vadd.f32 0.0, %v9082
      %v9084 = vpop.f32.mrf.mxu0
      %v9085 = vadd.f32 0.0, %v9084
      %9086 = vdwg.mxu0
      %v9087 = vadd.f32 %v9009, %v9068
      %v9088 = vadd.f32 %v9010, %v9070
      %v9089 = vadd.f32 %v9011, %v9073
      %v9090 = vadd.f32 %v9012, %v9075
      %v9091 = vadd.f32 %v9013, %v9078
      %v9092 = vadd.f32 %v9014, %v9080
      %v9093 = vadd.f32 %v9015, %v9083
      %v9094 = vadd.f32 %v9016, %v9085
      %s9095 = scalar_lea.vmem [#allocation3], 64
      %v9096 = vld [vmem:[%s9095] sm:$0xff]
      %v9097 = vld [vmem:[%s9095 + $0x10] sm:$0xff]
      %v9098 = vld [vmem:[%s9095 + $0x20] sm:$0xff]
      %v9099 = vld [vmem:[%s9095 + $0x30] sm:$0xff]
      %v9100 = vld [vmem:[%s9095 + $0x40] sm:$0xff]
      %v9101 = vld [vmem:[%s9095 + $0x50] sm:$0xff]
      %v9102 = vld [vmem:[%s9095 + $0x60] sm:$0xff]
      %v9103 = vld [vmem:[%s9095 + $0x70] sm:$0xff]
      %v9104 = vpack.c.bf16 %v9097, %v9096
      %v9105 = vpack.c.bf16 %v9099, %v9098
      %v9106 = vpack.c.bf16 %v9101, %v9100
      %v9107 = vpack.c.bf16 %v9103, %v9102
      %s9108 = scalar_lea.vmem %s5, 320
      %v9109 = vld [vmem:[%s9108] sm:$0xf]
      %v9110 = vld [vmem:[%s9108 + $0x4] sm:$0xf]
      %v9111 = vld [vmem:[%s9108 + $0x8] sm:$0xf]
      %v9112 = vld [vmem:[%s9108 + $0xc] sm:$0xf]
      %v9117 = vunpack.c.l.b16 %v9109
      %v9118 = vunpack.c.l.b16 %v9110
      %v9119 = vunpack.c.l.b16 %v9111
      %v9120 = vunpack.c.l.b16 %v9112
      %v9121 = vpack.c.b16 %v9118, %v9117
      %v9122 = vpack.c.b16 %v9120, %v9119
      %v9126 = vsel %vm1305, %v9104, 0
      %v9129 = vsel %vm1305, %v9105, 0
      %v9132 = vsel %vm1305, %v9106, 0
      %v9135 = vsel %vm1305, %v9107, 0
      %9137 = vmatpush.bf16.msra.mxu0 0
      %9138 = vmatpush.bf16.msra.mxu0 0
      %9139 = vmatpush.bf16.msra.mxu0 0
      %9140 = vmatpush.bf16.msra.mxu0 0
      %9141 = vmatpush.bf16.msra.mxu0 0
      %9142 = vmatpush.bf16.msra.mxu0 0
      %9143 = vmatpush.bf16.msra.mxu0 %v9122
      %9144 = vmatpush.bf16.msra.mxu0 %v9121
      %9145 = vmatmul.bf16.gmra.mxu0 %v9126
      %v9146 = vpop.f32.mrf.mxu0
      %v9147 = vadd.f32 0.0, %v9146
      %v9148 = vpop.f32.mrf.mxu0
      %v9149 = vadd.f32 0.0, %v9148
      %9150 = vmatmul.bf16.gmra.mxu0 %v9129
      %v9151 = vpop.f32.mrf.mxu0
      %v9152 = vadd.f32 0.0, %v9151
      %v9153 = vpop.f32.mrf.mxu0
      %v9154 = vadd.f32 0.0, %v9153
      %9155 = vmatmul.bf16.gmra.mxu0 %v9132
      %v9156 = vpop.f32.mrf.mxu0
      %v9157 = vadd.f32 0.0, %v9156
      %v9158 = vpop.f32.mrf.mxu0
      %v9159 = vadd.f32 0.0, %v9158
      %9160 = vmatmul.bf16.gmra.mxu0 %v9135
      %v9161 = vpop.f32.mrf.mxu0
      %v9162 = vadd.f32 0.0, %v9161
      %v9163 = vpop.f32.mrf.mxu0
      %v9164 = vadd.f32 0.0, %v9163
      %9165 = vdwg.mxu0
      %v9166 = vadd.f32 %v9087, %v9147
      %v9167 = vadd.f32 %v9088, %v9149
      %v9168 = vadd.f32 %v9089, %v9152
      %v9169 = vadd.f32 %v9090, %v9154
      %v9170 = vadd.f32 %v9091, %v9157
      %v9171 = vadd.f32 %v9092, %v9159
      %v9172 = vadd.f32 %v9093, %v9162
      %v9173 = vadd.f32 %v9094, %v9164
      %v9174 = vld [vmem:[%s9095 + $0x1] sm:$0xff]
      %v9175 = vld [vmem:[%s9095 + $0x11] sm:$0xff]
      %v9176 = vld [vmem:[%s9095 + $0x21] sm:$0xff]
      %v9177 = vld [vmem:[%s9095 + $0x31] sm:$0xff]
      %v9178 = vld [vmem:[%s9095 + $0x41] sm:$0xff]
      %v9179 = vld [vmem:[%s9095 + $0x51] sm:$0xff]
      %v9180 = vld [vmem:[%s9095 + $0x61] sm:$0xff]
      %v9181 = vld [vmem:[%s9095 + $0x71] sm:$0xff]
      %v9182 = vpack.c.bf16 %v9175, %v9174
      %v9183 = vpack.c.bf16 %v9177, %v9176
      %v9184 = vpack.c.bf16 %v9179, %v9178
      %v9185 = vpack.c.bf16 %v9181, %v9180
      %s9186 = scalar_lea.vmem %s5, 336
      %v9187 = vld [vmem:[%s9186] sm:$0xf]
      %v9188 = vld [vmem:[%s9186 + $0x4] sm:$0xf]
      %v9189 = vld [vmem:[%s9186 + $0x8] sm:$0xf]
      %v9190 = vld [vmem:[%s9186 + $0xc] sm:$0xf]
      %v9195 = vunpack.c.l.b16 %v9187
      %v9196 = vunpack.c.l.b16 %v9188
      %v9197 = vunpack.c.l.b16 %v9189
      %v9198 = vunpack.c.l.b16 %v9190
      %v9199 = vpack.c.b16 %v9196, %v9195
      %v9200 = vpack.c.b16 %v9198, %v9197
      %v9204 = vsel %vm1305, %v9182, 0
      %v9207 = vsel %vm1305, %v9183, 0
      %v9210 = vsel %vm1305, %v9184, 0
      %v9213 = vsel %vm1305, %v9185, 0
      %9215 = vmatpush.bf16.msra.mxu0 0
      %9216 = vmatpush.bf16.msra.mxu0 0
      %9217 = vmatpush.bf16.msra.mxu0 0
      %9218 = vmatpush.bf16.msra.mxu0 0
      %9219 = vmatpush.bf16.msra.mxu0 0
      %9220 = vmatpush.bf16.msra.mxu0 0
      %9221 = vmatpush.bf16.msra.mxu0 %v9200
      %9222 = vmatpush.bf16.msra.mxu0 %v9199
      %9223 = vmatmul.bf16.gmra.mxu0 %v9204
      %v9224 = vpop.f32.mrf.mxu0
      %v9225 = vadd.f32 0.0, %v9224
      %v9226 = vpop.f32.mrf.mxu0
      %v9227 = vadd.f32 0.0, %v9226
      %9228 = vmatmul.bf16.gmra.mxu0 %v9207
      %v9229 = vpop.f32.mrf.mxu0
      %v9230 = vadd.f32 0.0, %v9229
      %v9231 = vpop.f32.mrf.mxu0
      %v9232 = vadd.f32 0.0, %v9231
      %9233 = vmatmul.bf16.gmra.mxu0 %v9210
      %v9234 = vpop.f32.mrf.mxu0
      %v9235 = vadd.f32 0.0, %v9234
      %v9236 = vpop.f32.mrf.mxu0
      %v9237 = vadd.f32 0.0, %v9236
      %9238 = vmatmul.bf16.gmra.mxu0 %v9213
      %v9239 = vpop.f32.mrf.mxu0
      %v9240 = vadd.f32 0.0, %v9239
      %v9241 = vpop.f32.mrf.mxu0
      %v9242 = vadd.f32 0.0, %v9241
      %9243 = vdwg.mxu0
      %v9244 = vadd.f32 %v9166, %v9225
      %v9245 = vadd.f32 %v9167, %v9227
      %v9246 = vadd.f32 %v9168, %v9230
      %v9247 = vadd.f32 %v9169, %v9232
      %v9248 = vadd.f32 %v9170, %v9235
      %v9249 = vadd.f32 %v9171, %v9237
      %v9250 = vadd.f32 %v9172, %v9240
      %v9251 = vadd.f32 %v9173, %v9242
      %v9252 = vld [vmem:[%s9095 + $0x2] sm:$0xff]
      %v9253 = vld [vmem:[%s9095 + $0x12] sm:$0xff]
      %v9254 = vld [vmem:[%s9095 + $0x22] sm:$0xff]
      %v9255 = vld [vmem:[%s9095 + $0x32] sm:$0xff]
      %v9256 = vld [vmem:[%s9095 + $0x42] sm:$0xff]
      %v9257 = vld [vmem:[%s9095 + $0x52] sm:$0xff]
      %v9258 = vld [vmem:[%s9095 + $0x62] sm:$0xff]
      %v9259 = vld [vmem:[%s9095 + $0x72] sm:$0xff]
      %v9260 = vpack.c.bf16 %v9253, %v9252
      %v9261 = vpack.c.bf16 %v9255, %v9254
      %v9262 = vpack.c.bf16 %v9257, %v9256
      %v9263 = vpack.c.bf16 %v9259, %v9258
      %s9264 = scalar_lea.vmem %s5, 352
      %v9265 = vld [vmem:[%s9264] sm:$0xf]
      %v9266 = vld [vmem:[%s9264 + $0x4] sm:$0xf]
      %v9267 = vld [vmem:[%s9264 + $0x8] sm:$0xf]
      %v9268 = vld [vmem:[%s9264 + $0xc] sm:$0xf]
      %v9273 = vunpack.c.l.b16 %v9265
      %v9274 = vunpack.c.l.b16 %v9266
      %v9275 = vunpack.c.l.b16 %v9267
      %v9276 = vunpack.c.l.b16 %v9268
      %v9277 = vpack.c.b16 %v9274, %v9273
      %v9278 = vpack.c.b16 %v9276, %v9275
      %v9282 = vsel %vm1305, %v9260, 0
      %v9285 = vsel %vm1305, %v9261, 0
      %v9288 = vsel %vm1305, %v9262, 0
      %v9291 = vsel %vm1305, %v9263, 0
      %9293 = vmatpush.bf16.msra.mxu0 0
      %9294 = vmatpush.bf16.msra.mxu0 0
      %9295 = vmatpush.bf16.msra.mxu0 0
      %9296 = vmatpush.bf16.msra.mxu0 0
      %9297 = vmatpush.bf16.msra.mxu0 0
      %9298 = vmatpush.bf16.msra.mxu0 0
      %9299 = vmatpush.bf16.msra.mxu0 %v9278
      %9300 = vmatpush.bf16.msra.mxu0 %v9277
      %9301 = vmatmul.bf16.gmra.mxu0 %v9282
      %v9302 = vpop.f32.mrf.mxu0
      %v9303 = vadd.f32 0.0, %v9302
      %v9304 = vpop.f32.mrf.mxu0
      %v9305 = vadd.f32 0.0, %v9304
      %9306 = vmatmul.bf16.gmra.mxu0 %v9285
      %v9307 = vpop.f32.mrf.mxu0
      %v9308 = vadd.f32 0.0, %v9307
      %v9309 = vpop.f32.mrf.mxu0
      %v9310 = vadd.f32 0.0, %v9309
      %9311 = vmatmul.bf16.gmra.mxu0 %v9288
      %v9312 = vpop.f32.mrf.mxu0
      %v9313 = vadd.f32 0.0, %v9312
      %v9314 = vpop.f32.mrf.mxu0
      %v9315 = vadd.f32 0.0, %v9314
      %9316 = vmatmul.bf16.gmra.mxu0 %v9291
      %v9317 = vpop.f32.mrf.mxu0
      %v9318 = vadd.f32 0.0, %v9317
      %v9319 = vpop.f32.mrf.mxu0
      %v9320 = vadd.f32 0.0, %v9319
      %9321 = vdwg.mxu0
      %v9322 = vadd.f32 %v9244, %v9303
      %v9323 = vadd.f32 %v9245, %v9305
      %v9324 = vadd.f32 %v9246, %v9308
      %v9325 = vadd.f32 %v9247, %v9310
      %v9326 = vadd.f32 %v9248, %v9313
      %v9327 = vadd.f32 %v9249, %v9315
      %v9328 = vadd.f32 %v9250, %v9318
      %v9329 = vadd.f32 %v9251, %v9320
      %v9330 = vld [vmem:[%s9095 + $0x3] sm:$0xff]
      %v9331 = vld [vmem:[%s9095 + $0x13] sm:$0xff]
      %v9332 = vld [vmem:[%s9095 + $0x23] sm:$0xff]
      %v9333 = vld [vmem:[%s9095 + $0x33] sm:$0xff]
      %v9334 = vld [vmem:[%s9095 + $0x43] sm:$0xff]
      %v9335 = vld [vmem:[%s9095 + $0x53] sm:$0xff]
      %v9336 = vld [vmem:[%s9095 + $0x63] sm:$0xff]
      %v9337 = vld [vmem:[%s9095 + $0x73] sm:$0xff]
      %v9338 = vpack.c.bf16 %v9331, %v9330
      %v9339 = vpack.c.bf16 %v9333, %v9332
      %v9340 = vpack.c.bf16 %v9335, %v9334
      %v9341 = vpack.c.bf16 %v9337, %v9336
      %s9342 = scalar_lea.vmem %s5, 368
      %v9343 = vld [vmem:[%s9342] sm:$0xf]
      %v9344 = vld [vmem:[%s9342 + $0x4] sm:$0xf]
      %v9345 = vld [vmem:[%s9342 + $0x8] sm:$0xf]
      %v9346 = vld [vmem:[%s9342 + $0xc] sm:$0xf]
      %v9351 = vunpack.c.l.b16 %v9343
      %v9352 = vunpack.c.l.b16 %v9344
      %v9353 = vunpack.c.l.b16 %v9345
      %v9354 = vunpack.c.l.b16 %v9346
      %v9355 = vpack.c.b16 %v9352, %v9351
      %v9356 = vpack.c.b16 %v9354, %v9353
      %v9360 = vsel %vm1305, %v9338, 0
      %v9363 = vsel %vm1305, %v9339, 0
      %v9366 = vsel %vm1305, %v9340, 0
      %v9369 = vsel %vm1305, %v9341, 0
      %9371 = vmatpush.bf16.msra.mxu0 0
      %9372 = vmatpush.bf16.msra.mxu0 0
      %9373 = vmatpush.bf16.msra.mxu0 0
      %9374 = vmatpush.bf16.msra.mxu0 0
      %9375 = vmatpush.bf16.msra.mxu0 0
      %9376 = vmatpush.bf16.msra.mxu0 0
      %9377 = vmatpush.bf16.msra.mxu0 %v9356
      %9378 = vmatpush.bf16.msra.mxu0 %v9355
      %9379 = vmatmul.bf16.gmra.mxu0 %v9360
      %v9380 = vpop.f32.mrf.mxu0
      %v9381 = vadd.f32 0.0, %v9380
      %v9382 = vpop.f32.mrf.mxu0
      %v9383 = vadd.f32 0.0, %v9382
      %9384 = vmatmul.bf16.gmra.mxu0 %v9363
      %v9385 = vpop.f32.mrf.mxu0
      %v9386 = vadd.f32 0.0, %v9385
      %v9387 = vpop.f32.mrf.mxu0
      %v9388 = vadd.f32 0.0, %v9387
      %9389 = vmatmul.bf16.gmra.mxu0 %v9366
      %v9390 = vpop.f32.mrf.mxu0
      %v9391 = vadd.f32 0.0, %v9390
      %v9392 = vpop.f32.mrf.mxu0
      %v9393 = vadd.f32 0.0, %v9392
      %9394 = vmatmul.bf16.gmra.mxu0 %v9369
      %v9395 = vpop.f32.mrf.mxu0
      %v9396 = vadd.f32 0.0, %v9395
      %v9397 = vpop.f32.mrf.mxu0
      %v9398 = vadd.f32 0.0, %v9397
      %9399 = vdwg.mxu0
      %v9400 = vadd.f32 %v9322, %v9381
      %v9401 = vadd.f32 %v9323, %v9383
      %v9402 = vadd.f32 %v9324, %v9386
      %v9403 = vadd.f32 %v9325, %v9388
      %v9404 = vadd.f32 %v9326, %v9391
      %v9405 = vadd.f32 %v9327, %v9393
      %v9406 = vadd.f32 %v9328, %v9396
      %v9407 = vadd.f32 %v9329, %v9398
      %v9408 = vld [vmem:[%s9095 + $0x4] sm:$0xff]
      %v9409 = vld [vmem:[%s9095 + $0x14] sm:$0xff]
      %v9410 = vld [vmem:[%s9095 + $0x24] sm:$0xff]
      %v9411 = vld [vmem:[%s9095 + $0x34] sm:$0xff]
      %v9412 = vld [vmem:[%s9095 + $0x44] sm:$0xff]
      %v9413 = vld [vmem:[%s9095 + $0x54] sm:$0xff]
      %v9414 = vld [vmem:[%s9095 + $0x64] sm:$0xff]
      %v9415 = vld [vmem:[%s9095 + $0x74] sm:$0xff]
      %v9416 = vpack.c.bf16 %v9409, %v9408
      %v9417 = vpack.c.bf16 %v9411, %v9410
      %v9418 = vpack.c.bf16 %v9413, %v9412
      %v9419 = vpack.c.bf16 %v9415, %v9414
      %s9420 = scalar_lea.vmem %s5, 384
      %v9421 = vld [vmem:[%s9420] sm:$0xf]
      %v9422 = vld [vmem:[%s9420 + $0x4] sm:$0xf]
      %v9423 = vld [vmem:[%s9420 + $0x8] sm:$0xf]
      %v9424 = vld [vmem:[%s9420 + $0xc] sm:$0xf]
      %v9429 = vunpack.c.l.b16 %v9421
      %v9430 = vunpack.c.l.b16 %v9422
      %v9431 = vunpack.c.l.b16 %v9423
      %v9432 = vunpack.c.l.b16 %v9424
      %v9433 = vpack.c.b16 %v9430, %v9429
      %v9434 = vpack.c.b16 %v9432, %v9431
      %v9438 = vsel %vm1305, %v9416, 0
      %v9441 = vsel %vm1305, %v9417, 0
      %v9444 = vsel %vm1305, %v9418, 0
      %v9447 = vsel %vm1305, %v9419, 0
      %9449 = vmatpush.bf16.msra.mxu0 0
      %9450 = vmatpush.bf16.msra.mxu0 0
      %9451 = vmatpush.bf16.msra.mxu0 0
      %9452 = vmatpush.bf16.msra.mxu0 0
      %9453 = vmatpush.bf16.msra.mxu0 0
      %9454 = vmatpush.bf16.msra.mxu0 0
      %9455 = vmatpush.bf16.msra.mxu0 %v9434
      %9456 = vmatpush.bf16.msra.mxu0 %v9433
      %9457 = vmatmul.bf16.gmra.mxu0 %v9438
      %v9458 = vpop.f32.mrf.mxu0
      %v9459 = vadd.f32 0.0, %v9458
      %v9460 = vpop.f32.mrf.mxu0
      %v9461 = vadd.f32 0.0, %v9460
      %9462 = vmatmul.bf16.gmra.mxu0 %v9441
      %v9463 = vpop.f32.mrf.mxu0
      %v9464 = vadd.f32 0.0, %v9463
      %v9465 = vpop.f32.mrf.mxu0
      %v9466 = vadd.f32 0.0, %v9465
      %9467 = vmatmul.bf16.gmra.mxu0 %v9444
      %v9468 = vpop.f32.mrf.mxu0
      %v9469 = vadd.f32 0.0, %v9468
      %v9470 = vpop.f32.mrf.mxu0
      %v9471 = vadd.f32 0.0, %v9470
      %9472 = vmatmul.bf16.gmra.mxu0 %v9447
      %v9473 = vpop.f32.mrf.mxu0
      %v9474 = vadd.f32 0.0, %v9473
      %v9475 = vpop.f32.mrf.mxu0
      %v9476 = vadd.f32 0.0, %v9475
      %9477 = vdwg.mxu0
      %v9478 = vadd.f32 %v9400, %v9459
      %v9479 = vadd.f32 %v9401, %v9461
      %v9480 = vadd.f32 %v9402, %v9464
      %v9481 = vadd.f32 %v9403, %v9466
      %v9482 = vadd.f32 %v9404, %v9469
      %v9483 = vadd.f32 %v9405, %v9471
      %v9484 = vadd.f32 %v9406, %v9474
      %v9485 = vadd.f32 %v9407, %v9476
      %v9486 = vld [vmem:[%s6] sm:$0x1]
      %v9488 = vperm.slane %v9486, 0
      %v9490 = vadd.f32 %v9478, %v9488
      %v9491 = vadd.f32 %v9479, %v9488
      %v9492 = vadd.f32 %v9480, %v9488
      %v9493 = vadd.f32 %v9481, %v9488
      %v9494 = vadd.f32 %v9482, %v9488
      %v9495 = vadd.f32 %v9483, %v9488
      %v9496 = vadd.f32 %v9484, %v9488
      %v9497 = vadd.f32 %v9485, %v9488
      %v9498 = vmax.f32 %v9490, %v9491
      %v9499 = vmax.f32 %v9492, %v9493
      %v9500 = vmax.f32 %v9494, %v9495
      %v9501 = vmax.f32 %v9496, %v9497
      %vm9502 = vcmask 523264
      %9503 = vst.msk [vmem:[#allocation6] sm:$0xff] %vm9502, %v9498
      %9504 = vst.msk [vmem:[#allocation6 + $0x8] sm:$0xff] %vm9502, %v9499
      %9505 = vst.msk [vmem:[#allocation6 + $0x10] sm:$0xff] %vm9502, %v9500
      %9506 = vst.msk [vmem:[#allocation6 + $0x18] sm:$0xff] %vm9502, %v9501
      %v9507 = vld [vmem:[#allocation6] ss:$2 sm:$0xff]
      %s9508 = scalar_lea.vmem [#allocation6], 16
      %v9509 = vld [vmem:[%s9508] ss:$2 sm:$0xff]
      %s9510 = scalar_lea.vmem [#allocation6], 1
      %v9511 = vld [vmem:[%s9510] ss:$2 sm:$0xff]
      %s9512 = scalar_lea.vmem [#allocation6], 17
      %v9513 = vld [vmem:[%s9512] ss:$2 sm:$0xff]
      %v9514 = vmax.f32 %v9507, %v9511
      %v9515 = vmax.f32 %v9509, %v9513
      %v9516 = vpack.c.bf16 %v9514, %v9514
      %v9517 = vld [vmem:[%s7] sm:$0xf]
      %v9518 = vld [vmem:[%s7 + $0x4] sm:$0xf]
      %v9519 = vld [vmem:[%s7 + $0x8] sm:$0xf]
      %v9520 = vld [vmem:[%s7 + $0xc] sm:$0xf]
      %v9521 = vld [vmem:[%s7 + $0x10] sm:$0xf]
      %v9522 = vld [vmem:[%s7 + $0x14] sm:$0xf]
      %v9523 = vld [vmem:[%s7 + $0x18] sm:$0xf]
      %v9524 = vld [vmem:[%s7 + $0x1c] sm:$0xf]
      %s9525 = scalar_lea.vmem %s7, 32
      %v9526 = vld [vmem:[%s9525] sm:$0xf]
      %v9527 = vld [vmem:[%s9525 + $0x4] sm:$0xf]
      %v9528 = vld [vmem:[%s9525 + $0x8] sm:$0xf]
      %v9529 = vld [vmem:[%s9525 + $0xc] sm:$0xf]
      %v9530 = vld [vmem:[%s9525 + $0x10] sm:$0xf]
      %v9531 = vld [vmem:[%s9525 + $0x14] sm:$0xf]
      %v9532 = vld [vmem:[%s9525 + $0x18] sm:$0xf]
      %v9533 = vld [vmem:[%s9525 + $0x1c] sm:$0xf]
      %v9535 = vshrl.u32 %v9516, 16
      %v9545 = vunpack.c.l.b16 %v9526
      %v9546 = vunpack.c.l.b16 %v9527
      %v9547 = vunpack.c.l.b16 %v9528
      %v9548 = vunpack.c.l.b16 %v9529
      %v9549 = vunpack.c.l.b16 %v9530
      %v9550 = vunpack.c.l.b16 %v9531
      %v9551 = vunpack.c.l.b16 %v9532
      %v9552 = vunpack.c.l.b16 %v9533
      %v9553 = vpack.c.b16 %v9546, %v9545
      %v9554 = vpack.c.b16 %v9548, %v9547
      %v9555 = vpack.c.b16 %v9550, %v9549
      %v9556 = vpack.c.b16 %v9552, %v9551
      %v9562 = vsel %vm9502, %v9535, 0
      %9564 = vmatpush.bf16.msra.mxu0 0
      %9565 = vmatpush.bf16.msra.mxu0 0
      %9566 = vmatpush.bf16.msra.mxu0 0
      %9567 = vmatpush.bf16.msra.mxu0 0
      %9568 = vmatpush.bf16.msra.mxu0 %v9556
      %9569 = vmatpush.bf16.msra.mxu0 %v9555
      %9570 = vmatpush.bf16.msra.mxu0 %v9554
      %9571 = vmatpush.bf16.msra.mxu0 %v9553
      %9572 = vmatmul.bf16.gmra.mxu0 %v9562
      %v9573 = vpop.f32.mrf.mxu0
      %v9574 = vadd.f32 0.0, %v9573
      %v9575 = vpop.f32.mrf.mxu0
      %9576 = vdwg.mxu0
      %v9585 = vunpack.c.l.b16 %v9517
      %v9586 = vunpack.c.l.b16 %v9518
      %v9587 = vunpack.c.l.b16 %v9519
      %v9588 = vunpack.c.l.b16 %v9520
      %v9589 = vunpack.c.l.b16 %v9521
      %v9590 = vunpack.c.l.b16 %v9522
      %v9591 = vunpack.c.l.b16 %v9523
      %v9592 = vunpack.c.l.b16 %v9524
      %v9593 = vpack.c.b16 %v9586, %v9585
      %v9594 = vpack.c.b16 %v9588, %v9587
      %v9595 = vpack.c.b16 %v9590, %v9589
      %v9596 = vpack.c.b16 %v9592, %v9591
      %v9601 = vsel %vm9502, %v9516, 0
      %9603 = vmatpush.bf16.msra.mxu0 0
      %9604 = vmatpush.bf16.msra.mxu0 0
      %9605 = vmatpush.bf16.msra.mxu0 0
      %9606 = vmatpush.bf16.msra.mxu0 0
      %9607 = vmatpush.bf16.msra.mxu0 %v9596
      %9608 = vmatpush.bf16.msra.mxu0 %v9595
      %9609 = vmatpush.bf16.msra.mxu0 %v9594
      %9610 = vmatpush.bf16.msra.mxu0 %v9593
      %9611 = vmatmul.bf16.gmra.mxu0 %v9601
      %v9612 = vpop.f32.mrf.mxu0
      %v9613 = vadd.f32 %v9574, %v9612
      %v9614 = vpop.f32.mrf.mxu0
      %9615 = vdwg.mxu0
      %s9616 = scalar_lea.vmem %s7, 64
      %v9617 = vld [vmem:[%s9616] sm:$0xf]
      %v9618 = vld [vmem:[%s9616 + $0x4] sm:$0xf]
      %v9619 = vld [vmem:[%s9616 + $0x8] sm:$0xf]
      %v9620 = vld [vmem:[%s9616 + $0xc] sm:$0xf]
      %v9621 = vld [vmem:[%s9616 + $0x10] sm:$0xf]
      %v9622 = vld [vmem:[%s9616 + $0x14] sm:$0xf]
      %v9623 = vld [vmem:[%s9616 + $0x18] sm:$0xf]
      %v9624 = vld [vmem:[%s9616 + $0x1c] sm:$0xf]
      %v9626 = vrot.slane %v9516, 1
      %v9635 = vunpack.c.l.b16 %v9617
      %v9636 = vunpack.c.l.b16 %v9618
      %v9637 = vunpack.c.l.b16 %v9619
      %v9638 = vunpack.c.l.b16 %v9620
      %v9639 = vunpack.c.l.b16 %v9621
      %v9640 = vunpack.c.l.b16 %v9622
      %v9641 = vunpack.c.l.b16 %v9623
      %v9642 = vunpack.c.l.b16 %v9624
      %v9643 = vpack.c.b16 %v9636, %v9635
      %v9644 = vpack.c.b16 %v9638, %v9637
      %v9645 = vpack.c.b16 %v9640, %v9639
      %v9646 = vpack.c.b16 %v9642, %v9641
      %v9652 = vsel %vm9502, %v9626, 0
      %9654 = vmatpush.bf16.msra.mxu0 0
      %9655 = vmatpush.bf16.msra.mxu0 0
      %9656 = vmatpush.bf16.msra.mxu0 0
      %9657 = vmatpush.bf16.msra.mxu0 0
      %9658 = vmatpush.bf16.msra.mxu0 %v9646
      %9659 = vmatpush.bf16.msra.mxu0 %v9645
      %9660 = vmatpush.bf16.msra.mxu0 %v9644
      %9661 = vmatpush.bf16.msra.mxu0 %v9643
      %9662 = vmatmul.bf16.gmra.mxu0 %v9652
      %v9663 = vpop.f32.mrf.mxu0
      %v9664 = vadd.f32 0.0, %v9663
      %v9665 = vpop.f32.mrf.mxu0
      %9666 = vdwg.mxu0
      %v9667 = vadd.f32 %v9613, %v9664
      %s9668 = scalar_lea.vmem %s7, 96
      %v9669 = vld [vmem:[%s9668] sm:$0xf]
      %v9670 = vld [vmem:[%s9668 + $0x4] sm:$0xf]
      %v9671 = vld [vmem:[%s9668 + $0x8] sm:$0xf]
      %v9672 = vld [vmem:[%s9668 + $0xc] sm:$0xf]
      %v9673 = vld [vmem:[%s9668 + $0x10] sm:$0xf]
      %v9674 = vld [vmem:[%s9668 + $0x14] sm:$0xf]
      %v9675 = vld [vmem:[%s9668 + $0x18] sm:$0xf]
      %v9676 = vld [vmem:[%s9668 + $0x1c] sm:$0xf]
      %v9677 = vrot.slane %v9535, 1
      %v9686 = vunpack.c.l.b16 %v9669
      %v9687 = vunpack.c.l.b16 %v9670
      %v9688 = vunpack.c.l.b16 %v9671
      %v9689 = vunpack.c.l.b16 %v9672
      %v9690 = vunpack.c.l.b16 %v9673
      %v9691 = vunpack.c.l.b16 %v9674
      %v9692 = vunpack.c.l.b16 %v9675
      %v9693 = vunpack.c.l.b16 %v9676
      %v9694 = vpack.c.b16 %v9687, %v9686
      %v9695 = vpack.c.b16 %v9689, %v9688
      %v9696 = vpack.c.b16 %v9691, %v9690
      %v9697 = vpack.c.b16 %v9693, %v9692
      %v9703 = vsel %vm9502, %v9677, 0
      %9705 = vmatpush.bf16.msra.mxu0 0
      %9706 = vmatpush.bf16.msra.mxu0 0
      %9707 = vmatpush.bf16.msra.mxu0 0
      %9708 = vmatpush.bf16.msra.mxu0 0
      %9709 = vmatpush.bf16.msra.mxu0 %v9697
      %9710 = vmatpush.bf16.msra.mxu0 %v9696
      %9711 = vmatpush.bf16.msra.mxu0 %v9695
      %9712 = vmatpush.bf16.msra.mxu0 %v9694
      %9713 = vmatmul.bf16.gmra.mxu0 %v9703
      %v9714 = vpop.f32.mrf.mxu0
      %v9715 = vadd.f32 0.0, %v9714
      %v9716 = vpop.f32.mrf.mxu0
      %9717 = vdwg.mxu0
      %v9718 = vadd.f32 %v9667, %v9715
      %s9719 = scalar_lea.vmem %s7, 128
      %v9720 = vld [vmem:[%s9719] sm:$0xf]
      %v9721 = vld [vmem:[%s9719 + $0x4] sm:$0xf]
      %v9722 = vld [vmem:[%s9719 + $0x8] sm:$0xf]
      %v9723 = vld [vmem:[%s9719 + $0xc] sm:$0xf]
      %v9724 = vld [vmem:[%s9719 + $0x10] sm:$0xf]
      %v9725 = vld [vmem:[%s9719 + $0x14] sm:$0xf]
      %v9726 = vld [vmem:[%s9719 + $0x18] sm:$0xf]
      %v9727 = vld [vmem:[%s9719 + $0x1c] sm:$0xf]
      %v9728 = vrot.slane %v9516, 2
      %v9737 = vunpack.c.l.b16 %v9720
      %v9738 = vunpack.c.l.b16 %v9721
      %v9739 = vunpack.c.l.b16 %v9722
      %v9740 = vunpack.c.l.b16 %v9723
      %v9741 = vunpack.c.l.b16 %v9724
      %v9742 = vunpack.c.l.b16 %v9725
      %v9743 = vunpack.c.l.b16 %v9726
      %v9744 = vunpack.c.l.b16 %v9727
      %v9745 = vpack.c.b16 %v9738, %v9737
      %v9746 = vpack.c.b16 %v9740, %v9739
      %v9747 = vpack.c.b16 %v9742, %v9741
      %v9748 = vpack.c.b16 %v9744, %v9743
      %v9754 = vsel %vm9502, %v9728, 0
      %9756 = vmatpush.bf16.msra.mxu0 0
      %9757 = vmatpush.bf16.msra.mxu0 0
      %9758 = vmatpush.bf16.msra.mxu0 0
      %9759 = vmatpush.bf16.msra.mxu0 0
      %9760 = vmatpush.bf16.msra.mxu0 %v9748
      %9761 = vmatpush.bf16.msra.mxu0 %v9747
      %9762 = vmatpush.bf16.msra.mxu0 %v9746
      %9763 = vmatpush.bf16.msra.mxu0 %v9745
      %9764 = vmatmul.bf16.gmra.mxu0 %v9754
      %v9765 = vpop.f32.mrf.mxu0
      %v9766 = vadd.f32 0.0, %v9765
      %v9767 = vpop.f32.mrf.mxu0
      %9768 = vdwg.mxu0
      %v9769 = vadd.f32 %v9718, %v9766
      %s9770 = scalar_lea.vmem %s7, 160
      %v9771 = vld [vmem:[%s9770] sm:$0xf]
      %v9772 = vld [vmem:[%s9770 + $0x4] sm:$0xf]
      %v9773 = vld [vmem:[%s9770 + $0x8] sm:$0xf]
      %v9774 = vld [vmem:[%s9770 + $0xc] sm:$0xf]
      %v9775 = vld [vmem:[%s9770 + $0x10] sm:$0xf]
      %v9776 = vld [vmem:[%s9770 + $0x14] sm:$0xf]
      %v9777 = vld [vmem:[%s9770 + $0x18] sm:$0xf]
      %v9778 = vld [vmem:[%s9770 + $0x1c] sm:$0xf]
      %v9779 = vrot.slane %v9535, 2
      %v9788 = vunpack.c.l.b16 %v9771
      %v9789 = vunpack.c.l.b16 %v9772
      %v9790 = vunpack.c.l.b16 %v9773
      %v9791 = vunpack.c.l.b16 %v9774
      %v9792 = vunpack.c.l.b16 %v9775
      %v9793 = vunpack.c.l.b16 %v9776
      %v9794 = vunpack.c.l.b16 %v9777
      %v9795 = vunpack.c.l.b16 %v9778
      %v9796 = vpack.c.b16 %v9789, %v9788
      %v9797 = vpack.c.b16 %v9791, %v9790
      %v9798 = vpack.c.b16 %v9793, %v9792
      %v9799 = vpack.c.b16 %v9795, %v9794
      %v9805 = vsel %vm9502, %v9779, 0
      %9807 = vmatpush.bf16.msra.mxu0 0
      %9808 = vmatpush.bf16.msra.mxu0 0
      %9809 = vmatpush.bf16.msra.mxu0 0
      %9810 = vmatpush.bf16.msra.mxu0 0
      %9811 = vmatpush.bf16.msra.mxu0 %v9799
      %9812 = vmatpush.bf16.msra.mxu0 %v9798
      %9813 = vmatpush.bf16.msra.mxu0 %v9797
      %9814 = vmatpush.bf16.msra.mxu0 %v9796
      %9815 = vmatmul.bf16.gmra.mxu0 %v9805
      %v9816 = vpop.f32.mrf.mxu0
      %v9817 = vadd.f32 0.0, %v9816
      %v9818 = vpop.f32.mrf.mxu0
      %9819 = vdwg.mxu0
      %v9820 = vadd.f32 %v9769, %v9817
      %s9821 = scalar_lea.vmem %s7, 192
      %v9822 = vld [vmem:[%s9821] sm:$0xf]
      %v9823 = vld [vmem:[%s9821 + $0x4] sm:$0xf]
      %v9824 = vld [vmem:[%s9821 + $0x8] sm:$0xf]
      %v9825 = vld [vmem:[%s9821 + $0xc] sm:$0xf]
      %v9826 = vld [vmem:[%s9821 + $0x10] sm:$0xf]
      %v9827 = vld [vmem:[%s9821 + $0x14] sm:$0xf]
      %v9828 = vld [vmem:[%s9821 + $0x18] sm:$0xf]
      %v9829 = vld [vmem:[%s9821 + $0x1c] sm:$0xf]
      %v9830 = vrot.slane %v9516, 3
      %v9839 = vunpack.c.l.b16 %v9822
      %v9840 = vunpack.c.l.b16 %v9823
      %v9841 = vunpack.c.l.b16 %v9824
      %v9842 = vunpack.c.l.b16 %v9825
      %v9843 = vunpack.c.l.b16 %v9826
      %v9844 = vunpack.c.l.b16 %v9827
      %v9845 = vunpack.c.l.b16 %v9828
      %v9846 = vunpack.c.l.b16 %v9829
      %v9847 = vpack.c.b16 %v9840, %v9839
      %v9848 = vpack.c.b16 %v9842, %v9841
      %v9849 = vpack.c.b16 %v9844, %v9843
      %v9850 = vpack.c.b16 %v9846, %v9845
      %v9856 = vsel %vm9502, %v9830, 0
      %9858 = vmatpush.bf16.msra.mxu0 0
      %9859 = vmatpush.bf16.msra.mxu0 0
      %9860 = vmatpush.bf16.msra.mxu0 0
      %9861 = vmatpush.bf16.msra.mxu0 0
      %9862 = vmatpush.bf16.msra.mxu0 %v9850
      %9863 = vmatpush.bf16.msra.mxu0 %v9849
      %9864 = vmatpush.bf16.msra.mxu0 %v9848
      %9865 = vmatpush.bf16.msra.mxu0 %v9847
      %9866 = vmatmul.bf16.gmra.mxu0 %v9856
      %v9867 = vpop.f32.mrf.mxu0
      %v9868 = vadd.f32 0.0, %v9867
      %v9869 = vpop.f32.mrf.mxu0
      %9870 = vdwg.mxu0
      %v9871 = vadd.f32 %v9820, %v9868
      %s9872 = scalar_lea.vmem %s7, 224
      %v9873 = vld [vmem:[%s9872] sm:$0xf]
      %v9874 = vld [vmem:[%s9872 + $0x4] sm:$0xf]
      %v9875 = vld [vmem:[%s9872 + $0x8] sm:$0xf]
      %v9876 = vld [vmem:[%s9872 + $0xc] sm:$0xf]
      %v9877 = vld [vmem:[%s9872 + $0x10] sm:$0xf]
      %v9878 = vld [vmem:[%s9872 + $0x14] sm:$0xf]
      %v9879 = vld [vmem:[%s9872 + $0x18] sm:$0xf]
      %v9880 = vld [vmem:[%s9872 + $0x1c] sm:$0xf]
      %v9881 = vrot.slane %v9535, 3
      %v9890 = vunpack.c.l.b16 %v9873
      %v9891 = vunpack.c.l.b16 %v9874
      %v9892 = vunpack.c.l.b16 %v9875
      %v9893 = vunpack.c.l.b16 %v9876
      %v9894 = vunpack.c.l.b16 %v9877
      %v9895 = vunpack.c.l.b16 %v9878
      %v9896 = vunpack.c.l.b16 %v9879
      %v9897 = vunpack.c.l.b16 %v9880
      %v9898 = vpack.c.b16 %v9891, %v9890
      %v9899 = vpack.c.b16 %v9893, %v9892
      %v9900 = vpack.c.b16 %v9895, %v9894
      %v9901 = vpack.c.b16 %v9897, %v9896
      %v9907 = vsel %vm9502, %v9881, 0
      %9909 = vmatpush.bf16.msra.mxu0 0
      %9910 = vmatpush.bf16.msra.mxu0 0
      %9911 = vmatpush.bf16.msra.mxu0 0
      %9912 = vmatpush.bf16.msra.mxu0 0
      %9913 = vmatpush.bf16.msra.mxu0 %v9901
      %9914 = vmatpush.bf16.msra.mxu0 %v9900
      %9915 = vmatpush.bf16.msra.mxu0 %v9899
      %9916 = vmatpush.bf16.msra.mxu0 %v9898
      %9917 = vmatmul.bf16.gmra.mxu0 %v9907
      %v9918 = vpop.f32.mrf.mxu0
      %v9919 = vadd.f32 0.0, %v9918
      %v9920 = vpop.f32.mrf.mxu0
      %9921 = vdwg.mxu0
      %v9922 = vadd.f32 %v9871, %v9919
      %v9923 = vpack.c.bf16 %v9515, %v9515
      %s9924 = scalar_lea.vmem %s7, 256
      %v9925 = vld [vmem:[%s9924] sm:$0xf]
      %v9926 = vld [vmem:[%s9924 + $0x4] sm:$0xf]
      %v9927 = vld [vmem:[%s9924 + $0x8] sm:$0xf]
      %v9928 = vld [vmem:[%s9924 + $0xc] sm:$0xf]
      %v9929 = vld [vmem:[%s9924 + $0x10] sm:$0xf]
      %v9930 = vld [vmem:[%s9924 + $0x14] sm:$0xf]
      %v9931 = vld [vmem:[%s9924 + $0x18] sm:$0xf]
      %v9932 = vld [vmem:[%s9924 + $0x1c] sm:$0xf]
      %v9941 = vunpack.c.l.b16 %v9925
      %v9942 = vunpack.c.l.b16 %v9926
      %v9943 = vunpack.c.l.b16 %v9927
      %v9944 = vunpack.c.l.b16 %v9928
      %v9945 = vunpack.c.l.b16 %v9929
      %v9946 = vunpack.c.l.b16 %v9930
      %v9947 = vunpack.c.l.b16 %v9931
      %v9948 = vunpack.c.l.b16 %v9932
      %v9949 = vpack.c.b16 %v9942, %v9941
      %v9950 = vpack.c.b16 %v9944, %v9943
      %v9951 = vpack.c.b16 %v9946, %v9945
      %v9952 = vpack.c.b16 %v9948, %v9947
      %v9958 = vsel %vm9502, %v9923, 0
      %9960 = vmatpush.bf16.msra.mxu0 0
      %9961 = vmatpush.bf16.msra.mxu0 0
      %9962 = vmatpush.bf16.msra.mxu0 0
      %9963 = vmatpush.bf16.msra.mxu0 0
      %9964 = vmatpush.bf16.msra.mxu0 %v9952
      %9965 = vmatpush.bf16.msra.mxu0 %v9951
      %9966 = vmatpush.bf16.msra.mxu0 %v9950
      %9967 = vmatpush.bf16.msra.mxu0 %v9949
      %9968 = vmatmul.bf16.gmra.mxu0 %v9958
      %v9969 = vpop.f32.mrf.mxu0
      %v9970 = vadd.f32 0.0, %v9969
      %v9971 = vpop.f32.mrf.mxu0
      %9972 = vdwg.mxu0
      %v9973 = vadd.f32 %v9922, %v9970
      %s9974 = scalar_lea.vmem %s7, 288
      %v9975 = vld [vmem:[%s9974] sm:$0xf]
      %v9976 = vld [vmem:[%s9974 + $0x4] sm:$0xf]
      %v9977 = vld [vmem:[%s9974 + $0x8] sm:$0xf]
      %v9978 = vld [vmem:[%s9974 + $0xc] sm:$0xf]
      %v9979 = vld [vmem:[%s9974 + $0x10] sm:$0xf]
      %v9980 = vld [vmem:[%s9974 + $0x14] sm:$0xf]
      %v9981 = vld [vmem:[%s9974 + $0x18] sm:$0xf]
      %v9982 = vld [vmem:[%s9974 + $0x1c] sm:$0xf]
      %v9983 = vshrl.u32 %v9923, 16
      %v9993 = vunpack.c.l.b16 %v9975
      %v9994 = vunpack.c.l.b16 %v9976
      %v9995 = vunpack.c.l.b16 %v9977
      %v9996 = vunpack.c.l.b16 %v9978
      %v9997 = vunpack.c.l.b16 %v9979
      %v9998 = vunpack.c.l.b16 %v9980
      %v9999 = vunpack.c.l.b16 %v9981
      %v10000 = vunpack.c.l.b16 %v9982
      %v10001 = vpack.c.b16 %v9994, %v9993
      %v10002 = vpack.c.b16 %v9996, %v9995
      %v10003 = vpack.c.b16 %v9998, %v9997
      %v10004 = vpack.c.b16 %v10000, %v9999
      %v10010 = vsel %vm9502, %v9983, 0
      %10012 = vmatpush.bf16.msra.mxu0 0
      %10013 = vmatpush.bf16.msra.mxu0 0
      %10014 = vmatpush.bf16.msra.mxu0 0
      %10015 = vmatpush.bf16.msra.mxu0 0
      %10016 = vmatpush.bf16.msra.mxu0 %v10004
      %10017 = vmatpush.bf16.msra.mxu0 %v10003
      %10018 = vmatpush.bf16.msra.mxu0 %v10002
      %10019 = vmatpush.bf16.msra.mxu0 %v10001
      %10020 = vmatmul.bf16.gmra.mxu0 %v10010
      %v10021 = vpop.f32.mrf.mxu0
      %v10022 = vadd.f32 0.0, %v10021
      %v10023 = vpop.f32.mrf.mxu0
      %10024 = vdwg.mxu0
      %v10025 = vadd.f32 %v9973, %v10022
      %s10026 = scalar_lea.vmem %s7, 320
      %v10027 = vld [vmem:[%s10026] sm:$0xf]
      %v10028 = vld [vmem:[%s10026 + $0x4] sm:$0xf]
      %v10029 = vld [vmem:[%s10026 + $0x8] sm:$0xf]
      %v10030 = vld [vmem:[%s10026 + $0xc] sm:$0xf]
      %v10031 = vld [vmem:[%s10026 + $0x10] sm:$0xf]
      %v10032 = vld [vmem:[%s10026 + $0x14] sm:$0xf]
      %v10033 = vld [vmem:[%s10026 + $0x18] sm:$0xf]
      %v10034 = vld [vmem:[%s10026 + $0x1c] sm:$0xf]
      %v10036 = vrot.slane %v9923, 1
      %v10045 = vunpack.c.l.b16 %v10027
      %v10046 = vunpack.c.l.b16 %v10028
      %v10047 = vunpack.c.l.b16 %v10029
      %v10048 = vunpack.c.l.b16 %v10030
      %v10049 = vunpack.c.l.b16 %v10031
      %v10050 = vunpack.c.l.b16 %v10032
      %v10051 = vunpack.c.l.b16 %v10033
      %v10052 = vunpack.c.l.b16 %v10034
      %v10053 = vpack.c.b16 %v10046, %v10045
      %v10054 = vpack.c.b16 %v10048, %v10047
      %v10055 = vpack.c.b16 %v10050, %v10049
      %v10056 = vpack.c.b16 %v10052, %v10051
      %v10062 = vsel %vm9502, %v10036, 0
      %10064 = vmatpush.bf16.msra.mxu0 0
      %10065 = vmatpush.bf16.msra.mxu0 0
      %10066 = vmatpush.bf16.msra.mxu0 0
      %10067 = vmatpush.bf16.msra.mxu0 0
      %10068 = vmatpush.bf16.msra.mxu0 %v10056
      %10069 = vmatpush.bf16.msra.mxu0 %v10055
      %10070 = vmatpush.bf16.msra.mxu0 %v10054
      %10071 = vmatpush.bf16.msra.mxu0 %v10053
      %10072 = vmatmul.bf16.gmra.mxu0 %v10062
      %v10073 = vpop.f32.mrf.mxu0
      %v10074 = vadd.f32 0.0, %v10073
      %v10075 = vpop.f32.mrf.mxu0
      %10076 = vdwg.mxu0
      %v10077 = vadd.f32 %v10025, %v10074
      %s10078 = scalar_lea.vmem %s7, 352
      %v10079 = vld [vmem:[%s10078] sm:$0xf]
      %v10080 = vld [vmem:[%s10078 + $0x4] sm:$0xf]
      %v10081 = vld [vmem:[%s10078 + $0x8] sm:$0xf]
      %v10082 = vld [vmem:[%s10078 + $0xc] sm:$0xf]
      %v10083 = vld [vmem:[%s10078 + $0x10] sm:$0xf]
      %v10084 = vld [vmem:[%s10078 + $0x14] sm:$0xf]
      %v10085 = vld [vmem:[%s10078 + $0x18] sm:$0xf]
      %v10086 = vld [vmem:[%s10078 + $0x1c] sm:$0xf]
      %v10087 = vrot.slane %v9983, 1
      %v10096 = vunpack.c.l.b16 %v10079
      %v10097 = vunpack.c.l.b16 %v10080
      %v10098 = vunpack.c.l.b16 %v10081
      %v10099 = vunpack.c.l.b16 %v10082
      %v10100 = vunpack.c.l.b16 %v10083
      %v10101 = vunpack.c.l.b16 %v10084
      %v10102 = vunpack.c.l.b16 %v10085
      %v10103 = vunpack.c.l.b16 %v10086
      %v10104 = vpack.c.b16 %v10097, %v10096
      %v10105 = vpack.c.b16 %v10099, %v10098
      %v10106 = vpack.c.b16 %v10101, %v10100
      %v10107 = vpack.c.b16 %v10103, %v10102
      %v10113 = vsel %vm9502, %v10087, 0
      %10115 = vmatpush.bf16.msra.mxu0 0
      %10116 = vmatpush.bf16.msra.mxu0 0
      %10117 = vmatpush.bf16.msra.mxu0 0
      %10118 = vmatpush.bf16.msra.mxu0 0
      %10119 = vmatpush.bf16.msra.mxu0 %v10107
      %10120 = vmatpush.bf16.msra.mxu0 %v10106
      %10121 = vmatpush.bf16.msra.mxu0 %v10105
      %10122 = vmatpush.bf16.msra.mxu0 %v10104
      %10123 = vmatmul.bf16.gmra.mxu0 %v10113
      %v10124 = vpop.f32.mrf.mxu0
      %v10125 = vadd.f32 0.0, %v10124
      %v10126 = vpop.f32.mrf.mxu0
      %10127 = vdwg.mxu0
      %v10128 = vadd.f32 %v10077, %v10125
      %s10129 = scalar_lea.vmem %s7, 384
      %v10130 = vld [vmem:[%s10129] sm:$0xf]
      %v10131 = vld [vmem:[%s10129 + $0x4] sm:$0xf]
      %v10132 = vld [vmem:[%s10129 + $0x8] sm:$0xf]
      %v10133 = vld [vmem:[%s10129 + $0xc] sm:$0xf]
      %v10134 = vld [vmem:[%s10129 + $0x10] sm:$0xf]
      %v10135 = vld [vmem:[%s10129 + $0x14] sm:$0xf]
      %v10136 = vld [vmem:[%s10129 + $0x18] sm:$0xf]
      %v10137 = vld [vmem:[%s10129 + $0x1c] sm:$0xf]
      %v10138 = vrot.slane %v9923, 2
      %v10147 = vunpack.c.l.b16 %v10130
      %v10148 = vunpack.c.l.b16 %v10131
      %v10149 = vunpack.c.l.b16 %v10132
      %v10150 = vunpack.c.l.b16 %v10133
      %v10151 = vunpack.c.l.b16 %v10134
      %v10152 = vunpack.c.l.b16 %v10135
      %v10153 = vunpack.c.l.b16 %v10136
      %v10154 = vunpack.c.l.b16 %v10137
      %v10155 = vpack.c.b16 %v10148, %v10147
      %v10156 = vpack.c.b16 %v10150, %v10149
      %v10157 = vpack.c.b16 %v10152, %v10151
      %v10158 = vpack.c.b16 %v10154, %v10153
      %v10164 = vsel %vm9502, %v10138, 0
      %10166 = vmatpush.bf16.msra.mxu0 0
      %10167 = vmatpush.bf16.msra.mxu0 0
      %10168 = vmatpush.bf16.msra.mxu0 0
      %10169 = vmatpush.bf16.msra.mxu0 0
      %10170 = vmatpush.bf16.msra.mxu0 %v10158
      %10171 = vmatpush.bf16.msra.mxu0 %v10157
      %10172 = vmatpush.bf16.msra.mxu0 %v10156
      %10173 = vmatpush.bf16.msra.mxu0 %v10155
      %10174 = vmatmul.bf16.gmra.mxu0 %v10164
      %v10175 = vpop.f32.mrf.mxu0
      %v10176 = vadd.f32 0.0, %v10175
      %v10177 = vpop.f32.mrf.mxu0
      %10178 = vdwg.mxu0
      %v10179 = vadd.f32 %v10128, %v10176
      %s10180 = scalar_lea.vmem %s7, 416
      %v10181 = vld [vmem:[%s10180] sm:$0xf]
      %v10182 = vld [vmem:[%s10180 + $0x4] sm:$0xf]
      %v10183 = vld [vmem:[%s10180 + $0x8] sm:$0xf]
      %v10184 = vld [vmem:[%s10180 + $0xc] sm:$0xf]
      %v10185 = vld [vmem:[%s10180 + $0x10] sm:$0xf]
      %v10186 = vld [vmem:[%s10180 + $0x14] sm:$0xf]
      %v10187 = vld [vmem:[%s10180 + $0x18] sm:$0xf]
      %v10188 = vld [vmem:[%s10180 + $0x1c] sm:$0xf]
      %v10189 = vrot.slane %v9983, 2
      %v10198 = vunpack.c.l.b16 %v10181
      %v10199 = vunpack.c.l.b16 %v10182
      %v10200 = vunpack.c.l.b16 %v10183
      %v10201 = vunpack.c.l.b16 %v10184
      %v10202 = vunpack.c.l.b16 %v10185
      %v10203 = vunpack.c.l.b16 %v10186
      %v10204 = vunpack.c.l.b16 %v10187
      %v10205 = vunpack.c.l.b16 %v10188
      %v10206 = vpack.c.b16 %v10199, %v10198
      %v10207 = vpack.c.b16 %v10201, %v10200
      %v10208 = vpack.c.b16 %v10203, %v10202
      %v10209 = vpack.c.b16 %v10205, %v10204
      %v10215 = vsel %vm9502, %v10189, 0
      %10217 = vmatpush.bf16.msra.mxu0 0
      %10218 = vmatpush.bf16.msra.mxu0 0
      %10219 = vmatpush.bf16.msra.mxu0 0
      %10220 = vmatpush.bf16.msra.mxu0 0
      %10221 = vmatpush.bf16.msra.mxu0 %v10209
      %10222 = vmatpush.bf16.msra.mxu0 %v10208
      %10223 = vmatpush.bf16.msra.mxu0 %v10207
      %10224 = vmatpush.bf16.msra.mxu0 %v10206
      %10225 = vmatmul.bf16.gmra.mxu0 %v10215
      %v10226 = vpop.f32.mrf.mxu0
      %v10227 = vadd.f32 0.0, %v10226
      %v10228 = vpop.f32.mrf.mxu0
      %10229 = vdwg.mxu0
      %v10230 = vadd.f32 %v10179, %v10227
      %s10231 = scalar_lea.vmem %s7, 448
      %v10232 = vld [vmem:[%s10231] sm:$0xf]
      %v10233 = vld [vmem:[%s10231 + $0x4] sm:$0xf]
      %v10234 = vld [vmem:[%s10231 + $0x8] sm:$0xf]
      %v10235 = vld [vmem:[%s10231 + $0xc] sm:$0xf]
      %v10236 = vld [vmem:[%s10231 + $0x10] sm:$0xf]
      %v10237 = vld [vmem:[%s10231 + $0x14] sm:$0xf]
      %v10238 = vld [vmem:[%s10231 + $0x18] sm:$0xf]
      %v10239 = vld [vmem:[%s10231 + $0x1c] sm:$0xf]
      %v10240 = vrot.slane %v9923, 3
      %v10249 = vunpack.c.l.b16 %v10232
      %v10250 = vunpack.c.l.b16 %v10233
      %v10251 = vunpack.c.l.b16 %v10234
      %v10252 = vunpack.c.l.b16 %v10235
      %v10253 = vunpack.c.l.b16 %v10236
      %v10254 = vunpack.c.l.b16 %v10237
      %v10255 = vunpack.c.l.b16 %v10238
      %v10256 = vunpack.c.l.b16 %v10239
      %v10257 = vpack.c.b16 %v10250, %v10249
      %v10258 = vpack.c.b16 %v10252, %v10251
      %v10259 = vpack.c.b16 %v10254, %v10253
      %v10260 = vpack.c.b16 %v10256, %v10255
      %v10266 = vsel %vm9502, %v10240, 0
      %10268 = vmatpush.bf16.msra.mxu0 0
      %10269 = vmatpush.bf16.msra.mxu0 0
      %10270 = vmatpush.bf16.msra.mxu0 0
      %10271 = vmatpush.bf16.msra.mxu0 0
      %10272 = vmatpush.bf16.msra.mxu0 %v10260
      %10273 = vmatpush.bf16.msra.mxu0 %v10259
      %10274 = vmatpush.bf16.msra.mxu0 %v10258
      %10275 = vmatpush.bf16.msra.mxu0 %v10257
      %10276 = vmatmul.bf16.gmra.mxu0 %v10266
      %v10277 = vpop.f32.mrf.mxu0
      %v10278 = vadd.f32 0.0, %v10277
      %v10279 = vpop.f32.mrf.mxu0
      %10280 = vdwg.mxu0
      %v10281 = vadd.f32 %v10230, %v10278
      %s10282 = scalar_lea.vmem %s7, 480
      %v10283 = vld [vmem:[%s10282] sm:$0xf]
      %v10284 = vld [vmem:[%s10282 + $0x4] sm:$0xf]
      %v10285 = vld [vmem:[%s10282 + $0x8] sm:$0xf]
      %v10286 = vld [vmem:[%s10282 + $0xc] sm:$0xf]
      %v10287 = vld [vmem:[%s10282 + $0x10] sm:$0xf]
      %v10288 = vld [vmem:[%s10282 + $0x14] sm:$0xf]
      %v10289 = vld [vmem:[%s10282 + $0x18] sm:$0xf]
      %v10290 = vld [vmem:[%s10282 + $0x1c] sm:$0xf]
      %v10291 = vrot.slane %v9983, 3
      %v10300 = vunpack.c.l.b16 %v10283
      %v10301 = vunpack.c.l.b16 %v10284
      %v10302 = vunpack.c.l.b16 %v10285
      %v10303 = vunpack.c.l.b16 %v10286
      %v10304 = vunpack.c.l.b16 %v10287
      %v10305 = vunpack.c.l.b16 %v10288
      %v10306 = vunpack.c.l.b16 %v10289
      %v10307 = vunpack.c.l.b16 %v10290
      %v10308 = vpack.c.b16 %v10301, %v10300
      %v10309 = vpack.c.b16 %v10303, %v10302
      %v10310 = vpack.c.b16 %v10305, %v10304
      %v10311 = vpack.c.b16 %v10307, %v10306
      %v10317 = vsel %vm9502, %v10291, 0
      %10319 = vmatpush.bf16.msra.mxu0 0
      %10320 = vmatpush.bf16.msra.mxu0 0
      %10321 = vmatpush.bf16.msra.mxu0 0
      %10322 = vmatpush.bf16.msra.mxu0 0
      %10323 = vmatpush.bf16.msra.mxu0 %v10311
      %10324 = vmatpush.bf16.msra.mxu0 %v10310
      %10325 = vmatpush.bf16.msra.mxu0 %v10309
      %10326 = vmatpush.bf16.msra.mxu0 %v10308
      %10327 = vmatmul.bf16.gmra.mxu0 %v10317
      %v10328 = vpop.f32.mrf.mxu0
      %v10329 = vadd.f32 0.0, %v10328
      %v10330 = vpop.f32.mrf.mxu0
      %10331 = vdwg.mxu0
      %v10332 = vadd.f32 %v10281, %v10329
      %v10333 = vld [vmem:[%s8] sm:$0x1]
      %v10334 = vadd.f32 %v10332, %v10333
      %v10335 = vperm.slane %v10334, 0
      %10336 = vst [vmem:[%s330] sm:$0xff] %v10335
      %p10337 = scmp.lt.s32.totalorder %s20, 1
      %s10338 = scalar_select %p10337, %s20, 1
      %s10339 = smul.addr %s10338, 8
      %s10340 = scalar_lea.vmem %s9, %s10339
      // Predicated region
      $region57: #{net_forward.1} parent=55 // pred_check
        %p10341 = pneg %p232
      $region58: #{net_forward.1} parent=55 // pred_check_branch
        %10343 = sbr.rel (%p10341) target = $region60
      $region59: #{net_forward.1} parent=55 // pred_region
        _
      $region60: #{net_forward.1} parent=55 // pred_fallthru
        _
    $region56: #{net_forward.1} parent=5 // pred_fallthru
      _
    %p10344 = scmp.le.s32.totalorder 2, %s15
    // Predicated region
    $region61: #{net_forward.1} parent=5 // pred_check
      %p10345 = pneg %p10344
    $region62: #{net_forward.1} parent=5 // pred_check_branch
      %10347 = sbr.rel (%p10345) target = $region64
    $region63: #{net_forward.1} parent=5 // pred_region
      %s10348 = ssub.s32 %s15, 2
      // Predicated region
      $region65: #{net_forward.1} parent=63 // pred_check
        %p10349 = pneg %p238
      $region66: #{net_forward.1} parent=63 // pred_check_branch
        %10351 = sbr.rel (%p10349) target = $region68
      $region67: #{net_forward.1} parent=63 // pred_region
        %p10352 = scmp.lt.s32.totalorder %s21, 1
        %s10353 = scalar_select %p10352, %s21, 1
        %s10354 = smul.addr %s10353, 8
        %s10355 = scalar_lea.vmem %s9, %s10354
      $region68: #{net_forward.1} parent=63 // pred_fallthru
        _
    $region64: #{net_forward.1} parent=5 // pred_fallthru
      _
  $region6: #{net_forward.1} parent=0 // loop_footer
    %s19 = sadd.s32 1, %s15
  $region7: #{net_forward.1} parent=0 // loop_footer_branch
    %14 = sbr.rel target = $region3
  $region8: #{net_forward.1} parent=0 // loop_exit
    _

</llo_original>
